<compile_context>
chip_gen: v7x
topology: tpu7x:2x2x1
jax: 0.10.0
libtpu: 0.0.40
codegen_flags: <defaults>
</compile_context>

<pallas_src>
import functools

import jax
import jax.numpy as jnp
from jax.experimental import pallas as pl
from jax.experimental.pallas import tpu as pltpu


# -----------------------------------------------------------------------------
# Fused Conv2-block kernel:  conv(3x3,s2)+PReLU -> conv(3x3,s1)+PReLU [-> SE]
# -----------------------------------------------------------------------------
def _make_fused_block_kernel(H1, W1, C, with_se):
    Wp = W1 + 2                       # flat row width inside the kernel (2 junk cols)
    Lo = H1 * Wp                      # flattened output rows (incl. junk cols)
    base = (-(Wp + 1)) % 16           # sublane-aligned start for the conv1-result store
    offs1 = (0, 1, Wp, Wp + 1)        # s2d taps: (oy, ox) in {0,1}^2  -> oy*Wp + ox
    offs2 = tuple(dy * Wp + dx for dy in range(3) for dx in range(3))

    def kernel(*refs):
        if with_se:
            (xs_ref, m_ref, w1_ref, b1_ref, a1_ref, w2_ref, b2_ref, a2_ref,
             sw1_ref, sb1_ref, sw2_ref, sb2_ref, o_ref, c1_ref) = refs
        else:
            (xs_ref, m_ref, w1_ref, b1_ref, a1_ref, w2_ref, b2_ref, a2_ref,
             o_ref, c1_ref) = refs

        mask = m_ref[...]                                  # (Lo, 1) f32; 0 on junk cols

        # ---- conv1 (3x3, stride 2): 4 shifted bf16 matmuls over the s2d input ----
        acc = jnp.zeros((Lo, C), jnp.float32)
        for i, off in enumerate(offs1):
            tap = xs_ref[0, pl.ds(off, Lo), :]             # (Lo, 4*Cin) bf16
            acc = acc + jnp.dot(tap, w1_ref[i], preferred_element_type=jnp.float32)
        y1 = acc + b1_ref[...]
        y1 = jnp.where(y1 >= 0.0, y1, a1_ref[...] * y1)    # PReLU, f32 epilogue
        y1 = y1 * mask                                     # junk cols -> 0 == conv2 pad ring

        # ---- park conv1 result inside a zero ring (flat layout, bf16 scratch) ----
        c1_ref[...] = jnp.zeros_like(c1_ref)
        c1_ref[pl.ds(base + Wp + 1, Lo), :] = y1.astype(jnp.bfloat16)

        # ---- conv2 (3x3, stride 1): 9 shifted bf16 matmuls over the padded scratch ----
        acc2 = jnp.zeros((Lo, C), jnp.float32)
        for i, off in enumerate(offs2):
            tap = c1_ref[pl.ds(base + off, Lo), :]         # (Lo, C) bf16
            acc2 = acc2 + jnp.dot(tap, w2_ref[i], preferred_element_type=jnp.float32)
        y2 = acc2 + b2_ref[...]
        y2 = jnp.where(y2 >= 0.0, y2, a2_ref[...] * y2)    # PReLU, f32 epilogue

        if with_se:
            # fused SE: count-correct masked mean -> fc -> relu -> fc -> sigmoid -> scale
            pooled = jnp.sum(y2 * mask, axis=0, keepdims=True) * (1.0 / (H1 * W1))
            h = jnp.dot(pooled, sw1_ref[...], preferred_element_type=jnp.float32) + sb1_ref[...]
            h = jnp.maximum(h, 0.0)
            z = jnp.dot(h, sw2_ref[...], preferred_element_type=jnp.float32) + sb2_ref[...]
            g = 1.0 / (1.0 + jnp.exp(-z))                  # sigmoid
            y2 = y2 * g

        o_ref[0] = y2

    return kernel


# -----------------------------------------------------------------------------
# XLA-side glue (cheap, ~1x passes): layout prep + weight packing
# -----------------------------------------------------------------------------
def _s2d_prep(x_nhwc):
    """pad(1) + space-to-depth(2) + one extra zero row/col, flattened; bf16."""
    N, H, W, Cin = x_nhwc.shape
    H1, W1 = H // 2, W // 2
    xp = jnp.pad(x_nhwc, ((0, 0), (1, 1), (1, 1), (0, 0)))            # (N, H+2, W+2, Cin)
    xs = xp.reshape(N, H1 + 1, 2, W1 + 1, 2, Cin)
    xs = xs.transpose(0, 1, 3, 2, 4, 5).reshape(N, H1 + 1, W1 + 1, 4 * Cin)
    xs = jnp.pad(xs, ((0, 0), (0, 1), (0, 1), (0, 0)))                # (N, H1+2, W1+2, 4Cin)
    return xs.reshape(N, (H1 + 2) * (W1 + 2), 4 * Cin).astype(jnp.bfloat16)


def _pack_conv1_weights(w):
    """(Cout, Cin, 3, 3) -> (4, 4*Cin, Cout) bf16, matching the s2d tap layout."""
    Cout, Cin, _, _ = w.shape
    p = jnp.zeros((2, 2, 2, 2, Cin, Cout), jnp.float32)   # (oy, ox, sy, sx, cin, cout)
    for dy in range(3):
        for dx in range(3):
            oy, sy = divmod(dy, 2)
            ox, sx = divmod(dx, 2)
            p = p.at[oy, ox, sy, sx].set(jnp.transpose(w[:, :, dy, dx]))
    return p.reshape(4, 4 * Cin, Cout).astype(jnp.bfloat16)


def _pack_conv2_weights(w):
    """(Cout, Cin, 3, 3) -> (9, Cin, Cout) bf16, tap index = dy*3 + dx."""
    Cout, Cin, _, _ = w.shape
    return jnp.transpose(w, (2, 3, 1, 0)).reshape(9, Cin, Cout).astype(jnp.bfloat16)


def _col_mask(H1, W1):
    """(H1*(W1+2), 1) f32 mask: 1.0 on real columns, 0.0 on the 2 junk columns."""
    m = jnp.zeros((H1, W1 + 2), jnp.float32).at[:, :W1].set(1.0)
    return m.reshape(H1 * (W1 + 2), 1)


def fused_conv2_block(x_nhwc, block_params, se_params=None):
    """One Conv2 block (conv s2 + PReLU + conv s1 + PReLU [+ SE]) in a single pallas_call."""
    N, H, W, Cin = x_nhwc.shape
    assert H % 2 == 0 and W % 2 == 0, "ContextNet blocks expect even spatial dims"
    H1, W1 = H // 2, W // 2
    C = block_params["conv1"]["w"].shape[0]
    K4 = 4 * Cin
    Wp = W1 + 2
    Lo = H1 * Wp
    Lx = (H1 + 2) * Wp
    base = (-(Wp + 1)) % 16
    scratch_rows = base + Lx + 8

    xs = _s2d_prep(x_nhwc)                                 # (N, Lx, 4*Cin) bf16
    w1 = _pack_conv1_weights(block_params["conv1"]["w"])
    w2 = _pack_conv2_weights(block_params["conv2"]["w"])
    b1 = block_params["conv1"]["b"].reshape(1, C).astype(jnp.float32)
    a1 = block_params["conv1"]["alpha"].reshape(1, C).astype(jnp.float32)
    b2 = block_params["conv2"]["b"].reshape(1, C).astype(jnp.float32)
    a2 = block_params["conv2"]["alpha"].reshape(1, C).astype(jnp.float32)
    mask = _col_mask(H1, W1)

    inputs = [xs, mask, w1, b1, a1, w2, b2, a2]
    in_specs = [
        pl.BlockSpec((1, Lx, K4), lambda n: (n, 0, 0)),
        pl.BlockSpec((Lo, 1), lambda n: (0, 0)),
        pl.BlockSpec((4, K4, C), lambda n: (0, 0, 0)),
        pl.BlockSpec((1, C), lambda n: (0, 0)),
        pl.BlockSpec((1, C), lambda n: (0, 0)),
        pl.BlockSpec((9, C, C), lambda n: (0, 0, 0)),
        pl.BlockSpec((1, C), lambda n: (0, 0)),
        pl.BlockSpec((1, C), lambda n: (0, 0)),
    ]
    with_se = se_params is not None
    if with_se:
        Cr = se_params["w1"].shape[1]
        inputs += [se_params["w1"].astype(jnp.float32),
                   se_params["b1"].reshape(1, Cr).astype(jnp.float32),
                   se_params["w2"].astype(jnp.float32),
                   se_params["b2"].reshape(1, C).astype(jnp.float32)]
        in_specs += [pl.BlockSpec((C, Cr), lambda n: (0, 0)),
                     pl.BlockSpec((1, Cr), lambda n: (0, 0)),
                     pl.BlockSpec((Cr, C), lambda n: (0, 0)),
                     pl.BlockSpec((1, C), lambda n: (0, 0))]

    out = pl.pallas_call(
        _make_fused_block_kernel(H1, W1, C, with_se),
        out_shape=jax.ShapeDtypeStruct((N, Lo, C), jnp.float32),
        grid=(N,),
        in_specs=in_specs,
        out_specs=pl.BlockSpec((1, Lo, C), lambda n: (n, 0, 0)),
        scratch_shapes=[pltpu.VMEM((scratch_rows, C), jnp.bfloat16)],
        compiler_params=pltpu.CompilerParams(
            dimension_semantics=("parallel",),
            vmem_limit_bytes=64 * 1024 * 1024),
    )(*inputs)

    # (N, H1*(W1+2), C) -> (N, H1, W1, C): drop the two junk columns per row.
    return out.reshape(N, H1, Wp, C)[:, :, :W1, :]


# -----------------------------------------------------------------------------
# Parameter construction (deterministic, synthetic)
# -----------------------------------------------------------------------------
def _conv_params(key, cin, cout):
    k1, k2 = jax.random.split(key)
    w = jax.random.normal(k1, (cout, cin, 3, 3), jnp.float32) / jnp.sqrt(9.0 * cin)
    b = 0.01 * jax.random.normal(k2, (cout,), jnp.float32)
    alpha = jnp.full((cout,), 0.25, jnp.float32)           # PyTorch PReLU default init
    return {"w": w, "b": b, "alpha": alpha}


def init_context_net(key, c):
    keys = jax.random.split(key, 8)
    params = {
        "down0": {"conv1": _conv_params(keys[0], c[0], c[1]),
                  "conv2": _conv_params(keys[1], c[1], c[1])},
        "down1": {"conv1": _conv_params(keys[2], c[1], c[2]),
                  "conv2": _conv_params(keys[3], c[2], c[2])},
        "down2": {"conv1": _conv_params(keys[4], c[2], c[3]),
                  "conv2": _conv_params(keys[5], c[3], c[3])},
    }
    C = c[3]
    Cr = max(1, C // 8)
    k1, k2 = jax.random.split(keys[6])
    k3, k4 = jax.random.split(keys[7])
    params["attnet2"] = {
        "w1": jax.random.normal(k1, (C, Cr), jnp.float32) / jnp.sqrt(float(C)),
        "b1": 0.01 * jax.random.normal(k2, (Cr,), jnp.float32),
        "w2": jax.random.normal(k3, (Cr, C), jnp.float32) / jnp.sqrt(float(Cr)),
        "b2": 0.01 * jax.random.normal(k4, (C,), jnp.float32),
    }
    return params


# -----------------------------------------------------------------------------
# ContextNet forward (public API matches the PyTorch module: NCHW in / NCHW out)
# -----------------------------------------------------------------------------
def context_net_forward(params, x):
    is_list = isinstance(x, (tuple, list))
    if is_list:
        batch_dim = x[0].shape[0]
        x = jnp.concatenate(list(x), axis=0)
    x = jnp.transpose(x, (0, 2, 3, 1))                     # NCHW -> NHWC (kernels are NHWC)
    x1 = fused_conv2_block(x, params["down0"])
    x2 = fused_conv2_block(x1, params["down1"])
    x3 = fused_conv2_block(x2, params["down2"], se_params=params["attnet2"])
    outs = [jnp.transpose(t, (0, 3, 1, 2)) for t in (x1, x2, x3)]   # back to NCHW
    if is_list:
        return ([o[:batch_dim] for o in outs], [o[batch_dim:] for o in outs])
    return outs


# -----------------------------------------------------------------------------
# Pure-JAX reference (same bf16 matmul inputs / f32 accumulation as the kernel)
# -----------------------------------------------------------------------------
def _ref_conv_prelu(x, p, stride):
    w = jnp.transpose(p["w"], (2, 3, 1, 0)).astype(jnp.bfloat16)
    y = jax.lax.conv_general_dilated(
        x.astype(jnp.bfloat16), w, (stride, stride), ((1, 1), (1, 1)),
        dimension_numbers=("NHWC", "HWIO", "NHWC"),
        preferred_element_type=jnp.float32)
    y = y + p["b"]
    return jnp.where(y >= 0.0, y, p["alpha"] * y)


def _ref_forward(params, x_nchw):
    x = jnp.transpose(x_nchw, (0, 2, 3, 1))
    outs = []
    for name in ("down0", "down1", "down2"):
        x = _ref_conv_prelu(x, params[name]["conv1"], 2)
        x = _ref_conv_prelu(x, params[name]["conv2"], 1)
        outs.append(x)
    a = params["attnet2"]
    x = outs[-1]
    pooled = jnp.mean(x, axis=(1, 2))
    h = jnp.maximum(pooled @ a["w1"] + a["b1"], 0.0)
    g = jax.nn.sigmoid(h @ a["w2"] + a["b2"])
    outs[-1] = x * g[:, None, None, :]
    return [jnp.transpose(t, (0, 3, 1, 2)) for t in outs]


# -----------------------------------------------------------------------------
if __name__ == "__main__":
    c = (4, 8, 16, 32)                    # channel config for ContextNet(c)
    key = jax.random.PRNGKey(0)
    kp, kx = jax.random.split(key)
    params = init_context_net(kp, c)
    x = jax.random.normal(kx, (2, c[0], 16, 16), jnp.float32)   # NCHW

    fwd = jax.jit(functools.partial(context_net_forward, params))
    x1, x2, x3 = fwd(x)
    jax.block_until_ready((x1, x2, x3))

    assert x1.shape == (2, c[1], 8, 8)
    assert x2.shape == (2, c[2], 4, 4)
    assert x3.shape == (2, c[3], 2, 2)

    r1, r2, r3 = _ref_forward(params, x)
    for got, ref in ((x1, r1), (x2, r2), (x3, r3)):
        max_err = float(jnp.max(jnp.abs(got - ref)))
        assert jnp.allclose(got, ref, atol=1e-2, rtol=1e-2), f"mismatch vs reference: {max_err}"

    print("KERNEL_OK")
</pallas_src>

<mosaic_0001>
module attributes {stable_mosaic.version = 11 : i64} {
  func.func @kernel(%arg0: i32, %arg1: memref<1x100x16xbf16, #tpu.memory_space<vmem>>, %arg2: memref<80x1xf32, #tpu.memory_space<vmem>>, %arg3: memref<4x16x8xbf16, #tpu.memory_space<vmem>>, %arg4: memref<1x8xf32, #tpu.memory_space<vmem>>, %arg5: memref<1x8xf32, #tpu.memory_space<vmem>>, %arg6: memref<9x8x8xbf16, #tpu.memory_space<vmem>>, %arg7: memref<1x8xf32, #tpu.memory_space<vmem>>, %arg8: memref<1x8xf32, #tpu.memory_space<vmem>>, %arg9: memref<1x80x8xf32, #tpu.memory_space<vmem>>, %arg10: memref<113x8xbf16, #tpu.memory_space<vmem>>) attributes {dimension_semantics = [#tpu.dimension_semantics<parallel>], iteration_bounds = array<i64: 2>, scalar_prefetch = 0 : i64, scratch_operands = 1 : i64, tpu.core_type = #tpu.core_type<tc>, window_params = [{transform_indices = @transform_0, window_bounds = array<i64: 1, 100, 16>}, {pipeline_mode = #tpu.pipeline_mode<synchronous>, transform_indices = @transform_1, window_bounds = array<i64: 80, 1>}, {pipeline_mode = #tpu.pipeline_mode<synchronous>, transform_indices = @transform_2, window_bounds = array<i64: 4, 16, 8>}, {pipeline_mode = #tpu.pipeline_mode<synchronous>, transform_indices = @transform_3, window_bounds = array<i64: 1, 8>}, {pipeline_mode = #tpu.pipeline_mode<synchronous>, transform_indices = @transform_4, window_bounds = array<i64: 1, 8>}, {pipeline_mode = #tpu.pipeline_mode<synchronous>, transform_indices = @transform_5, window_bounds = array<i64: 9, 8, 8>}, {pipeline_mode = #tpu.pipeline_mode<synchronous>, transform_indices = @transform_6, window_bounds = array<i64: 1, 8>}, {pipeline_mode = #tpu.pipeline_mode<synchronous>, transform_indices = @transform_7, window_bounds = array<i64: 1, 8>}, {transform_indices = @transform_8, window_bounds = array<i64: 1, 80, 8>}]} {
    %c0 = arith.constant 0 : index
    %c0_0 = arith.constant 0 : index
    %0 = vector.load %arg2[%c0, %c0_0] : memref<80x1xf32, #tpu.memory_space<vmem>>, vector<80x1xf32>
    %cst = arith.constant 0.000000e+00 : f32
    %1 = vector.broadcast %cst : f32 to vector<80x8xf32>
    %c0_1 = arith.constant 0 : index
    %c0_2 = arith.constant 0 : index
    %c0_3 = arith.constant 0 : index
    %2 = vector.load %arg1[%c0_1, %c0_2, %c0_3] : memref<1x100x16xbf16, #tpu.memory_space<vmem>>, vector<1x80x16xbf16>
    %3 = vector.shape_cast %2 : vector<1x80x16xbf16> to vector<80x16xbf16>
    %c0_4 = arith.constant 0 : index
    %c0_5 = arith.constant 0 : index
    %c0_6 = arith.constant 0 : index
    %4 = vector.load %arg3[%c0_4, %c0_5, %c0_6] : memref<4x16x8xbf16, #tpu.memory_space<vmem>>, vector<1x16x8xbf16>
    %5 = vector.shape_cast %4 : vector<1x16x8xbf16> to vector<16x8xbf16>
    %cst_7 = arith.constant dense<0.000000e+00> : vector<80x8xf32>
    %6 = tpu.matmul %3, %5, %cst_7 {dimension_numbers = #tpu.dot_dimension_numbers<[1], [0], [0], [1], [0, 0, 1, 1], [], []>} : vector<80x16xbf16>, vector<16x8xbf16>, vector<80x8xf32> -> vector<80x8xf32>
    %7 = arith.addf %1, %6 : vector<80x8xf32>
    %c0_8 = arith.constant 0 : index
    %c1 = arith.constant 1 : index
    %c0_9 = arith.constant 0 : index
    %8 = vector.load %arg1[%c0_8, %c1, %c0_9] : memref<1x100x16xbf16, #tpu.memory_space<vmem>>, vector<1x80x16xbf16>
    %9 = vector.shape_cast %8 : vector<1x80x16xbf16> to vector<80x16xbf16>
    %c1_10 = arith.constant 1 : index
    %c0_11 = arith.constant 0 : index
    %c0_12 = arith.constant 0 : index
    %10 = vector.load %arg3[%c1_10, %c0_11, %c0_12] : memref<4x16x8xbf16, #tpu.memory_space<vmem>>, vector<1x16x8xbf16>
    %11 = vector.shape_cast %10 : vector<1x16x8xbf16> to vector<16x8xbf16>
    %cst_13 = arith.constant dense<0.000000e+00> : vector<80x8xf32>
    %12 = tpu.matmul %9, %11, %cst_13 {dimension_numbers = #tpu.dot_dimension_numbers<[1], [0], [0], [1], [0, 0, 1, 1], [], []>} : vector<80x16xbf16>, vector<16x8xbf16>, vector<80x8xf32> -> vector<80x8xf32>
    %13 = arith.addf %7, %12 : vector<80x8xf32>
    %c0_14 = arith.constant 0 : index
    %c10 = arith.constant 10 : index
    %c0_15 = arith.constant 0 : index
    %14 = vector.load %arg1[%c0_14, %c10, %c0_15] : memref<1x100x16xbf16, #tpu.memory_space<vmem>>, vector<1x80x16xbf16>
    %15 = vector.shape_cast %14 : vector<1x80x16xbf16> to vector<80x16xbf16>
    %c2 = arith.constant 2 : index
    %c0_16 = arith.constant 0 : index
    %c0_17 = arith.constant 0 : index
    %16 = vector.load %arg3[%c2, %c0_16, %c0_17] : memref<4x16x8xbf16, #tpu.memory_space<vmem>>, vector<1x16x8xbf16>
    %17 = vector.shape_cast %16 : vector<1x16x8xbf16> to vector<16x8xbf16>
    %cst_18 = arith.constant dense<0.000000e+00> : vector<80x8xf32>
    %18 = tpu.matmul %15, %17, %cst_18 {dimension_numbers = #tpu.dot_dimension_numbers<[1], [0], [0], [1], [0, 0, 1, 1], [], []>} : vector<80x16xbf16>, vector<16x8xbf16>, vector<80x8xf32> -> vector<80x8xf32>
    %19 = arith.addf %13, %18 : vector<80x8xf32>
    %c0_19 = arith.constant 0 : index
    %c11 = arith.constant 11 : index
    %c0_20 = arith.constant 0 : index
    %20 = vector.load %arg1[%c0_19, %c11, %c0_20] : memref<1x100x16xbf16, #tpu.memory_space<vmem>>, vector<1x80x16xbf16>
    %21 = vector.shape_cast %20 : vector<1x80x16xbf16> to vector<80x16xbf16>
    %c3 = arith.constant 3 : index
    %c0_21 = arith.constant 0 : index
    %c0_22 = arith.constant 0 : index
    %22 = vector.load %arg3[%c3, %c0_21, %c0_22] : memref<4x16x8xbf16, #tpu.memory_space<vmem>>, vector<1x16x8xbf16>
    %23 = vector.shape_cast %22 : vector<1x16x8xbf16> to vector<16x8xbf16>
    %cst_23 = arith.constant dense<0.000000e+00> : vector<80x8xf32>
    %24 = tpu.matmul %21, %23, %cst_23 {dimension_numbers = #tpu.dot_dimension_numbers<[1], [0], [0], [1], [0, 0, 1, 1], [], []>} : vector<80x16xbf16>, vector<16x8xbf16>, vector<80x8xf32> -> vector<80x8xf32>
    %25 = arith.addf %19, %24 : vector<80x8xf32>
    %c0_24 = arith.constant 0 : index
    %c0_25 = arith.constant 0 : index
    %26 = vector.load %arg4[%c0_24, %c0_25] : memref<1x8xf32, #tpu.memory_space<vmem>>, vector<1x8xf32>
    %27 = vector.broadcast %26 : vector<1x8xf32> to vector<80x8xf32>
    %28 = arith.addf %25, %27 : vector<80x8xf32>
    %cst_26 = arith.constant 0.000000e+00 : f32
    %29 = vector.broadcast %cst_26 : f32 to vector<80x8xf32>
    %30 = arith.cmpf oge, %28, %29 : vector<80x8xf32>
    %c0_27 = arith.constant 0 : index
    %c0_28 = arith.constant 0 : index
    %31 = vector.load %arg5[%c0_27, %c0_28] : memref<1x8xf32, #tpu.memory_space<vmem>>, vector<1x8xf32>
    %32 = vector.broadcast %31 : vector<1x8xf32> to vector<80x8xf32>
    %33 = arith.mulf %32, %28 : vector<80x8xf32>
    %34 = arith.select %30, %28, %33 : vector<80x8xi1>, vector<80x8xf32>
    %35 = vector.broadcast %0 : vector<80x1xf32> to vector<80x8xf32>
    %36 = arith.mulf %34, %35 : vector<80x8xf32>
    %cst_29 = arith.constant 0.000000e+00 : bf16
    %37 = vector.broadcast %cst_29 : bf16 to vector<113x8xbf16>
    %c0_30 = arith.constant 0 : index
    %c0_31 = arith.constant 0 : index
    %38 = vector.load %arg10[%c0_30, %c0_31] : memref<113x8xbf16, #tpu.memory_space<vmem>>, vector<113x8xbf16>
    tpu.vector_store %arg10[%c0_30, %c0_31], %37 {strides = array<i32>} : memref<113x8xbf16, #tpu.memory_space<vmem>>, vector<113x8xbf16>,
    %39 = arith.truncf %36 : vector<80x8xf32> to vector<80x8xbf16>
    %c16 = arith.constant 16 : index
    %c0_32 = arith.constant 0 : index
    %40 = vector.load %arg10[%c16, %c0_32] : memref<113x8xbf16, #tpu.memory_space<vmem>>, vector<80x8xbf16>
    tpu.vector_store %arg10[%c16, %c0_32], %39 {strides = array<i32>} : memref<113x8xbf16, #tpu.memory_space<vmem>>, vector<80x8xbf16>,
    %cst_33 = arith.constant 0.000000e+00 : f32
    %41 = vector.broadcast %cst_33 : f32 to vector<80x8xf32>
    %c5 = arith.constant 5 : index
    %c0_34 = arith.constant 0 : index
    %42 = vector.load %arg10[%c5, %c0_34] : memref<113x8xbf16, #tpu.memory_space<vmem>>, vector<80x8xbf16>
    %c0_35 = arith.constant 0 : index
    %c0_36 = arith.constant 0 : index
    %c0_37 = arith.constant 0 : index
    %43 = vector.load %arg6[%c0_35, %c0_36, %c0_37] : memref<9x8x8xbf16, #tpu.memory_space<vmem>>, vector<1x8x8xbf16>
    %44 = vector.shape_cast %43 : vector<1x8x8xbf16> to vector<8x8xbf16>
    %cst_38 = arith.constant dense<0.000000e+00> : vector<80x8xf32>
    %45 = tpu.matmul %42, %44, %cst_38 {dimension_numbers = #tpu.dot_dimension_numbers<[1], [0], [0], [1], [0, 0, 1, 1], [], []>} : vector<80x8xbf16>, vector<8x8xbf16>, vector<80x8xf32> -> vector<80x8xf32>
    %46 = arith.addf %41, %45 : vector<80x8xf32>
    %c6 = arith.constant 6 : index
    %c0_39 = arith.constant 0 : index
    %47 = vector.load %arg10[%c6, %c0_39] : memref<113x8xbf16, #tpu.memory_space<vmem>>, vector<80x8xbf16>
    %c1_40 = arith.constant 1 : index
    %c0_41 = arith.constant 0 : index
    %c0_42 = arith.constant 0 : index
    %48 = vector.load %arg6[%c1_40, %c0_41, %c0_42] : memref<9x8x8xbf16, #tpu.memory_space<vmem>>, vector<1x8x8xbf16>
    %49 = vector.shape_cast %48 : vector<1x8x8xbf16> to vector<8x8xbf16>
    %cst_43 = arith.constant dense<0.000000e+00> : vector<80x8xf32>
    %50 = tpu.matmul %47, %49, %cst_43 {dimension_numbers = #tpu.dot_dimension_numbers<[1], [0], [0], [1], [0, 0, 1, 1], [], []>} : vector<80x8xbf16>, vector<8x8xbf16>, vector<80x8xf32> -> vector<80x8xf32>
    %51 = arith.addf %46, %50 : vector<80x8xf32>
    %c7 = arith.constant 7 : index
    %c0_44 = arith.constant 0 : index
    %52 = vector.load %arg10[%c7, %c0_44] : memref<113x8xbf16, #tpu.memory_space<vmem>>, vector<80x8xbf16>
    %c2_45 = arith.constant 2 : index
    %c0_46 = arith.constant 0 : index
    %c0_47 = arith.constant 0 : index
    %53 = vector.load %arg6[%c2_45, %c0_46, %c0_47] : memref<9x8x8xbf16, #tpu.memory_space<vmem>>, vector<1x8x8xbf16>
    %54 = vector.shape_cast %53 : vector<1x8x8xbf16> to vector<8x8xbf16>
    %cst_48 = arith.constant dense<0.000000e+00> : vector<80x8xf32>
    %55 = tpu.matmul %52, %54, %cst_48 {dimension_numbers = #tpu.dot_dimension_numbers<[1], [0], [0], [1], [0, 0, 1, 1], [], []>} : vector<80x8xbf16>, vector<8x8xbf16>, vector<80x8xf32> -> vector<80x8xf32>
    %56 = arith.addf %51, %55 : vector<80x8xf32>
    %c15 = arith.constant 15 : index
    %c0_49 = arith.constant 0 : index
    %57 = vector.load %arg10[%c15, %c0_49] : memref<113x8xbf16, #tpu.memory_space<vmem>>, vector<80x8xbf16>
    %c3_50 = arith.constant 3 : index
    %c0_51 = arith.constant 0 : index
    %c0_52 = arith.constant 0 : index
    %58 = vector.load %arg6[%c3_50, %c0_51, %c0_52] : memref<9x8x8xbf16, #tpu.memory_space<vmem>>, vector<1x8x8xbf16>
    %59 = vector.shape_cast %58 : vector<1x8x8xbf16> to vector<8x8xbf16>
    %cst_53 = arith.constant dense<0.000000e+00> : vector<80x8xf32>
    %60 = tpu.matmul %57, %59, %cst_53 {dimension_numbers = #tpu.dot_dimension_numbers<[1], [0], [0], [1], [0, 0, 1, 1], [], []>} : vector<80x8xbf16>, vector<8x8xbf16>, vector<80x8xf32> -> vector<80x8xf32>
    %61 = arith.addf %56, %60 : vector<80x8xf32>
    %c16_54 = arith.constant 16 : index
    %c0_55 = arith.constant 0 : index
    %62 = vector.load %arg10[%c16_54, %c0_55] : memref<113x8xbf16, #tpu.memory_space<vmem>>, vector<80x8xbf16>
    %c4 = arith.constant 4 : index
    %c0_56 = arith.constant 0 : index
    %c0_57 = arith.constant 0 : index
    %63 = vector.load %arg6[%c4, %c0_56, %c0_57] : memref<9x8x8xbf16, #tpu.memory_space<vmem>>, vector<1x8x8xbf16>
    %64 = vector.shape_cast %63 : vector<1x8x8xbf16> to vector<8x8xbf16>
    %cst_58 = arith.constant dense<0.000000e+00> : vector<80x8xf32>
    %65 = tpu.matmul %62, %64, %cst_58 {dimension_numbers = #tpu.dot_dimension_numbers<[1], [0], [0], [1], [0, 0, 1, 1], [], []>} : vector<80x8xbf16>, vector<8x8xbf16>, vector<80x8xf32> -> vector<80x8xf32>
    %66 = arith.addf %61, %65 : vector<80x8xf32>
    %c17 = arith.constant 17 : index
    %c0_59 = arith.constant 0 : index
    %67 = vector.load %arg10[%c17, %c0_59] : memref<113x8xbf16, #tpu.memory_space<vmem>>, vector<80x8xbf16>
    %c5_60 = arith.constant 5 : index
    %c0_61 = arith.constant 0 : index
    %c0_62 = arith.constant 0 : index
    %68 = vector.load %arg6[%c5_60, %c0_61, %c0_62] : memref<9x8x8xbf16, #tpu.memory_space<vmem>>, vector<1x8x8xbf16>
    %69 = vector.shape_cast %68 : vector<1x8x8xbf16> to vector<8x8xbf16>
    %cst_63 = arith.constant dense<0.000000e+00> : vector<80x8xf32>
    %70 = tpu.matmul %67, %69, %cst_63 {dimension_numbers = #tpu.dot_dimension_numbers<[1], [0], [0], [1], [0, 0, 1, 1], [], []>} : vector<80x8xbf16>, vector<8x8xbf16>, vector<80x8xf32> -> vector<80x8xf32>
    %71 = arith.addf %66, %70 : vector<80x8xf32>
    %c25 = arith.constant 25 : index
    %c0_64 = arith.constant 0 : index
    %72 = vector.load %arg10[%c25, %c0_64] : memref<113x8xbf16, #tpu.memory_space<vmem>>, vector<80x8xbf16>
    %c6_65 = arith.constant 6 : index
    %c0_66 = arith.constant 0 : index
    %c0_67 = arith.constant 0 : index
    %73 = vector.load %arg6[%c6_65, %c0_66, %c0_67] : memref<9x8x8xbf16, #tpu.memory_space<vmem>>, vector<1x8x8xbf16>
    %74 = vector.shape_cast %73 : vector<1x8x8xbf16> to vector<8x8xbf16>
    %cst_68 = arith.constant dense<0.000000e+00> : vector<80x8xf32>
    %75 = tpu.matmul %72, %74, %cst_68 {dimension_numbers = #tpu.dot_dimension_numbers<[1], [0], [0], [1], [0, 0, 1, 1], [], []>} : vector<80x8xbf16>, vector<8x8xbf16>, vector<80x8xf32> -> vector<80x8xf32>
    %76 = arith.addf %71, %75 : vector<80x8xf32>
    %c26 = arith.constant 26 : index
    %c0_69 = arith.constant 0 : index
    %77 = vector.load %arg10[%c26, %c0_69] : memref<113x8xbf16, #tpu.memory_space<vmem>>, vector<80x8xbf16>
    %c7_70 = arith.constant 7 : index
    %c0_71 = arith.constant 0 : index
    %c0_72 = arith.constant 0 : index
    %78 = vector.load %arg6[%c7_70, %c0_71, %c0_72] : memref<9x8x8xbf16, #tpu.memory_space<vmem>>, vector<1x8x8xbf16>
    %79 = vector.shape_cast %78 : vector<1x8x8xbf16> to vector<8x8xbf16>
    %cst_73 = arith.constant dense<0.000000e+00> : vector<80x8xf32>
    %80 = tpu.matmul %77, %79, %cst_73 {dimension_numbers = #tpu.dot_dimension_numbers<[1], [0], [0], [1], [0, 0, 1, 1], [], []>} : vector<80x8xbf16>, vector<8x8xbf16>, vector<80x8xf32> -> vector<80x8xf32>
    %81 = arith.addf %76, %80 : vector<80x8xf32>
    %c27 = arith.constant 27 : index
    %c0_74 = arith.constant 0 : index
    %82 = vector.load %arg10[%c27, %c0_74] : memref<113x8xbf16, #tpu.memory_space<vmem>>, vector<80x8xbf16>
    %c8 = arith.constant 8 : index
    %c0_75 = arith.constant 0 : index
    %c0_76 = arith.constant 0 : index
    %83 = vector.load %arg6[%c8, %c0_75, %c0_76] : memref<9x8x8xbf16, #tpu.memory_space<vmem>>, vector<1x8x8xbf16>
    %84 = vector.shape_cast %83 : vector<1x8x8xbf16> to vector<8x8xbf16>
    %cst_77 = arith.constant dense<0.000000e+00> : vector<80x8xf32>
    %85 = tpu.matmul %82, %84, %cst_77 {dimension_numbers = #tpu.dot_dimension_numbers<[1], [0], [0], [1], [0, 0, 1, 1], [], []>} : vector<80x8xbf16>, vector<8x8xbf16>, vector<80x8xf32> -> vector<80x8xf32>
    %86 = arith.addf %81, %85 : vector<80x8xf32>
    %c0_78 = arith.constant 0 : index
    %c0_79 = arith.constant 0 : index
    %87 = vector.load %arg7[%c0_78, %c0_79] : memref<1x8xf32, #tpu.memory_space<vmem>>, vector<1x8xf32>
    %88 = vector.broadcast %87 : vector<1x8xf32> to vector<80x8xf32>
    %89 = arith.addf %86, %88 : vector<80x8xf32>
    %cst_80 = arith.constant 0.000000e+00 : f32
    %90 = vector.broadcast %cst_80 : f32 to vector<80x8xf32>
    %91 = arith.cmpf oge, %89, %90 : vector<80x8xf32>
    %c0_81 = arith.constant 0 : index
    %c0_82 = arith.constant 0 : index
    %92 = vector.load %arg8[%c0_81, %c0_82] : memref<1x8xf32, #tpu.memory_space<vmem>>, vector<1x8xf32>
    %93 = vector.broadcast %92 : vector<1x8xf32> to vector<80x8xf32>
    %94 = arith.mulf %93, %89 : vector<80x8xf32>
    %95 = arith.select %91, %89, %94 : vector<80x8xi1>, vector<80x8xf32>
    %c0_83 = arith.constant 0 : index
    %c0_84 = arith.constant 0 : index
    %c0_85 = arith.constant 0 : index
    %96 = vector.load %arg9[%c0_83, %c0_84, %c0_85] : memref<1x80x8xf32, #tpu.memory_space<vmem>>, vector<1x80x8xf32>
    %97 = vector.shape_cast %96 : vector<1x80x8xf32> to vector<80x8xf32>
    %98 = vector.shape_cast %95 : vector<80x8xf32> to vector<1x80x8xf32>
    tpu.vector_store %arg9[%c0_83, %c0_84, %c0_85], %98 {strides = array<i32>} : memref<1x80x8xf32, #tpu.memory_space<vmem>>, vector<1x80x8xf32>,
    return
  }
  func.func @transform_0(%arg0: i32) -> (i32, i32, i32) {
    %c0_i32 = arith.constant 0 : i32
    %c0_i32_0 = arith.constant 0 : i32
    %c0_i32_1 = arith.constant 0 : i32
    return %arg0, %c0_i32, %c0_i32_0 : i32, i32, i32
  }
  func.func @transform_1(%arg0: i32) -> (i32, i32) {
    %c0_i32 = arith.constant 0 : i32
    %c0_i32_0 = arith.constant 0 : i32
    %c0_i32_1 = arith.constant 0 : i32
    return %c0_i32, %c0_i32_0 : i32, i32
  }
  func.func @transform_2(%arg0: i32) -> (i32, i32, i32) {
    %c0_i32 = arith.constant 0 : i32
    %c0_i32_0 = arith.constant 0 : i32
    %c0_i32_1 = arith.constant 0 : i32
    %c0_i32_2 = arith.constant 0 : i32
    return %c0_i32, %c0_i32_0, %c0_i32_1 : i32, i32, i32
  }
  func.func @transform_3(%arg0: i32) -> (i32, i32) {
    %c0_i32 = arith.constant 0 : i32
    %c0_i32_0 = arith.constant 0 : i32
    %c0_i32_1 = arith.constant 0 : i32
    return %c0_i32, %c0_i32_0 : i32, i32
  }
  func.func @transform_4(%arg0: i32) -> (i32, i32) {
    %c0_i32 = arith.constant 0 : i32
    %c0_i32_0 = arith.constant 0 : i32
    %c0_i32_1 = arith.constant 0 : i32
    return %c0_i32, %c0_i32_0 : i32, i32
  }
  func.func @transform_5(%arg0: i32) -> (i32, i32, i32) {
    %c0_i32 = arith.constant 0 : i32
    %c0_i32_0 = arith.constant 0 : i32
    %c0_i32_1 = arith.constant 0 : i32
    %c0_i32_2 = arith.constant 0 : i32
    return %c0_i32, %c0_i32_0, %c0_i32_1 : i32, i32, i32
  }
  func.func @transform_6(%arg0: i32) -> (i32, i32) {
    %c0_i32 = arith.constant 0 : i32
    %c0_i32_0 = arith.constant 0 : i32
    %c0_i32_1 = arith.constant 0 : i32
    return %c0_i32, %c0_i32_0 : i32, i32
  }
  func.func @transform_7(%arg0: i32) -> (i32, i32) {
    %c0_i32 = arith.constant 0 : i32
    %c0_i32_0 = arith.constant 0 : i32
    %c0_i32_1 = arith.constant 0 : i32
    return %c0_i32, %c0_i32_0 : i32, i32
  }
  func.func @transform_8(%arg0: i32) -> (i32, i32, i32) {
    %c0_i32 = arith.constant 0 : i32
    %c0_i32_0 = arith.constant 0 : i32
    %c0_i32_1 = arith.constant 0 : i32
    return %arg0, %c0_i32, %c0_i32_0 : i32, i32, i32
  }
}

module attributes {stable_mosaic.version = 11 : i64} {
  func.func @kernel(%arg0: i32, %arg1: memref<1x36x32xbf16, #tpu.memory_space<vmem>>, %arg2: memref<24x1xf32, #tpu.memory_space<vmem>>, %arg3: memref<4x32x16xbf16, #tpu.memory_space<vmem>>, %arg4: memref<1x16xf32, #tpu.memory_space<vmem>>, %arg5: memref<1x16xf32, #tpu.memory_space<vmem>>, %arg6: memref<9x16x16xbf16, #tpu.memory_space<vmem>>, %arg7: memref<1x16xf32, #tpu.memory_space<vmem>>, %arg8: memref<1x16xf32, #tpu.memory_space<vmem>>, %arg9: memref<1x24x16xf32, #tpu.memory_space<vmem>>, %arg10: memref<53x16xbf16, #tpu.memory_space<vmem>>) attributes {dimension_semantics = [#tpu.dimension_semantics<parallel>], iteration_bounds = array<i64: 2>, scalar_prefetch = 0 : i64, scratch_operands = 1 : i64, tpu.core_type = #tpu.core_type<tc>, window_params = [{transform_indices = @transform_0, window_bounds = array<i64: 1, 36, 32>}, {pipeline_mode = #tpu.pipeline_mode<synchronous>, transform_indices = @transform_1, window_bounds = array<i64: 24, 1>}, {pipeline_mode = #tpu.pipeline_mode<synchronous>, transform_indices = @transform_2, window_bounds = array<i64: 4, 32, 16>}, {pipeline_mode = #tpu.pipeline_mode<synchronous>, transform_indices = @transform_3, window_bounds = array<i64: 1, 16>}, {pipeline_mode = #tpu.pipeline_mode<synchronous>, transform_indices = @transform_4, window_bounds = array<i64: 1, 16>}, {pipeline_mode = #tpu.pipeline_mode<synchronous>, transform_indices = @transform_5, window_bounds = array<i64: 9, 16, 16>}, {pipeline_mode = #tpu.pipeline_mode<synchronous>, transform_indices = @transform_6, window_bounds = array<i64: 1, 16>}, {pipeline_mode = #tpu.pipeline_mode<synchronous>, transform_indices = @transform_7, window_bounds = array<i64: 1, 16>}, {transform_indices = @transform_8, window_bounds = array<i64: 1, 24, 16>}]} {
    %c0 = arith.constant 0 : index
    %c0_0 = arith.constant 0 : index
    %0 = vector.load %arg2[%c0, %c0_0] : memref<24x1xf32, #tpu.memory_space<vmem>>, vector<24x1xf32>
    %cst = arith.constant 0.000000e+00 : f32
    %1 = vector.broadcast %cst : f32 to vector<24x16xf32>
    %c0_1 = arith.constant 0 : index
    %c0_2 = arith.constant 0 : index
    %c0_3 = arith.constant 0 : index
    %2 = vector.load %arg1[%c0_1, %c0_2, %c0_3] : memref<1x36x32xbf16, #tpu.memory_space<vmem>>, vector<1x24x32xbf16>
    %3 = vector.shape_cast %2 : vector<1x24x32xbf16> to vector<24x32xbf16>
    %c0_4 = arith.constant 0 : index
    %c0_5 = arith.constant 0 : index
    %c0_6 = arith.constant 0 : index
    %4 = vector.load %arg3[%c0_4, %c0_5, %c0_6] : memref<4x32x16xbf16, #tpu.memory_space<vmem>>, vector<1x32x16xbf16>
    %5 = vector.shape_cast %4 : vector<1x32x16xbf16> to vector<32x16xbf16>
    %cst_7 = arith.constant dense<0.000000e+00> : vector<24x16xf32>
    %6 = tpu.matmul %3, %5, %cst_7 {dimension_numbers = #tpu.dot_dimension_numbers<[1], [0], [0], [1], [0, 0, 1, 1], [], []>} : vector<24x32xbf16>, vector<32x16xbf16>, vector<24x16xf32> -> vector<24x16xf32>
    %7 = arith.addf %1, %6 : vector<24x16xf32>
    %c0_8 = arith.constant 0 : index
    %c1 = arith.constant 1 : index
    %c0_9 = arith.constant 0 : index
    %8 = vector.load %arg1[%c0_8, %c1, %c0_9] : memref<1x36x32xbf16, #tpu.memory_space<vmem>>, vector<1x24x32xbf16>
    %9 = vector.shape_cast %8 : vector<1x24x32xbf16> to vector<24x32xbf16>
    %c1_10 = arith.constant 1 : index
    %c0_11 = arith.constant 0 : index
    %c0_12 = arith.constant 0 : index
    %10 = vector.load %arg3[%c1_10, %c0_11, %c0_12] : memref<4x32x16xbf16, #tpu.memory_space<vmem>>, vector<1x32x16xbf16>
    %11 = vector.shape_cast %10 : vector<1x32x16xbf16> to vector<32x16xbf16>
    %cst_13 = arith.constant dense<0.000000e+00> : vector<24x16xf32>
    %12 = tpu.matmul %9, %11, %cst_13 {dimension_numbers = #tpu.dot_dimension_numbers<[1], [0], [0], [1], [0, 0, 1, 1], [], []>} : vector<24x32xbf16>, vector<32x16xbf16>, vector<24x16xf32> -> vector<24x16xf32>
    %13 = arith.addf %7, %12 : vector<24x16xf32>
    %c0_14 = arith.constant 0 : index
    %c6 = arith.constant 6 : index
    %c0_15 = arith.constant 0 : index
    %14 = vector.load %arg1[%c0_14, %c6, %c0_15] : memref<1x36x32xbf16, #tpu.memory_space<vmem>>, vector<1x24x32xbf16>
    %15 = vector.shape_cast %14 : vector<1x24x32xbf16> to vector<24x32xbf16>
    %c2 = arith.constant 2 : index
    %c0_16 = arith.constant 0 : index
    %c0_17 = arith.constant 0 : index
    %16 = vector.load %arg3[%c2, %c0_16, %c0_17] : memref<4x32x16xbf16, #tpu.memory_space<vmem>>, vector<1x32x16xbf16>
    %17 = vector.shape_cast %16 : vector<1x32x16xbf16> to vector<32x16xbf16>
    %cst_18 = arith.constant dense<0.000000e+00> : vector<24x16xf32>
    %18 = tpu.matmul %15, %17, %cst_18 {dimension_numbers = #tpu.dot_dimension_numbers<[1], [0], [0], [1], [0, 0, 1, 1], [], []>} : vector<24x32xbf16>, vector<32x16xbf16>, vector<24x16xf32> -> vector<24x16xf32>
    %19 = arith.addf %13, %18 : vector<24x16xf32>
    %c0_19 = arith.constant 0 : index
    %c7 = arith.constant 7 : index
    %c0_20 = arith.constant 0 : index
    %20 = vector.load %arg1[%c0_19, %c7, %c0_20] : memref<1x36x32xbf16, #tpu.memory_space<vmem>>, vector<1x24x32xbf16>
    %21 = vector.shape_cast %20 : vector<1x24x32xbf16> to vector<24x32xbf16>
    %c3 = arith.constant 3 : index
    %c0_21 = arith.constant 0 : index
    %c0_22 = arith.constant 0 : index
    %22 = vector.load %arg3[%c3, %c0_21, %c0_22] : memref<4x32x16xbf16, #tpu.memory_space<vmem>>, vector<1x32x16xbf16>
    %23 = vector.shape_cast %22 : vector<1x32x16xbf16> to vector<32x16xbf16>
    %cst_23 = arith.constant dense<0.000000e+00> : vector<24x16xf32>
    %24 = tpu.matmul %21, %23, %cst_23 {dimension_numbers = #tpu.dot_dimension_numbers<[1], [0], [0], [1], [0, 0, 1, 1], [], []>} : vector<24x32xbf16>, vector<32x16xbf16>, vector<24x16xf32> -> vector<24x16xf32>
    %25 = arith.addf %19, %24 : vector<24x16xf32>
    %c0_24 = arith.constant 0 : index
    %c0_25 = arith.constant 0 : index
    %26 = vector.load %arg4[%c0_24, %c0_25] : memref<1x16xf32, #tpu.memory_space<vmem>>, vector<1x16xf32>
    %27 = vector.broadcast %26 : vector<1x16xf32> to vector<24x16xf32>
    %28 = arith.addf %25, %27 : vector<24x16xf32>
    %cst_26 = arith.constant 0.000000e+00 : f32
    %29 = vector.broadcast %cst_26 : f32 to vector<24x16xf32>
    %30 = arith.cmpf oge, %28, %29 : vector<24x16xf32>
    %c0_27 = arith.constant 0 : index
    %c0_28 = arith.constant 0 : index
    %31 = vector.load %arg5[%c0_27, %c0_28] : memref<1x16xf32, #tpu.memory_space<vmem>>, vector<1x16xf32>
    %32 = vector.broadcast %31 : vector<1x16xf32> to vector<24x16xf32>
    %33 = arith.mulf %32, %28 : vector<24x16xf32>
    %34 = arith.select %30, %28, %33 : vector<24x16xi1>, vector<24x16xf32>
    %35 = vector.broadcast %0 : vector<24x1xf32> to vector<24x16xf32>
    %36 = arith.mulf %34, %35 : vector<24x16xf32>
    %cst_29 = arith.constant 0.000000e+00 : bf16
    %37 = vector.broadcast %cst_29 : bf16 to vector<53x16xbf16>
    %c0_30 = arith.constant 0 : index
    %c0_31 = arith.constant 0 : index
    %38 = vector.load %arg10[%c0_30, %c0_31] : memref<53x16xbf16, #tpu.memory_space<vmem>>, vector<53x16xbf16>
    tpu.vector_store %arg10[%c0_30, %c0_31], %37 {strides = array<i32>} : memref<53x16xbf16, #tpu.memory_space<vmem>>, vector<53x16xbf16>,
    %39 = arith.truncf %36 : vector<24x16xf32> to vector<24x16xbf16>
    %c16 = arith.constant 16 : index
    %c0_32 = arith.constant 0 : index
    %40 = vector.load %arg10[%c16, %c0_32] : memref<53x16xbf16, #tpu.memory_space<vmem>>, vector<24x16xbf16>
    tpu.vector_store %arg10[%c16, %c0_32], %39 {strides = array<i32>} : memref<53x16xbf16, #tpu.memory_space<vmem>>, vector<24x16xbf16>,
    %cst_33 = arith.constant 0.000000e+00 : f32
    %41 = vector.broadcast %cst_33 : f32 to vector<24x16xf32>
    %c9 = arith.constant 9 : index
    %c0_34 = arith.constant 0 : index
    %42 = vector.load %arg10[%c9, %c0_34] : memref<53x16xbf16, #tpu.memory_space<vmem>>, vector<24x16xbf16>
    %c0_35 = arith.constant 0 : index
    %c0_36 = arith.constant 0 : index
    %c0_37 = arith.constant 0 : index
    %43 = vector.load %arg6[%c0_35, %c0_36, %c0_37] : memref<9x16x16xbf16, #tpu.memory_space<vmem>>, vector<1x16x16xbf16>
    %44 = vector.shape_cast %43 : vector<1x16x16xbf16> to vector<16x16xbf16>
    %cst_38 = arith.constant dense<0.000000e+00> : vector<24x16xf32>
    %45 = tpu.matmul %42, %44, %cst_38 {dimension_numbers = #tpu.dot_dimension_numbers<[1], [0], [0], [1], [0, 0, 1, 1], [], []>} : vector<24x16xbf16>, vector<16x16xbf16>, vector<24x16xf32> -> vector<24x16xf32>
    %46 = arith.addf %41, %45 : vector<24x16xf32>
    %c10 = arith.constant 10 : index
    %c0_39 = arith.constant 0 : index
    %47 = vector.load %arg10[%c10, %c0_39] : memref<53x16xbf16, #tpu.memory_space<vmem>>, vector<24x16xbf16>
    %c1_40 = arith.constant 1 : index
    %c0_41 = arith.constant 0 : index
    %c0_42 = arith.constant 0 : index
    %48 = vector.load %arg6[%c1_40, %c0_41, %c0_42] : memref<9x16x16xbf16, #tpu.memory_space<vmem>>, vector<1x16x16xbf16>
    %49 = vector.shape_cast %48 : vector<1x16x16xbf16> to vector<16x16xbf16>
    %cst_43 = arith.constant dense<0.000000e+00> : vector<24x16xf32>
    %50 = tpu.matmul %47, %49, %cst_43 {dimension_numbers = #tpu.dot_dimension_numbers<[1], [0], [0], [1], [0, 0, 1, 1], [], []>} : vector<24x16xbf16>, vector<16x16xbf16>, vector<24x16xf32> -> vector<24x16xf32>
    %51 = arith.addf %46, %50 : vector<24x16xf32>
    %c11 = arith.constant 11 : index
    %c0_44 = arith.constant 0 : index
    %52 = vector.load %arg10[%c11, %c0_44] : memref<53x16xbf16, #tpu.memory_space<vmem>>, vector<24x16xbf16>
    %c2_45 = arith.constant 2 : index
    %c0_46 = arith.constant 0 : index
    %c0_47 = arith.constant 0 : index
    %53 = vector.load %arg6[%c2_45, %c0_46, %c0_47] : memref<9x16x16xbf16, #tpu.memory_space<vmem>>, vector<1x16x16xbf16>
    %54 = vector.shape_cast %53 : vector<1x16x16xbf16> to vector<16x16xbf16>
    %cst_48 = arith.constant dense<0.000000e+00> : vector<24x16xf32>
    %55 = tpu.matmul %52, %54, %cst_48 {dimension_numbers = #tpu.dot_dimension_numbers<[1], [0], [0], [1], [0, 0, 1, 1], [], []>} : vector<24x16xbf16>, vector<16x16xbf16>, vector<24x16xf32> -> vector<24x16xf32>
    %56 = arith.addf %51, %55 : vector<24x16xf32>
    %c15 = arith.constant 15 : index
    %c0_49 = arith.constant 0 : index
    %57 = vector.load %arg10[%c15, %c0_49] : memref<53x16xbf16, #tpu.memory_space<vmem>>, vector<24x16xbf16>
    %c3_50 = arith.constant 3 : index
    %c0_51 = arith.constant 0 : index
    %c0_52 = arith.constant 0 : index
    %58 = vector.load %arg6[%c3_50, %c0_51, %c0_52] : memref<9x16x16xbf16, #tpu.memory_space<vmem>>, vector<1x16x16xbf16>
    %59 = vector.shape_cast %58 : vector<1x16x16xbf16> to vector<16x16xbf16>
    %cst_53 = arith.constant dense<0.000000e+00> : vector<24x16xf32>
    %60 = tpu.matmul %57, %59, %cst_53 {dimension_numbers = #tpu.dot_dimension_numbers<[1], [0], [0], [1], [0, 0, 1, 1], [], []>} : vector<24x16xbf16>, vector<16x16xbf16>, vector<24x16xf32> -> vector<24x16xf32>
    %61 = arith.addf %56, %60 : vector<24x16xf32>
    %c16_54 = arith.constant 16 : index
    %c0_55 = arith.constant 0 : index
    %62 = vector.load %arg10[%c16_54, %c0_55] : memref<53x16xbf16, #tpu.memory_space<vmem>>, vector<24x16xbf16>
    %c4 = arith.constant 4 : index
    %c0_56 = arith.constant 0 : index
    %c0_57 = arith.constant 0 : index
    %63 = vector.load %arg6[%c4, %c0_56, %c0_57] : memref<9x16x16xbf16, #tpu.memory_space<vmem>>, vector<1x16x16xbf16>
    %64 = vector.shape_cast %63 : vector<1x16x16xbf16> to vector<16x16xbf16>
    %cst_58 = arith.constant dense<0.000000e+00> : vector<24x16xf32>
    %65 = tpu.matmul %62, %64, %cst_58 {dimension_numbers = #tpu.dot_dimension_numbers<[1], [0], [0], [1], [0, 0, 1, 1], [], []>} : vector<24x16xbf16>, vector<16x16xbf16>, vector<24x16xf32> -> vector<24x16xf32>
    %66 = arith.addf %61, %65 : vector<24x16xf32>
    %c17 = arith.constant 17 : index
    %c0_59 = arith.constant 0 : index
    %67 = vector.load %arg10[%c17, %c0_59] : memref<53x16xbf16, #tpu.memory_space<vmem>>, vector<24x16xbf16>
    %c5 = arith.constant 5 : index
    %c0_60 = arith.constant 0 : index
    %c0_61 = arith.constant 0 : index
    %68 = vector.load %arg6[%c5, %c0_60, %c0_61] : memref<9x16x16xbf16, #tpu.memory_space<vmem>>, vector<1x16x16xbf16>
    %69 = vector.shape_cast %68 : vector<1x16x16xbf16> to vector<16x16xbf16>
    %cst_62 = arith.constant dense<0.000000e+00> : vector<24x16xf32>
    %70 = tpu.matmul %67, %69, %cst_62 {dimension_numbers = #tpu.dot_dimension_numbers<[1], [0], [0], [1], [0, 0, 1, 1], [], []>} : vector<24x16xbf16>, vector<16x16xbf16>, vector<24x16xf32> -> vector<24x16xf32>
    %71 = arith.addf %66, %70 : vector<24x16xf32>
    %c21 = arith.constant 21 : index
    %c0_63 = arith.constant 0 : index
    %72 = vector.load %arg10[%c21, %c0_63] : memref<53x16xbf16, #tpu.memory_space<vmem>>, vector<24x16xbf16>
    %c6_64 = arith.constant 6 : index
    %c0_65 = arith.constant 0 : index
    %c0_66 = arith.constant 0 : index
    %73 = vector.load %arg6[%c6_64, %c0_65, %c0_66] : memref<9x16x16xbf16, #tpu.memory_space<vmem>>, vector<1x16x16xbf16>
    %74 = vector.shape_cast %73 : vector<1x16x16xbf16> to vector<16x16xbf16>
    %cst_67 = arith.constant dense<0.000000e+00> : vector<24x16xf32>
    %75 = tpu.matmul %72, %74, %cst_67 {dimension_numbers = #tpu.dot_dimension_numbers<[1], [0], [0], [1], [0, 0, 1, 1], [], []>} : vector<24x16xbf16>, vector<16x16xbf16>, vector<24x16xf32> -> vector<24x16xf32>
    %76 = arith.addf %71, %75 : vector<24x16xf32>
    %c22 = arith.constant 22 : index
    %c0_68 = arith.constant 0 : index
    %77 = vector.load %arg10[%c22, %c0_68] : memref<53x16xbf16, #tpu.memory_space<vmem>>, vector<24x16xbf16>
    %c7_69 = arith.constant 7 : index
    %c0_70 = arith.constant 0 : index
    %c0_71 = arith.constant 0 : index
    %78 = vector.load %arg6[%c7_69, %c0_70, %c0_71] : memref<9x16x16xbf16, #tpu.memory_space<vmem>>, vector<1x16x16xbf16>
    %79 = vector.shape_cast %78 : vector<1x16x16xbf16> to vector<16x16xbf16>
    %cst_72 = arith.constant dense<0.000000e+00> : vector<24x16xf32>
    %80 = tpu.matmul %77, %79, %cst_72 {dimension_numbers = #tpu.dot_dimension_numbers<[1], [0], [0], [1], [0, 0, 1, 1], [], []>} : vector<24x16xbf16>, vector<16x16xbf16>, vector<24x16xf32> -> vector<24x16xf32>
    %81 = arith.addf %76, %80 : vector<24x16xf32>
    %c23 = arith.constant 23 : index
    %c0_73 = arith.constant 0 : index
    %82 = vector.load %arg10[%c23, %c0_73] : memref<53x16xbf16, #tpu.memory_space<vmem>>, vector<24x16xbf16>
    %c8 = arith.constant 8 : index
    %c0_74 = arith.constant 0 : index
    %c0_75 = arith.constant 0 : index
    %83 = vector.load %arg6[%c8, %c0_74, %c0_75] : memref<9x16x16xbf16, #tpu.memory_space<vmem>>, vector<1x16x16xbf16>
    %84 = vector.shape_cast %83 : vector<1x16x16xbf16> to vector<16x16xbf16>
    %cst_76 = arith.constant dense<0.000000e+00> : vector<24x16xf32>
    %85 = tpu.matmul %82, %84, %cst_76 {dimension_numbers = #tpu.dot_dimension_numbers<[1], [0], [0], [1], [0, 0, 1, 1], [], []>} : vector<24x16xbf16>, vector<16x16xbf16>, vector<24x16xf32> -> vector<24x16xf32>
    %86 = arith.addf %81, %85 : vector<24x16xf32>
    %c0_77 = arith.constant 0 : index
    %c0_78 = arith.constant 0 : index
    %87 = vector.load %arg7[%c0_77, %c0_78] : memref<1x16xf32, #tpu.memory_space<vmem>>, vector<1x16xf32>
    %88 = vector.broadcast %87 : vector<1x16xf32> to vector<24x16xf32>
    %89 = arith.addf %86, %88 : vector<24x16xf32>
    %cst_79 = arith.constant 0.000000e+00 : f32
    %90 = vector.broadcast %cst_79 : f32 to vector<24x16xf32>
    %91 = arith.cmpf oge, %89, %90 : vector<24x16xf32>
    %c0_80 = arith.constant 0 : index
    %c0_81 = arith.constant 0 : index
    %92 = vector.load %arg8[%c0_80, %c0_81] : memref<1x16xf32, #tpu.memory_space<vmem>>, vector<1x16xf32>
    %93 = vector.broadcast %92 : vector<1x16xf32> to vector<24x16xf32>
    %94 = arith.mulf %93, %89 : vector<24x16xf32>
    %95 = arith.select %91, %89, %94 : vector<24x16xi1>, vector<24x16xf32>
    %c0_82 = arith.constant 0 : index
    %c0_83 = arith.constant 0 : index
    %c0_84 = arith.constant 0 : index
    %96 = vector.load %arg9[%c0_82, %c0_83, %c0_84] : memref<1x24x16xf32, #tpu.memory_space<vmem>>, vector<1x24x16xf32>
    %97 = vector.shape_cast %96 : vector<1x24x16xf32> to vector<24x16xf32>
    %98 = vector.shape_cast %95 : vector<24x16xf32> to vector<1x24x16xf32>
    tpu.vector_store %arg9[%c0_82, %c0_83, %c0_84], %98 {strides = array<i32>} : memref<1x24x16xf32, #tpu.memory_space<vmem>>, vector<1x24x16xf32>,
    return
  }
  func.func @transform_0(%arg0: i32) -> (i32, i32, i32) {
    %c0_i32 = arith.constant 0 : i32
    %c0_i32_0 = arith.constant 0 : i32
    %c0_i32_1 = arith.constant 0 : i32
    return %arg0, %c0_i32, %c0_i32_0 : i32, i32, i32
  }
  func.func @transform_1(%arg0: i32) -> (i32, i32) {
    %c0_i32 = arith.constant 0 : i32
    %c0_i32_0 = arith.constant 0 : i32
    %c0_i32_1 = arith.constant 0 : i32
    return %c0_i32, %c0_i32_0 : i32, i32
  }
  func.func @transform_2(%arg0: i32) -> (i32, i32, i32) {
    %c0_i32 = arith.constant 0 : i32
    %c0_i32_0 = arith.constant 0 : i32
    %c0_i32_1 = arith.constant 0 : i32
    %c0_i32_2 = arith.constant 0 : i32
    return %c0_i32, %c0_i32_0, %c0_i32_1 : i32, i32, i32
  }
  func.func @transform_3(%arg0: i32) -> (i32, i32) {
    %c0_i32 = arith.constant 0 : i32
    %c0_i32_0 = arith.constant 0 : i32
    %c0_i32_1 = arith.constant 0 : i32
    return %c0_i32, %c0_i32_0 : i32, i32
  }
  func.func @transform_4(%arg0: i32) -> (i32, i32) {
    %c0_i32 = arith.constant 0 : i32
    %c0_i32_0 = arith.constant 0 : i32
    %c0_i32_1 = arith.constant 0 : i32
    return %c0_i32, %c0_i32_0 : i32, i32
  }
  func.func @transform_5(%arg0: i32) -> (i32, i32, i32) {
    %c0_i32 = arith.constant 0 : i32
    %c0_i32_0 = arith.constant 0 : i32
    %c0_i32_1 = arith.constant 0 : i32
    %c0_i32_2 = arith.constant 0 : i32
    return %c0_i32, %c0_i32_0, %c0_i32_1 : i32, i32, i32
  }
  func.func @transform_6(%arg0: i32) -> (i32, i32) {
    %c0_i32 = arith.constant 0 : i32
    %c0_i32_0 = arith.constant 0 : i32
    %c0_i32_1 = arith.constant 0 : i32
    return %c0_i32, %c0_i32_0 : i32, i32
  }
  func.func @transform_7(%arg0: i32) -> (i32, i32) {
    %c0_i32 = arith.constant 0 : i32
    %c0_i32_0 = arith.constant 0 : i32
    %c0_i32_1 = arith.constant 0 : i32
    return %c0_i32, %c0_i32_0 : i32, i32
  }
  func.func @transform_8(%arg0: i32) -> (i32, i32, i32) {
    %c0_i32 = arith.constant 0 : i32
    %c0_i32_0 = arith.constant 0 : i32
    %c0_i32_1 = arith.constant 0 : i32
    return %arg0, %c0_i32, %c0_i32_0 : i32, i32, i32
  }
}

module attributes {stable_mosaic.version = 11 : i64} {
  func.func @kernel(%arg0: i32, %arg1: memref<1x16x64xbf16, #tpu.memory_space<vmem>>, %arg2: memref<8x1xf32, #tpu.memory_space<vmem>>, %arg3: memref<4x64x32xbf16, #tpu.memory_space<vmem>>, %arg4: memref<1x32xf32, #tpu.memory_space<vmem>>, %arg5: memref<1x32xf32, #tpu.memory_space<vmem>>, %arg6: memref<9x32x32xbf16, #tpu.memory_space<vmem>>, %arg7: memref<1x32xf32, #tpu.memory_space<vmem>>, %arg8: memref<1x32xf32, #tpu.memory_space<vmem>>, %arg9: memref<32x4xf32, #tpu.memory_space<vmem>>, %arg10: memref<1x4xf32, #tpu.memory_space<vmem>>, %arg11: memref<4x32xf32, #tpu.memory_space<vmem>>, %arg12: memref<1x32xf32, #tpu.memory_space<vmem>>, %arg13: memref<1x8x32xf32, #tpu.memory_space<vmem>>, %arg14: memref<35x32xbf16, #tpu.memory_space<vmem>>) attributes {dimension_semantics = [#tpu.dimension_semantics<parallel>], iteration_bounds = array<i64: 2>, scalar_prefetch = 0 : i64, scratch_operands = 1 : i64, tpu.core_type = #tpu.core_type<tc>, window_params = [{transform_indices = @transform_0, window_bounds = array<i64: 1, 16, 64>}, {pipeline_mode = #tpu.pipeline_mode<synchronous>, transform_indices = @transform_1, window_bounds = array<i64: 8, 1>}, {pipeline_mode = #tpu.pipeline_mode<synchronous>, transform_indices = @transform_2, window_bounds = array<i64: 4, 64, 32>}, {pipeline_mode = #tpu.pipeline_mode<synchronous>, transform_indices = @transform_3, window_bounds = array<i64: 1, 32>}, {pipeline_mode = #tpu.pipeline_mode<synchronous>, transform_indices = @transform_4, window_bounds = array<i64: 1, 32>}, {pipeline_mode = #tpu.pipeline_mode<synchronous>, transform_indices = @transform_5, window_bounds = array<i64: 9, 32, 32>}, {pipeline_mode = #tpu.pipeline_mode<synchronous>, transform_indices = @transform_6, window_bounds = array<i64: 1, 32>}, {pipeline_mode = #tpu.pipeline_mode<synchronous>, transform_indices = @transform_7, window_bounds = array<i64: 1, 32>}, {pipeline_mode = #tpu.pipeline_mode<synchronous>, transform_indices = @transform_8, window_bounds = array<i64: 32, 4>}, {pipeline_mode = #tpu.pipeline_mode<synchronous>, transform_indices = @transform_9, window_bounds = array<i64: 1, 4>}, {pipeline_mode = #tpu.pipeline_mode<synchronous>, transform_indices = @transform_10, window_bounds = array<i64: 4, 32>}, {pipeline_mode = #tpu.pipeline_mode<synchronous>, transform_indices = @transform_11, window_bounds = array<i64: 1, 32>}, {transform_indices = @transform_12, window_bounds = array<i64: 1, 8, 32>}]} {
    %c0 = arith.constant 0 : index
    %c0_0 = arith.constant 0 : index
    %0 = vector.load %arg2[%c0, %c0_0] : memref<8x1xf32, #tpu.memory_space<vmem>>, vector<8x1xf32>
    %cst = arith.constant 0.000000e+00 : f32
    %1 = vector.broadcast %cst : f32 to vector<8x32xf32>
    %c0_1 = arith.constant 0 : index
    %c0_2 = arith.constant 0 : index
    %c0_3 = arith.constant 0 : index
    %2 = vector.load %arg1[%c0_1, %c0_2, %c0_3] : memref<1x16x64xbf16, #tpu.memory_space<vmem>>, vector<1x8x64xbf16>
    %3 = vector.shape_cast %2 : vector<1x8x64xbf16> to vector<8x64xbf16>
    %c0_4 = arith.constant 0 : index
    %c0_5 = arith.constant 0 : index
    %c0_6 = arith.constant 0 : index
    %4 = vector.load %arg3[%c0_4, %c0_5, %c0_6] : memref<4x64x32xbf16, #tpu.memory_space<vmem>>, vector<1x64x32xbf16>
    %5 = vector.shape_cast %4 : vector<1x64x32xbf16> to vector<64x32xbf16>
    %cst_7 = arith.constant dense<0.000000e+00> : vector<8x32xf32>
    %6 = tpu.matmul %3, %5, %cst_7 {dimension_numbers = #tpu.dot_dimension_numbers<[1], [0], [0], [1], [0, 0, 1, 1], [], []>} : vector<8x64xbf16>, vector<64x32xbf16>, vector<8x32xf32> -> vector<8x32xf32>
    %7 = arith.addf %1, %6 : vector<8x32xf32>
    %c0_8 = arith.constant 0 : index
    %c1 = arith.constant 1 : index
    %c0_9 = arith.constant 0 : index
    %8 = vector.load %arg1[%c0_8, %c1, %c0_9] : memref<1x16x64xbf16, #tpu.memory_space<vmem>>, vector<1x8x64xbf16>
    %9 = vector.shape_cast %8 : vector<1x8x64xbf16> to vector<8x64xbf16>
    %c1_10 = arith.constant 1 : index
    %c0_11 = arith.constant 0 : index
    %c0_12 = arith.constant 0 : index
    %10 = vector.load %arg3[%c1_10, %c0_11, %c0_12] : memref<4x64x32xbf16, #tpu.memory_space<vmem>>, vector<1x64x32xbf16>
    %11 = vector.shape_cast %10 : vector<1x64x32xbf16> to vector<64x32xbf16>
    %cst_13 = arith.constant dense<0.000000e+00> : vector<8x32xf32>
    %12 = tpu.matmul %9, %11, %cst_13 {dimension_numbers = #tpu.dot_dimension_numbers<[1], [0], [0], [1], [0, 0, 1, 1], [], []>} : vector<8x64xbf16>, vector<64x32xbf16>, vector<8x32xf32> -> vector<8x32xf32>
    %13 = arith.addf %7, %12 : vector<8x32xf32>
    %c0_14 = arith.constant 0 : index
    %c4 = arith.constant 4 : index
    %c0_15 = arith.constant 0 : index
    %14 = vector.load %arg1[%c0_14, %c4, %c0_15] : memref<1x16x64xbf16, #tpu.memory_space<vmem>>, vector<1x8x64xbf16>
    %15 = vector.shape_cast %14 : vector<1x8x64xbf16> to vector<8x64xbf16>
    %c2 = arith.constant 2 : index
    %c0_16 = arith.constant 0 : index
    %c0_17 = arith.constant 0 : index
    %16 = vector.load %arg3[%c2, %c0_16, %c0_17] : memref<4x64x32xbf16, #tpu.memory_space<vmem>>, vector<1x64x32xbf16>
    %17 = vector.shape_cast %16 : vector<1x64x32xbf16> to vector<64x32xbf16>
    %cst_18 = arith.constant dense<0.000000e+00> : vector<8x32xf32>
    %18 = tpu.matmul %15, %17, %cst_18 {dimension_numbers = #tpu.dot_dimension_numbers<[1], [0], [0], [1], [0, 0, 1, 1], [], []>} : vector<8x64xbf16>, vector<64x32xbf16>, vector<8x32xf32> -> vector<8x32xf32>
    %19 = arith.addf %13, %18 : vector<8x32xf32>
    %c0_19 = arith.constant 0 : index
    %c5 = arith.constant 5 : index
    %c0_20 = arith.constant 0 : index
    %20 = vector.load %arg1[%c0_19, %c5, %c0_20] : memref<1x16x64xbf16, #tpu.memory_space<vmem>>, vector<1x8x64xbf16>
    %21 = vector.shape_cast %20 : vector<1x8x64xbf16> to vector<8x64xbf16>
    %c3 = arith.constant 3 : index
    %c0_21 = arith.constant 0 : index
    %c0_22 = arith.constant 0 : index
    %22 = vector.load %arg3[%c3, %c0_21, %c0_22] : memref<4x64x32xbf16, #tpu.memory_space<vmem>>, vector<1x64x32xbf16>
    %23 = vector.shape_cast %22 : vector<1x64x32xbf16> to vector<64x32xbf16>
    %cst_23 = arith.constant dense<0.000000e+00> : vector<8x32xf32>
    %24 = tpu.matmul %21, %23, %cst_23 {dimension_numbers = #tpu.dot_dimension_numbers<[1], [0], [0], [1], [0, 0, 1, 1], [], []>} : vector<8x64xbf16>, vector<64x32xbf16>, vector<8x32xf32> -> vector<8x32xf32>
    %25 = arith.addf %19, %24 : vector<8x32xf32>
    %c0_24 = arith.constant 0 : index
    %c0_25 = arith.constant 0 : index
    %26 = vector.load %arg4[%c0_24, %c0_25] : memref<1x32xf32, #tpu.memory_space<vmem>>, vector<1x32xf32>
    %27 = vector.broadcast %26 : vector<1x32xf32> to vector<8x32xf32>
    %28 = arith.addf %25, %27 : vector<8x32xf32>
    %cst_26 = arith.constant 0.000000e+00 : f32
    %29 = vector.broadcast %cst_26 : f32 to vector<8x32xf32>
    %30 = arith.cmpf oge, %28, %29 : vector<8x32xf32>
    %c0_27 = arith.constant 0 : index
    %c0_28 = arith.constant 0 : index
    %31 = vector.load %arg5[%c0_27, %c0_28] : memref<1x32xf32, #tpu.memory_space<vmem>>, vector<1x32xf32>
    %32 = vector.broadcast %31 : vector<1x32xf32> to vector<8x32xf32>
    %33 = arith.mulf %32, %28 : vector<8x32xf32>
    %34 = arith.select %30, %28, %33 : vector<8x32xi1>, vector<8x32xf32>
    %35 = vector.broadcast %0 : vector<8x1xf32> to vector<8x32xf32>
    %36 = arith.mulf %34, %35 : vector<8x32xf32>
    %cst_29 = arith.constant 0.000000e+00 : bf16
    %37 = vector.broadcast %cst_29 : bf16 to vector<35x32xbf16>
    %c0_30 = arith.constant 0 : index
    %c0_31 = arith.constant 0 : index
    %38 = vector.load %arg14[%c0_30, %c0_31] : memref<35x32xbf16, #tpu.memory_space<vmem>>, vector<35x32xbf16>
    tpu.vector_store %arg14[%c0_30, %c0_31], %37 {strides = array<i32>} : memref<35x32xbf16, #tpu.memory_space<vmem>>, vector<35x32xbf16>,
    %39 = arith.truncf %36 : vector<8x32xf32> to vector<8x32xbf16>
    %c16 = arith.constant 16 : index
    %c0_32 = arith.constant 0 : index
    %40 = vector.load %arg14[%c16, %c0_32] : memref<35x32xbf16, #tpu.memory_space<vmem>>, vector<8x32xbf16>
    tpu.vector_store %arg14[%c16, %c0_32], %39 {strides = array<i32>} : memref<35x32xbf16, #tpu.memory_space<vmem>>, vector<8x32xbf16>,
    %cst_33 = arith.constant 0.000000e+00 : f32
    %41 = vector.broadcast %cst_33 : f32 to vector<8x32xf32>
    %c11 = arith.constant 11 : index
    %c0_34 = arith.constant 0 : index
    %42 = vector.load %arg14[%c11, %c0_34] : memref<35x32xbf16, #tpu.memory_space<vmem>>, vector<8x32xbf16>
    %c0_35 = arith.constant 0 : index
    %c0_36 = arith.constant 0 : index
    %c0_37 = arith.constant 0 : index
    %43 = vector.load %arg6[%c0_35, %c0_36, %c0_37] : memref<9x32x32xbf16, #tpu.memory_space<vmem>>, vector<1x32x32xbf16>
    %44 = vector.shape_cast %43 : vector<1x32x32xbf16> to vector<32x32xbf16>
    %cst_38 = arith.constant dense<0.000000e+00> : vector<8x32xf32>
    %45 = tpu.matmul %42, %44, %cst_38 {dimension_numbers = #tpu.dot_dimension_numbers<[1], [0], [0], [1], [0, 0, 1, 1], [], []>} : vector<8x32xbf16>, vector<32x32xbf16>, vector<8x32xf32> -> vector<8x32xf32>
    %46 = arith.addf %41, %45 : vector<8x32xf32>
    %c12 = arith.constant 12 : index
    %c0_39 = arith.constant 0 : index
    %47 = vector.load %arg14[%c12, %c0_39] : memref<35x32xbf16, #tpu.memory_space<vmem>>, vector<8x32xbf16>
    %c1_40 = arith.constant 1 : index
    %c0_41 = arith.constant 0 : index
    %c0_42 = arith.constant 0 : index
    %48 = vector.load %arg6[%c1_40, %c0_41, %c0_42] : memref<9x32x32xbf16, #tpu.memory_space<vmem>>, vector<1x32x32xbf16>
    %49 = vector.shape_cast %48 : vector<1x32x32xbf16> to vector<32x32xbf16>
    %cst_43 = arith.constant dense<0.000000e+00> : vector<8x32xf32>
    %50 = tpu.matmul %47, %49, %cst_43 {dimension_numbers = #tpu.dot_dimension_numbers<[1], [0], [0], [1], [0, 0, 1, 1], [], []>} : vector<8x32xbf16>, vector<32x32xbf16>, vector<8x32xf32> -> vector<8x32xf32>
    %51 = arith.addf %46, %50 : vector<8x32xf32>
    %c13 = arith.constant 13 : index
    %c0_44 = arith.constant 0 : index
    %52 = vector.load %arg14[%c13, %c0_44] : memref<35x32xbf16, #tpu.memory_space<vmem>>, vector<8x32xbf16>
    %c2_45 = arith.constant 2 : index
    %c0_46 = arith.constant 0 : index
    %c0_47 = arith.constant 0 : index
    %53 = vector.load %arg6[%c2_45, %c0_46, %c0_47] : memref<9x32x32xbf16, #tpu.memory_space<vmem>>, vector<1x32x32xbf16>
    %54 = vector.shape_cast %53 : vector<1x32x32xbf16> to vector<32x32xbf16>
    %cst_48 = arith.constant dense<0.000000e+00> : vector<8x32xf32>
    %55 = tpu.matmul %52, %54, %cst_48 {dimension_numbers = #tpu.dot_dimension_numbers<[1], [0], [0], [1], [0, 0, 1, 1], [], []>} : vector<8x32xbf16>, vector<32x32xbf16>, vector<8x32xf32> -> vector<8x32xf32>
    %56 = arith.addf %51, %55 : vector<8x32xf32>
    %c15 = arith.constant 15 : index
    %c0_49 = arith.constant 0 : index
    %57 = vector.load %arg14[%c15, %c0_49] : memref<35x32xbf16, #tpu.memory_space<vmem>>, vector<8x32xbf16>
    %c3_50 = arith.constant 3 : index
    %c0_51 = arith.constant 0 : index
    %c0_52 = arith.constant 0 : index
    %58 = vector.load %arg6[%c3_50, %c0_51, %c0_52] : memref<9x32x32xbf16, #tpu.memory_space<vmem>>, vector<1x32x32xbf16>
    %59 = vector.shape_cast %58 : vector<1x32x32xbf16> to vector<32x32xbf16>
    %cst_53 = arith.constant dense<0.000000e+00> : vector<8x32xf32>
    %60 = tpu.matmul %57, %59, %cst_53 {dimension_numbers = #tpu.dot_dimension_numbers<[1], [0], [0], [1], [0, 0, 1, 1], [], []>} : vector<8x32xbf16>, vector<32x32xbf16>, vector<8x32xf32> -> vector<8x32xf32>
    %61 = arith.addf %56, %60 : vector<8x32xf32>
    %c16_54 = arith.constant 16 : index
    %c0_55 = arith.constant 0 : index
    %62 = vector.load %arg14[%c16_54, %c0_55] : memref<35x32xbf16, #tpu.memory_space<vmem>>, vector<8x32xbf16>
    %c4_56 = arith.constant 4 : index
    %c0_57 = arith.constant 0 : index
    %c0_58 = arith.constant 0 : index
    %63 = vector.load %arg6[%c4_56, %c0_57, %c0_58] : memref<9x32x32xbf16, #tpu.memory_space<vmem>>, vector<1x32x32xbf16>
    %64 = vector.shape_cast %63 : vector<1x32x32xbf16> to vector<32x32xbf16>
    %cst_59 = arith.constant dense<0.000000e+00> : vector<8x32xf32>
    %65 = tpu.matmul %62, %64, %cst_59 {dimension_numbers = #tpu.dot_dimension_numbers<[1], [0], [0], [1], [0, 0, 1, 1], [], []>} : vector<8x32xbf16>, vector<32x32xbf16>, vector<8x32xf32> -> vector<8x32xf32>
    %66 = arith.addf %61, %65 : vector<8x32xf32>
    %c17 = arith.constant 17 : index
    %c0_60 = arith.constant 0 : index
    %67 = vector.load %arg14[%c17, %c0_60] : memref<35x32xbf16, #tpu.memory_space<vmem>>, vector<8x32xbf16>
    %c5_61 = arith.constant 5 : index
    %c0_62 = arith.constant 0 : index
    %c0_63 = arith.constant 0 : index
    %68 = vector.load %arg6[%c5_61, %c0_62, %c0_63] : memref<9x32x32xbf16, #tpu.memory_space<vmem>>, vector<1x32x32xbf16>
    %69 = vector.shape_cast %68 : vector<1x32x32xbf16> to vector<32x32xbf16>
    %cst_64 = arith.constant dense<0.000000e+00> : vector<8x32xf32>
    %70 = tpu.matmul %67, %69, %cst_64 {dimension_numbers = #tpu.dot_dimension_numbers<[1], [0], [0], [1], [0, 0, 1, 1], [], []>} : vector<8x32xbf16>, vector<32x32xbf16>, vector<8x32xf32> -> vector<8x32xf32>
    %71 = arith.addf %66, %70 : vector<8x32xf32>
    %c19 = arith.constant 19 : index
    %c0_65 = arith.constant 0 : index
    %72 = vector.load %arg14[%c19, %c0_65] : memref<35x32xbf16, #tpu.memory_space<vmem>>, vector<8x32xbf16>
    %c6 = arith.constant 6 : index
    %c0_66 = arith.constant 0 : index
    %c0_67 = arith.constant 0 : index
    %73 = vector.load %arg6[%c6, %c0_66, %c0_67] : memref<9x32x32xbf16, #tpu.memory_space<vmem>>, vector<1x32x32xbf16>
    %74 = vector.shape_cast %73 : vector<1x32x32xbf16> to vector<32x32xbf16>
    %cst_68 = arith.constant dense<0.000000e+00> : vector<8x32xf32>
    %75 = tpu.matmul %72, %74, %cst_68 {dimension_numbers = #tpu.dot_dimension_numbers<[1], [0], [0], [1], [0, 0, 1, 1], [], []>} : vector<8x32xbf16>, vector<32x32xbf16>, vector<8x32xf32> -> vector<8x32xf32>
    %76 = arith.addf %71, %75 : vector<8x32xf32>
    %c20 = arith.constant 20 : index
    %c0_69 = arith.constant 0 : index
    %77 = vector.load %arg14[%c20, %c0_69] : memref<35x32xbf16, #tpu.memory_space<vmem>>, vector<8x32xbf16>
    %c7 = arith.constant 7 : index
    %c0_70 = arith.constant 0 : index
    %c0_71 = arith.constant 0 : index
    %78 = vector.load %arg6[%c7, %c0_70, %c0_71] : memref<9x32x32xbf16, #tpu.memory_space<vmem>>, vector<1x32x32xbf16>
    %79 = vector.shape_cast %78 : vector<1x32x32xbf16> to vector<32x32xbf16>
    %cst_72 = arith.constant dense<0.000000e+00> : vector<8x32xf32>
    %80 = tpu.matmul %77, %79, %cst_72 {dimension_numbers = #tpu.dot_dimension_numbers<[1], [0], [0], [1], [0, 0, 1, 1], [], []>} : vector<8x32xbf16>, vector<32x32xbf16>, vector<8x32xf32> -> vector<8x32xf32>
    %81 = arith.addf %76, %80 : vector<8x32xf32>
    %c21 = arith.constant 21 : index
    %c0_73 = arith.constant 0 : index
    %82 = vector.load %arg14[%c21, %c0_73] : memref<35x32xbf16, #tpu.memory_space<vmem>>, vector<8x32xbf16>
    %c8 = arith.constant 8 : index
    %c0_74 = arith.constant 0 : index
    %c0_75 = arith.constant 0 : index
    %83 = vector.load %arg6[%c8, %c0_74, %c0_75] : memref<9x32x32xbf16, #tpu.memory_space<vmem>>, vector<1x32x32xbf16>
    %84 = vector.shape_cast %83 : vector<1x32x32xbf16> to vector<32x32xbf16>
    %cst_76 = arith.constant dense<0.000000e+00> : vector<8x32xf32>
    %85 = tpu.matmul %82, %84, %cst_76 {dimension_numbers = #tpu.dot_dimension_numbers<[1], [0], [0], [1], [0, 0, 1, 1], [], []>} : vector<8x32xbf16>, vector<32x32xbf16>, vector<8x32xf32> -> vector<8x32xf32>
    %86 = arith.addf %81, %85 : vector<8x32xf32>
    %c0_77 = arith.constant 0 : index
    %c0_78 = arith.constant 0 : index
    %87 = vector.load %arg7[%c0_77, %c0_78] : memref<1x32xf32, #tpu.memory_space<vmem>>, vector<1x32xf32>
    %88 = vector.broadcast %87 : vector<1x32xf32> to vector<8x32xf32>
    %89 = arith.addf %86, %88 : vector<8x32xf32>
    %cst_79 = arith.constant 0.000000e+00 : f32
    %90 = vector.broadcast %cst_79 : f32 to vector<8x32xf32>
    %91 = arith.cmpf oge, %89, %90 : vector<8x32xf32>
    %c0_80 = arith.constant 0 : index
    %c0_81 = arith.constant 0 : index
    %92 = vector.load %arg8[%c0_80, %c0_81] : memref<1x32xf32, #tpu.memory_space<vmem>>, vector<1x32xf32>
    %93 = vector.broadcast %92 : vector<1x32xf32> to vector<8x32xf32>
    %94 = arith.mulf %93, %89 : vector<8x32xf32>
    %95 = arith.select %91, %89, %94 : vector<8x32xi1>, vector<8x32xf32>
    %96 = vector.broadcast %0 : vector<8x1xf32> to vector<8x32xf32>
    %97 = arith.mulf %95, %96 : vector<8x32xf32>
    %cst_82 = arith.constant dense<0.000000e+00> : vector<32xf32>
    %98 = vector.multi_reduction <add>, %97, %cst_82 [0] : vector<8x32xf32> to vector<32xf32>
    %99 = vector.shape_cast %98 : vector<32xf32> to vector<1x32xf32>
    %cst_83 = arith.constant 2.500000e-01 : f32
    %100 = vector.broadcast %cst_83 : f32 to vector<1x32xf32>
    %101 = arith.mulf %99, %100 : vector<1x32xf32>
    %c0_84 = arith.constant 0 : index
    %c0_85 = arith.constant 0 : index
    %102 = vector.load %arg9[%c0_84, %c0_85] : memref<32x4xf32, #tpu.memory_space<vmem>>, vector<32x4xf32>
    %cst_86 = arith.constant dense<0.000000e+00> : vector<1x4xf32>
    %103 = tpu.matmul %101, %102, %cst_86 {dimension_numbers = #tpu.dot_dimension_numbers<[1], [0], [0], [1], [0, 0, 1, 1], [], []>} : vector<1x32xf32>, vector<32x4xf32>, vector<1x4xf32> -> vector<1x4xf32>
    %c0_87 = arith.constant 0 : index
    %c0_88 = arith.constant 0 : index
    %104 = vector.load %arg10[%c0_87, %c0_88] : memref<1x4xf32, #tpu.memory_space<vmem>>, vector<1x4xf32>
    %105 = arith.addf %103, %104 : vector<1x4xf32>
    %cst_89 = arith.constant 0.000000e+00 : f32
    %106 = vector.broadcast %cst_89 : f32 to vector<1x4xf32>
    %107 = arith.maximumf %105, %106 : vector<1x4xf32>
    %c0_90 = arith.constant 0 : index
    %c0_91 = arith.constant 0 : index
    %108 = vector.load %arg11[%c0_90, %c0_91] : memref<4x32xf32, #tpu.memory_space<vmem>>, vector<4x32xf32>
    %cst_92 = arith.constant dense<0.000000e+00> : vector<1x32xf32>
    %109 = tpu.matmul %107, %108, %cst_92 {dimension_numbers = #tpu.dot_dimension_numbers<[1], [0], [0], [1], [0, 0, 1, 1], [], []>} : vector<1x4xf32>, vector<4x32xf32>, vector<1x32xf32> -> vector<1x32xf32>
    %c0_93 = arith.constant 0 : index
    %c0_94 = arith.constant 0 : index
    %110 = vector.load %arg12[%c0_93, %c0_94] : memref<1x32xf32, #tpu.memory_space<vmem>>, vector<1x32xf32>
    %111 = arith.addf %109, %110 : vector<1x32xf32>
    %cst_95 = arith.constant 0.000000e+00 : f32
    %112 = vector.broadcast %cst_95 : f32 to vector<1x32xf32>
    %113 = arith.subf %112, %111 : vector<1x32xf32>
    %114 = math.exp %113 : vector<1x32xf32>
    %cst_96 = arith.constant 1.000000e+00 : f32
    %115 = vector.broadcast %cst_96 : f32 to vector<1x32xf32>
    %116 = arith.addf %115, %114 : vector<1x32xf32>
    %cst_97 = arith.constant 1.000000e+00 : f32
    %117 = vector.broadcast %cst_97 : f32 to vector<1x32xf32>
    %118 = arith.divf %117, %116 : vector<1x32xf32>
    %119 = vector.broadcast %118 : vector<1x32xf32> to vector<8x32xf32>
    %120 = arith.mulf %95, %119 : vector<8x32xf32>
    %c0_98 = arith.constant 0 : index
    %c0_99 = arith.constant 0 : index
    %c0_100 = arith.constant 0 : index
    %121 = vector.load %arg13[%c0_98, %c0_99, %c0_100] : memref<1x8x32xf32, #tpu.memory_space<vmem>>, vector<1x8x32xf32>
    %122 = vector.shape_cast %121 : vector<1x8x32xf32> to vector<8x32xf32>
    %123 = vector.shape_cast %120 : vector<8x32xf32> to vector<1x8x32xf32>
    tpu.vector_store %arg13[%c0_98, %c0_99, %c0_100], %123 {strides = array<i32>} : memref<1x8x32xf32, #tpu.memory_space<vmem>>, vector<1x8x32xf32>,
    return
  }
  func.func @transform_0(%arg0: i32) -> (i32, i32, i32) {
    %c0_i32 = arith.constant 0 : i32
    %c0_i32_0 = arith.constant 0 : i32
    %c0_i32_1 = arith.constant 0 : i32
    return %arg0, %c0_i32, %c0_i32_0 : i32, i32, i32
  }
  func.func @transform_1(%arg0: i32) -> (i32, i32) {
    %c0_i32 = arith.constant 0 : i32
    %c0_i32_0 = arith.constant 0 : i32
    %c0_i32_1 = arith.constant 0 : i32
    return %c0_i32, %c0_i32_0 : i32, i32
  }
  func.func @transform_2(%arg0: i32) -> (i32, i32, i32) {
    %c0_i32 = arith.constant 0 : i32
    %c0_i32_0 = arith.constant 0 : i32
    %c0_i32_1 = arith.constant 0 : i32
    %c0_i32_2 = arith.constant 0 : i32
    return %c0_i32, %c0_i32_0, %c0_i32_1 : i32, i32, i32
  }
  func.func @transform_3(%arg0: i32) -> (i32, i32) {
    %c0_i32 = arith.constant 0 : i32
    %c0_i32_0 = arith.constant 0 : i32
    %c0_i32_1 = arith.constant 0 : i32
    return %c0_i32, %c0_i32_0 : i32, i32
  }
  func.func @transform_4(%arg0: i32) -> (i32, i32) {
    %c0_i32 = arith.constant 0 : i32
    %c0_i32_0 = arith.constant 0 : i32
    %c0_i32_1 = arith.constant 0 : i32
    return %c0_i32, %c0_i32_0 : i32, i32
  }
  func.func @transform_5(%arg0: i32) -> (i32, i32, i32) {
    %c0_i32 = arith.constant 0 : i32
    %c0_i32_0 = arith.constant 0 : i32
    %c0_i32_1 = arith.constant 0 : i32
    %c0_i32_2 = arith.constant 0 : i32
    return %c0_i32, %c0_i32_0, %c0_i32_1 : i32, i32, i32
  }
  func.func @transform_6(%arg0: i32) -> (i32, i32) {
    %c0_i32 = arith.constant 0 : i32
    %c0_i32_0 = arith.constant 0 : i32
    %c0_i32_1 = arith.constant 0 : i32
    return %c0_i32, %c0_i32_0 : i32, i32
  }
  func.func @transform_7(%arg0: i32) -> (i32, i32) {
    %c0_i32 = arith.constant 0 : i32
    %c0_i32_0 = arith.constant 0 : i32
    %c0_i32_1 = arith.constant 0 : i32
    return %c0_i32, %c0_i32_0 : i32, i32
  }
  func.func @transform_8(%arg0: i32) -> (i32, i32) {
    %c0_i32 = arith.constant 0 : i32
    %c0_i32_0 = arith.constant 0 : i32
    %c0_i32_1 = arith.constant 0 : i32
    return %c0_i32, %c0_i32_0 : i32, i32
  }
  func.func @transform_9(%arg0: i32) -> (i32, i32) {
    %c0_i32 = arith.constant 0 : i32
    %c0_i32_0 = arith.constant 0 : i32
    %c0_i32_1 = arith.constant 0 : i32
    return %c0_i32, %c0_i32_0 : i32, i32
  }
  func.func @transform_10(%arg0: i32) -> (i32, i32) {
    %c0_i32 = arith.constant 0 : i32
    %c0_i32_0 = arith.constant 0 : i32
    %c0_i32_1 = arith.constant 0 : i32
    return %c0_i32, %c0_i32_0 : i32, i32
  }
  func.func @transform_11(%arg0: i32) -> (i32, i32) {
    %c0_i32 = arith.constant 0 : i32
    %c0_i32_0 = arith.constant 0 : i32
    %c0_i32_1 = arith.constant 0 : i32
    return %c0_i32, %c0_i32_0 : i32, i32
  }
  func.func @transform_12(%arg0: i32) -> (i32, i32, i32) {
    %c0_i32 = arith.constant 0 : i32
    %c0_i32_0 = arith.constant 0 : i32
    %c0_i32_1 = arith.constant 0 : i32
    return %arg0, %c0_i32, %c0_i32_0 : i32, i32, i32
  }
}

</mosaic_0001>

<llo_original>
// kernel: context_net_forward.3
$region0: #{context_net_forward.3}
  #allocation0 [shape = 'u32[]', space=smem, size = 0x4, offset = 0x4, fixed_abs, tag = 'smem constant byte address 0x4 - core index']
  #allocation1 [shape = 'u32[144,128]{1,0:T(1,128)}', space=vmem, size = 0x12000, scoped, tag = 'internal scratch']
  #allocation2 [shape = 'bf16[113,8]{1,0:T(8,128)(2,1)}', space=vmem, size = 0x7800, scoped, tag = 'scratch operand']
  %s0 = inlined_call_operand.hbm [shape: bf16[2,100,16], index: 0, kind: input, shape index: {}]
  %s1 = inlined_call_operand.hbm [shape: f32[80,1], index: 1, kind: input, shape index: {}]
  %s2 = inlined_call_operand.hbm [shape: bf16[4,16,8], index: 2, kind: input, shape index: {}]
  %s3 = inlined_call_operand.hbm [shape: f32[1,8], index: 3, kind: input, shape index: {}]
  %s4 = inlined_call_operand.hbm [shape: f32[1,8], index: 4, kind: input, shape index: {}, may-alias: {4,7}]
  %s5 = inlined_call_operand.hbm [shape: bf16[9,8,8], index: 5, kind: input, shape index: {}]
  %s6 = inlined_call_operand.hbm [shape: f32[1,8], index: 6, kind: input, shape index: {}]
  %s7 = inlined_call_operand.hbm [shape: f32[1,8], index: 7, kind: input, shape index: {}, may-alias: {4,7}]
  %s8 = inlined_call_operand.hbm [shape: f32[2,80,8], index: 8, kind: output, shape index: {}]
  %s9 = sld [smem:[#allocation0]]
  $region97: #{context_net_forward.3} parent=0
    _
  %s11 = ssub.s32 1, %s9
  %s12 = scalar_select 0, %s11, %s9
  $region1: #{context_net_forward.3} parent=0
    #allocation3 [shape = 'u8[53248]{0}', space=vmem, size = 0xd000, scoped, tag = 'input window, operand 0']
    #allocation4 [shape = 's32[2]{0}', space=sflag, size = 0x8, scoped, tag = 'scoped memory for context_net_forward.3']
    #allocation5 [shape = 's32[2]{0}', space=sflag, size = 0x8, scoped, tag = 'scoped memory for context_net_forward.3']
    #allocation6 [shape = 'u8[40960]{0}', space=vmem, size = 0xa000, scoped, tag = 'input window, operand 1, single buffered']
    #allocation7 [shape = 's32[1]{0}', space=sflag, size = 0x4, scoped, tag = 'scoped memory for context_net_forward.3']
    #allocation8 [shape = 'u8[16384]{0}', space=vmem, size = 0x4000, scoped, tag = 'input window, operand 2, single buffered']
    #allocation9 [shape = 'u8[512]{0}', space=vmem, size = 0x400, scoped, tag = 'input window, operand 3, single buffered']
    #allocation10 [shape = 's32[1]{0}', space=sflag, size = 0x4, scoped, tag = 'scoped memory for context_net_forward.3']
    #allocation11 [shape = 'u8[512]{0}', space=vmem, size = 0x400, scoped, tag = 'input window, operand 4, single buffered']
    #allocation12 [shape = 'u8[18432]{0}', space=vmem, size = 0x4800, scoped, tag = 'input window, operand 5, single buffered']
    #allocation13 [shape = 's32[1]{0}', space=sflag, size = 0x4, scoped, tag = 'scoped memory for context_net_forward.3']
    #allocation14 [shape = 'u8[512]{0}', space=vmem, size = 0x400, scoped, tag = 'input window, operand 6, single buffered']
    #allocation15 [shape = 'u8[512]{0}', space=vmem, size = 0x400, scoped, tag = 'input window, operand 7, single buffered']
    #allocation16 [shape = 's32[1]{0}', space=sflag, size = 0x4, scoped, tag = 'scoped memory for context_net_forward.3']
    #allocation17 [shape = 'u8[81920]{0}', space=vmem, size = 0x14000, scoped, tag = 'output window, operand 0']
    %13 = vsyncpa [#allocation4], 0
    %s14 = scalar_lea.sflag [#allocation4], 1
    %15 = vsyncpa %s14, 0
    %16 = vsyncpa [#allocation7], 0
    %17 = vsyncpa [#allocation10], 0
    %18 = vsyncpa [#allocation13], 0
    %19 = vsyncpa [#allocation16], 0
    %20 = vsyncpa [#allocation5], 0
    %s21 = scalar_lea.sflag [#allocation5], 1
    %22 = vsyncpa %s21, 0
    loop: start=0, step=1, limit=4
    $region2: #{context_net_forward.3} parent=1 // loop_pre_header
      _
    $region3: #{context_net_forward.3} parent=1 // loop_header
      %s24 = sphi 0, %s28
      %p25 = scmp.ge.s32.totalorder %s24, 4
      %s34 = sphi 0, %s36
      %s37 = sphi 0, %s34
      %s38 = sphi 0, %s37
      %s54 = sphi 0, %s38
      %s58 = sphi 0, %s58
      %s60 = sphi 0, %s58
      %s61 = sphi 0, %s60
      %s75 = sphi 0, %s61
      %s79 = sphi 0, %s79
      %s81 = sphi 0, %s79
      %s82 = sphi 0, %s81
      %s96 = sphi 0, %s82
      %s100 = sphi 0, %s100
      %s102 = sphi 0, %s100
      %s103 = sphi 0, %s102
      %s117 = sphi 0, %s103
      %s121 = sphi 0, %s121
      %s123 = sphi 0, %s121
      %s124 = sphi 0, %s123
      %s138 = sphi 0, %s124
      %s142 = sphi 0, %s142
      %s144 = sphi 0, %s142
      %s145 = sphi 0, %s144
      %s159 = sphi 0, %s145
      %s163 = sphi 0, %s163
      %s165 = sphi 0, %s163
      %s166 = sphi 0, %s165
      %s180 = sphi 0, %s166
      %s184 = sphi 0, %s184
      %s186 = sphi 0, %s184
      %s187 = sphi 0, %s186
      %s201 = sphi 0, %s187
      %s207 = sphi 0, %s209
      %s210 = sphi 0, %s207
      %s211 = sphi 0, %s210
      %s227 = sphi 0, %s211
    $region4: #{context_net_forward.3} parent=1 // loop_header_branch
      %27 = sbr.rel (%p25) target = $region8
    $region5: #{context_net_forward.3} parent=1 // loop_body
      %s29 = ssub.s32 %s24, 1
      %s30 = ssub.s32 %s24, 2
      %s31 = sadd.s32 %s24, 1
      %s32 = ssub.s32 %s24, %s31
      %p33 = scmp.eq.s32.totalorder %s32, 0
      %s35 = sadd.s32 %s34, 1
      %s36 = scalar_select %p33, %s34, %s35
      %p39 = pneg %p33
      %p40 = scmp.eq.s32.totalorder %s24, 1
      %p41 = por %p39, %p40
      %p42 = scmp.ne.s32.totalorder %s34, %s37
      %p43 = scmp.eq.s32.totalorder %s24, 0
      %p44 = por %p42, %p43
      %p45 = scmp.ne.s32.totalorder %s34, %s37
      %p46 = scmp.eq.s32.totalorder %s29, 1
      %p47 = por %p45, %p46
      %p48 = scmp.ne.s32.totalorder %s37, %s38
      %p49 = scmp.eq.s32.totalorder %s29, 0
      %p50 = por %p48, %p49
      %p51 = scmp.ne.s32.totalorder %s37, %s38
      %p52 = scmp.eq.s32.totalorder %s30, 1
      %p53 = por %p51, %p52
      %p55 = scmp.ne.s32.totalorder %s38, %s54
      %p56 = scmp.eq.s32.totalorder %s30, 0
      %p57 = por %p55, %p56
      %s59 = sadd.s32 %s58, 1
      %p62 = scmp.eq.s32.totalorder %s24, 1
      %p63 = scmp.ne.s32.totalorder %s58, %s60
      %p64 = scmp.eq.s32.totalorder %s24, 0
      %p65 = por %p63, %p64
      %p66 = scmp.ne.s32.totalorder %s58, %s60
      %p67 = scmp.eq.s32.totalorder %s29, 1
      %p68 = por %p66, %p67
      %p69 = scmp.ne.s32.totalorder %s60, %s61
      %p70 = scmp.eq.s32.totalorder %s29, 0
      %p71 = por %p69, %p70
      %p72 = scmp.ne.s32.totalorder %s60, %s61
      %p73 = scmp.eq.s32.totalorder %s30, 1
      %p74 = por %p72, %p73
      %p76 = scmp.ne.s32.totalorder %s61, %s75
      %p77 = scmp.eq.s32.totalorder %s30, 0
      %p78 = por %p76, %p77
      %s80 = sadd.s32 %s79, 1
      %p83 = scmp.eq.s32.totalorder %s24, 1
      %p84 = scmp.ne.s32.totalorder %s79, %s81
      %p85 = scmp.eq.s32.totalorder %s24, 0
      %p86 = por %p84, %p85
      %p87 = scmp.ne.s32.totalorder %s79, %s81
      %p88 = scmp.eq.s32.totalorder %s29, 1
      %p89 = por %p87, %p88
      %p90 = scmp.ne.s32.totalorder %s81, %s82
      %p91 = scmp.eq.s32.totalorder %s29, 0
      %p92 = por %p90, %p91
      %p93 = scmp.ne.s32.totalorder %s81, %s82
      %p94 = scmp.eq.s32.totalorder %s30, 1
      %p95 = por %p93, %p94
      %p97 = scmp.ne.s32.totalorder %s82, %s96
      %p98 = scmp.eq.s32.totalorder %s30, 0
      %p99 = por %p97, %p98
      %s101 = sadd.s32 %s100, 1
      %p104 = scmp.eq.s32.totalorder %s24, 1
      %p105 = scmp.ne.s32.totalorder %s100, %s102
      %p106 = scmp.eq.s32.totalorder %s24, 0
      %p107 = por %p105, %p106
      %p108 = scmp.ne.s32.totalorder %s100, %s102
      %p109 = scmp.eq.s32.totalorder %s29, 1
      %p110 = por %p108, %p109
      %p111 = scmp.ne.s32.totalorder %s102, %s103
      %p112 = scmp.eq.s32.totalorder %s29, 0
      %p113 = por %p111, %p112
      %p114 = scmp.ne.s32.totalorder %s102, %s103
      %p115 = scmp.eq.s32.totalorder %s30, 1
      %p116 = por %p114, %p115
      %p118 = scmp.ne.s32.totalorder %s103, %s117
      %p119 = scmp.eq.s32.totalorder %s30, 0
      %p120 = por %p118, %p119
      %s122 = sadd.s32 %s121, 1
      %p125 = scmp.eq.s32.totalorder %s24, 1
      %p126 = scmp.ne.s32.totalorder %s121, %s123
      %p127 = scmp.eq.s32.totalorder %s24, 0
      %p128 = por %p126, %p127
      %p129 = scmp.ne.s32.totalorder %s121, %s123
      %p130 = scmp.eq.s32.totalorder %s29, 1
      %p131 = por %p129, %p130
      %p132 = scmp.ne.s32.totalorder %s123, %s124
      %p133 = scmp.eq.s32.totalorder %s29, 0
      %p134 = por %p132, %p133
      %p135 = scmp.ne.s32.totalorder %s123, %s124
      %p136 = scmp.eq.s32.totalorder %s30, 1
      %p137 = por %p135, %p136
      %p139 = scmp.ne.s32.totalorder %s124, %s138
      %p140 = scmp.eq.s32.totalorder %s30, 0
      %p141 = por %p139, %p140
      %s143 = sadd.s32 %s142, 1
      %p146 = scmp.eq.s32.totalorder %s24, 1
      %p147 = scmp.ne.s32.totalorder %s142, %s144
      %p148 = scmp.eq.s32.totalorder %s24, 0
      %p149 = por %p147, %p148
      %p150 = scmp.ne.s32.totalorder %s142, %s144
      %p151 = scmp.eq.s32.totalorder %s29, 1
      %p152 = por %p150, %p151
      %p153 = scmp.ne.s32.totalorder %s144, %s145
      %p154 = scmp.eq.s32.totalorder %s29, 0
      %p155 = por %p153, %p154
      %p156 = scmp.ne.s32.totalorder %s144, %s145
      %p157 = scmp.eq.s32.totalorder %s30, 1
      %p158 = por %p156, %p157
      %p160 = scmp.ne.s32.totalorder %s145, %s159
      %p161 = scmp.eq.s32.totalorder %s30, 0
      %p162 = por %p160, %p161
      %s164 = sadd.s32 %s163, 1
      %p167 = scmp.eq.s32.totalorder %s24, 1
      %p168 = scmp.ne.s32.totalorder %s163, %s165
      %p169 = scmp.eq.s32.totalorder %s24, 0
      %p170 = por %p168, %p169
      %p171 = scmp.ne.s32.totalorder %s163, %s165
      %p172 = scmp.eq.s32.totalorder %s29, 1
      %p173 = por %p171, %p172
      %p174 = scmp.ne.s32.totalorder %s165, %s166
      %p175 = scmp.eq.s32.totalorder %s29, 0
      %p176 = por %p174, %p175
      %p177 = scmp.ne.s32.totalorder %s165, %s166
      %p178 = scmp.eq.s32.totalorder %s30, 1
      %p179 = por %p177, %p178
      %p181 = scmp.ne.s32.totalorder %s166, %s180
      %p182 = scmp.eq.s32.totalorder %s30, 0
      %p183 = por %p181, %p182
      %s185 = sadd.s32 %s184, 1
      %p188 = scmp.eq.s32.totalorder %s24, 1
      %p189 = scmp.ne.s32.totalorder %s184, %s186
      %p190 = scmp.eq.s32.totalorder %s24, 0
      %p191 = por %p189, %p190
      %p192 = scmp.ne.s32.totalorder %s184, %s186
      %p193 = scmp.eq.s32.totalorder %s29, 1
      %p194 = por %p192, %p193
      %p195 = scmp.ne.s32.totalorder %s186, %s187
      %p196 = scmp.eq.s32.totalorder %s29, 0
      %p197 = por %p195, %p196
      %p198 = scmp.ne.s32.totalorder %s186, %s187
      %p199 = scmp.eq.s32.totalorder %s30, 1
      %p200 = por %p198, %p199
      %p202 = scmp.ne.s32.totalorder %s187, %s201
      %p203 = scmp.eq.s32.totalorder %s30, 0
      %p204 = por %p202, %p203
      %s205 = ssub.s32 %s24, %s31
      %p206 = scmp.eq.s32.totalorder %s205, 0
      %s208 = sadd.s32 %s207, 1
      %s209 = scalar_select %p206, %s207, %s208
      %p212 = pneg %p206
      %p213 = scmp.eq.s32.totalorder %s24, 1
      %p214 = por %p212, %p213
      %p215 = scmp.ne.s32.totalorder %s207, %s210
      %p216 = scmp.eq.s32.totalorder %s24, 0
      %p217 = por %p215, %p216
      %p218 = scmp.ne.s32.totalorder %s207, %s210
      %p219 = scmp.eq.s32.totalorder %s29, 1
      %p220 = por %p218, %p219
      %p221 = scmp.ne.s32.totalorder %s210, %s211
      %p222 = scmp.eq.s32.totalorder %s29, 0
      %p223 = por %p221, %p222
      %p224 = scmp.ne.s32.totalorder %s210, %s211
      %p225 = scmp.eq.s32.totalorder %s30, 1
      %p226 = por %p224, %p225
      %p228 = scmp.ne.s32.totalorder %s211, %s227
      %p229 = scmp.eq.s32.totalorder %s30, 0
      %p230 = por %p228, %p229
      %p231 = scmp.le.s32.totalorder 1, %s24
      %p232 = scmp.lt.s32.totalorder %s24, 3
      %p233 = pnand %p231, %p232
      %p234 = pneg %p233
      // Predicated region
      $region9: #{context_net_forward.3} parent=5 // pred_check
        _
      $region10: #{context_net_forward.3} parent=5 // pred_check_branch
        %236 = sbr.rel (%p233) target = $region12
      $region11: #{context_net_forward.3} parent=5 // pred_region
        %s237 = ssub.s32 %s24, 1
        // Predicated region
        $region13: #{context_net_forward.3} parent=11 // pred_check
          %p238 = pneg %p71
        $region14: #{context_net_forward.3} parent=11 // pred_check_branch
          %240 = sbr.rel (%p238) target = $region16
        $region15: #{context_net_forward.3} parent=11 // pred_region
          %s242 = ssub.s32 1280, 1280
          %243 = vsyncadd [#allocation7], %s242
          %s244 = sshll.u32 [#allocation6], 4
          %s245 = int_to_ptr.vmem [resolvable:$true] %s244
          %250 = dma.hbm_to_vmem [thread:$0]  %s1, 1280, %s245, [#allocation7], 128, 128, 8
        $region16: #{context_net_forward.3} parent=11 // pred_fallthru
          _
        // Predicated region
        $region17: #{context_net_forward.3} parent=11 // pred_check
          %p251 = pneg %p92
        $region18: #{context_net_forward.3} parent=11 // pred_check_branch
          %253 = sbr.rel (%p251) target = $region20
        $region19: #{context_net_forward.3} parent=11 // pred_region
          %s255 = ssub.s32 512, 512
          %256 = vsyncadd [#allocation7], %s255
          %s257 = sshll.u32 [#allocation8], 4
          %s258 = int_to_ptr.vmem [resolvable:$true] %s257
          %263 = dma.hbm_to_vmem [thread:$0]  %s2, 512, %s258, [#allocation7], 64, 64, 4
        $region20: #{context_net_forward.3} parent=11 // pred_fallthru
          _
        // Predicated region
        $region21: #{context_net_forward.3} parent=11 // pred_check
          %p264 = pneg %p113
        $region22: #{context_net_forward.3} parent=11 // pred_check_branch
          %266 = sbr.rel (%p264) target = $region24
        $region23: #{context_net_forward.3} parent=11 // pred_region
          %s268 = ssub.s32 16, 16
          %269 = vsyncadd [#allocation10], %s268
          %s271 = sshll.u32 [#allocation9], 4
          %s272 = int_to_ptr.vmem [resolvable:$true] %s271
          %274 = dma.hbm_to_vmem [thread:$0]  %s3, 16, %s272, [#allocation10]
        $region24: #{context_net_forward.3} parent=11 // pred_fallthru
          _
        // Predicated region
        $region25: #{context_net_forward.3} parent=11 // pred_check
          %p275 = pneg %p134
        $region26: #{context_net_forward.3} parent=11 // pred_check_branch
          %277 = sbr.rel (%p275) target = $region28
        $region27: #{context_net_forward.3} parent=11 // pred_region
          %s279 = ssub.s32 16, 16
          %280 = vsyncadd [#allocation10], %s279
          %s282 = sshll.u32 [#allocation11], 4
          %s283 = int_to_ptr.vmem [resolvable:$true] %s282
          %285 = dma.hbm_to_vmem [thread:$0]  %s4, 16, %s283, [#allocation10]
        $region28: #{context_net_forward.3} parent=11 // pred_fallthru
          _
        // Predicated region
        $region29: #{context_net_forward.3} parent=11 // pred_check
          %p286 = pneg %p155
        $region30: #{context_net_forward.3} parent=11 // pred_check_branch
          %288 = sbr.rel (%p286) target = $region32
        $region31: #{context_net_forward.3} parent=11 // pred_region
          %s290 = ssub.s32 576, 576
          %291 = vsyncadd [#allocation13], %s290
          %s292 = sshll.u32 [#allocation12], 4
          %s293 = int_to_ptr.vmem [resolvable:$true] %s292
          %298 = dma.hbm_to_vmem [thread:$0]  %s5, 576, %s293, [#allocation13], 64, 64, 4
        $region32: #{context_net_forward.3} parent=11 // pred_fallthru
          _
        // Predicated region
        $region33: #{context_net_forward.3} parent=11 // pred_check
          %p299 = pneg %p176
        $region34: #{context_net_forward.3} parent=11 // pred_check_branch
          %301 = sbr.rel (%p299) target = $region36
        $region35: #{context_net_forward.3} parent=11 // pred_region
          %s303 = ssub.s32 16, 16
          %304 = vsyncadd [#allocation13], %s303
          %s306 = sshll.u32 [#allocation14], 4
          %s307 = int_to_ptr.vmem [resolvable:$true] %s306
          %309 = dma.hbm_to_vmem [thread:$0]  %s6, 16, %s307, [#allocation13]
        $region36: #{context_net_forward.3} parent=11 // pred_fallthru
          _
        // Predicated region
        $region37: #{context_net_forward.3} parent=11 // pred_check
          %p310 = pneg %p197
        $region38: #{context_net_forward.3} parent=11 // pred_check_branch
          %312 = sbr.rel (%p310) target = $region40
        $region39: #{context_net_forward.3} parent=11 // pred_region
          %s314 = ssub.s32 16, 16
          %315 = vsyncadd [#allocation16], %s314
          %s317 = sshll.u32 [#allocation15], 4
          %s318 = int_to_ptr.vmem [resolvable:$true] %s317
          %320 = dma.hbm_to_vmem [thread:$0]  %s7, 16, %s318, [#allocation16]
        $region40: #{context_net_forward.3} parent=11 // pred_fallthru
          _
      $region12: #{context_net_forward.3} parent=5 // pred_fallthru
        _
      %p321 = scmp.lt.s32.totalorder %s24, 2
      // Predicated region
      $region41: #{context_net_forward.3} parent=5 // pred_check
        %p322 = pneg %p321
      $region42: #{context_net_forward.3} parent=5 // pred_check_branch
        %324 = sbr.rel (%p322) target = $region44
      $region43: #{context_net_forward.3} parent=5 // pred_region
        // Predicated region
        $region45: #{context_net_forward.3} parent=43 // pred_check
          %p325 = pneg %p44
        $region46: #{context_net_forward.3} parent=43 // pred_check_branch
          %327 = sbr.rel (%p325) target = $region48
        $region47: #{context_net_forward.3} parent=43 // pred_region
          %s328 = sand.u32 %s34, 1
          %s329 = scalar_lea.sflag [#allocation4], %s328
          %s330 = sand.u32 %s34, 1
          %s331 = smul.addr %s330, 52
          %s332 = scalar_lea.vmem [#allocation3], %s331
          %s334 = ssub.s32 832, 832
          %335 = vsyncadd %s329, %s334
          %s336 = smul.addr %s24, 13
          %s337 = smul.addr %s336, 64
          %s338 = scalar_lea.hbm %s0, %s337
          %s339 = sshll.u32 %s332, 4
          %s340 = int_to_ptr.vmem [resolvable:$true] %s339
          %345 = dma.hbm_to_vmem [thread:$0]  %s338, 832, %s340, %s329, 64, 64, 4
        $region48: #{context_net_forward.3} parent=43 // pred_fallthru
          _
      $region44: #{context_net_forward.3} parent=5 // pred_fallthru
        _
      %p346 = scmp.le.s32.totalorder 1, %s24
      %p347 = scmp.lt.s32.totalorder %s24, 3
      %p348 = pnand %p346, %p347
      %p349 = pneg %p348
      // Predicated region
      $region49: #{context_net_forward.3} parent=5 // pred_check
        _
      $region50: #{context_net_forward.3} parent=5 // pred_check_branch
        %351 = sbr.rel (%p348) target = $region52
      $region51: #{context_net_forward.3} parent=5 // pred_region
        %s352 = ssub.s32 %s24, 1
        %s353 = sand.u32 %s37, 1
        %s354 = scalar_lea.sflag [#allocation4], %s353
        %s355 = sand.u32 %s37, 1
        %s356 = smul.addr %s355, 52
        %s357 = scalar_lea.vmem [#allocation3], %s356
        // Predicated region
        $region53: #{context_net_forward.3} parent=51 // pred_check
          %p358 = pneg %p50
        $region54: #{context_net_forward.3} parent=51 // pred_check_branch
          %360 = sbr.rel (%p358) target = $region56
        $region55: #{context_net_forward.3} parent=51 // pred_region
          %361 = dma.done %s354, 832
        $region56: #{context_net_forward.3} parent=51 // pred_fallthru
          _
        // Predicated region
        $region57: #{context_net_forward.3} parent=51 // pred_check
          %p362 = pneg %p71
        $region58: #{context_net_forward.3} parent=51 // pred_check_branch
          %364 = sbr.rel (%p362) target = $region60
        $region59: #{context_net_forward.3} parent=51 // pred_region
          %365 = dma.done [#allocation7], 1280
        $region60: #{context_net_forward.3} parent=51 // pred_fallthru
          _
        // Predicated region
        $region61: #{context_net_forward.3} parent=51 // pred_check
          %p366 = pneg %p92
        $region62: #{context_net_forward.3} parent=51 // pred_check_branch
          %368 = sbr.rel (%p366) target = $region64
        $region63: #{context_net_forward.3} parent=51 // pred_region
          %369 = dma.done [#allocation7], 512
        $region64: #{context_net_forward.3} parent=51 // pred_fallthru
          _
        // Predicated region
        $region65: #{context_net_forward.3} parent=51 // pred_check
          %p370 = pneg %p113
        $region66: #{context_net_forward.3} parent=51 // pred_check_branch
          %372 = sbr.rel (%p370) target = $region68
        $region67: #{context_net_forward.3} parent=51 // pred_region
          %373 = dma.done [#allocation10], 16
        $region68: #{context_net_forward.3} parent=51 // pred_fallthru
          _
        // Predicated region
        $region69: #{context_net_forward.3} parent=51 // pred_check
          %p374 = pneg %p134
        $region70: #{context_net_forward.3} parent=51 // pred_check_branch
          %376 = sbr.rel (%p374) target = $region72
        $region71: #{context_net_forward.3} parent=51 // pred_region
          %377 = dma.done [#allocation10], 16
        $region72: #{context_net_forward.3} parent=51 // pred_fallthru
          _
        // Predicated region
        $region73: #{context_net_forward.3} parent=51 // pred_check
          %p378 = pneg %p155
        $region74: #{context_net_forward.3} parent=51 // pred_check_branch
          %380 = sbr.rel (%p378) target = $region76
        $region75: #{context_net_forward.3} parent=51 // pred_region
          %381 = dma.done [#allocation13], 576
        $region76: #{context_net_forward.3} parent=51 // pred_fallthru
          _
        // Predicated region
        $region77: #{context_net_forward.3} parent=51 // pred_check
          %p382 = pneg %p176
        $region78: #{context_net_forward.3} parent=51 // pred_check_branch
          %384 = sbr.rel (%p382) target = $region80
        $region79: #{context_net_forward.3} parent=51 // pred_region
          %385 = dma.done [#allocation13], 16
        $region80: #{context_net_forward.3} parent=51 // pred_fallthru
          _
        // Predicated region
        $region81: #{context_net_forward.3} parent=51 // pred_check
          %p386 = pneg %p197
        $region82: #{context_net_forward.3} parent=51 // pred_check_branch
          %388 = sbr.rel (%p386) target = $region84
        $region83: #{context_net_forward.3} parent=51 // pred_region
          %389 = dma.done [#allocation16], 16
        $region84: #{context_net_forward.3} parent=51 // pred_fallthru
          _
        %s390 = sand.u32 %s37, 1
        %s391 = scalar_lea.sflag [#allocation4], %s390
        %s392 = sand.u32 %s37, 1
        %s393 = smul.addr %s392, 52
        %s394 = scalar_lea.vmem [#allocation3], %s393
        %p395 = pneg %p50
        %p396 = pneg %p47
        %p397 = pneg %p71
        %p398 = pneg %p68
        %p399 = pneg %p92
        %p400 = pneg %p89
        %p401 = pneg %p113
        %p402 = pneg %p110
        %p403 = pneg %p134
        %p404 = pneg %p131
        %p405 = pneg %p155
        %p406 = pneg %p152
        %p407 = pneg %p176
        %p408 = pneg %p173
        %p409 = pneg %p197
        %p410 = pneg %p194
        %p411 = pneg %p223
        %p412 = pneg %p220
        %s413 = sand.u32 %s210, 1
        %s414 = scalar_lea.sflag [#allocation5], %s413
        %s415 = sand.u32 %s210, 1
        %s416 = smul.addr %s415, 80
        %s417 = scalar_lea.vmem [#allocation17], %s416
        %v419 = vld [vmem:[#allocation6] sm:$0xff]
        %v420 = vld [vmem:[#allocation6 + $0x8] sm:$0xff]
        %v421 = vld [vmem:[#allocation6 + $0x10] sm:$0xff]
        %v422 = vld [vmem:[#allocation6 + $0x18] sm:$0xff]
        %v423 = vld [vmem:[#allocation6 + $0x20] sm:$0xff]
        %v424 = vld [vmem:[#allocation6 + $0x28] sm:$0xff]
        %v425 = vld [vmem:[#allocation6 + $0x30] sm:$0xff]
        %v426 = vld [vmem:[#allocation6 + $0x38] sm:$0xff]
        %v427 = vld [vmem:[#allocation6 + $0x40] sm:$0xff]
        %v428 = vld [vmem:[#allocation6 + $0x48] sm:$0xff]
        %v429 = vld [vmem:[%s357] sm:$0xf]
        %v430 = vld [vmem:[%s357 + $0x4] sm:$0xf]
        %v431 = vld [vmem:[%s357 + $0x8] sm:$0xf]
        %v432 = vld [vmem:[%s357 + $0xc] sm:$0xf]
        %v433 = vld [vmem:[%s357 + $0x10] sm:$0xf]
        %v434 = vld [vmem:[%s357 + $0x14] sm:$0xf]
        %v435 = vld [vmem:[%s357 + $0x18] sm:$0xf]
        %v436 = vld [vmem:[%s357 + $0x1c] sm:$0xf]
        %v437 = vld [vmem:[%s357 + $0x20] sm:$0xf]
        %v438 = vld [vmem:[%s357 + $0x24] sm:$0xf]
        %v439 = vld [vmem:[#allocation8] sm:$0xf]
        %v440 = vld [vmem:[#allocation8 + $0x4] sm:$0xf]
        %v441 = vld [vmem:[%s357 + $0x28] sm:$0x1]
        %s442 = scalar_lea.vmem [#allocation8], 8
        %v443 = vld [vmem:[%s442] sm:$0xf]
        %v444 = vld [vmem:[%s442 + $0x4] sm:$0xf]
        %v456 = vunpack.c.l.b16 %v429
        %v457 = vunpack.c.l.b16 %v430
        %v458 = vunpack.c.l.b16 %v431
        %v459 = vunpack.c.l.b16 %v432
        %v460 = vunpack.c.l.b16 %v433
        %v461 = vunpack.c.l.b16 %v434
        %v462 = vunpack.c.l.b16 %v435
        %v463 = vunpack.c.l.b16 %v436
        %v464 = vunpack.c.l.b16 %v437
        %v465 = vunpack.c.l.b16 %v438
        %v466 = vunpack.c.l.b16 %v441
        %v467 = vpack.c.b16 %v457, %v456
        %v468 = vpack.c.b16 %v459, %v458
        %v469 = vpack.c.b16 %v461, %v460
        %v470 = vpack.c.b16 %v463, %v462
        %v471 = vpack.c.b16 %v465, %v464
        %v472 = vpack.c.b16 %v466, %v466
        %vm473 = vsmask.f32 7424
        %v475 = vshrl.u32 %v467, 16
        %v477 = vshll.u32 %v467, 16
        %v479 = vrot.slane %v477, 1
        %v480 = vor.u32 %v475, %v479
        %v482 = vshll.u32 %v468, 16
        %v484 = vrot.slane %v482, 1
        %v485 = vsel %vm473, %v480, %v484
        %v486 = vshrl.u32 %v468, 16
        %v488 = vor.u32 %v486, %v484
        %v490 = vshll.u32 %v469, 16
        %v492 = vrot.slane %v490, 1
        %v493 = vsel %vm473, %v488, %v492
        %v494 = vshrl.u32 %v469, 16
        %v496 = vor.u32 %v494, %v492
        %v498 = vshll.u32 %v470, 16
        %v500 = vrot.slane %v498, 1
        %v501 = vsel %vm473, %v496, %v500
        %v502 = vshrl.u32 %v470, 16
        %v504 = vor.u32 %v502, %v500
        %v506 = vshll.u32 %v471, 16
        %v508 = vrot.slane %v506, 1
        %v509 = vsel %vm473, %v504, %v508
        %v510 = vshrl.u32 %v471, 16
        %v512 = vor.u32 %v510, %v508
        %v514 = vshll.u32 %v472, 16
        %v516 = vrot.slane %v514, 1
        %v517 = vsel %vm473, %v512, %v516
        %v520 = vunpack.c.l.b16 %v443
        %v521 = vunpack.c.l.b16 %v444
        %v522 = vpack.c.b16 %v521, %v520
        %vm524 = vcmask 130048
        %v526 = vsel %vm524, %v485, 0
        %v529 = vsel %vm524, %v493, 0
        %v532 = vsel %vm524, %v501, 0
        %v535 = vsel %vm524, %v509, 0
        %v538 = vsel %vm524, %v517, 0
        %540 = vmatprep.subr.bf16.mxu0 0
        %541 = vmatpush1.bf16.msra.mxu0 %v522
        %542 = vmatprep.subr.bf16.mxu0 0
        %543 = vmatpush1.bf16.msra.mxu0 0
        %544 = vmatprep.subr.bf16.mxu0 0
        %545 = vmatpush1.bf16.msra.mxu0 0
        %546 = vmatprep.subr.bf16.mxu0 0
        %547 = vmatpush1.bf16.msra.mxu0 0
        %548 = vmatprep.subr.bf16.mxu0 0
        %549 = vmatpush1.bf16.msra.mxu0 0
        %550 = vmatprep.subr.bf16.mxu0 0
        %551 = vmatpush1.bf16.msra.mxu0 0
        %552 = vmatprep.subr.bf16.mxu0 0
        %553 = vmatpush1.bf16.msra.mxu0 0
        %554 = vmatprep.subr.bf16.mxu0 0
        %555 = vmatpush1.bf16.msra.mxu0 0
        %556 = vmatprep.subr.bf16.mxu0 0
        %557 = vmatpush1.bf16.msra.mxu0 0
        %558 = vmatprep.subr.bf16.mxu0 0
        %559 = vmatpush1.bf16.msra.mxu0 0
        %560 = vmatprep.subr.bf16.mxu0 0
        %561 = vmatpush1.bf16.msra.mxu0 0
        %562 = vmatprep.subr.bf16.mxu0 0
        %563 = vmatpush1.bf16.msra.mxu0 0
        %564 = vmatprep.subr.bf16.mxu0 0
        %565 = vmatpush1.bf16.msra.mxu0 0
        %566 = vmatprep.subr.bf16.mxu0 0
        %567 = vmatpush1.bf16.msra.mxu0 0
        %568 = vmatprep.subr.bf16.mxu0 0
        %569 = vmatpush1.bf16.msra.mxu0 0
        %570 = vmatprep.subr.bf16.mxu0 0
        %571 = vmatpush1.bf16.msra.mxu0 0
        %572 = vmatprep.mubr.bf16.mxu0 0
        %573 = vmatmul.mubr.bf16.gmra.mrb[0].mxu0 %v526
        %v574 = vpop.f32.mrb[0].mxu0
        %v575 = vadd.f32 0.0, %v574
        %v576 = vpop.f32.mrb[0].mxu0
        %v577 = vpop.f32.mrb[0].mxu0
        %v578 = vadd.f32 0.0, %v577
        %v579 = vpop.f32.mrb[0].mxu0
        %580 = vmatprep.mubr.bf16.mxu0 0
        %581 = vmatmul.mubr.bf16.gmra.mrb[0].mxu0 %v529
        %v582 = vpop.f32.mrb[0].mxu0
        %v583 = vadd.f32 0.0, %v582
        %v584 = vpop.f32.mrb[0].mxu0
        %v585 = vpop.f32.mrb[0].mxu0
        %v586 = vadd.f32 0.0, %v585
        %v587 = vpop.f32.mrb[0].mxu0
        %588 = vmatprep.mubr.bf16.mxu0 0
        %589 = vmatmul.mubr.bf16.gmra.mrb[0].mxu0 %v532
        %v590 = vpop.f32.mrb[0].mxu0
        %v591 = vadd.f32 0.0, %v590
        %v592 = vpop.f32.mrb[0].mxu0
        %v593 = vpop.f32.mrb[0].mxu0
        %v594 = vadd.f32 0.0, %v593
        %v595 = vpop.f32.mrb[0].mxu0
        %596 = vmatprep.mubr.bf16.mxu0 0
        %597 = vmatmul.mubr.bf16.gmra.mrb[0].mxu0 %v535
        %v598 = vpop.f32.mrb[0].mxu0
        %v599 = vadd.f32 0.0, %v598
        %v600 = vpop.f32.mrb[0].mxu0
        %v601 = vpop.f32.mrb[0].mxu0
        %v602 = vadd.f32 0.0, %v601
        %v603 = vpop.f32.mrb[0].mxu0
        %604 = vmatprep.mubr.bf16.mxu0 0
        %605 = vmatmul.mubr.bf16.gmra.mrb[0].mxu0 %v538
        %v606 = vpop.f32.mrb[0].mxu0
        %v607 = vadd.f32 0.0, %v606
        %v608 = vpop.f32.mrb[0].mxu0
        %v609 = vpop.f32.mrb[0].mxu0
        %v610 = vadd.f32 0.0, %v609
        %v611 = vpop.f32.mrb[0].mxu0
        %612 = vdwg.mxu0
        %v615 = vunpack.c.l.b16 %v439
        %v616 = vunpack.c.l.b16 %v440
        %v617 = vpack.c.b16 %v616, %v615
        %v619 = vsel %vm524, %v467, 0
        %v621 = vsel %vm524, %v468, 0
        %v623 = vsel %vm524, %v469, 0
        %v625 = vsel %vm524, %v470, 0
        %v627 = vsel %vm524, %v471, 0
        %629 = vmatprep.subr.bf16.mxu0 0
        %630 = vmatpush1.bf16.msra.mxu0 %v617
        %631 = vmatprep.subr.bf16.mxu0 0
        %632 = vmatpush1.bf16.msra.mxu0 0
        %633 = vmatprep.subr.bf16.mxu0 0
        %634 = vmatpush1.bf16.msra.mxu0 0
        %635 = vmatprep.subr.bf16.mxu0 0
        %636 = vmatpush1.bf16.msra.mxu0 0
        %637 = vmatprep.subr.bf16.mxu0 0
        %638 = vmatpush1.bf16.msra.mxu0 0
        %639 = vmatprep.subr.bf16.mxu0 0
        %640 = vmatpush1.bf16.msra.mxu0 0
        %641 = vmatprep.subr.bf16.mxu0 0
        %642 = vmatpush1.bf16.msra.mxu0 0
        %643 = vmatprep.subr.bf16.mxu0 0
        %644 = vmatpush1.bf16.msra.mxu0 0
        %645 = vmatprep.subr.bf16.mxu0 0
        %646 = vmatpush1.bf16.msra.mxu0 0
        %647 = vmatprep.subr.bf16.mxu0 0
        %648 = vmatpush1.bf16.msra.mxu0 0
        %649 = vmatprep.subr.bf16.mxu0 0
        %650 = vmatpush1.bf16.msra.mxu0 0
        %651 = vmatprep.subr.bf16.mxu0 0
        %652 = vmatpush1.bf16.msra.mxu0 0
        %653 = vmatprep.subr.bf16.mxu0 0
        %654 = vmatpush1.bf16.msra.mxu0 0
        %655 = vmatprep.subr.bf16.mxu0 0
        %656 = vmatpush1.bf16.msra.mxu0 0
        %657 = vmatprep.subr.bf16.mxu0 0
        %658 = vmatpush1.bf16.msra.mxu0 0
        %659 = vmatprep.subr.bf16.mxu0 0
        %660 = vmatpush1.bf16.msra.mxu0 0
        %661 = vmatprep.mubr.bf16.mxu0 0
        %662 = vmatmul.mubr.bf16.gmra.mrb[0].mxu0 %v619
        %v663 = vpop.f32.mrb[0].mxu0
        %v664 = vadd.f32 %v575, %v663
        %v665 = vpop.f32.mrb[0].mxu0
        %v666 = vpop.f32.mrb[0].mxu0
        %v667 = vadd.f32 %v578, %v666
        %v668 = vpop.f32.mrb[0].mxu0
        %669 = vmatprep.mubr.bf16.mxu0 0
        %670 = vmatmul.mubr.bf16.gmra.mrb[0].mxu0 %v621
        %v671 = vpop.f32.mrb[0].mxu0
        %v672 = vadd.f32 %v583, %v671
        %v673 = vpop.f32.mrb[0].mxu0
        %v674 = vpop.f32.mrb[0].mxu0
        %v675 = vadd.f32 %v586, %v674
        %v676 = vpop.f32.mrb[0].mxu0
        %677 = vmatprep.mubr.bf16.mxu0 0
        %678 = vmatmul.mubr.bf16.gmra.mrb[0].mxu0 %v623
        %v679 = vpop.f32.mrb[0].mxu0
        %v680 = vadd.f32 %v591, %v679
        %v681 = vpop.f32.mrb[0].mxu0
        %v682 = vpop.f32.mrb[0].mxu0
        %v683 = vadd.f32 %v594, %v682
        %v684 = vpop.f32.mrb[0].mxu0
        %685 = vmatprep.mubr.bf16.mxu0 0
        %686 = vmatmul.mubr.bf16.gmra.mrb[0].mxu0 %v625
        %v687 = vpop.f32.mrb[0].mxu0
        %v688 = vadd.f32 %v599, %v687
        %v689 = vpop.f32.mrb[0].mxu0
        %v690 = vpop.f32.mrb[0].mxu0
        %v691 = vadd.f32 %v602, %v690
        %v692 = vpop.f32.mrb[0].mxu0
        %693 = vmatprep.mubr.bf16.mxu0 0
        %694 = vmatmul.mubr.bf16.gmra.mrb[0].mxu0 %v627
        %v695 = vpop.f32.mrb[0].mxu0
        %v696 = vadd.f32 %v607, %v695
        %v697 = vpop.f32.mrb[0].mxu0
        %v698 = vpop.f32.mrb[0].mxu0
        %v699 = vadd.f32 %v610, %v698
        %v700 = vpop.f32.mrb[0].mxu0
        %701 = vdwg.mxu0
        %v702 = vld [vmem:[%s357 + $0x4] sm:$0xe]
        %v703 = vld [vmem:[%s357 + $0x8] sm:$0xf]
        %v704 = vld [vmem:[%s357 + $0xc] sm:$0xf]
        %v705 = vld [vmem:[%s357 + $0x10] sm:$0xf]
        %v706 = vld [vmem:[%s357 + $0x14] sm:$0xf]
        %v707 = vld [vmem:[%s357 + $0x18] sm:$0xf]
        %v708 = vld [vmem:[%s357 + $0x1c] sm:$0xf]
        %v709 = vld [vmem:[%s357 + $0x20] sm:$0xf]
        %v710 = vld [vmem:[%s357 + $0x24] sm:$0xf]
        %v711 = vld [vmem:[%s357 + $0x28] sm:$0xf]
        %v712 = vld [vmem:[%s357 + $0x2c] sm:$0x1]
        %s713 = scalar_lea.vmem [#allocation8], 16
        %v714 = vld [vmem:[%s713] sm:$0xf]
        %v715 = vld [vmem:[%s713 + $0x4] sm:$0xf]
        %v727 = vunpack.c.l.b16 %v702
        %v728 = vunpack.c.l.b16 %v703
        %v729 = vunpack.c.l.b16 %v704
        %v730 = vunpack.c.l.b16 %v705
        %v731 = vunpack.c.l.b16 %v706
        %v732 = vunpack.c.l.b16 %v707
        %v733 = vunpack.c.l.b16 %v708
        %v734 = vunpack.c.l.b16 %v709
        %v735 = vunpack.c.l.b16 %v710
        %v736 = vunpack.c.l.b16 %v711
        %v737 = vunpack.c.l.b16 %v712
        %v738 = vpack.c.b16 %v728, %v727
        %v739 = vpack.c.b16 %v730, %v729
        %v740 = vpack.c.b16 %v732, %v731
        %v741 = vpack.c.b16 %v734, %v733
        %v742 = vpack.c.b16 %v736, %v735
        %v743 = vpack.c.b16 %v737, %v737
        %vm744 = vcmask 1046528
        %v745 = vrot.slane %v738, 1
        %v746 = vrot.slane %v739, 1
        %v747 = vsel %vm744, %v745, %v746
        %v748 = vrot.slane %v740, 1
        %v749 = vsel %vm744, %v746, %v748
        %v750 = vrot.slane %v741, 1
        %v751 = vsel %vm744, %v748, %v750
        %v752 = vrot.slane %v742, 1
        %v753 = vsel %vm744, %v750, %v752
        %v754 = vrot.slane %v743, 1
        %v755 = vsel %vm744, %v752, %v754
        %v758 = vunpack.c.l.b16 %v714
        %v759 = vunpack.c.l.b16 %v715
        %v760 = vpack.c.b16 %v759, %v758
        %v763 = vsel %vm524, %v747, 0
        %v766 = vsel %vm524, %v749, 0
        %v769 = vsel %vm524, %v751, 0
        %v772 = vsel %vm524, %v753, 0
        %v775 = vsel %vm524, %v755, 0
        %777 = vmatprep.subr.bf16.mxu0 0
        %778 = vmatpush1.bf16.msra.mxu0 %v760
        %779 = vmatprep.subr.bf16.mxu0 0
        %780 = vmatpush1.bf16.msra.mxu0 0
        %781 = vmatprep.subr.bf16.mxu0 0
        %782 = vmatpush1.bf16.msra.mxu0 0
        %783 = vmatprep.subr.bf16.mxu0 0
        %784 = vmatpush1.bf16.msra.mxu0 0
        %785 = vmatprep.subr.bf16.mxu0 0
        %786 = vmatpush1.bf16.msra.mxu0 0
        %787 = vmatprep.subr.bf16.mxu0 0
        %788 = vmatpush1.bf16.msra.mxu0 0
        %789 = vmatprep.subr.bf16.mxu0 0
        %790 = vmatpush1.bf16.msra.mxu0 0
        %791 = vmatprep.subr.bf16.mxu0 0
        %792 = vmatpush1.bf16.msra.mxu0 0
        %793 = vmatprep.subr.bf16.mxu0 0
        %794 = vmatpush1.bf16.msra.mxu0 0
        %795 = vmatprep.subr.bf16.mxu0 0
        %796 = vmatpush1.bf16.msra.mxu0 0
        %797 = vmatprep.subr.bf16.mxu0 0
        %798 = vmatpush1.bf16.msra.mxu0 0
        %799 = vmatprep.subr.bf16.mxu0 0
        %800 = vmatpush1.bf16.msra.mxu0 0
        %801 = vmatprep.subr.bf16.mxu0 0
        %802 = vmatpush1.bf16.msra.mxu0 0
        %803 = vmatprep.subr.bf16.mxu0 0
        %804 = vmatpush1.bf16.msra.mxu0 0
        %805 = vmatprep.subr.bf16.mxu0 0
        %806 = vmatpush1.bf16.msra.mxu0 0
        %807 = vmatprep.subr.bf16.mxu0 0
        %808 = vmatpush1.bf16.msra.mxu0 0
        %809 = vmatprep.mubr.bf16.mxu0 0
        %810 = vmatmul.mubr.bf16.gmra.mrb[0].mxu0 %v763
        %v811 = vpop.f32.mrb[0].mxu0
        %v812 = vadd.f32 0.0, %v811
        %v813 = vpop.f32.mrb[0].mxu0
        %v814 = vpop.f32.mrb[0].mxu0
        %v815 = vadd.f32 0.0, %v814
        %v816 = vpop.f32.mrb[0].mxu0
        %817 = vmatprep.mubr.bf16.mxu0 0
        %818 = vmatmul.mubr.bf16.gmra.mrb[0].mxu0 %v766
        %v819 = vpop.f32.mrb[0].mxu0
        %v820 = vadd.f32 0.0, %v819
        %v821 = vpop.f32.mrb[0].mxu0
        %v822 = vpop.f32.mrb[0].mxu0
        %v823 = vadd.f32 0.0, %v822
        %v824 = vpop.f32.mrb[0].mxu0
        %825 = vmatprep.mubr.bf16.mxu0 0
        %826 = vmatmul.mubr.bf16.gmra.mrb[0].mxu0 %v769
        %v827 = vpop.f32.mrb[0].mxu0
        %v828 = vadd.f32 0.0, %v827
        %v829 = vpop.f32.mrb[0].mxu0
        %v830 = vpop.f32.mrb[0].mxu0
        %v831 = vadd.f32 0.0, %v830
        %v832 = vpop.f32.mrb[0].mxu0
        %833 = vmatprep.mubr.bf16.mxu0 0
        %834 = vmatmul.mubr.bf16.gmra.mrb[0].mxu0 %v772
        %v835 = vpop.f32.mrb[0].mxu0
        %v836 = vadd.f32 0.0, %v835
        %v837 = vpop.f32.mrb[0].mxu0
        %v838 = vpop.f32.mrb[0].mxu0
        %v839 = vadd.f32 0.0, %v838
        %v840 = vpop.f32.mrb[0].mxu0
        %841 = vmatprep.mubr.bf16.mxu0 0
        %842 = vmatmul.mubr.bf16.gmra.mrb[0].mxu0 %v775
        %v843 = vpop.f32.mrb[0].mxu0
        %v844 = vadd.f32 0.0, %v843
        %v845 = vpop.f32.mrb[0].mxu0
        %v846 = vpop.f32.mrb[0].mxu0
        %v847 = vadd.f32 0.0, %v846
        %v848 = vpop.f32.mrb[0].mxu0
        %849 = vdwg.mxu0
        %v850 = vadd.f32 %v664, %v812
        %v851 = vadd.f32 %v667, %v815
        %v852 = vadd.f32 %v672, %v820
        %v853 = vadd.f32 %v675, %v823
        %v854 = vadd.f32 %v680, %v828
        %v855 = vadd.f32 %v683, %v831
        %v856 = vadd.f32 %v688, %v836
        %v857 = vadd.f32 %v691, %v839
        %v858 = vadd.f32 %v696, %v844
        %v859 = vadd.f32 %v699, %v847
        %v860 = vld [vmem:[%s357 + $0x2c] sm:$0x3]
        %s861 = scalar_lea.vmem [#allocation8], 24
        %v862 = vld [vmem:[%s861] sm:$0xf]
        %v863 = vld [vmem:[%s861 + $0x4] sm:$0xf]
        %v865 = vunpack.c.l.b16 %v860
        %v866 = vpack.c.b16 %v865, %v865
        %vm867 = vsmask.f32 6400
        %v869 = vshrl.u32 %v738, 16
        %v871 = vrot.slane %v869, 1
        %v872 = vshll.u32 %v738, 16
        %v874 = vrot.slane %v872, 2
        %v875 = vor.u32 %v871, %v874
        %v877 = vshrl.u32 %v739, 16
        %v879 = vrot.slane %v877, 1
        %v880 = vshll.u32 %v739, 16
        %v882 = vrot.slane %v880, 2
        %v883 = vor.u32 %v879, %v882
        %v884 = vsel %vm867, %v875, %v883
        %v886 = vshrl.u32 %v740, 16
        %v888 = vrot.slane %v886, 1
        %v889 = vshll.u32 %v740, 16
        %v891 = vrot.slane %v889, 2
        %v892 = vor.u32 %v888, %v891
        %v893 = vsel %vm867, %v883, %v892
        %v895 = vshrl.u32 %v741, 16
        %v897 = vrot.slane %v895, 1
        %v898 = vshll.u32 %v741, 16
        %v900 = vrot.slane %v898, 2
        %v901 = vor.u32 %v897, %v900
        %v902 = vsel %vm867, %v892, %v901
        %v904 = vshrl.u32 %v742, 16
        %v906 = vrot.slane %v904, 1
        %v907 = vshll.u32 %v742, 16
        %v909 = vrot.slane %v907, 2
        %v910 = vor.u32 %v906, %v909
        %v911 = vsel %vm867, %v901, %v910
        %v913 = vshrl.u32 %v866, 16
        %v915 = vrot.slane %v913, 1
        %v916 = vshll.u32 %v866, 16
        %v918 = vrot.slane %v916, 2
        %v919 = vor.u32 %v915, %v918
        %v920 = vsel %vm867, %v910, %v919
        %v923 = vunpack.c.l.b16 %v862
        %v924 = vunpack.c.l.b16 %v863
        %v925 = vpack.c.b16 %v924, %v923
        %v928 = vsel %vm524, %v884, 0
        %v931 = vsel %vm524, %v893, 0
        %v934 = vsel %vm524, %v902, 0
        %v937 = vsel %vm524, %v911, 0
        %v940 = vsel %vm524, %v920, 0
        %942 = vmatprep.subr.bf16.mxu0 0
        %943 = vmatpush1.bf16.msra.mxu0 %v925
        %944 = vmatprep.subr.bf16.mxu0 0
        %945 = vmatpush1.bf16.msra.mxu0 0
        %946 = vmatprep.subr.bf16.mxu0 0
        %947 = vmatpush1.bf16.msra.mxu0 0
        %948 = vmatprep.subr.bf16.mxu0 0
        %949 = vmatpush1.bf16.msra.mxu0 0
        %950 = vmatprep.subr.bf16.mxu0 0
        %951 = vmatpush1.bf16.msra.mxu0 0
        %952 = vmatprep.subr.bf16.mxu0 0
        %953 = vmatpush1.bf16.msra.mxu0 0
        %954 = vmatprep.subr.bf16.mxu0 0
        %955 = vmatpush1.bf16.msra.mxu0 0
        %956 = vmatprep.subr.bf16.mxu0 0
        %957 = vmatpush1.bf16.msra.mxu0 0
        %958 = vmatprep.subr.bf16.mxu0 0
        %959 = vmatpush1.bf16.msra.mxu0 0
        %960 = vmatprep.subr.bf16.mxu0 0
        %961 = vmatpush1.bf16.msra.mxu0 0
        %962 = vmatprep.subr.bf16.mxu0 0
        %963 = vmatpush1.bf16.msra.mxu0 0
        %964 = vmatprep.subr.bf16.mxu0 0
        %965 = vmatpush1.bf16.msra.mxu0 0
        %966 = vmatprep.subr.bf16.mxu0 0
        %967 = vmatpush1.bf16.msra.mxu0 0
        %968 = vmatprep.subr.bf16.mxu0 0
        %969 = vmatpush1.bf16.msra.mxu0 0
        %970 = vmatprep.subr.bf16.mxu0 0
        %971 = vmatpush1.bf16.msra.mxu0 0
        %972 = vmatprep.subr.bf16.mxu0 0
        %973 = vmatpush1.bf16.msra.mxu0 0
        %974 = vmatprep.mubr.bf16.mxu0 0
        %975 = vmatmul.mubr.bf16.gmra.mrb[0].mxu0 %v928
        %v976 = vpop.f32.mrb[0].mxu0
        %v977 = vadd.f32 0.0, %v976
        %v978 = vpop.f32.mrb[0].mxu0
        %v979 = vpop.f32.mrb[0].mxu0
        %v980 = vadd.f32 0.0, %v979
        %v981 = vpop.f32.mrb[0].mxu0
        %982 = vmatprep.mubr.bf16.mxu0 0
        %983 = vmatmul.mubr.bf16.gmra.mrb[0].mxu0 %v931
        %v984 = vpop.f32.mrb[0].mxu0
        %v985 = vadd.f32 0.0, %v984
        %v986 = vpop.f32.mrb[0].mxu0
        %v987 = vpop.f32.mrb[0].mxu0
        %v988 = vadd.f32 0.0, %v987
        %v989 = vpop.f32.mrb[0].mxu0
        %990 = vmatprep.mubr.bf16.mxu0 0
        %991 = vmatmul.mubr.bf16.gmra.mrb[0].mxu0 %v934
        %v992 = vpop.f32.mrb[0].mxu0
        %v993 = vadd.f32 0.0, %v992
        %v994 = vpop.f32.mrb[0].mxu0
        %v995 = vpop.f32.mrb[0].mxu0
        %v996 = vadd.f32 0.0, %v995
        %v997 = vpop.f32.mrb[0].mxu0
        %998 = vmatprep.mubr.bf16.mxu0 0
        %999 = vmatmul.mubr.bf16.gmra.mrb[0].mxu0 %v937
        %v1000 = vpop.f32.mrb[0].mxu0
        %v1001 = vadd.f32 0.0, %v1000
        %v1002 = vpop.f32.mrb[0].mxu0
        %v1003 = vpop.f32.mrb[0].mxu0
        %v1004 = vadd.f32 0.0, %v1003
        %v1005 = vpop.f32.mrb[0].mxu0
        %1006 = vmatprep.mubr.bf16.mxu0 0
        %1007 = vmatmul.mubr.bf16.gmra.mrb[0].mxu0 %v940
        %v1008 = vpop.f32.mrb[0].mxu0
        %v1009 = vadd.f32 0.0, %v1008
        %v1010 = vpop.f32.mrb[0].mxu0
        %v1011 = vpop.f32.mrb[0].mxu0
        %v1012 = vadd.f32 0.0, %v1011
        %v1013 = vpop.f32.mrb[0].mxu0
        %1014 = vdwg.mxu0
        %v1015 = vadd.f32 %v850, %v977
        %v1016 = vadd.f32 %v851, %v980
        %v1017 = vadd.f32 %v852, %v985
        %v1018 = vadd.f32 %v853, %v988
        %v1019 = vadd.f32 %v854, %v993
        %v1020 = vadd.f32 %v855, %v996
        %v1021 = vadd.f32 %v856, %v1001
        %v1022 = vadd.f32 %v857, %v1004
        %v1023 = vadd.f32 %v858, %v1009
        %v1024 = vadd.f32 %v859, %v1012
        %v1025 = vld [vmem:[#allocation9] sm:$0x1]
        %v1027 = vlaneseq
        %v1028 = vshrl.u32 %v1027, 7
        %v1029 = vsub.s32 0, %v1028
        %v1030 = vrot.slane %v1025, %v1029
        %v1032 = vadd.f32 %v1015, %v1030
        %v1033 = vadd.f32 %v1016, %v1030
        %v1034 = vadd.f32 %v1017, %v1030
        %v1035 = vadd.f32 %v1018, %v1030
        %v1036 = vadd.f32 %v1019, %v1030
        %v1037 = vadd.f32 %v1020, %v1030
        %v1038 = vadd.f32 %v1021, %v1030
        %v1039 = vadd.f32 %v1022, %v1030
        %v1040 = vadd.f32 %v1023, %v1030
        %v1041 = vadd.f32 %v1024, %v1030
        %vm1042 = vcmp.ge.f32.partialorder %v1032, 0.0
        %vm1043 = vcmp.ge.f32.partialorder %v1033, 0.0
        %vm1044 = vcmp.ge.f32.partialorder %v1034, 0.0
        %vm1045 = vcmp.ge.f32.partialorder %v1035, 0.0
        %vm1046 = vcmp.ge.f32.partialorder %v1036, 0.0
        %vm1047 = vcmp.ge.f32.partialorder %v1037, 0.0
        %vm1048 = vcmp.ge.f32.partialorder %v1038, 0.0
        %vm1049 = vcmp.ge.f32.partialorder %v1039, 0.0
        %vm1050 = vcmp.ge.f32.partialorder %v1040, 0.0
        %vm1051 = vcmp.ge.f32.partialorder %v1041, 0.0
        %v1052 = vld [vmem:[#allocation11] sm:$0x1]
        %v1054 = vlaneseq
        %v1055 = vshrl.u32 %v1054, 7
        %v1056 = vsub.s32 0, %v1055
        %v1057 = vrot.slane %v1052, %v1056
        %v1059 = vmul.f32 %v1057, %v1032
        %v1060 = vmul.f32 %v1057, %v1033
        %v1061 = vmul.f32 %v1057, %v1034
        %v1062 = vmul.f32 %v1057, %v1035
        %v1063 = vmul.f32 %v1057, %v1036
        %v1064 = vmul.f32 %v1057, %v1037
        %v1065 = vmul.f32 %v1057, %v1038
        %v1066 = vmul.f32 %v1057, %v1039
        %v1067 = vmul.f32 %v1057, %v1040
        %v1068 = vmul.f32 %v1057, %v1041
        %v1069 = vsel %vm1042, %v1032, %v1059
        %v1070 = vsel %vm1043, %v1033, %v1060
        %v1071 = vsel %vm1044, %v1034, %v1061
        %v1072 = vsel %vm1045, %v1035, %v1062
        %v1073 = vsel %vm1046, %v1036, %v1063
        %v1074 = vsel %vm1047, %v1037, %v1064
        %v1075 = vsel %vm1048, %v1038, %v1065
        %v1076 = vsel %vm1049, %v1039, %v1066
        %v1077 = vsel %vm1050, %v1040, %v1067
        %v1078 = vsel %vm1051, %v1041, %v1068
        %1080 = vset.pattern.permute.xlu0 0
        %1081 = vperm.xlu0 %1080, %v419
        %v1082 = vpop.permute.xlu0 %1081
        %1085 = vset.pattern.permute.xlu0 0
        %1086 = vperm.xlu0 %1085, %v420
        %v1087 = vpop.permute.xlu0 %1086
        %1090 = vset.pattern.permute.xlu0 0
        %1091 = vperm.xlu0 %1090, %v421
        %v1092 = vpop.permute.xlu0 %1091
        %1095 = vset.pattern.permute.xlu0 0
        %1096 = vperm.xlu0 %1095, %v422
        %v1097 = vpop.permute.xlu0 %1096
        %1100 = vset.pattern.permute.xlu0 0
        %1101 = vperm.xlu0 %1100, %v423
        %v1102 = vpop.permute.xlu0 %1101
        %1105 = vset.pattern.permute.xlu0 0
        %1106 = vperm.xlu0 %1105, %v424
        %v1107 = vpop.permute.xlu0 %1106
        %1110 = vset.pattern.permute.xlu0 0
        %1111 = vperm.xlu0 %1110, %v425
        %v1112 = vpop.permute.xlu0 %1111
        %1115 = vset.pattern.permute.xlu0 0
        %1116 = vperm.xlu0 %1115, %v426
        %v1117 = vpop.permute.xlu0 %1116
        %1120 = vset.pattern.permute.xlu0 0
        %1121 = vperm.xlu0 %1120, %v427
        %v1122 = vpop.permute.xlu0 %1121
        %1125 = vset.pattern.permute.xlu0 0
        %1126 = vperm.xlu0 %1125, %v428
        %v1127 = vpop.permute.xlu0 %1126
        %v1129 = vmul.f32 %v1069, %v1082
        %v1130 = vmul.f32 %v1070, %v1087
        %v1131 = vmul.f32 %v1071, %v1092
        %v1132 = vmul.f32 %v1072, %v1097
        %v1133 = vmul.f32 %v1073, %v1102
        %v1134 = vmul.f32 %v1074, %v1107
        %v1135 = vmul.f32 %v1075, %v1112
        %v1136 = vmul.f32 %v1076, %v1117
        %v1137 = vmul.f32 %v1077, %v1122
        %v1138 = vmul.f32 %v1078, %v1127
        %vm1139 = vcmask 60416
        %1140 = vst.msk [vmem:[#allocation2] sm:$0xf] %vm1139, 0
        %1141 = vst.msk [vmem:[#allocation2 + $0x4] sm:$0xf] %vm1139, 0
        %1142 = vst.msk [vmem:[#allocation2 + $0x8] sm:$0xf] %vm1139, 0
        %1143 = vst.msk [vmem:[#allocation2 + $0xc] sm:$0xf] %vm1139, 0
        %1144 = vst.msk [vmem:[#allocation2 + $0x10] sm:$0xf] %vm1139, 0
        %1145 = vst.msk [vmem:[#allocation2 + $0x14] sm:$0xf] %vm1139, 0
        %1146 = vst.msk [vmem:[#allocation2 + $0x18] sm:$0xf] %vm1139, 0
        %1147 = vst.msk [vmem:[#allocation2 + $0x1c] sm:$0xf] %vm1139, 0
        %1148 = vst.msk [vmem:[#allocation2 + $0x20] sm:$0xf] %vm1139, 0
        %1149 = vst.msk [vmem:[#allocation2 + $0x24] sm:$0xf] %vm1139, 0
        %1150 = vst.msk [vmem:[#allocation2 + $0x28] sm:$0xf] %vm1139, 0
        %1151 = vst.msk [vmem:[#allocation2 + $0x2c] sm:$0xf] %vm1139, 0
        %1152 = vst.msk [vmem:[#allocation2 + $0x30] sm:$0xf] %vm1139, 0
        %1153 = vst.msk [vmem:[#allocation2 + $0x34] sm:$0xf] %vm1139, 0
        %vm1154 = vcmask 57344
        %vm1155 = vsmask.f32 256
        %vm1156 = vmand %vm1154, %vm1155
        %v1157 = vld [vmem:[#allocation2 + $0x38] sm:$0x1]
        %v1158 = vsel %vm1156, 0, %v1157
        %1159 = vst [vmem:[#allocation2 + $0x38] sm:$0x1] %v1158
        %v1160 = vpack.c.bf16 %v1130, %v1129
        %v1161 = vpack.c.bf16 %v1132, %v1131
        %v1162 = vpack.c.bf16 %v1134, %v1133
        %v1163 = vpack.c.bf16 %v1136, %v1135
        %v1164 = vpack.c.bf16 %v1138, %v1137
        %v1170 = vunpack.c.l.b16 %v1160
        %v1171 = vunpack.c.h.b16 %v1160
        %v1172 = vunpack.c.l.b16 %v1161
        %v1173 = vunpack.c.h.b16 %v1161
        %v1174 = vunpack.c.l.b16 %v1162
        %v1175 = vunpack.c.h.b16 %v1162
        %v1176 = vunpack.c.l.b16 %v1163
        %v1177 = vunpack.c.h.b16 %v1163
        %v1178 = vunpack.c.l.b16 %v1164
        %v1179 = vunpack.c.h.b16 %v1164
        %v1180 = vpack.c.b16 %v1170, %v1170
        %v1181 = vpack.c.b16 %v1171, %v1171
        %v1182 = vpack.c.b16 %v1172, %v1172
        %v1183 = vpack.c.b16 %v1173, %v1173
        %v1184 = vpack.c.b16 %v1174, %v1174
        %v1185 = vpack.c.b16 %v1175, %v1175
        %v1186 = vpack.c.b16 %v1176, %v1176
        %v1187 = vpack.c.b16 %v1177, %v1177
        %v1188 = vpack.c.b16 %v1178, %v1178
        %v1189 = vpack.c.b16 %v1179, %v1179
        %1200 = vst.msk [vmem:[#allocation2 + $0x8] sm:$0xf] %vm1139, %v1180
        %1201 = vst.msk [vmem:[#allocation2 + $0xc] sm:$0xf] %vm1139, %v1181
        %1202 = vst.msk [vmem:[#allocation2 + $0x10] sm:$0xf] %vm1139, %v1182
        %1203 = vst.msk [vmem:[#allocation2 + $0x14] sm:$0xf] %vm1139, %v1183
        %1204 = vst.msk [vmem:[#allocation2 + $0x18] sm:$0xf] %vm1139, %v1184
        %1205 = vst.msk [vmem:[#allocation2 + $0x1c] sm:$0xf] %vm1139, %v1185
        %1206 = vst.msk [vmem:[#allocation2 + $0x20] sm:$0xf] %vm1139, %v1186
        %1207 = vst.msk [vmem:[#allocation2 + $0x24] sm:$0xf] %vm1139, %v1187
        %1208 = vst.msk [vmem:[#allocation2 + $0x28] sm:$0xf] %vm1139, %v1188
        %1209 = vst.msk [vmem:[#allocation2 + $0x2c] sm:$0xf] %vm1139, %v1189
        %v1210 = vld [vmem:[#allocation2] sm:$0xc]
        %v1211 = vld [vmem:[#allocation2 + $0x4] sm:$0xf]
        %v1212 = vld [vmem:[#allocation2 + $0x8] sm:$0xf]
        %v1213 = vld [vmem:[#allocation2 + $0xc] sm:$0xf]
        %v1214 = vld [vmem:[#allocation2 + $0x10] sm:$0xf]
        %v1215 = vld [vmem:[#allocation2 + $0x14] sm:$0xf]
        %v1216 = vld [vmem:[#allocation2 + $0x18] sm:$0xf]
        %v1217 = vld [vmem:[#allocation2 + $0x1c] sm:$0xf]
        %v1218 = vld [vmem:[#allocation2 + $0x20] sm:$0xf]
        %v1219 = vld [vmem:[#allocation2 + $0x24] sm:$0xf]
        %v1220 = vld [vmem:[#allocation2 + $0x28] sm:$0x7]
        %v1221 = vld [vmem:[#allocation12] sm:$0xf]
        %v1222 = vld [vmem:[#allocation2] sm:$0x8]
        %s1223 = scalar_lea.vmem [#allocation12], 4
        %v1224 = vld [vmem:[%s1223] sm:$0xf]
        %v1236 = vunpack.c.l.b16 %v1222
        %v1237 = vunpack.c.l.b16 %v1211
        %v1238 = vunpack.c.l.b16 %v1212
        %v1239 = vunpack.c.l.b16 %v1213
        %v1240 = vunpack.c.l.b16 %v1214
        %v1241 = vunpack.c.l.b16 %v1215
        %v1242 = vunpack.c.l.b16 %v1216
        %v1243 = vunpack.c.l.b16 %v1217
        %v1244 = vunpack.c.l.b16 %v1218
        %v1245 = vunpack.c.l.b16 %v1219
        %v1246 = vunpack.c.l.b16 %v1220
        %v1247 = vpack.c.b16 %v1237, %v1236
        %v1248 = vpack.c.b16 %v1239, %v1238
        %v1249 = vpack.c.b16 %v1241, %v1240
        %v1250 = vpack.c.b16 %v1243, %v1242
        %v1251 = vpack.c.b16 %v1245, %v1244
        %v1252 = vpack.c.b16 %v1246, %v1246
        %vm1253 = vcmask 1044480
        %v1254 = vrot.slane %v1247, 3
        %v1255 = vrot.slane %v1248, 3
        %v1256 = vsel %vm1253, %v1254, %v1255
        %v1257 = vrot.slane %v1249, 3
        %v1258 = vsel %vm1253, %v1255, %v1257
        %v1259 = vrot.slane %v1250, 3
        %v1260 = vsel %vm1253, %v1257, %v1259
        %v1261 = vrot.slane %v1251, 3
        %v1262 = vsel %vm1253, %v1259, %v1261
        %v1263 = vrot.slane %v1252, 3
        %v1264 = vsel %vm1253, %v1261, %v1263
        %vm1265 = vcmask 64512
        %v1267 = vsel %vm1265, %v1256, 0
        %v1270 = vsel %vm1265, %v1258, 0
        %v1273 = vsel %vm1265, %v1260, 0
        %v1276 = vsel %vm1265, %v1262, 0
        %v1279 = vsel %vm1265, %v1264, 0
        %vm1281 = vcmask 1043456
        %v1283 = vsel %vm1281, %v1224, 0
        %1285 = vmatprep.subr.bf16.mxu0 0
        %1286 = vmatpush1.bf16.msra.mxu0 %v1283
        %1287 = vmatprep.subr.bf16.mxu0 0
        %1288 = vmatpush1.bf16.msra.mxu0 0
        %1289 = vmatprep.subr.bf16.mxu0 0
        %1290 = vmatpush1.bf16.msra.mxu0 0
        %1291 = vmatprep.subr.bf16.mxu0 0
        %1292 = vmatpush1.bf16.msra.mxu0 0
        %1293 = vmatprep.subr.bf16.mxu0 0
        %1294 = vmatpush1.bf16.msra.mxu0 0
        %1295 = vmatprep.subr.bf16.mxu0 0
        %1296 = vmatpush1.bf16.msra.mxu0 0
        %1297 = vmatprep.subr.bf16.mxu0 0
        %1298 = vmatpush1.bf16.msra.mxu0 0
        %1299 = vmatprep.subr.bf16.mxu0 0
        %1300 = vmatpush1.bf16.msra.mxu0 0
        %1301 = vmatprep.subr.bf16.mxu0 0
        %1302 = vmatpush1.bf16.msra.mxu0 0
        %1303 = vmatprep.subr.bf16.mxu0 0
        %1304 = vmatpush1.bf16.msra.mxu0 0
        %1305 = vmatprep.subr.bf16.mxu0 0
        %1306 = vmatpush1.bf16.msra.mxu0 0
        %1307 = vmatprep.subr.bf16.mxu0 0
        %1308 = vmatpush1.bf16.msra.mxu0 0
        %1309 = vmatprep.subr.bf16.mxu0 0
        %1310 = vmatpush1.bf16.msra.mxu0 0
        %1311 = vmatprep.subr.bf16.mxu0 0
        %1312 = vmatpush1.bf16.msra.mxu0 0
        %1313 = vmatprep.subr.bf16.mxu0 0
        %1314 = vmatpush1.bf16.msra.mxu0 0
        %1315 = vmatprep.subr.bf16.mxu0 0
        %1316 = vmatpush1.bf16.msra.mxu0 0
        %1317 = vmatprep.mubr.bf16.mxu0 0
        %1318 = vmatmul.mubr.bf16.gmra.mrb[0].mxu0 %v1267
        %v1319 = vpop.f32.mrb[0].mxu0
        %v1320 = vadd.f32 0.0, %v1319
        %v1321 = vpop.f32.mrb[0].mxu0
        %v1322 = vpop.f32.mrb[0].mxu0
        %v1323 = vadd.f32 0.0, %v1322
        %v1324 = vpop.f32.mrb[0].mxu0
        %1325 = vmatprep.mubr.bf16.mxu0 0
        %1326 = vmatmul.mubr.bf16.gmra.mrb[0].mxu0 %v1270
        %v1327 = vpop.f32.mrb[0].mxu0
        %v1328 = vadd.f32 0.0, %v1327
        %v1329 = vpop.f32.mrb[0].mxu0
        %v1330 = vpop.f32.mrb[0].mxu0
        %v1331 = vadd.f32 0.0, %v1330
        %v1332 = vpop.f32.mrb[0].mxu0
        %1333 = vmatprep.mubr.bf16.mxu0 0
        %1334 = vmatmul.mubr.bf16.gmra.mrb[0].mxu0 %v1273
        %v1335 = vpop.f32.mrb[0].mxu0
        %v1336 = vadd.f32 0.0, %v1335
        %v1337 = vpop.f32.mrb[0].mxu0
        %v1338 = vpop.f32.mrb[0].mxu0
        %v1339 = vadd.f32 0.0, %v1338
        %v1340 = vpop.f32.mrb[0].mxu0
        %1341 = vmatprep.mubr.bf16.mxu0 0
        %1342 = vmatmul.mubr.bf16.gmra.mrb[0].mxu0 %v1276
        %v1343 = vpop.f32.mrb[0].mxu0
        %v1344 = vadd.f32 0.0, %v1343
        %v1345 = vpop.f32.mrb[0].mxu0
        %v1346 = vpop.f32.mrb[0].mxu0
        %v1347 = vadd.f32 0.0, %v1346
        %v1348 = vpop.f32.mrb[0].mxu0
        %1349 = vmatprep.mubr.bf16.mxu0 0
        %1350 = vmatmul.mubr.bf16.gmra.mrb[0].mxu0 %v1279
        %v1351 = vpop.f32.mrb[0].mxu0
        %v1352 = vadd.f32 0.0, %v1351
        %v1353 = vpop.f32.mrb[0].mxu0
        %v1354 = vpop.f32.mrb[0].mxu0
        %v1355 = vadd.f32 0.0, %v1354
        %v1356 = vpop.f32.mrb[0].mxu0
        %1357 = vdwg.mxu0
        %v1359 = vunpack.c.l.b16 %v1210
        %v1360 = vpack.c.b16 %v1237, %v1359
        %vm1361 = vsmask.f32 5376
        %v1363 = vshrl.u32 %v1360, 16
        %v1365 = vrot.slane %v1363, 2
        %v1366 = vshll.u32 %v1360, 16
        %v1368 = vrot.slane %v1366, 3
        %v1369 = vor.u32 %v1365, %v1368
        %v1371 = vshrl.u32 %v1248, 16
        %v1373 = vrot.slane %v1371, 2
        %v1374 = vshll.u32 %v1248, 16
        %v1376 = vrot.slane %v1374, 3
        %v1377 = vor.u32 %v1373, %v1376
        %v1378 = vsel %vm1361, %v1369, %v1377
        %v1380 = vshrl.u32 %v1249, 16
        %v1382 = vrot.slane %v1380, 2
        %v1383 = vshll.u32 %v1249, 16
        %v1385 = vrot.slane %v1383, 3
        %v1386 = vor.u32 %v1382, %v1385
        %v1387 = vsel %vm1361, %v1377, %v1386
        %v1389 = vshrl.u32 %v1250, 16
        %v1391 = vrot.slane %v1389, 2
        %v1392 = vshll.u32 %v1250, 16
        %v1394 = vrot.slane %v1392, 3
        %v1395 = vor.u32 %v1391, %v1394
        %v1396 = vsel %vm1361, %v1386, %v1395
        %v1398 = vshrl.u32 %v1251, 16
        %v1400 = vrot.slane %v1398, 2
        %v1401 = vshll.u32 %v1251, 16
        %v1403 = vrot.slane %v1401, 3
        %v1404 = vor.u32 %v1400, %v1403
        %v1405 = vsel %vm1361, %v1395, %v1404
        %v1407 = vshrl.u32 %v1252, 16
        %v1409 = vrot.slane %v1407, 2
        %v1410 = vshll.u32 %v1252, 16
        %v1412 = vrot.slane %v1410, 3
        %v1413 = vor.u32 %v1409, %v1412
        %v1414 = vsel %vm1361, %v1404, %v1413
        %v1416 = vsel %vm1265, %v1378, 0
        %v1419 = vsel %vm1265, %v1387, 0
        %v1422 = vsel %vm1265, %v1396, 0
        %v1425 = vsel %vm1265, %v1405, 0
        %v1428 = vsel %vm1265, %v1414, 0
        %v1431 = vsel %vm1281, %v1221, 0
        %1433 = vmatprep.subr.bf16.mxu0 0
        %1434 = vmatpush1.bf16.msra.mxu0 %v1431
        %1435 = vmatprep.subr.bf16.mxu0 0
        %1436 = vmatpush1.bf16.msra.mxu0 0
        %1437 = vmatprep.subr.bf16.mxu0 0
        %1438 = vmatpush1.bf16.msra.mxu0 0
        %1439 = vmatprep.subr.bf16.mxu0 0
        %1440 = vmatpush1.bf16.msra.mxu0 0
        %1441 = vmatprep.subr.bf16.mxu0 0
        %1442 = vmatpush1.bf16.msra.mxu0 0
        %1443 = vmatprep.subr.bf16.mxu0 0
        %1444 = vmatpush1.bf16.msra.mxu0 0
        %1445 = vmatprep.subr.bf16.mxu0 0
        %1446 = vmatpush1.bf16.msra.mxu0 0
        %1447 = vmatprep.subr.bf16.mxu0 0
        %1448 = vmatpush1.bf16.msra.mxu0 0
        %1449 = vmatprep.subr.bf16.mxu0 0
        %1450 = vmatpush1.bf16.msra.mxu0 0
        %1451 = vmatprep.subr.bf16.mxu0 0
        %1452 = vmatpush1.bf16.msra.mxu0 0
        %1453 = vmatprep.subr.bf16.mxu0 0
        %1454 = vmatpush1.bf16.msra.mxu0 0
        %1455 = vmatprep.subr.bf16.mxu0 0
        %1456 = vmatpush1.bf16.msra.mxu0 0
        %1457 = vmatprep.subr.bf16.mxu0 0
        %1458 = vmatpush1.bf16.msra.mxu0 0
        %1459 = vmatprep.subr.bf16.mxu0 0
        %1460 = vmatpush1.bf16.msra.mxu0 0
        %1461 = vmatprep.subr.bf16.mxu0 0
        %1462 = vmatpush1.bf16.msra.mxu0 0
        %1463 = vmatprep.subr.bf16.mxu0 0
        %1464 = vmatpush1.bf16.msra.mxu0 0
        %1465 = vmatprep.mubr.bf16.mxu0 0
        %1466 = vmatmul.mubr.bf16.gmra.mrb[0].mxu0 %v1416
        %v1467 = vpop.f32.mrb[0].mxu0
        %v1468 = vadd.f32 %v1320, %v1467
        %v1469 = vpop.f32.mrb[0].mxu0
        %v1470 = vpop.f32.mrb[0].mxu0
        %v1471 = vadd.f32 %v1323, %v1470
        %v1472 = vpop.f32.mrb[0].mxu0
        %1473 = vmatprep.mubr.bf16.mxu0 0
        %1474 = vmatmul.mubr.bf16.gmra.mrb[0].mxu0 %v1419
        %v1475 = vpop.f32.mrb[0].mxu0
        %v1476 = vadd.f32 %v1328, %v1475
        %v1477 = vpop.f32.mrb[0].mxu0
        %v1478 = vpop.f32.mrb[0].mxu0
        %v1479 = vadd.f32 %v1331, %v1478
        %v1480 = vpop.f32.mrb[0].mxu0
        %1481 = vmatprep.mubr.bf16.mxu0 0
        %1482 = vmatmul.mubr.bf16.gmra.mrb[0].mxu0 %v1422
        %v1483 = vpop.f32.mrb[0].mxu0
        %v1484 = vadd.f32 %v1336, %v1483
        %v1485 = vpop.f32.mrb[0].mxu0
        %v1486 = vpop.f32.mrb[0].mxu0
        %v1487 = vadd.f32 %v1339, %v1486
        %v1488 = vpop.f32.mrb[0].mxu0
        %1489 = vmatprep.mubr.bf16.mxu0 0
        %1490 = vmatmul.mubr.bf16.gmra.mrb[0].mxu0 %v1425
        %v1491 = vpop.f32.mrb[0].mxu0
        %v1492 = vadd.f32 %v1344, %v1491
        %v1493 = vpop.f32.mrb[0].mxu0
        %v1494 = vpop.f32.mrb[0].mxu0
        %v1495 = vadd.f32 %v1347, %v1494
        %v1496 = vpop.f32.mrb[0].mxu0
        %1497 = vmatprep.mubr.bf16.mxu0 0
        %1498 = vmatmul.mubr.bf16.gmra.mrb[0].mxu0 %v1428
        %v1499 = vpop.f32.mrb[0].mxu0
        %v1500 = vadd.f32 %v1352, %v1499
        %v1501 = vpop.f32.mrb[0].mxu0
        %v1502 = vpop.f32.mrb[0].mxu0
        %v1503 = vadd.f32 %v1355, %v1502
        %v1504 = vpop.f32.mrb[0].mxu0
        %1505 = vdwg.mxu0
        %v1506 = vld [vmem:[#allocation2 + $0x28] sm:$0xf]
        %s1507 = scalar_lea.vmem [#allocation12], 8
        %v1508 = vld [vmem:[%s1507] sm:$0xf]
        %v1510 = vunpack.c.l.b16 %v1506
        %v1511 = vpack.c.b16 %v1510, %v1510
        %vm1512 = vsmask.f32 4352
        %v1514 = vshrl.u32 %v1247, 16
        %v1516 = vrot.slane %v1514, 3
        %v1517 = vshll.u32 %v1247, 16
        %v1519 = vrot.slane %v1517, 4
        %v1520 = vor.u32 %v1516, %v1519
        %v1521 = vrot.slane %v1371, 3
        %v1522 = vrot.slane %v1374, 4
        %v1523 = vor.u32 %v1521, %v1522
        %v1524 = vsel %vm1512, %v1520, %v1523
        %v1525 = vrot.slane %v1380, 3
        %v1526 = vrot.slane %v1383, 4
        %v1527 = vor.u32 %v1525, %v1526
        %v1528 = vsel %vm1512, %v1523, %v1527
        %v1529 = vrot.slane %v1389, 3
        %v1530 = vrot.slane %v1392, 4
        %v1531 = vor.u32 %v1529, %v1530
        %v1532 = vsel %vm1512, %v1527, %v1531
        %v1533 = vrot.slane %v1398, 3
        %v1534 = vrot.slane %v1401, 4
        %v1535 = vor.u32 %v1533, %v1534
        %v1536 = vsel %vm1512, %v1531, %v1535
        %v1538 = vshrl.u32 %v1511, 16
        %v1540 = vrot.slane %v1538, 3
        %v1541 = vshll.u32 %v1511, 16
        %v1543 = vrot.slane %v1541, 4
        %v1544 = vor.u32 %v1540, %v1543
        %v1545 = vsel %vm1512, %v1535, %v1544
        %v1547 = vsel %vm1265, %v1524, 0
        %v1550 = vsel %vm1265, %v1528, 0
        %v1553 = vsel %vm1265, %v1532, 0
        %v1556 = vsel %vm1265, %v1536, 0
        %v1559 = vsel %vm1265, %v1545, 0
        %v1562 = vsel %vm1281, %v1508, 0
        %1564 = vmatprep.subr.bf16.mxu0 0
        %1565 = vmatpush1.bf16.msra.mxu0 %v1562
        %1566 = vmatprep.subr.bf16.mxu0 0
        %1567 = vmatpush1.bf16.msra.mxu0 0
        %1568 = vmatprep.subr.bf16.mxu0 0
        %1569 = vmatpush1.bf16.msra.mxu0 0
        %1570 = vmatprep.subr.bf16.mxu0 0
        %1571 = vmatpush1.bf16.msra.mxu0 0
        %1572 = vmatprep.subr.bf16.mxu0 0
        %1573 = vmatpush1.bf16.msra.mxu0 0
        %1574 = vmatprep.subr.bf16.mxu0 0
        %1575 = vmatpush1.bf16.msra.mxu0 0
        %1576 = vmatprep.subr.bf16.mxu0 0
        %1577 = vmatpush1.bf16.msra.mxu0 0
        %1578 = vmatprep.subr.bf16.mxu0 0
        %1579 = vmatpush1.bf16.msra.mxu0 0
        %1580 = vmatprep.subr.bf16.mxu0 0
        %1581 = vmatpush1.bf16.msra.mxu0 0
        %1582 = vmatprep.subr.bf16.mxu0 0
        %1583 = vmatpush1.bf16.msra.mxu0 0
        %1584 = vmatprep.subr.bf16.mxu0 0
        %1585 = vmatpush1.bf16.msra.mxu0 0
        %1586 = vmatprep.subr.bf16.mxu0 0
        %1587 = vmatpush1.bf16.msra.mxu0 0
        %1588 = vmatprep.subr.bf16.mxu0 0
        %1589 = vmatpush1.bf16.msra.mxu0 0
        %1590 = vmatprep.subr.bf16.mxu0 0
        %1591 = vmatpush1.bf16.msra.mxu0 0
        %1592 = vmatprep.subr.bf16.mxu0 0
        %1593 = vmatpush1.bf16.msra.mxu0 0
        %1594 = vmatprep.subr.bf16.mxu0 0
        %1595 = vmatpush1.bf16.msra.mxu0 0
        %1596 = vmatprep.mubr.bf16.mxu0 0
        %1597 = vmatmul.mubr.bf16.gmra.mrb[0].mxu0 %v1547
        %v1598 = vpop.f32.mrb[0].mxu0
        %v1599 = vadd.f32 0.0, %v1598
        %v1600 = vpop.f32.mrb[0].mxu0
        %v1601 = vpop.f32.mrb[0].mxu0
        %v1602 = vadd.f32 0.0, %v1601
        %v1603 = vpop.f32.mrb[0].mxu0
        %1604 = vmatprep.mubr.bf16.mxu0 0
        %1605 = vmatmul.mubr.bf16.gmra.mrb[0].mxu0 %v1550
        %v1606 = vpop.f32.mrb[0].mxu0
        %v1607 = vadd.f32 0.0, %v1606
        %v1608 = vpop.f32.mrb[0].mxu0
        %v1609 = vpop.f32.mrb[0].mxu0
        %v1610 = vadd.f32 0.0, %v1609
        %v1611 = vpop.f32.mrb[0].mxu0
        %1612 = vmatprep.mubr.bf16.mxu0 0
        %1613 = vmatmul.mubr.bf16.gmra.mrb[0].mxu0 %v1553
        %v1614 = vpop.f32.mrb[0].mxu0
        %v1615 = vadd.f32 0.0, %v1614
        %v1616 = vpop.f32.mrb[0].mxu0
        %v1617 = vpop.f32.mrb[0].mxu0
        %v1618 = vadd.f32 0.0, %v1617
        %v1619 = vpop.f32.mrb[0].mxu0
        %1620 = vmatprep.mubr.bf16.mxu0 0
        %1621 = vmatmul.mubr.bf16.gmra.mrb[0].mxu0 %v1556
        %v1622 = vpop.f32.mrb[0].mxu0
        %v1623 = vadd.f32 0.0, %v1622
        %v1624 = vpop.f32.mrb[0].mxu0
        %v1625 = vpop.f32.mrb[0].mxu0
        %v1626 = vadd.f32 0.0, %v1625
        %v1627 = vpop.f32.mrb[0].mxu0
        %1628 = vmatprep.mubr.bf16.mxu0 0
        %1629 = vmatmul.mubr.bf16.gmra.mrb[0].mxu0 %v1559
        %v1630 = vpop.f32.mrb[0].mxu0
        %v1631 = vadd.f32 0.0, %v1630
        %v1632 = vpop.f32.mrb[0].mxu0
        %v1633 = vpop.f32.mrb[0].mxu0
        %v1634 = vadd.f32 0.0, %v1633
        %v1635 = vpop.f32.mrb[0].mxu0
        %1636 = vdwg.mxu0
        %v1637 = vadd.f32 %v1468, %v1599
        %v1638 = vadd.f32 %v1471, %v1602
        %v1639 = vadd.f32 %v1476, %v1607
        %v1640 = vadd.f32 %v1479, %v1610
        %v1641 = vadd.f32 %v1484, %v1615
        %v1642 = vadd.f32 %v1487, %v1618
        %v1643 = vadd.f32 %v1492, %v1623
        %v1644 = vadd.f32 %v1495, %v1626
        %v1645 = vadd.f32 %v1500, %v1631
        %v1646 = vadd.f32 %v1503, %v1634
        %v1647 = vld [vmem:[#allocation2 + $0x4] sm:$0x8]
        %v1648 = vld [vmem:[#allocation2 + $0x8] sm:$0xf]
        %v1649 = vld [vmem:[#allocation2 + $0xc] sm:$0xf]
        %v1650 = vld [vmem:[#allocation2 + $0x10] sm:$0xf]
        %v1651 = vld [vmem:[#allocation2 + $0x14] sm:$0xf]
        %v1652 = vld [vmem:[#allocation2 + $0x18] sm:$0xf]
        %v1653 = vld [vmem:[#allocation2 + $0x1c] sm:$0xf]
        %v1654 = vld [vmem:[#allocation2 + $0x20] sm:$0xf]
        %v1655 = vld [vmem:[#allocation2 + $0x24] sm:$0xf]
        %v1656 = vld [vmem:[#allocation2 + $0x28] sm:$0xf]
        %v1657 = vld [vmem:[#allocation2 + $0x2c] sm:$0xf]
        %s1658 = scalar_lea.vmem [#allocation12], 12
        %v1659 = vld [vmem:[%s1658] sm:$0xf]
        %v1671 = vunpack.c.l.b16 %v1647
        %v1672 = vunpack.c.l.b16 %v1648
        %v1673 = vunpack.c.l.b16 %v1649
        %v1674 = vunpack.c.l.b16 %v1650
        %v1675 = vunpack.c.l.b16 %v1651
        %v1676 = vunpack.c.l.b16 %v1652
        %v1677 = vunpack.c.l.b16 %v1653
        %v1678 = vunpack.c.l.b16 %v1654
        %v1679 = vunpack.c.l.b16 %v1655
        %v1680 = vunpack.c.l.b16 %v1656
        %v1681 = vunpack.c.l.b16 %v1657
        %v1682 = vpack.c.b16 %v1672, %v1671
        %v1683 = vpack.c.b16 %v1674, %v1673
        %v1684 = vpack.c.b16 %v1676, %v1675
        %v1685 = vpack.c.b16 %v1678, %v1677
        %v1686 = vpack.c.b16 %v1680, %v1679
        %v1687 = vpack.c.b16 %v1681, %v1681
        %v1689 = vshrl.u32 %v1682, 16
        %v1691 = vrot.slane %v1689, 3
        %v1692 = vshll.u32 %v1682, 16
        %v1694 = vrot.slane %v1692, 4
        %v1695 = vor.u32 %v1691, %v1694
        %v1697 = vshrl.u32 %v1683, 16
        %v1699 = vrot.slane %v1697, 3
        %v1700 = vshll.u32 %v1683, 16
        %v1702 = vrot.slane %v1700, 4
        %v1703 = vor.u32 %v1699, %v1702
        %v1704 = vsel %vm1512, %v1695, %v1703
        %v1706 = vshrl.u32 %v1684, 16
        %v1708 = vrot.slane %v1706, 3
        %v1709 = vshll.u32 %v1684, 16
        %v1711 = vrot.slane %v1709, 4
        %v1712 = vor.u32 %v1708, %v1711
        %v1713 = vsel %vm1512, %v1703, %v1712
        %v1715 = vshrl.u32 %v1685, 16
        %v1717 = vrot.slane %v1715, 3
        %v1718 = vshll.u32 %v1685, 16
        %v1720 = vrot.slane %v1718, 4
        %v1721 = vor.u32 %v1717, %v1720
        %v1722 = vsel %vm1512, %v1712, %v1721
        %v1724 = vshrl.u32 %v1686, 16
        %v1726 = vrot.slane %v1724, 3
        %v1727 = vshll.u32 %v1686, 16
        %v1729 = vrot.slane %v1727, 4
        %v1730 = vor.u32 %v1726, %v1729
        %v1731 = vsel %vm1512, %v1721, %v1730
        %v1733 = vshrl.u32 %v1687, 16
        %v1735 = vrot.slane %v1733, 3
        %v1736 = vshll.u32 %v1687, 16
        %v1738 = vrot.slane %v1736, 4
        %v1739 = vor.u32 %v1735, %v1738
        %v1740 = vsel %vm1512, %v1730, %v1739
        %v1742 = vsel %vm1265, %v1704, 0
        %v1745 = vsel %vm1265, %v1713, 0
        %v1748 = vsel %vm1265, %v1722, 0
        %v1751 = vsel %vm1265, %v1731, 0
        %v1754 = vsel %vm1265, %v1740, 0
        %v1757 = vsel %vm1281, %v1659, 0
        %1759 = vmatprep.subr.bf16.mxu0 0
        %1760 = vmatpush1.bf16.msra.mxu0 %v1757
        %1761 = vmatprep.subr.bf16.mxu0 0
        %1762 = vmatpush1.bf16.msra.mxu0 0
        %1763 = vmatprep.subr.bf16.mxu0 0
        %1764 = vmatpush1.bf16.msra.mxu0 0
        %1765 = vmatprep.subr.bf16.mxu0 0
        %1766 = vmatpush1.bf16.msra.mxu0 0
        %1767 = vmatprep.subr.bf16.mxu0 0
        %1768 = vmatpush1.bf16.msra.mxu0 0
        %1769 = vmatprep.subr.bf16.mxu0 0
        %1770 = vmatpush1.bf16.msra.mxu0 0
        %1771 = vmatprep.subr.bf16.mxu0 0
        %1772 = vmatpush1.bf16.msra.mxu0 0
        %1773 = vmatprep.subr.bf16.mxu0 0
        %1774 = vmatpush1.bf16.msra.mxu0 0
        %1775 = vmatprep.subr.bf16.mxu0 0
        %1776 = vmatpush1.bf16.msra.mxu0 0
        %1777 = vmatprep.subr.bf16.mxu0 0
        %1778 = vmatpush1.bf16.msra.mxu0 0
        %1779 = vmatprep.subr.bf16.mxu0 0
        %1780 = vmatpush1.bf16.msra.mxu0 0
        %1781 = vmatprep.subr.bf16.mxu0 0
        %1782 = vmatpush1.bf16.msra.mxu0 0
        %1783 = vmatprep.subr.bf16.mxu0 0
        %1784 = vmatpush1.bf16.msra.mxu0 0
        %1785 = vmatprep.subr.bf16.mxu0 0
        %1786 = vmatpush1.bf16.msra.mxu0 0
        %1787 = vmatprep.subr.bf16.mxu0 0
        %1788 = vmatpush1.bf16.msra.mxu0 0
        %1789 = vmatprep.subr.bf16.mxu0 0
        %1790 = vmatpush1.bf16.msra.mxu0 0
        %1791 = vmatprep.mubr.bf16.mxu0 0
        %1792 = vmatmul.mubr.bf16.gmra.mrb[0].mxu0 %v1742
        %v1793 = vpop.f32.mrb[0].mxu0
        %v1794 = vadd.f32 0.0, %v1793
        %v1795 = vpop.f32.mrb[0].mxu0
        %v1796 = vpop.f32.mrb[0].mxu0
        %v1797 = vadd.f32 0.0, %v1796
        %v1798 = vpop.f32.mrb[0].mxu0
        %1799 = vmatprep.mubr.bf16.mxu0 0
        %1800 = vmatmul.mubr.bf16.gmra.mrb[0].mxu0 %v1745
        %v1801 = vpop.f32.mrb[0].mxu0
        %v1802 = vadd.f32 0.0, %v1801
        %v1803 = vpop.f32.mrb[0].mxu0
        %v1804 = vpop.f32.mrb[0].mxu0
        %v1805 = vadd.f32 0.0, %v1804
        %v1806 = vpop.f32.mrb[0].mxu0
        %1807 = vmatprep.mubr.bf16.mxu0 0
        %1808 = vmatmul.mubr.bf16.gmra.mrb[0].mxu0 %v1748
        %v1809 = vpop.f32.mrb[0].mxu0
        %v1810 = vadd.f32 0.0, %v1809
        %v1811 = vpop.f32.mrb[0].mxu0
        %v1812 = vpop.f32.mrb[0].mxu0
        %v1813 = vadd.f32 0.0, %v1812
        %v1814 = vpop.f32.mrb[0].mxu0
        %1815 = vmatprep.mubr.bf16.mxu0 0
        %1816 = vmatmul.mubr.bf16.gmra.mrb[0].mxu0 %v1751
        %v1817 = vpop.f32.mrb[0].mxu0
        %v1818 = vadd.f32 0.0, %v1817
        %v1819 = vpop.f32.mrb[0].mxu0
        %v1820 = vpop.f32.mrb[0].mxu0
        %v1821 = vadd.f32 0.0, %v1820
        %v1822 = vpop.f32.mrb[0].mxu0
        %1823 = vmatprep.mubr.bf16.mxu0 0
        %1824 = vmatmul.mubr.bf16.gmra.mrb[0].mxu0 %v1754
        %v1825 = vpop.f32.mrb[0].mxu0
        %v1826 = vadd.f32 0.0, %v1825
        %v1827 = vpop.f32.mrb[0].mxu0
        %v1828 = vpop.f32.mrb[0].mxu0
        %v1829 = vadd.f32 0.0, %v1828
        %v1830 = vpop.f32.mrb[0].mxu0
        %1831 = vdwg.mxu0
        %v1832 = vadd.f32 %v1637, %v1794
        %v1833 = vadd.f32 %v1638, %v1797
        %v1834 = vadd.f32 %v1639, %v1802
        %v1835 = vadd.f32 %v1640, %v1805
        %v1836 = vadd.f32 %v1641, %v1810
        %v1837 = vadd.f32 %v1642, %v1813
        %v1838 = vadd.f32 %v1643, %v1818
        %v1839 = vadd.f32 %v1644, %v1821
        %v1840 = vadd.f32 %v1645, %v1826
        %v1841 = vadd.f32 %v1646, %v1829
        %s1842 = scalar_lea.vmem [#allocation12], 16
        %v1843 = vld [vmem:[%s1842] sm:$0xf]
        %v1844 = vpack.c.b16 %v1673, %v1672
        %v1845 = vpack.c.b16 %v1675, %v1674
        %v1846 = vpack.c.b16 %v1677, %v1676
        %v1847 = vpack.c.b16 %v1679, %v1678
        %v1848 = vpack.c.b16 %v1681, %v1680
        %v1850 = vsel %vm1265, %v1844, 0
        %v1853 = vsel %vm1265, %v1845, 0
        %v1856 = vsel %vm1265, %v1846, 0
        %v1859 = vsel %vm1265, %v1847, 0
        %v1862 = vsel %vm1265, %v1848, 0
        %v1865 = vsel %vm1281, %v1843, 0
        %1867 = vmatprep.subr.bf16.mxu0 0
        %1868 = vmatpush1.bf16.msra.mxu0 %v1865
        %1869 = vmatprep.subr.bf16.mxu0 0
        %1870 = vmatpush1.bf16.msra.mxu0 0
        %1871 = vmatprep.subr.bf16.mxu0 0
        %1872 = vmatpush1.bf16.msra.mxu0 0
        %1873 = vmatprep.subr.bf16.mxu0 0
        %1874 = vmatpush1.bf16.msra.mxu0 0
        %1875 = vmatprep.subr.bf16.mxu0 0
        %1876 = vmatpush1.bf16.msra.mxu0 0
        %1877 = vmatprep.subr.bf16.mxu0 0
        %1878 = vmatpush1.bf16.msra.mxu0 0
        %1879 = vmatprep.subr.bf16.mxu0 0
        %1880 = vmatpush1.bf16.msra.mxu0 0
        %1881 = vmatprep.subr.bf16.mxu0 0
        %1882 = vmatpush1.bf16.msra.mxu0 0
        %1883 = vmatprep.subr.bf16.mxu0 0
        %1884 = vmatpush1.bf16.msra.mxu0 0
        %1885 = vmatprep.subr.bf16.mxu0 0
        %1886 = vmatpush1.bf16.msra.mxu0 0
        %1887 = vmatprep.subr.bf16.mxu0 0
        %1888 = vmatpush1.bf16.msra.mxu0 0
        %1889 = vmatprep.subr.bf16.mxu0 0
        %1890 = vmatpush1.bf16.msra.mxu0 0
        %1891 = vmatprep.subr.bf16.mxu0 0
        %1892 = vmatpush1.bf16.msra.mxu0 0
        %1893 = vmatprep.subr.bf16.mxu0 0
        %1894 = vmatpush1.bf16.msra.mxu0 0
        %1895 = vmatprep.subr.bf16.mxu0 0
        %1896 = vmatpush1.bf16.msra.mxu0 0
        %1897 = vmatprep.subr.bf16.mxu0 0
        %1898 = vmatpush1.bf16.msra.mxu0 0
        %1899 = vmatprep.mubr.bf16.mxu0 0
        %1900 = vmatmul.mubr.bf16.gmra.mrb[0].mxu0 %v1850
        %v1901 = vpop.f32.mrb[0].mxu0
        %v1902 = vadd.f32 0.0, %v1901
        %v1903 = vpop.f32.mrb[0].mxu0
        %v1904 = vpop.f32.mrb[0].mxu0
        %v1905 = vadd.f32 0.0, %v1904
        %v1906 = vpop.f32.mrb[0].mxu0
        %1907 = vmatprep.mubr.bf16.mxu0 0
        %1908 = vmatmul.mubr.bf16.gmra.mrb[0].mxu0 %v1853
        %v1909 = vpop.f32.mrb[0].mxu0
        %v1910 = vadd.f32 0.0, %v1909
        %v1911 = vpop.f32.mrb[0].mxu0
        %v1912 = vpop.f32.mrb[0].mxu0
        %v1913 = vadd.f32 0.0, %v1912
        %v1914 = vpop.f32.mrb[0].mxu0
        %1915 = vmatprep.mubr.bf16.mxu0 0
        %1916 = vmatmul.mubr.bf16.gmra.mrb[0].mxu0 %v1856
        %v1917 = vpop.f32.mrb[0].mxu0
        %v1918 = vadd.f32 0.0, %v1917
        %v1919 = vpop.f32.mrb[0].mxu0
        %v1920 = vpop.f32.mrb[0].mxu0
        %v1921 = vadd.f32 0.0, %v1920
        %v1922 = vpop.f32.mrb[0].mxu0
        %1923 = vmatprep.mubr.bf16.mxu0 0
        %1924 = vmatmul.mubr.bf16.gmra.mrb[0].mxu0 %v1859
        %v1925 = vpop.f32.mrb[0].mxu0
        %v1926 = vadd.f32 0.0, %v1925
        %v1927 = vpop.f32.mrb[0].mxu0
        %v1928 = vpop.f32.mrb[0].mxu0
        %v1929 = vadd.f32 0.0, %v1928
        %v1930 = vpop.f32.mrb[0].mxu0
        %1931 = vmatprep.mubr.bf16.mxu0 0
        %1932 = vmatmul.mubr.bf16.gmra.mrb[0].mxu0 %v1862
        %v1933 = vpop.f32.mrb[0].mxu0
        %v1934 = vadd.f32 0.0, %v1933
        %v1935 = vpop.f32.mrb[0].mxu0
        %v1936 = vpop.f32.mrb[0].mxu0
        %v1937 = vadd.f32 0.0, %v1936
        %v1938 = vpop.f32.mrb[0].mxu0
        %1939 = vdwg.mxu0
        %v1940 = vadd.f32 %v1832, %v1902
        %v1941 = vadd.f32 %v1833, %v1905
        %v1942 = vadd.f32 %v1834, %v1910
        %v1943 = vadd.f32 %v1835, %v1913
        %v1944 = vadd.f32 %v1836, %v1918
        %v1945 = vadd.f32 %v1837, %v1921
        %v1946 = vadd.f32 %v1838, %v1926
        %v1947 = vadd.f32 %v1839, %v1929
        %v1948 = vadd.f32 %v1840, %v1934
        %v1949 = vadd.f32 %v1841, %v1937
        %v1950 = vld [vmem:[#allocation2 + $0x8] sm:$0xf]
        %v1951 = vld [vmem:[#allocation2 + $0xc] sm:$0xf]
        %v1952 = vld [vmem:[#allocation2 + $0x10] sm:$0xf]
        %v1953 = vld [vmem:[#allocation2 + $0x14] sm:$0xf]
        %v1954 = vld [vmem:[#allocation2 + $0x18] sm:$0xf]
        %v1955 = vld [vmem:[#allocation2 + $0x1c] sm:$0xf]
        %v1956 = vld [vmem:[#allocation2 + $0x20] sm:$0xf]
        %v1957 = vld [vmem:[#allocation2 + $0x24] sm:$0xf]
        %v1958 = vld [vmem:[#allocation2 + $0x28] sm:$0xf]
        %v1959 = vld [vmem:[#allocation2 + $0x2c] sm:$0xf]
        %v1960 = vld [vmem:[#allocation2 + $0x30] sm:$0x1]
        %s1961 = scalar_lea.vmem [#allocation12], 20
        %v1962 = vld [vmem:[%s1961] sm:$0xf]
        %v1974 = vunpack.c.l.b16 %v1950
        %v1975 = vunpack.c.l.b16 %v1951
        %v1976 = vunpack.c.l.b16 %v1952
        %v1977 = vunpack.c.l.b16 %v1953
        %v1978 = vunpack.c.l.b16 %v1954
        %v1979 = vunpack.c.l.b16 %v1955
        %v1980 = vunpack.c.l.b16 %v1956
        %v1981 = vunpack.c.l.b16 %v1957
        %v1982 = vunpack.c.l.b16 %v1958
        %v1983 = vunpack.c.l.b16 %v1959
        %v1984 = vunpack.c.l.b16 %v1960
        %v1985 = vpack.c.b16 %v1975, %v1974
        %v1986 = vpack.c.b16 %v1977, %v1976
        %v1987 = vpack.c.b16 %v1979, %v1978
        %v1988 = vpack.c.b16 %v1981, %v1980
        %v1989 = vpack.c.b16 %v1983, %v1982
        %v1990 = vpack.c.b16 %v1984, %v1984
        %v1992 = vshrl.u32 %v1985, 16
        %v1994 = vshll.u32 %v1985, 16
        %v1996 = vrot.slane %v1994, 1
        %v1997 = vor.u32 %v1992, %v1996
        %v1999 = vshll.u32 %v1986, 16
        %v2001 = vrot.slane %v1999, 1
        %v2002 = vsel %vm473, %v1997, %v2001
        %v2003 = vshrl.u32 %v1986, 16
        %v2005 = vor.u32 %v2003, %v2001
        %v2007 = vshll.u32 %v1987, 16
        %v2009 = vrot.slane %v2007, 1
        %v2010 = vsel %vm473, %v2005, %v2009
        %v2011 = vshrl.u32 %v1987, 16
        %v2013 = vor.u32 %v2011, %v2009
        %v2015 = vshll.u32 %v1988, 16
        %v2017 = vrot.slane %v2015, 1
        %v2018 = vsel %vm473, %v2013, %v2017
        %v2019 = vshrl.u32 %v1988, 16
        %v2021 = vor.u32 %v2019, %v2017
        %v2023 = vshll.u32 %v1989, 16
        %v2025 = vrot.slane %v2023, 1
        %v2026 = vsel %vm473, %v2021, %v2025
        %v2027 = vshrl.u32 %v1989, 16
        %v2029 = vor.u32 %v2027, %v2025
        %v2031 = vshll.u32 %v1990, 16
        %v2033 = vrot.slane %v2031, 1
        %v2034 = vsel %vm473, %v2029, %v2033
        %v2036 = vsel %vm1265, %v2002, 0
        %v2039 = vsel %vm1265, %v2010, 0
        %v2042 = vsel %vm1265, %v2018, 0
        %v2045 = vsel %vm1265, %v2026, 0
        %v2048 = vsel %vm1265, %v2034, 0
        %v2051 = vsel %vm1281, %v1962, 0
        %2053 = vmatprep.subr.bf16.mxu0 0
        %2054 = vmatpush1.bf16.msra.mxu0 %v2051
        %2055 = vmatprep.subr.bf16.mxu0 0
        %2056 = vmatpush1.bf16.msra.mxu0 0
        %2057 = vmatprep.subr.bf16.mxu0 0
        %2058 = vmatpush1.bf16.msra.mxu0 0
        %2059 = vmatprep.subr.bf16.mxu0 0
        %2060 = vmatpush1.bf16.msra.mxu0 0
        %2061 = vmatprep.subr.bf16.mxu0 0
        %2062 = vmatpush1.bf16.msra.mxu0 0
        %2063 = vmatprep.subr.bf16.mxu0 0
        %2064 = vmatpush1.bf16.msra.mxu0 0
        %2065 = vmatprep.subr.bf16.mxu0 0
        %2066 = vmatpush1.bf16.msra.mxu0 0
        %2067 = vmatprep.subr.bf16.mxu0 0
        %2068 = vmatpush1.bf16.msra.mxu0 0
        %2069 = vmatprep.subr.bf16.mxu0 0
        %2070 = vmatpush1.bf16.msra.mxu0 0
        %2071 = vmatprep.subr.bf16.mxu0 0
        %2072 = vmatpush1.bf16.msra.mxu0 0
        %2073 = vmatprep.subr.bf16.mxu0 0
        %2074 = vmatpush1.bf16.msra.mxu0 0
        %2075 = vmatprep.subr.bf16.mxu0 0
        %2076 = vmatpush1.bf16.msra.mxu0 0
        %2077 = vmatprep.subr.bf16.mxu0 0
        %2078 = vmatpush1.bf16.msra.mxu0 0
        %2079 = vmatprep.subr.bf16.mxu0 0
        %2080 = vmatpush1.bf16.msra.mxu0 0
        %2081 = vmatprep.subr.bf16.mxu0 0
        %2082 = vmatpush1.bf16.msra.mxu0 0
        %2083 = vmatprep.subr.bf16.mxu0 0
        %2084 = vmatpush1.bf16.msra.mxu0 0
        %2085 = vmatprep.mubr.bf16.mxu0 0
        %2086 = vmatmul.mubr.bf16.gmra.mrb[0].mxu0 %v2036
        %v2087 = vpop.f32.mrb[0].mxu0
        %v2088 = vadd.f32 0.0, %v2087
        %v2089 = vpop.f32.mrb[0].mxu0
        %v2090 = vpop.f32.mrb[0].mxu0
        %v2091 = vadd.f32 0.0, %v2090
        %v2092 = vpop.f32.mrb[0].mxu0
        %2093 = vmatprep.mubr.bf16.mxu0 0
        %2094 = vmatmul.mubr.bf16.gmra.mrb[0].mxu0 %v2039
        %v2095 = vpop.f32.mrb[0].mxu0
        %v2096 = vadd.f32 0.0, %v2095
        %v2097 = vpop.f32.mrb[0].mxu0
        %v2098 = vpop.f32.mrb[0].mxu0
        %v2099 = vadd.f32 0.0, %v2098
        %v2100 = vpop.f32.mrb[0].mxu0
        %2101 = vmatprep.mubr.bf16.mxu0 0
        %2102 = vmatmul.mubr.bf16.gmra.mrb[0].mxu0 %v2042
        %v2103 = vpop.f32.mrb[0].mxu0
        %v2104 = vadd.f32 0.0, %v2103
        %v2105 = vpop.f32.mrb[0].mxu0
        %v2106 = vpop.f32.mrb[0].mxu0
        %v2107 = vadd.f32 0.0, %v2106
        %v2108 = vpop.f32.mrb[0].mxu0
        %2109 = vmatprep.mubr.bf16.mxu0 0
        %2110 = vmatmul.mubr.bf16.gmra.mrb[0].mxu0 %v2045
        %v2111 = vpop.f32.mrb[0].mxu0
        %v2112 = vadd.f32 0.0, %v2111
        %v2113 = vpop.f32.mrb[0].mxu0
        %v2114 = vpop.f32.mrb[0].mxu0
        %v2115 = vadd.f32 0.0, %v2114
        %v2116 = vpop.f32.mrb[0].mxu0
        %2117 = vmatprep.mubr.bf16.mxu0 0
        %2118 = vmatmul.mubr.bf16.gmra.mrb[0].mxu0 %v2048
        %v2119 = vpop.f32.mrb[0].mxu0
        %v2120 = vadd.f32 0.0, %v2119
        %v2121 = vpop.f32.mrb[0].mxu0
        %v2122 = vpop.f32.mrb[0].mxu0
        %v2123 = vadd.f32 0.0, %v2122
        %v2124 = vpop.f32.mrb[0].mxu0
        %2125 = vdwg.mxu0
        %v2126 = vadd.f32 %v1940, %v2088
        %v2127 = vadd.f32 %v1941, %v2091
        %v2128 = vadd.f32 %v1942, %v2096
        %v2129 = vadd.f32 %v1943, %v2099
        %v2130 = vadd.f32 %v1944, %v2104
        %v2131 = vadd.f32 %v1945, %v2107
        %v2132 = vadd.f32 %v1946, %v2112
        %v2133 = vadd.f32 %v1947, %v2115
        %v2134 = vadd.f32 %v1948, %v2120
        %v2135 = vadd.f32 %v1949, %v2123
        %v2136 = vld [vmem:[#allocation2 + $0xc] sm:$0xf]
        %v2137 = vld [vmem:[#allocation2 + $0x10] sm:$0xf]
        %v2138 = vld [vmem:[#allocation2 + $0x14] sm:$0xf]
        %v2139 = vld [vmem:[#allocation2 + $0x18] sm:$0xf]
        %v2140 = vld [vmem:[#allocation2 + $0x1c] sm:$0xf]
        %v2141 = vld [vmem:[#allocation2 + $0x20] sm:$0xf]
        %v2142 = vld [vmem:[#allocation2 + $0x24] sm:$0xf]
        %v2143 = vld [vmem:[#allocation2 + $0x28] sm:$0xf]
        %v2144 = vld [vmem:[#allocation2 + $0x2c] sm:$0xf]
        %v2145 = vld [vmem:[#allocation2 + $0x30] sm:$0xf]
        %v2146 = vld [vmem:[#allocation2 + $0x34] sm:$0x1]
        %s2147 = scalar_lea.vmem [#allocation12], 24
        %v2148 = vld [vmem:[%s2147] sm:$0xf]
        %v2160 = vunpack.c.l.b16 %v2136
        %v2161 = vunpack.c.l.b16 %v2137
        %v2162 = vunpack.c.l.b16 %v2138
        %v2163 = vunpack.c.l.b16 %v2139
        %v2164 = vunpack.c.l.b16 %v2140
        %v2165 = vunpack.c.l.b16 %v2141
        %v2166 = vunpack.c.l.b16 %v2142
        %v2167 = vunpack.c.l.b16 %v2143
        %v2168 = vunpack.c.l.b16 %v2144
        %v2169 = vunpack.c.l.b16 %v2145
        %v2170 = vunpack.c.l.b16 %v2146
        %v2171 = vpack.c.b16 %v2161, %v2160
        %v2172 = vpack.c.b16 %v2163, %v2162
        %v2173 = vpack.c.b16 %v2165, %v2164
        %v2174 = vpack.c.b16 %v2167, %v2166
        %v2175 = vpack.c.b16 %v2169, %v2168
        %v2176 = vpack.c.b16 %v2170, %v2170
        %v2178 = vshrl.u32 %v2171, 16
        %v2180 = vshll.u32 %v2171, 16
        %v2182 = vrot.slane %v2180, 1
        %v2183 = vor.u32 %v2178, %v2182
        %v2185 = vshll.u32 %v2172, 16
        %v2187 = vrot.slane %v2185, 1
        %v2188 = vsel %vm473, %v2183, %v2187
        %v2189 = vshrl.u32 %v2172, 16
        %v2191 = vor.u32 %v2189, %v2187
        %v2193 = vshll.u32 %v2173, 16
        %v2195 = vrot.slane %v2193, 1
        %v2196 = vsel %vm473, %v2191, %v2195
        %v2197 = vshrl.u32 %v2173, 16
        %v2199 = vor.u32 %v2197, %v2195
        %v2201 = vshll.u32 %v2174, 16
        %v2203 = vrot.slane %v2201, 1
        %v2204 = vsel %vm473, %v2199, %v2203
        %v2205 = vshrl.u32 %v2174, 16
        %v2207 = vor.u32 %v2205, %v2203
        %v2209 = vshll.u32 %v2175, 16
        %v2211 = vrot.slane %v2209, 1
        %v2212 = vsel %vm473, %v2207, %v2211
        %v2213 = vshrl.u32 %v2175, 16
        %v2215 = vor.u32 %v2213, %v2211
        %v2217 = vshll.u32 %v2176, 16
        %v2219 = vrot.slane %v2217, 1
        %v2220 = vsel %vm473, %v2215, %v2219
        %v2222 = vsel %vm1265, %v2188, 0
        %v2225 = vsel %vm1265, %v2196, 0
        %v2228 = vsel %vm1265, %v2204, 0
        %v2231 = vsel %vm1265, %v2212, 0
        %v2234 = vsel %vm1265, %v2220, 0
        %v2237 = vsel %vm1281, %v2148, 0
        %2239 = vmatprep.subr.bf16.mxu0 0
        %2240 = vmatpush1.bf16.msra.mxu0 %v2237
        %2241 = vmatprep.subr.bf16.mxu0 0
        %2242 = vmatpush1.bf16.msra.mxu0 0
        %2243 = vmatprep.subr.bf16.mxu0 0
        %2244 = vmatpush1.bf16.msra.mxu0 0
        %2245 = vmatprep.subr.bf16.mxu0 0
        %2246 = vmatpush1.bf16.msra.mxu0 0
        %2247 = vmatprep.subr.bf16.mxu0 0
        %2248 = vmatpush1.bf16.msra.mxu0 0
        %2249 = vmatprep.subr.bf16.mxu0 0
        %2250 = vmatpush1.bf16.msra.mxu0 0
        %2251 = vmatprep.subr.bf16.mxu0 0
        %2252 = vmatpush1.bf16.msra.mxu0 0
        %2253 = vmatprep.subr.bf16.mxu0 0
        %2254 = vmatpush1.bf16.msra.mxu0 0
        %2255 = vmatprep.subr.bf16.mxu0 0
        %2256 = vmatpush1.bf16.msra.mxu0 0
        %2257 = vmatprep.subr.bf16.mxu0 0
        %2258 = vmatpush1.bf16.msra.mxu0 0
        %2259 = vmatprep.subr.bf16.mxu0 0
        %2260 = vmatpush1.bf16.msra.mxu0 0
        %2261 = vmatprep.subr.bf16.mxu0 0
        %2262 = vmatpush1.bf16.msra.mxu0 0
        %2263 = vmatprep.subr.bf16.mxu0 0
        %2264 = vmatpush1.bf16.msra.mxu0 0
        %2265 = vmatprep.subr.bf16.mxu0 0
        %2266 = vmatpush1.bf16.msra.mxu0 0
        %2267 = vmatprep.subr.bf16.mxu0 0
        %2268 = vmatpush1.bf16.msra.mxu0 0
        %2269 = vmatprep.subr.bf16.mxu0 0
        %2270 = vmatpush1.bf16.msra.mxu0 0
        %2271 = vmatprep.mubr.bf16.mxu0 0
        %2272 = vmatmul.mubr.bf16.gmra.mrb[0].mxu0 %v2222
        %v2273 = vpop.f32.mrb[0].mxu0
        %v2274 = vadd.f32 0.0, %v2273
        %v2275 = vpop.f32.mrb[0].mxu0
        %v2276 = vpop.f32.mrb[0].mxu0
        %v2277 = vadd.f32 0.0, %v2276
        %v2278 = vpop.f32.mrb[0].mxu0
        %2279 = vmatprep.mubr.bf16.mxu0 0
        %2280 = vmatmul.mubr.bf16.gmra.mrb[0].mxu0 %v2225
        %v2281 = vpop.f32.mrb[0].mxu0
        %v2282 = vadd.f32 0.0, %v2281
        %v2283 = vpop.f32.mrb[0].mxu0
        %v2284 = vpop.f32.mrb[0].mxu0
        %v2285 = vadd.f32 0.0, %v2284
        %v2286 = vpop.f32.mrb[0].mxu0
        %2287 = vmatprep.mubr.bf16.mxu0 0
        %2288 = vmatmul.mubr.bf16.gmra.mrb[0].mxu0 %v2228
        %v2289 = vpop.f32.mrb[0].mxu0
        %v2290 = vadd.f32 0.0, %v2289
        %v2291 = vpop.f32.mrb[0].mxu0
        %v2292 = vpop.f32.mrb[0].mxu0
        %v2293 = vadd.f32 0.0, %v2292
        %v2294 = vpop.f32.mrb[0].mxu0
        %2295 = vmatprep.mubr.bf16.mxu0 0
        %2296 = vmatmul.mubr.bf16.gmra.mrb[0].mxu0 %v2231
        %v2297 = vpop.f32.mrb[0].mxu0
        %v2298 = vadd.f32 0.0, %v2297
        %v2299 = vpop.f32.mrb[0].mxu0
        %v2300 = vpop.f32.mrb[0].mxu0
        %v2301 = vadd.f32 0.0, %v2300
        %v2302 = vpop.f32.mrb[0].mxu0
        %2303 = vmatprep.mubr.bf16.mxu0 0
        %2304 = vmatmul.mubr.bf16.gmra.mrb[0].mxu0 %v2234
        %v2305 = vpop.f32.mrb[0].mxu0
        %v2306 = vadd.f32 0.0, %v2305
        %v2307 = vpop.f32.mrb[0].mxu0
        %v2308 = vpop.f32.mrb[0].mxu0
        %v2309 = vadd.f32 0.0, %v2308
        %v2310 = vpop.f32.mrb[0].mxu0
        %2311 = vdwg.mxu0
        %v2312 = vadd.f32 %v2126, %v2274
        %v2313 = vadd.f32 %v2127, %v2277
        %v2314 = vadd.f32 %v2128, %v2282
        %v2315 = vadd.f32 %v2129, %v2285
        %v2316 = vadd.f32 %v2130, %v2290
        %v2317 = vadd.f32 %v2131, %v2293
        %v2318 = vadd.f32 %v2132, %v2298
        %v2319 = vadd.f32 %v2133, %v2301
        %v2320 = vadd.f32 %v2134, %v2306
        %v2321 = vadd.f32 %v2135, %v2309
        %v2322 = vld [vmem:[#allocation2 + $0xc] sm:$0xe]
        %s2323 = scalar_lea.vmem [#allocation12], 28
        %v2324 = vld [vmem:[%s2323] sm:$0xf]
        %v2326 = vunpack.c.l.b16 %v2322
        %v2327 = vpack.c.b16 %v2161, %v2326
        %v2328 = vrot.slane %v2327, 1
        %v2329 = vrot.slane %v2172, 1
        %v2330 = vsel %vm744, %v2328, %v2329
        %v2331 = vrot.slane %v2173, 1
        %v2332 = vsel %vm744, %v2329, %v2331
        %v2333 = vrot.slane %v2174, 1
        %v2334 = vsel %vm744, %v2331, %v2333
        %v2335 = vrot.slane %v2175, 1
        %v2336 = vsel %vm744, %v2333, %v2335
        %v2337 = vrot.slane %v2176, 1
        %v2338 = vsel %vm744, %v2335, %v2337
        %v2340 = vsel %vm1265, %v2330, 0
        %v2343 = vsel %vm1265, %v2332, 0
        %v2346 = vsel %vm1265, %v2334, 0
        %v2349 = vsel %vm1265, %v2336, 0
        %v2352 = vsel %vm1265, %v2338, 0
        %v2355 = vsel %vm1281, %v2324, 0
        %2357 = vmatprep.subr.bf16.mxu0 0
        %2358 = vmatpush1.bf16.msra.mxu0 %v2355
        %2359 = vmatprep.subr.bf16.mxu0 0
        %2360 = vmatpush1.bf16.msra.mxu0 0
        %2361 = vmatprep.subr.bf16.mxu0 0
        %2362 = vmatpush1.bf16.msra.mxu0 0
        %2363 = vmatprep.subr.bf16.mxu0 0
        %2364 = vmatpush1.bf16.msra.mxu0 0
        %2365 = vmatprep.subr.bf16.mxu0 0
        %2366 = vmatpush1.bf16.msra.mxu0 0
        %2367 = vmatprep.subr.bf16.mxu0 0
        %2368 = vmatpush1.bf16.msra.mxu0 0
        %2369 = vmatprep.subr.bf16.mxu0 0
        %2370 = vmatpush1.bf16.msra.mxu0 0
        %2371 = vmatprep.subr.bf16.mxu0 0
        %2372 = vmatpush1.bf16.msra.mxu0 0
        %2373 = vmatprep.subr.bf16.mxu0 0
        %2374 = vmatpush1.bf16.msra.mxu0 0
        %2375 = vmatprep.subr.bf16.mxu0 0
        %2376 = vmatpush1.bf16.msra.mxu0 0
        %2377 = vmatprep.subr.bf16.mxu0 0
        %2378 = vmatpush1.bf16.msra.mxu0 0
        %2379 = vmatprep.subr.bf16.mxu0 0
        %2380 = vmatpush1.bf16.msra.mxu0 0
        %2381 = vmatprep.subr.bf16.mxu0 0
        %2382 = vmatpush1.bf16.msra.mxu0 0
        %2383 = vmatprep.subr.bf16.mxu0 0
        %2384 = vmatpush1.bf16.msra.mxu0 0
        %2385 = vmatprep.subr.bf16.mxu0 0
        %2386 = vmatpush1.bf16.msra.mxu0 0
        %2387 = vmatprep.subr.bf16.mxu0 0
        %2388 = vmatpush1.bf16.msra.mxu0 0
        %2389 = vmatprep.mubr.bf16.mxu0 0
        %2390 = vmatmul.mubr.bf16.gmra.mrb[0].mxu0 %v2340
        %v2391 = vpop.f32.mrb[0].mxu0
        %v2392 = vadd.f32 0.0, %v2391
        %v2393 = vpop.f32.mrb[0].mxu0
        %v2394 = vpop.f32.mrb[0].mxu0
        %v2395 = vadd.f32 0.0, %v2394
        %v2396 = vpop.f32.mrb[0].mxu0
        %2397 = vmatprep.mubr.bf16.mxu0 0
        %2398 = vmatmul.mubr.bf16.gmra.mrb[0].mxu0 %v2343
        %v2399 = vpop.f32.mrb[0].mxu0
        %v2400 = vadd.f32 0.0, %v2399
        %v2401 = vpop.f32.mrb[0].mxu0
        %v2402 = vpop.f32.mrb[0].mxu0
        %v2403 = vadd.f32 0.0, %v2402
        %v2404 = vpop.f32.mrb[0].mxu0
        %2405 = vmatprep.mubr.bf16.mxu0 0
        %2406 = vmatmul.mubr.bf16.gmra.mrb[0].mxu0 %v2346
        %v2407 = vpop.f32.mrb[0].mxu0
        %v2408 = vadd.f32 0.0, %v2407
        %v2409 = vpop.f32.mrb[0].mxu0
        %v2410 = vpop.f32.mrb[0].mxu0
        %v2411 = vadd.f32 0.0, %v2410
        %v2412 = vpop.f32.mrb[0].mxu0
        %2413 = vmatprep.mubr.bf16.mxu0 0
        %2414 = vmatmul.mubr.bf16.gmra.mrb[0].mxu0 %v2349
        %v2415 = vpop.f32.mrb[0].mxu0
        %v2416 = vadd.f32 0.0, %v2415
        %v2417 = vpop.f32.mrb[0].mxu0
        %v2418 = vpop.f32.mrb[0].mxu0
        %v2419 = vadd.f32 0.0, %v2418
        %v2420 = vpop.f32.mrb[0].mxu0
        %2421 = vmatprep.mubr.bf16.mxu0 0
        %2422 = vmatmul.mubr.bf16.gmra.mrb[0].mxu0 %v2352
        %v2423 = vpop.f32.mrb[0].mxu0
        %v2424 = vadd.f32 0.0, %v2423
        %v2425 = vpop.f32.mrb[0].mxu0
        %v2426 = vpop.f32.mrb[0].mxu0
        %v2427 = vadd.f32 0.0, %v2426
        %v2428 = vpop.f32.mrb[0].mxu0
        %2429 = vdwg.mxu0
        %v2430 = vadd.f32 %v2312, %v2392
        %v2431 = vadd.f32 %v2313, %v2395
        %v2432 = vadd.f32 %v2314, %v2400
        %v2433 = vadd.f32 %v2315, %v2403
        %v2434 = vadd.f32 %v2316, %v2408
        %v2435 = vadd.f32 %v2317, %v2411
        %v2436 = vadd.f32 %v2318, %v2416
        %v2437 = vadd.f32 %v2319, %v2419
        %v2438 = vadd.f32 %v2320, %v2424
        %v2439 = vadd.f32 %v2321, %v2427
        %v2440 = vld [vmem:[#allocation2 + $0x34] sm:$0x3]
        %s2441 = scalar_lea.vmem [#allocation12], 32
        %v2442 = vld [vmem:[%s2441] sm:$0xf]
        %v2444 = vunpack.c.l.b16 %v2440
        %v2445 = vpack.c.b16 %v2444, %v2444
        %v2447 = vshrl.u32 %v2327, 16
        %v2449 = vrot.slane %v2447, 1
        %v2450 = vshll.u32 %v2327, 16
        %v2452 = vrot.slane %v2450, 2
        %v2453 = vor.u32 %v2449, %v2452
        %v2454 = vrot.slane %v2189, 1
        %v2455 = vrot.slane %v2185, 2
        %v2456 = vor.u32 %v2454, %v2455
        %v2457 = vsel %vm867, %v2453, %v2456
        %v2458 = vrot.slane %v2197, 1
        %v2459 = vrot.slane %v2193, 2
        %v2460 = vor.u32 %v2458, %v2459
        %v2461 = vsel %vm867, %v2456, %v2460
        %v2462 = vrot.slane %v2205, 1
        %v2463 = vrot.slane %v2201, 2
        %v2464 = vor.u32 %v2462, %v2463
        %v2465 = vsel %vm867, %v2460, %v2464
        %v2466 = vrot.slane %v2213, 1
        %v2467 = vrot.slane %v2209, 2
        %v2468 = vor.u32 %v2466, %v2467
        %v2469 = vsel %vm867, %v2464, %v2468
        %v2471 = vshrl.u32 %v2445, 16
        %v2473 = vrot.slane %v2471, 1
        %v2474 = vshll.u32 %v2445, 16
        %v2476 = vrot.slane %v2474, 2
        %v2477 = vor.u32 %v2473, %v2476
        %v2478 = vsel %vm867, %v2468, %v2477
        %v2480 = vsel %vm1265, %v2457, 0
        %v2483 = vsel %vm1265, %v2461, 0
        %v2486 = vsel %vm1265, %v2465, 0
        %v2489 = vsel %vm1265, %v2469, 0
        %v2492 = vsel %vm1265, %v2478, 0
        %v2495 = vsel %vm1281, %v2442, 0
        %2497 = vmatprep.subr.bf16.mxu0 0
        %2498 = vmatpush1.bf16.msra.mxu0 %v2495
        %2499 = vmatprep.subr.bf16.mxu0 0
        %2500 = vmatpush1.bf16.msra.mxu0 0
        %2501 = vmatprep.subr.bf16.mxu0 0
        %2502 = vmatpush1.bf16.msra.mxu0 0
        %2503 = vmatprep.subr.bf16.mxu0 0
        %2504 = vmatpush1.bf16.msra.mxu0 0
        %2505 = vmatprep.subr.bf16.mxu0 0
        %2506 = vmatpush1.bf16.msra.mxu0 0
        %2507 = vmatprep.subr.bf16.mxu0 0
        %2508 = vmatpush1.bf16.msra.mxu0 0
        %2509 = vmatprep.subr.bf16.mxu0 0
        %2510 = vmatpush1.bf16.msra.mxu0 0
        %2511 = vmatprep.subr.bf16.mxu0 0
        %2512 = vmatpush1.bf16.msra.mxu0 0
        %2513 = vmatprep.subr.bf16.mxu0 0
        %2514 = vmatpush1.bf16.msra.mxu0 0
        %2515 = vmatprep.subr.bf16.mxu0 0
        %2516 = vmatpush1.bf16.msra.mxu0 0
        %2517 = vmatprep.subr.bf16.mxu0 0
        %2518 = vmatpush1.bf16.msra.mxu0 0
        %2519 = vmatprep.subr.bf16.mxu0 0
        %2520 = vmatpush1.bf16.msra.mxu0 0
        %2521 = vmatprep.subr.bf16.mxu0 0
        %2522 = vmatpush1.bf16.msra.mxu0 0
        %2523 = vmatprep.subr.bf16.mxu0 0
        %2524 = vmatpush1.bf16.msra.mxu0 0
        %2525 = vmatprep.subr.bf16.mxu0 0
        %2526 = vmatpush1.bf16.msra.mxu0 0
        %2527 = vmatprep.subr.bf16.mxu0 0
        %2528 = vmatpush1.bf16.msra.mxu0 0
        %2529 = vmatprep.mubr.bf16.mxu0 0
        %2530 = vmatmul.mubr.bf16.gmra.mrb[0].mxu0 %v2480
        %v2531 = vpop.f32.mrb[0].mxu0
        %v2532 = vadd.f32 0.0, %v2531
        %v2533 = vpop.f32.mrb[0].mxu0
        %v2534 = vpop.f32.mrb[0].mxu0
        %v2535 = vadd.f32 0.0, %v2534
        %v2536 = vpop.f32.mrb[0].mxu0
        %2537 = vmatprep.mubr.bf16.mxu0 0
        %2538 = vmatmul.mubr.bf16.gmra.mrb[0].mxu0 %v2483
        %v2539 = vpop.f32.mrb[0].mxu0
        %v2540 = vadd.f32 0.0, %v2539
        %v2541 = vpop.f32.mrb[0].mxu0
        %v2542 = vpop.f32.mrb[0].mxu0
        %v2543 = vadd.f32 0.0, %v2542
        %v2544 = vpop.f32.mrb[0].mxu0
        %2545 = vmatprep.mubr.bf16.mxu0 0
        %2546 = vmatmul.mubr.bf16.gmra.mrb[0].mxu0 %v2486
        %v2547 = vpop.f32.mrb[0].mxu0
        %v2548 = vadd.f32 0.0, %v2547
        %v2549 = vpop.f32.mrb[0].mxu0
        %v2550 = vpop.f32.mrb[0].mxu0
        %v2551 = vadd.f32 0.0, %v2550
        %v2552 = vpop.f32.mrb[0].mxu0
        %2553 = vmatprep.mubr.bf16.mxu0 0
        %2554 = vmatmul.mubr.bf16.gmra.mrb[0].mxu0 %v2489
        %v2555 = vpop.f32.mrb[0].mxu0
        %v2556 = vadd.f32 0.0, %v2555
        %v2557 = vpop.f32.mrb[0].mxu0
        %v2558 = vpop.f32.mrb[0].mxu0
        %v2559 = vadd.f32 0.0, %v2558
        %v2560 = vpop.f32.mrb[0].mxu0
        %2561 = vmatprep.mubr.bf16.mxu0 0
        %2562 = vmatmul.mubr.bf16.gmra.mrb[0].mxu0 %v2492
        %v2563 = vpop.f32.mrb[0].mxu0
        %v2564 = vadd.f32 0.0, %v2563
        %v2565 = vpop.f32.mrb[0].mxu0
        %v2566 = vpop.f32.mrb[0].mxu0
        %v2567 = vadd.f32 0.0, %v2566
        %v2568 = vpop.f32.mrb[0].mxu0
        %2569 = vdwg.mxu0
        %v2570 = vadd.f32 %v2430, %v2532
        %v2571 = vadd.f32 %v2431, %v2535
        %v2572 = vadd.f32 %v2432, %v2540
        %v2573 = vadd.f32 %v2433, %v2543
        %v2574 = vadd.f32 %v2434, %v2548
        %v2575 = vadd.f32 %v2435, %v2551
        %v2576 = vadd.f32 %v2436, %v2556
        %v2577 = vadd.f32 %v2437, %v2559
        %v2578 = vadd.f32 %v2438, %v2564
        %v2579 = vadd.f32 %v2439, %v2567
        %v2580 = vld [vmem:[#allocation14] sm:$0x1]
        %v2582 = vlaneseq
        %v2583 = vshrl.u32 %v2582, 7
        %v2584 = vsub.s32 0, %v2583
        %v2585 = vrot.slane %v2580, %v2584
        %v2587 = vadd.f32 %v2570, %v2585
        %v2588 = vadd.f32 %v2571, %v2585
        %v2589 = vadd.f32 %v2572, %v2585
        %v2590 = vadd.f32 %v2573, %v2585
        %v2591 = vadd.f32 %v2574, %v2585
        %v2592 = vadd.f32 %v2575, %v2585
        %v2593 = vadd.f32 %v2576, %v2585
        %v2594 = vadd.f32 %v2577, %v2585
        %v2595 = vadd.f32 %v2578, %v2585
        %v2596 = vadd.f32 %v2579, %v2585
        %vm2597 = vcmp.ge.f32.partialorder %v2587, 0.0
        %vm2598 = vcmp.ge.f32.partialorder %v2588, 0.0
        %vm2599 = vcmp.ge.f32.partialorder %v2589, 0.0
        %vm2600 = vcmp.ge.f32.partialorder %v2590, 0.0
        %vm2601 = vcmp.ge.f32.partialorder %v2591, 0.0
        %vm2602 = vcmp.ge.f32.partialorder %v2592, 0.0
        %vm2603 = vcmp.ge.f32.partialorder %v2593, 0.0
        %vm2604 = vcmp.ge.f32.partialorder %v2594, 0.0
        %vm2605 = vcmp.ge.f32.partialorder %v2595, 0.0
        %vm2606 = vcmp.ge.f32.partialorder %v2596, 0.0
        %v2607 = vld [vmem:[#allocation15] sm:$0x1]
        %v2609 = vlaneseq
        %v2610 = vshrl.u32 %v2609, 7
        %v2611 = vsub.s32 0, %v2610
        %v2612 = vrot.slane %v2607, %v2611
        %v2614 = vmul.f32 %v2612, %v2587
        %v2615 = vmul.f32 %v2612, %v2588
        %v2616 = vmul.f32 %v2612, %v2589
        %v2617 = vmul.f32 %v2612, %v2590
        %v2618 = vmul.f32 %v2612, %v2591
        %v2619 = vmul.f32 %v2612, %v2592
        %v2620 = vmul.f32 %v2612, %v2593
        %v2621 = vmul.f32 %v2612, %v2594
        %v2622 = vmul.f32 %v2612, %v2595
        %v2623 = vmul.f32 %v2612, %v2596
        %v2624 = vsel %vm2597, %v2587, %v2614
        %v2625 = vsel %vm2598, %v2588, %v2615
        %v2626 = vsel %vm2599, %v2589, %v2616
        %v2627 = vsel %vm2600, %v2590, %v2617
        %v2628 = vsel %vm2601, %v2591, %v2618
        %v2629 = vsel %vm2602, %v2592, %v2619
        %v2630 = vsel %vm2603, %v2593, %v2620
        %v2631 = vsel %vm2604, %v2594, %v2621
        %v2632 = vsel %vm2605, %v2595, %v2622
        %v2633 = vsel %vm2606, %v2596, %v2623
        %2634 = vst.msk [vmem:[%s417] sm:$0xff] %vm1265, %v2624
        %2635 = vst.msk [vmem:[%s417 + $0x8] sm:$0xff] %vm1265, %v2625
        %2636 = vst.msk [vmem:[%s417 + $0x10] sm:$0xff] %vm1265, %v2626
        %2637 = vst.msk [vmem:[%s417 + $0x18] sm:$0xff] %vm1265, %v2627
        %2638 = vst.msk [vmem:[%s417 + $0x20] sm:$0xff] %vm1265, %v2628
        %2639 = vst.msk [vmem:[%s417 + $0x28] sm:$0xff] %vm1265, %v2629
        %2640 = vst.msk [vmem:[%s417 + $0x30] sm:$0xff] %vm1265, %v2630
        %2641 = vst.msk [vmem:[%s417 + $0x38] sm:$0xff] %vm1265, %v2631
        %2642 = vst.msk [vmem:[%s417 + $0x40] sm:$0xff] %vm1265, %v2632
        %2643 = vst.msk [vmem:[%s417 + $0x48] sm:$0xff] %vm1265, %v2633
        %s2644 = sand.u32 %s210, 1
        %s2645 = scalar_lea.sflag [#allocation5], %s2644
        %s2646 = sand.u32 %s210, 1
        %s2647 = smul.addr %s2646, 80
        %s2648 = scalar_lea.vmem [#allocation17], %s2647
        // Predicated region
        $region85: #{context_net_forward.3} parent=51 // pred_check
          %p2649 = pneg %p220
        $region86: #{context_net_forward.3} parent=51 // pred_check_branch
          %2651 = sbr.rel (%p2649) target = $region88
        $region87: #{context_net_forward.3} parent=51 // pred_region
          %s2653 = ssub.s32 1280, 1280
          %2654 = vsyncadd %s2645, %s2653
          %s2655 = smul.addr %s29, 10
          %s2656 = smul.addr %s2655, 128
          %s2657 = scalar_lea.hbm %s8, %s2656
          %s2658 = sshll.u32 %s2648, 4
          %s2659 = int_to_ptr.vmem [resolvable:$true] %s2658
          %2664 = dma.vmem_to_hbm [thread:$0]  %s2659, 1280, %s2657, %s2645, 128, 128, 8
        $region88: #{context_net_forward.3} parent=51 // pred_fallthru
          _
      $region52: #{context_net_forward.3} parent=5 // pred_fallthru
        _
      %p2665 = scmp.le.s32.totalorder 2, %s24
      // Predicated region
      $region89: #{context_net_forward.3} parent=5 // pred_check
        %p2666 = pneg %p2665
      $region90: #{context_net_forward.3} parent=5 // pred_check_branch
        %2668 = sbr.rel (%p2666) target = $region92
      $region91: #{context_net_forward.3} parent=5 // pred_region
        %s2669 = ssub.s32 %s24, 2
        // Predicated region
        $region93: #{context_net_forward.3} parent=91 // pred_check
          %p2670 = pneg %p226
        $region94: #{context_net_forward.3} parent=91 // pred_check_branch
          %2672 = sbr.rel (%p2670) target = $region96
        $region95: #{context_net_forward.3} parent=91 // pred_region
          %s2673 = sand.u32 %s211, 1
          %s2674 = scalar_lea.sflag [#allocation5], %s2673
          %s2675 = sand.u32 %s211, 1
          %s2676 = smul.addr %s2675, 80
          %s2677 = scalar_lea.vmem [#allocation17], %s2676
          %2678 = dma.done %s2674, 1280
        $region96: #{context_net_forward.3} parent=91 // pred_fallthru
          _
      $region92: #{context_net_forward.3} parent=5 // pred_fallthru
        _
    $region6: #{context_net_forward.3} parent=1 // loop_footer
      %s28 = sadd.s32 1, %s24
    $region7: #{context_net_forward.3} parent=1 // loop_footer_branch
      %23 = sbr.rel target = $region3
    $region8: #{context_net_forward.3} parent=1 // loop_exit
      _
    %2679 = vsyncpa [#allocation4], 1
    %s2680 = scalar_lea.sflag [#allocation4], 1
    %2681 = vsyncpa %s2680, 1
    %2682 = vsyncpa [#allocation7], 1
    %2683 = vsyncpa [#allocation10], 1
    %2684 = vsyncpa [#allocation13], 1
    %2685 = vsyncpa [#allocation16], 1
    %2686 = vsyncpa [#allocation5], 1
    %s2687 = scalar_lea.sflag [#allocation5], 1
    %2688 = vsyncpa %s2687, 1

// kernel: context_net_forward.4
$region0: #{context_net_forward.4}
  #allocation0 [shape = 'u32[]', space=smem, size = 0x4, offset = 0x4, fixed_abs, tag = 'smem constant byte address 0x4 - core index']
  #allocation1 [shape = 'u32[144,128]{1,0:T(1,128)}', space=vmem, size = 0x12000, scoped, tag = 'internal scratch']
  #allocation2 [shape = 'bf16[53,16]{1,0:T(8,128)(2,1)}', space=vmem, size = 0x3800, scoped, tag = 'scratch operand']
  %s0 = inlined_call_operand.hbm [shape: bf16[2,36,32], index: 0, kind: input, shape index: {}]
  %s1 = inlined_call_operand.hbm [shape: f32[24,1], index: 1, kind: input, shape index: {}]
  %s2 = inlined_call_operand.hbm [shape: bf16[4,32,16], index: 2, kind: input, shape index: {}]
  %s3 = inlined_call_operand.hbm [shape: f32[1,16], index: 3, kind: input, shape index: {}]
  %s4 = inlined_call_operand.hbm [shape: f32[1,16], index: 4, kind: input, shape index: {}, may-alias: {4,7}]
  %s5 = inlined_call_operand.hbm [shape: bf16[9,16,16], index: 5, kind: input, shape index: {}]
  %s6 = inlined_call_operand.hbm [shape: f32[1,16], index: 6, kind: input, shape index: {}]
  %s7 = inlined_call_operand.hbm [shape: f32[1,16], index: 7, kind: input, shape index: {}, may-alias: {4,7}]
  %s8 = inlined_call_operand.hbm [shape: f32[2,24,16], index: 8, kind: output, shape index: {}]
  %s9 = sld [smem:[#allocation0]]
  $region97: #{context_net_forward.4} parent=0
    _
  %s11 = ssub.s32 1, %s9
  %s12 = scalar_select 0, %s11, %s9
  $region1: #{context_net_forward.4} parent=0
    #allocation3 [shape = 'u8[20480]{0}', space=vmem, size = 0x5000, scoped, tag = 'input window, operand 0']
    #allocation4 [shape = 's32[2]{0}', space=sflag, size = 0x8, scoped, tag = 'scoped memory for context_net_forward.4']
    #allocation5 [shape = 's32[2]{0}', space=sflag, size = 0x8, scoped, tag = 'scoped memory for context_net_forward.4']
    #allocation6 [shape = 'u8[12288]{0}', space=vmem, size = 0x3000, scoped, tag = 'input window, operand 1, single buffered']
    #allocation7 [shape = 's32[1]{0}', space=sflag, size = 0x4, scoped, tag = 'scoped memory for context_net_forward.4']
    #allocation8 [shape = 'u8[32768]{0}', space=vmem, size = 0x8000, scoped, tag = 'input window, operand 2, single buffered']
    #allocation9 [shape = 'u8[512]{0}', space=vmem, size = 0x400, scoped, tag = 'input window, operand 3, single buffered']
    #allocation10 [shape = 's32[1]{0}', space=sflag, size = 0x4, scoped, tag = 'scoped memory for context_net_forward.4']
    #allocation11 [shape = 'u8[512]{0}', space=vmem, size = 0x400, scoped, tag = 'input window, operand 4, single buffered']
    #allocation12 [shape = 'u8[36864]{0}', space=vmem, size = 0x9000, scoped, tag = 'input window, operand 5, single buffered']
    #allocation13 [shape = 's32[1]{0}', space=sflag, size = 0x4, scoped, tag = 'scoped memory for context_net_forward.4']
    #allocation14 [shape = 'u8[512]{0}', space=vmem, size = 0x400, scoped, tag = 'input window, operand 6, single buffered']
    #allocation15 [shape = 'u8[512]{0}', space=vmem, size = 0x400, scoped, tag = 'input window, operand 7, single buffered']
    #allocation16 [shape = 's32[1]{0}', space=sflag, size = 0x4, scoped, tag = 'scoped memory for context_net_forward.4']
    #allocation17 [shape = 'u8[24576]{0}', space=vmem, size = 0x6000, scoped, tag = 'output window, operand 0']
    %13 = vsyncpa [#allocation4], 0
    %s14 = scalar_lea.sflag [#allocation4], 1
    %15 = vsyncpa %s14, 0
    %16 = vsyncpa [#allocation7], 0
    %17 = vsyncpa [#allocation10], 0
    %18 = vsyncpa [#allocation13], 0
    %19 = vsyncpa [#allocation16], 0
    %20 = vsyncpa [#allocation5], 0
    %s21 = scalar_lea.sflag [#allocation5], 1
    %22 = vsyncpa %s21, 0
    loop: start=0, step=1, limit=4
    $region2: #{context_net_forward.4} parent=1 // loop_pre_header
      _
    $region3: #{context_net_forward.4} parent=1 // loop_header
      %s24 = sphi 0, %s28
      %p25 = scmp.ge.s32.totalorder %s24, 4
      %s34 = sphi 0, %s36
      %s37 = sphi 0, %s34
      %s38 = sphi 0, %s37
      %s54 = sphi 0, %s38
      %s58 = sphi 0, %s58
      %s60 = sphi 0, %s58
      %s61 = sphi 0, %s60
      %s75 = sphi 0, %s61
      %s79 = sphi 0, %s79
      %s81 = sphi 0, %s79
      %s82 = sphi 0, %s81
      %s96 = sphi 0, %s82
      %s100 = sphi 0, %s100
      %s102 = sphi 0, %s100
      %s103 = sphi 0, %s102
      %s117 = sphi 0, %s103
      %s121 = sphi 0, %s121
      %s123 = sphi 0, %s121
      %s124 = sphi 0, %s123
      %s138 = sphi 0, %s124
      %s142 = sphi 0, %s142
      %s144 = sphi 0, %s142
      %s145 = sphi 0, %s144
      %s159 = sphi 0, %s145
      %s163 = sphi 0, %s163
      %s165 = sphi 0, %s163
      %s166 = sphi 0, %s165
      %s180 = sphi 0, %s166
      %s184 = sphi 0, %s184
      %s186 = sphi 0, %s184
      %s187 = sphi 0, %s186
      %s201 = sphi 0, %s187
      %s207 = sphi 0, %s209
      %s210 = sphi 0, %s207
      %s211 = sphi 0, %s210
      %s227 = sphi 0, %s211
    $region4: #{context_net_forward.4} parent=1 // loop_header_branch
      %27 = sbr.rel (%p25) target = $region8
    $region5: #{context_net_forward.4} parent=1 // loop_body
      %s29 = ssub.s32 %s24, 1
      %s30 = ssub.s32 %s24, 2
      %s31 = sadd.s32 %s24, 1
      %s32 = ssub.s32 %s24, %s31
      %p33 = scmp.eq.s32.totalorder %s32, 0
      %s35 = sadd.s32 %s34, 1
      %s36 = scalar_select %p33, %s34, %s35
      %p39 = pneg %p33
      %p40 = scmp.eq.s32.totalorder %s24, 1
      %p41 = por %p39, %p40
      %p42 = scmp.ne.s32.totalorder %s34, %s37
      %p43 = scmp.eq.s32.totalorder %s24, 0
      %p44 = por %p42, %p43
      %p45 = scmp.ne.s32.totalorder %s34, %s37
      %p46 = scmp.eq.s32.totalorder %s29, 1
      %p47 = por %p45, %p46
      %p48 = scmp.ne.s32.totalorder %s37, %s38
      %p49 = scmp.eq.s32.totalorder %s29, 0
      %p50 = por %p48, %p49
      %p51 = scmp.ne.s32.totalorder %s37, %s38
      %p52 = scmp.eq.s32.totalorder %s30, 1
      %p53 = por %p51, %p52
      %p55 = scmp.ne.s32.totalorder %s38, %s54
      %p56 = scmp.eq.s32.totalorder %s30, 0
      %p57 = por %p55, %p56
      %s59 = sadd.s32 %s58, 1
      %p62 = scmp.eq.s32.totalorder %s24, 1
      %p63 = scmp.ne.s32.totalorder %s58, %s60
      %p64 = scmp.eq.s32.totalorder %s24, 0
      %p65 = por %p63, %p64
      %p66 = scmp.ne.s32.totalorder %s58, %s60
      %p67 = scmp.eq.s32.totalorder %s29, 1
      %p68 = por %p66, %p67
      %p69 = scmp.ne.s32.totalorder %s60, %s61
      %p70 = scmp.eq.s32.totalorder %s29, 0
      %p71 = por %p69, %p70
      %p72 = scmp.ne.s32.totalorder %s60, %s61
      %p73 = scmp.eq.s32.totalorder %s30, 1
      %p74 = por %p72, %p73
      %p76 = scmp.ne.s32.totalorder %s61, %s75
      %p77 = scmp.eq.s32.totalorder %s30, 0
      %p78 = por %p76, %p77
      %s80 = sadd.s32 %s79, 1
      %p83 = scmp.eq.s32.totalorder %s24, 1
      %p84 = scmp.ne.s32.totalorder %s79, %s81
      %p85 = scmp.eq.s32.totalorder %s24, 0
      %p86 = por %p84, %p85
      %p87 = scmp.ne.s32.totalorder %s79, %s81
      %p88 = scmp.eq.s32.totalorder %s29, 1
      %p89 = por %p87, %p88
      %p90 = scmp.ne.s32.totalorder %s81, %s82
      %p91 = scmp.eq.s32.totalorder %s29, 0
      %p92 = por %p90, %p91
      %p93 = scmp.ne.s32.totalorder %s81, %s82
      %p94 = scmp.eq.s32.totalorder %s30, 1
      %p95 = por %p93, %p94
      %p97 = scmp.ne.s32.totalorder %s82, %s96
      %p98 = scmp.eq.s32.totalorder %s30, 0
      %p99 = por %p97, %p98
      %s101 = sadd.s32 %s100, 1
      %p104 = scmp.eq.s32.totalorder %s24, 1
      %p105 = scmp.ne.s32.totalorder %s100, %s102
      %p106 = scmp.eq.s32.totalorder %s24, 0
      %p107 = por %p105, %p106
      %p108 = scmp.ne.s32.totalorder %s100, %s102
      %p109 = scmp.eq.s32.totalorder %s29, 1
      %p110 = por %p108, %p109
      %p111 = scmp.ne.s32.totalorder %s102, %s103
      %p112 = scmp.eq.s32.totalorder %s29, 0
      %p113 = por %p111, %p112
      %p114 = scmp.ne.s32.totalorder %s102, %s103
      %p115 = scmp.eq.s32.totalorder %s30, 1
      %p116 = por %p114, %p115
      %p118 = scmp.ne.s32.totalorder %s103, %s117
      %p119 = scmp.eq.s32.totalorder %s30, 0
      %p120 = por %p118, %p119
      %s122 = sadd.s32 %s121, 1
      %p125 = scmp.eq.s32.totalorder %s24, 1
      %p126 = scmp.ne.s32.totalorder %s121, %s123
      %p127 = scmp.eq.s32.totalorder %s24, 0
      %p128 = por %p126, %p127
      %p129 = scmp.ne.s32.totalorder %s121, %s123
      %p130 = scmp.eq.s32.totalorder %s29, 1
      %p131 = por %p129, %p130
      %p132 = scmp.ne.s32.totalorder %s123, %s124
      %p133 = scmp.eq.s32.totalorder %s29, 0
      %p134 = por %p132, %p133
      %p135 = scmp.ne.s32.totalorder %s123, %s124
      %p136 = scmp.eq.s32.totalorder %s30, 1
      %p137 = por %p135, %p136
      %p139 = scmp.ne.s32.totalorder %s124, %s138
      %p140 = scmp.eq.s32.totalorder %s30, 0
      %p141 = por %p139, %p140
      %s143 = sadd.s32 %s142, 1
      %p146 = scmp.eq.s32.totalorder %s24, 1
      %p147 = scmp.ne.s32.totalorder %s142, %s144
      %p148 = scmp.eq.s32.totalorder %s24, 0
      %p149 = por %p147, %p148
      %p150 = scmp.ne.s32.totalorder %s142, %s144
      %p151 = scmp.eq.s32.totalorder %s29, 1
      %p152 = por %p150, %p151
      %p153 = scmp.ne.s32.totalorder %s144, %s145
      %p154 = scmp.eq.s32.totalorder %s29, 0
      %p155 = por %p153, %p154
      %p156 = scmp.ne.s32.totalorder %s144, %s145
      %p157 = scmp.eq.s32.totalorder %s30, 1
      %p158 = por %p156, %p157
      %p160 = scmp.ne.s32.totalorder %s145, %s159
      %p161 = scmp.eq.s32.totalorder %s30, 0
      %p162 = por %p160, %p161
      %s164 = sadd.s32 %s163, 1
      %p167 = scmp.eq.s32.totalorder %s24, 1
      %p168 = scmp.ne.s32.totalorder %s163, %s165
      %p169 = scmp.eq.s32.totalorder %s24, 0
      %p170 = por %p168, %p169
      %p171 = scmp.ne.s32.totalorder %s163, %s165
      %p172 = scmp.eq.s32.totalorder %s29, 1
      %p173 = por %p171, %p172
      %p174 = scmp.ne.s32.totalorder %s165, %s166
      %p175 = scmp.eq.s32.totalorder %s29, 0
      %p176 = por %p174, %p175
      %p177 = scmp.ne.s32.totalorder %s165, %s166
      %p178 = scmp.eq.s32.totalorder %s30, 1
      %p179 = por %p177, %p178
      %p181 = scmp.ne.s32.totalorder %s166, %s180
      %p182 = scmp.eq.s32.totalorder %s30, 0
      %p183 = por %p181, %p182
      %s185 = sadd.s32 %s184, 1
      %p188 = scmp.eq.s32.totalorder %s24, 1
      %p189 = scmp.ne.s32.totalorder %s184, %s186
      %p190 = scmp.eq.s32.totalorder %s24, 0
      %p191 = por %p189, %p190
      %p192 = scmp.ne.s32.totalorder %s184, %s186
      %p193 = scmp.eq.s32.totalorder %s29, 1
      %p194 = por %p192, %p193
      %p195 = scmp.ne.s32.totalorder %s186, %s187
      %p196 = scmp.eq.s32.totalorder %s29, 0
      %p197 = por %p195, %p196
      %p198 = scmp.ne.s32.totalorder %s186, %s187
      %p199 = scmp.eq.s32.totalorder %s30, 1
      %p200 = por %p198, %p199
      %p202 = scmp.ne.s32.totalorder %s187, %s201
      %p203 = scmp.eq.s32.totalorder %s30, 0
      %p204 = por %p202, %p203
      %s205 = ssub.s32 %s24, %s31
      %p206 = scmp.eq.s32.totalorder %s205, 0
      %s208 = sadd.s32 %s207, 1
      %s209 = scalar_select %p206, %s207, %s208
      %p212 = pneg %p206
      %p213 = scmp.eq.s32.totalorder %s24, 1
      %p214 = por %p212, %p213
      %p215 = scmp.ne.s32.totalorder %s207, %s210
      %p216 = scmp.eq.s32.totalorder %s24, 0
      %p217 = por %p215, %p216
      %p218 = scmp.ne.s32.totalorder %s207, %s210
      %p219 = scmp.eq.s32.totalorder %s29, 1
      %p220 = por %p218, %p219
      %p221 = scmp.ne.s32.totalorder %s210, %s211
      %p222 = scmp.eq.s32.totalorder %s29, 0
      %p223 = por %p221, %p222
      %p224 = scmp.ne.s32.totalorder %s210, %s211
      %p225 = scmp.eq.s32.totalorder %s30, 1
      %p226 = por %p224, %p225
      %p228 = scmp.ne.s32.totalorder %s211, %s227
      %p229 = scmp.eq.s32.totalorder %s30, 0
      %p230 = por %p228, %p229
      %p231 = scmp.le.s32.totalorder 1, %s24
      %p232 = scmp.lt.s32.totalorder %s24, 3
      %p233 = pnand %p231, %p232
      %p234 = pneg %p233
      // Predicated region
      $region9: #{context_net_forward.4} parent=5 // pred_check
        _
      $region10: #{context_net_forward.4} parent=5 // pred_check_branch
        %236 = sbr.rel (%p233) target = $region12
      $region11: #{context_net_forward.4} parent=5 // pred_region
        %s237 = ssub.s32 %s24, 1
        // Predicated region
        $region13: #{context_net_forward.4} parent=11 // pred_check
          %p238 = pneg %p71
        $region14: #{context_net_forward.4} parent=11 // pred_check_branch
          %240 = sbr.rel (%p238) target = $region16
        $region15: #{context_net_forward.4} parent=11 // pred_region
          %s242 = ssub.s32 384, 384
          %243 = vsyncadd [#allocation7], %s242
          %s244 = sshll.u32 [#allocation6], 4
          %s245 = int_to_ptr.vmem [resolvable:$true] %s244
          %250 = dma.hbm_to_vmem [thread:$0]  %s1, 384, %s245, [#allocation7], 128, 128, 8
        $region16: #{context_net_forward.4} parent=11 // pred_fallthru
          _
        // Predicated region
        $region17: #{context_net_forward.4} parent=11 // pred_check
          %p251 = pneg %p92
        $region18: #{context_net_forward.4} parent=11 // pred_check_branch
          %253 = sbr.rel (%p251) target = $region20
        $region19: #{context_net_forward.4} parent=11 // pred_region
          %s255 = ssub.s32 1024, 1024
          %256 = vsyncadd [#allocation7], %s255
          %s257 = sshll.u32 [#allocation8], 4
          %s258 = int_to_ptr.vmem [resolvable:$true] %s257
          %263 = dma.hbm_to_vmem [thread:$0]  %s2, 1024, %s258, [#allocation7], 64, 64, 4
        $region20: #{context_net_forward.4} parent=11 // pred_fallthru
          _
        // Predicated region
        $region21: #{context_net_forward.4} parent=11 // pred_check
          %p264 = pneg %p113
        $region22: #{context_net_forward.4} parent=11 // pred_check_branch
          %266 = sbr.rel (%p264) target = $region24
        $region23: #{context_net_forward.4} parent=11 // pred_region
          %s268 = ssub.s32 16, 16
          %269 = vsyncadd [#allocation10], %s268
          %s271 = sshll.u32 [#allocation9], 4
          %s272 = int_to_ptr.vmem [resolvable:$true] %s271
          %274 = dma.hbm_to_vmem [thread:$0]  %s3, 16, %s272, [#allocation10]
        $region24: #{context_net_forward.4} parent=11 // pred_fallthru
          _
        // Predicated region
        $region25: #{context_net_forward.4} parent=11 // pred_check
          %p275 = pneg %p134
        $region26: #{context_net_forward.4} parent=11 // pred_check_branch
          %277 = sbr.rel (%p275) target = $region28
        $region27: #{context_net_forward.4} parent=11 // pred_region
          %s279 = ssub.s32 16, 16
          %280 = vsyncadd [#allocation10], %s279
          %s282 = sshll.u32 [#allocation11], 4
          %s283 = int_to_ptr.vmem [resolvable:$true] %s282
          %285 = dma.hbm_to_vmem [thread:$0]  %s4, 16, %s283, [#allocation10]
        $region28: #{context_net_forward.4} parent=11 // pred_fallthru
          _
        // Predicated region
        $region29: #{context_net_forward.4} parent=11 // pred_check
          %p286 = pneg %p155
        $region30: #{context_net_forward.4} parent=11 // pred_check_branch
          %288 = sbr.rel (%p286) target = $region32
        $region31: #{context_net_forward.4} parent=11 // pred_region
          %s290 = ssub.s32 1152, 1152
          %291 = vsyncadd [#allocation13], %s290
          %s292 = sshll.u32 [#allocation12], 4
          %s293 = int_to_ptr.vmem [resolvable:$true] %s292
          %298 = dma.hbm_to_vmem [thread:$0]  %s5, 1152, %s293, [#allocation13], 64, 64, 4
        $region32: #{context_net_forward.4} parent=11 // pred_fallthru
          _
        // Predicated region
        $region33: #{context_net_forward.4} parent=11 // pred_check
          %p299 = pneg %p176
        $region34: #{context_net_forward.4} parent=11 // pred_check_branch
          %301 = sbr.rel (%p299) target = $region36
        $region35: #{context_net_forward.4} parent=11 // pred_region
          %s303 = ssub.s32 16, 16
          %304 = vsyncadd [#allocation13], %s303
          %s306 = sshll.u32 [#allocation14], 4
          %s307 = int_to_ptr.vmem [resolvable:$true] %s306
          %309 = dma.hbm_to_vmem [thread:$0]  %s6, 16, %s307, [#allocation13]
        $region36: #{context_net_forward.4} parent=11 // pred_fallthru
          _
        // Predicated region
        $region37: #{context_net_forward.4} parent=11 // pred_check
          %p310 = pneg %p197
        $region38: #{context_net_forward.4} parent=11 // pred_check_branch
          %312 = sbr.rel (%p310) target = $region40
        $region39: #{context_net_forward.4} parent=11 // pred_region
          %s314 = ssub.s32 16, 16
          %315 = vsyncadd [#allocation16], %s314
          %s317 = sshll.u32 [#allocation15], 4
          %s318 = int_to_ptr.vmem [resolvable:$true] %s317
          %320 = dma.hbm_to_vmem [thread:$0]  %s7, 16, %s318, [#allocation16]
        $region40: #{context_net_forward.4} parent=11 // pred_fallthru
          _
      $region12: #{context_net_forward.4} parent=5 // pred_fallthru
        _
      %p321 = scmp.lt.s32.totalorder %s24, 2
      // Predicated region
      $region41: #{context_net_forward.4} parent=5 // pred_check
        %p322 = pneg %p321
      $region42: #{context_net_forward.4} parent=5 // pred_check_branch
        %324 = sbr.rel (%p322) target = $region44
      $region43: #{context_net_forward.4} parent=5 // pred_region
        // Predicated region
        $region45: #{context_net_forward.4} parent=43 // pred_check
          %p325 = pneg %p44
        $region46: #{context_net_forward.4} parent=43 // pred_check_branch
          %327 = sbr.rel (%p325) target = $region48
        $region47: #{context_net_forward.4} parent=43 // pred_region
          %s328 = sand.u32 %s34, 1
          %s329 = scalar_lea.sflag [#allocation4], %s328
          %s330 = sand.u32 %s34, 1
          %s331 = smul.addr %s330, 20
          %s332 = scalar_lea.vmem [#allocation3], %s331
          %s334 = ssub.s32 320, 320
          %335 = vsyncadd %s329, %s334
          %s336 = smul.addr %s24, 5
          %s337 = smul.addr %s336, 64
          %s338 = scalar_lea.hbm %s0, %s337
          %s339 = sshll.u32 %s332, 4
          %s340 = int_to_ptr.vmem [resolvable:$true] %s339
          %345 = dma.hbm_to_vmem [thread:$0]  %s338, 320, %s340, %s329, 64, 64, 4
        $region48: #{context_net_forward.4} parent=43 // pred_fallthru
          _
      $region44: #{context_net_forward.4} parent=5 // pred_fallthru
        _
      %p346 = scmp.le.s32.totalorder 1, %s24
      %p347 = scmp.lt.s32.totalorder %s24, 3
      %p348 = pnand %p346, %p347
      %p349 = pneg %p348
      // Predicated region
      $region49: #{context_net_forward.4} parent=5 // pred_check
        _
      $region50: #{context_net_forward.4} parent=5 // pred_check_branch
        %351 = sbr.rel (%p348) target = $region52
      $region51: #{context_net_forward.4} parent=5 // pred_region
        %s352 = ssub.s32 %s24, 1
        %s353 = sand.u32 %s37, 1
        %s354 = scalar_lea.sflag [#allocation4], %s353
        %s355 = sand.u32 %s37, 1
        %s356 = smul.addr %s355, 20
        %s357 = scalar_lea.vmem [#allocation3], %s356
        // Predicated region
        $region53: #{context_net_forward.4} parent=51 // pred_check
          %p358 = pneg %p50
        $region54: #{context_net_forward.4} parent=51 // pred_check_branch
          %360 = sbr.rel (%p358) target = $region56
        $region55: #{context_net_forward.4} parent=51 // pred_region
          %361 = dma.done %s354, 320
        $region56: #{context_net_forward.4} parent=51 // pred_fallthru
          _
        // Predicated region
        $region57: #{context_net_forward.4} parent=51 // pred_check
          %p362 = pneg %p71
        $region58: #{context_net_forward.4} parent=51 // pred_check_branch
          %364 = sbr.rel (%p362) target = $region60
        $region59: #{context_net_forward.4} parent=51 // pred_region
          %365 = dma.done [#allocation7], 384
        $region60: #{context_net_forward.4} parent=51 // pred_fallthru
          _
        // Predicated region
        $region61: #{context_net_forward.4} parent=51 // pred_check
          %p366 = pneg %p92
        $region62: #{context_net_forward.4} parent=51 // pred_check_branch
          %368 = sbr.rel (%p366) target = $region64
        $region63: #{context_net_forward.4} parent=51 // pred_region
          %369 = dma.done [#allocation7], 1024
        $region64: #{context_net_forward.4} parent=51 // pred_fallthru
          _
        // Predicated region
        $region65: #{context_net_forward.4} parent=51 // pred_check
          %p370 = pneg %p113
        $region66: #{context_net_forward.4} parent=51 // pred_check_branch
          %372 = sbr.rel (%p370) target = $region68
        $region67: #{context_net_forward.4} parent=51 // pred_region
          %373 = dma.done [#allocation10], 16
        $region68: #{context_net_forward.4} parent=51 // pred_fallthru
          _
        // Predicated region
        $region69: #{context_net_forward.4} parent=51 // pred_check
          %p374 = pneg %p134
        $region70: #{context_net_forward.4} parent=51 // pred_check_branch
          %376 = sbr.rel (%p374) target = $region72
        $region71: #{context_net_forward.4} parent=51 // pred_region
          %377 = dma.done [#allocation10], 16
        $region72: #{context_net_forward.4} parent=51 // pred_fallthru
          _
        // Predicated region
        $region73: #{context_net_forward.4} parent=51 // pred_check
          %p378 = pneg %p155
        $region74: #{context_net_forward.4} parent=51 // pred_check_branch
          %380 = sbr.rel (%p378) target = $region76
        $region75: #{context_net_forward.4} parent=51 // pred_region
          %381 = dma.done [#allocation13], 1152
        $region76: #{context_net_forward.4} parent=51 // pred_fallthru
          _
        // Predicated region
        $region77: #{context_net_forward.4} parent=51 // pred_check
          %p382 = pneg %p176
        $region78: #{context_net_forward.4} parent=51 // pred_check_branch
          %384 = sbr.rel (%p382) target = $region80
        $region79: #{context_net_forward.4} parent=51 // pred_region
          %385 = dma.done [#allocation13], 16
        $region80: #{context_net_forward.4} parent=51 // pred_fallthru
          _
        // Predicated region
        $region81: #{context_net_forward.4} parent=51 // pred_check
          %p386 = pneg %p197
        $region82: #{context_net_forward.4} parent=51 // pred_check_branch
          %388 = sbr.rel (%p386) target = $region84
        $region83: #{context_net_forward.4} parent=51 // pred_region
          %389 = dma.done [#allocation16], 16
        $region84: #{context_net_forward.4} parent=51 // pred_fallthru
          _
        %s390 = sand.u32 %s37, 1
        %s391 = scalar_lea.sflag [#allocation4], %s390
        %s392 = sand.u32 %s37, 1
        %s393 = smul.addr %s392, 20
        %s394 = scalar_lea.vmem [#allocation3], %s393
        %p395 = pneg %p50
        %p396 = pneg %p47
        %p397 = pneg %p71
        %p398 = pneg %p68
        %p399 = pneg %p92
        %p400 = pneg %p89
        %p401 = pneg %p113
        %p402 = pneg %p110
        %p403 = pneg %p134
        %p404 = pneg %p131
        %p405 = pneg %p155
        %p406 = pneg %p152
        %p407 = pneg %p176
        %p408 = pneg %p173
        %p409 = pneg %p197
        %p410 = pneg %p194
        %p411 = pneg %p223
        %p412 = pneg %p220
        %s413 = sand.u32 %s210, 1
        %s414 = scalar_lea.sflag [#allocation5], %s413
        %s415 = sand.u32 %s210, 1
        %s416 = smul.addr %s415, 24
        %s417 = scalar_lea.vmem [#allocation17], %s416
        %v419 = vld [vmem:[#allocation6] sm:$0xff]
        %v420 = vld [vmem:[#allocation6 + $0x8] sm:$0xff]
        %v421 = vld [vmem:[#allocation6 + $0x10] sm:$0xff]
        %v422 = vld [vmem:[%s357] sm:$0xf]
        %v423 = vld [vmem:[%s357 + $0x4] sm:$0xf]
        %v424 = vld [vmem:[%s357 + $0x8] sm:$0xf]
        %v425 = vld [vmem:[#allocation8] sm:$0xf]
        %v426 = vld [vmem:[#allocation8 + $0x4] sm:$0xf]
        %v427 = vld [vmem:[#allocation8 + $0x8] sm:$0xf]
        %v428 = vld [vmem:[#allocation8 + $0xc] sm:$0xf]
        %v429 = vld [vmem:[%s357 + $0xc] sm:$0x1]
        %s430 = scalar_lea.vmem [#allocation8], 16
        %v431 = vld [vmem:[%s430] sm:$0xf]
        %v432 = vld [vmem:[%s430 + $0x4] sm:$0xf]
        %v433 = vld [vmem:[%s430 + $0x8] sm:$0xf]
        %v434 = vld [vmem:[%s430 + $0xc] sm:$0xf]
        %v439 = vunpack.c.l.b16 %v422
        %v440 = vunpack.c.l.b16 %v423
        %v441 = vunpack.c.l.b16 %v424
        %v442 = vunpack.c.l.b16 %v429
        %v443 = vpack.c.b16 %v440, %v439
        %v444 = vpack.c.b16 %v442, %v441
        %vm445 = vsmask.f32 7424
        %v447 = vshrl.u32 %v443, 16
        %v449 = vshll.u32 %v443, 16
        %v451 = vrot.slane %v449, 1
        %v452 = vor.u32 %v447, %v451
        %v454 = vshll.u32 %v444, 16
        %v456 = vrot.slane %v454, 1
        %v457 = vsel %vm445, %v452, %v456
        %v458 = vshrl.u32 %v444, 16
        %v460 = vor.u32 %v458, %v456
        %v465 = vunpack.c.l.b16 %v431
        %v466 = vunpack.c.l.b16 %v432
        %v467 = vunpack.c.l.b16 %v433
        %v468 = vunpack.c.l.b16 %v434
        %v469 = vpack.c.b16 %v466, %v465
        %v470 = vpack.c.b16 %v468, %v467
        %vm473 = vcmask 261120
        %v475 = vsel %vm473, %v457, 0
        %v478 = vsel %vm473, %v460, 0
        %480 = vmatprep.subr.bf16.mxu0 0
        %481 = vmatpush1.bf16.msra.mxu0 %v469
        %482 = vmatprep.subr.bf16.mxu0 0
        %483 = vmatpush1.bf16.msra.mxu0 %v470
        %484 = vmatprep.subr.bf16.mxu0 0
        %485 = vmatpush1.bf16.msra.mxu0 0
        %486 = vmatprep.subr.bf16.mxu0 0
        %487 = vmatpush1.bf16.msra.mxu0 0
        %488 = vmatprep.subr.bf16.mxu0 0
        %489 = vmatpush1.bf16.msra.mxu0 0
        %490 = vmatprep.subr.bf16.mxu0 0
        %491 = vmatpush1.bf16.msra.mxu0 0
        %492 = vmatprep.subr.bf16.mxu0 0
        %493 = vmatpush1.bf16.msra.mxu0 0
        %494 = vmatprep.subr.bf16.mxu0 0
        %495 = vmatpush1.bf16.msra.mxu0 0
        %496 = vmatprep.subr.bf16.mxu0 0
        %497 = vmatpush1.bf16.msra.mxu0 0
        %498 = vmatprep.subr.bf16.mxu0 0
        %499 = vmatpush1.bf16.msra.mxu0 0
        %500 = vmatprep.subr.bf16.mxu0 0
        %501 = vmatpush1.bf16.msra.mxu0 0
        %502 = vmatprep.subr.bf16.mxu0 0
        %503 = vmatpush1.bf16.msra.mxu0 0
        %504 = vmatprep.subr.bf16.mxu0 0
        %505 = vmatpush1.bf16.msra.mxu0 0
        %506 = vmatprep.subr.bf16.mxu0 0
        %507 = vmatpush1.bf16.msra.mxu0 0
        %508 = vmatprep.subr.bf16.mxu0 0
        %509 = vmatpush1.bf16.msra.mxu0 0
        %510 = vmatprep.subr.bf16.mxu0 0
        %511 = vmatpush1.bf16.msra.mxu0 0
        %512 = vmatprep.mubr.bf16.mxu0 0
        %513 = vmatmul.mubr.bf16.gmra.mrb[0].mxu0 %v475
        %v514 = vpop.f32.mrb[0].mxu0
        %v515 = vadd.f32 0.0, %v514
        %v516 = vpop.f32.mrb[0].mxu0
        %v517 = vpop.f32.mrb[0].mxu0
        %v518 = vadd.f32 0.0, %v517
        %v519 = vpop.f32.mrb[0].mxu0
        %520 = vmatprep.mubr.bf16.mxu0 0
        %521 = vmatmul.mubr.bf16.gmra.mrb[0].mxu0 %v478
        %v522 = vpop.f32.mrb[0].mxu0
        %v523 = vadd.f32 0.0, %v522
        %v524 = vpop.f32.mrb[0].mxu0
        %v525 = vpop.f32.mrb[0].mxu0
        %v526 = vpop.f32.mrb[0].mxu0
        %527 = vdwg.mxu0
        %v528 = vpack.c.b16 %v441, %v441
        %v533 = vunpack.c.l.b16 %v425
        %v534 = vunpack.c.l.b16 %v426
        %v535 = vunpack.c.l.b16 %v427
        %v536 = vunpack.c.l.b16 %v428
        %v537 = vpack.c.b16 %v534, %v533
        %v538 = vpack.c.b16 %v536, %v535
        %v541 = vsel %vm473, %v443, 0
        %v544 = vsel %vm473, %v528, 0
        %546 = vmatprep.subr.bf16.mxu0 0
        %547 = vmatpush1.bf16.msra.mxu0 %v537
        %548 = vmatprep.subr.bf16.mxu0 0
        %549 = vmatpush1.bf16.msra.mxu0 %v538
        %550 = vmatprep.subr.bf16.mxu0 0
        %551 = vmatpush1.bf16.msra.mxu0 0
        %552 = vmatprep.subr.bf16.mxu0 0
        %553 = vmatpush1.bf16.msra.mxu0 0
        %554 = vmatprep.subr.bf16.mxu0 0
        %555 = vmatpush1.bf16.msra.mxu0 0
        %556 = vmatprep.subr.bf16.mxu0 0
        %557 = vmatpush1.bf16.msra.mxu0 0
        %558 = vmatprep.subr.bf16.mxu0 0
        %559 = vmatpush1.bf16.msra.mxu0 0
        %560 = vmatprep.subr.bf16.mxu0 0
        %561 = vmatpush1.bf16.msra.mxu0 0
        %562 = vmatprep.subr.bf16.mxu0 0
        %563 = vmatpush1.bf16.msra.mxu0 0
        %564 = vmatprep.subr.bf16.mxu0 0
        %565 = vmatpush1.bf16.msra.mxu0 0
        %566 = vmatprep.subr.bf16.mxu0 0
        %567 = vmatpush1.bf16.msra.mxu0 0
        %568 = vmatprep.subr.bf16.mxu0 0
        %569 = vmatpush1.bf16.msra.mxu0 0
        %570 = vmatprep.subr.bf16.mxu0 0
        %571 = vmatpush1.bf16.msra.mxu0 0
        %572 = vmatprep.subr.bf16.mxu0 0
        %573 = vmatpush1.bf16.msra.mxu0 0
        %574 = vmatprep.subr.bf16.mxu0 0
        %575 = vmatpush1.bf16.msra.mxu0 0
        %576 = vmatprep.subr.bf16.mxu0 0
        %577 = vmatpush1.bf16.msra.mxu0 0
        %578 = vmatprep.mubr.bf16.mxu0 0
        %579 = vmatmul.mubr.bf16.gmra.mrb[0].mxu0 %v541
        %v580 = vpop.f32.mrb[0].mxu0
        %v581 = vadd.f32 %v515, %v580
        %v582 = vpop.f32.mrb[0].mxu0
        %v583 = vpop.f32.mrb[0].mxu0
        %v584 = vadd.f32 %v518, %v583
        %v585 = vpop.f32.mrb[0].mxu0
        %586 = vmatprep.mubr.bf16.mxu0 0
        %587 = vmatmul.mubr.bf16.gmra.mrb[0].mxu0 %v544
        %v588 = vpop.f32.mrb[0].mxu0
        %v589 = vadd.f32 %v523, %v588
        %v590 = vpop.f32.mrb[0].mxu0
        %v591 = vpop.f32.mrb[0].mxu0
        %v592 = vpop.f32.mrb[0].mxu0
        %593 = vdwg.mxu0
        %v594 = vld [vmem:[%s357] sm:$0x8]
        %v595 = vld [vmem:[%s357 + $0xc] sm:$0x7]
        %s596 = scalar_lea.vmem [#allocation8], 32
        %v597 = vld [vmem:[%s596] sm:$0xf]
        %v598 = vld [vmem:[%s596 + $0x4] sm:$0xf]
        %v599 = vld [vmem:[%s596 + $0x8] sm:$0xf]
        %v600 = vld [vmem:[%s596 + $0xc] sm:$0xf]
        %v603 = vunpack.c.l.b16 %v594
        %v604 = vunpack.c.l.b16 %v595
        %v605 = vpack.c.b16 %v440, %v603
        %v606 = vpack.c.b16 %v604, %v441
        %vm607 = vcmask 1044480
        %v608 = vrot.slane %v605, 3
        %v609 = vrot.slane %v606, 3
        %v610 = vsel %vm607, %v608, %v609
        %v615 = vunpack.c.l.b16 %v597
        %v616 = vunpack.c.l.b16 %v598
        %v617 = vunpack.c.l.b16 %v599
        %v618 = vunpack.c.l.b16 %v600
        %v619 = vpack.c.b16 %v616, %v615
        %v620 = vpack.c.b16 %v618, %v617
        %v624 = vsel %vm473, %v610, 0
        %v627 = vsel %vm473, %v609, 0
        %629 = vmatprep.subr.bf16.mxu0 0
        %630 = vmatpush1.bf16.msra.mxu0 %v619
        %631 = vmatprep.subr.bf16.mxu0 0
        %632 = vmatpush1.bf16.msra.mxu0 %v620
        %633 = vmatprep.subr.bf16.mxu0 0
        %634 = vmatpush1.bf16.msra.mxu0 0
        %635 = vmatprep.subr.bf16.mxu0 0
        %636 = vmatpush1.bf16.msra.mxu0 0
        %637 = vmatprep.subr.bf16.mxu0 0
        %638 = vmatpush1.bf16.msra.mxu0 0
        %639 = vmatprep.subr.bf16.mxu0 0
        %640 = vmatpush1.bf16.msra.mxu0 0
        %641 = vmatprep.subr.bf16.mxu0 0
        %642 = vmatpush1.bf16.msra.mxu0 0
        %643 = vmatprep.subr.bf16.mxu0 0
        %644 = vmatpush1.bf16.msra.mxu0 0
        %645 = vmatprep.subr.bf16.mxu0 0
        %646 = vmatpush1.bf16.msra.mxu0 0
        %647 = vmatprep.subr.bf16.mxu0 0
        %648 = vmatpush1.bf16.msra.mxu0 0
        %649 = vmatprep.subr.bf16.mxu0 0
        %650 = vmatpush1.bf16.msra.mxu0 0
        %651 = vmatprep.subr.bf16.mxu0 0
        %652 = vmatpush1.bf16.msra.mxu0 0
        %653 = vmatprep.subr.bf16.mxu0 0
        %654 = vmatpush1.bf16.msra.mxu0 0
        %655 = vmatprep.subr.bf16.mxu0 0
        %656 = vmatpush1.bf16.msra.mxu0 0
        %657 = vmatprep.subr.bf16.mxu0 0
        %658 = vmatpush1.bf16.msra.mxu0 0
        %659 = vmatprep.subr.bf16.mxu0 0
        %660 = vmatpush1.bf16.msra.mxu0 0
        %661 = vmatprep.mubr.bf16.mxu0 0
        %662 = vmatmul.mubr.bf16.gmra.mrb[0].mxu0 %v624
        %v663 = vpop.f32.mrb[0].mxu0
        %v664 = vadd.f32 0.0, %v663
        %v665 = vpop.f32.mrb[0].mxu0
        %v666 = vpop.f32.mrb[0].mxu0
        %v667 = vadd.f32 0.0, %v666
        %v668 = vpop.f32.mrb[0].mxu0
        %669 = vmatprep.mubr.bf16.mxu0 0
        %670 = vmatmul.mubr.bf16.gmra.mrb[0].mxu0 %v627
        %v671 = vpop.f32.mrb[0].mxu0
        %v672 = vadd.f32 0.0, %v671
        %v673 = vpop.f32.mrb[0].mxu0
        %v674 = vpop.f32.mrb[0].mxu0
        %v675 = vpop.f32.mrb[0].mxu0
        %676 = vdwg.mxu0
        %v677 = vadd.f32 %v581, %v664
        %v678 = vadd.f32 %v584, %v667
        %v679 = vadd.f32 %v589, %v672
        %v680 = vld [vmem:[%s357 + $0xc] sm:$0xf]
        %s681 = scalar_lea.vmem [#allocation8], 48
        %v682 = vld [vmem:[%s681] sm:$0xf]
        %v683 = vld [vmem:[%s681 + $0x4] sm:$0xf]
        %v684 = vld [vmem:[%s681 + $0x8] sm:$0xf]
        %v685 = vld [vmem:[%s681 + $0xc] sm:$0xf]
        %v687 = vunpack.c.l.b16 %v680
        %v688 = vpack.c.b16 %v687, %v441
        %vm689 = vsmask.f32 4352
        %v691 = vshrl.u32 %v605, 16
        %v693 = vrot.slane %v691, 3
        %v694 = vshll.u32 %v605, 16
        %v696 = vrot.slane %v694, 4
        %v697 = vor.u32 %v693, %v696
        %v699 = vshrl.u32 %v688, 16
        %v701 = vrot.slane %v699, 3
        %v702 = vshll.u32 %v688, 16
        %v704 = vrot.slane %v702, 4
        %v705 = vor.u32 %v701, %v704
        %v706 = vsel %vm689, %v697, %v705
        %v711 = vunpack.c.l.b16 %v682
        %v712 = vunpack.c.l.b16 %v683
        %v713 = vunpack.c.l.b16 %v684
        %v714 = vunpack.c.l.b16 %v685
        %v715 = vpack.c.b16 %v712, %v711
        %v716 = vpack.c.b16 %v714, %v713
        %v720 = vsel %vm473, %v706, 0
        %v723 = vsel %vm473, %v705, 0
        %725 = vmatprep.subr.bf16.mxu0 0
        %726 = vmatpush1.bf16.msra.mxu0 %v715
        %727 = vmatprep.subr.bf16.mxu0 0
        %728 = vmatpush1.bf16.msra.mxu0 %v716
        %729 = vmatprep.subr.bf16.mxu0 0
        %730 = vmatpush1.bf16.msra.mxu0 0
        %731 = vmatprep.subr.bf16.mxu0 0
        %732 = vmatpush1.bf16.msra.mxu0 0
        %733 = vmatprep.subr.bf16.mxu0 0
        %734 = vmatpush1.bf16.msra.mxu0 0
        %735 = vmatprep.subr.bf16.mxu0 0
        %736 = vmatpush1.bf16.msra.mxu0 0
        %737 = vmatprep.subr.bf16.mxu0 0
        %738 = vmatpush1.bf16.msra.mxu0 0
        %739 = vmatprep.subr.bf16.mxu0 0
        %740 = vmatpush1.bf16.msra.mxu0 0
        %741 = vmatprep.subr.bf16.mxu0 0
        %742 = vmatpush1.bf16.msra.mxu0 0
        %743 = vmatprep.subr.bf16.mxu0 0
        %744 = vmatpush1.bf16.msra.mxu0 0
        %745 = vmatprep.subr.bf16.mxu0 0
        %746 = vmatpush1.bf16.msra.mxu0 0
        %747 = vmatprep.subr.bf16.mxu0 0
        %748 = vmatpush1.bf16.msra.mxu0 0
        %749 = vmatprep.subr.bf16.mxu0 0
        %750 = vmatpush1.bf16.msra.mxu0 0
        %751 = vmatprep.subr.bf16.mxu0 0
        %752 = vmatpush1.bf16.msra.mxu0 0
        %753 = vmatprep.subr.bf16.mxu0 0
        %754 = vmatpush1.bf16.msra.mxu0 0
        %755 = vmatprep.subr.bf16.mxu0 0
        %756 = vmatpush1.bf16.msra.mxu0 0
        %757 = vmatprep.mubr.bf16.mxu0 0
        %758 = vmatmul.mubr.bf16.gmra.mrb[0].mxu0 %v720
        %v759 = vpop.f32.mrb[0].mxu0
        %v760 = vadd.f32 0.0, %v759
        %v761 = vpop.f32.mrb[0].mxu0
        %v762 = vpop.f32.mrb[0].mxu0
        %v763 = vadd.f32 0.0, %v762
        %v764 = vpop.f32.mrb[0].mxu0
        %765 = vmatprep.mubr.bf16.mxu0 0
        %766 = vmatmul.mubr.bf16.gmra.mrb[0].mxu0 %v723
        %v767 = vpop.f32.mrb[0].mxu0
        %v768 = vadd.f32 0.0, %v767
        %v769 = vpop.f32.mrb[0].mxu0
        %v770 = vpop.f32.mrb[0].mxu0
        %v771 = vpop.f32.mrb[0].mxu0
        %772 = vdwg.mxu0
        %v773 = vadd.f32 %v677, %v760
        %v774 = vadd.f32 %v678, %v763
        %v775 = vadd.f32 %v679, %v768
        %v776 = vld [vmem:[#allocation9] sm:$0x1]
        %v778 = vlaneseq
        %v779 = vshrl.u32 %v778, 7
        %v780 = vsub.s32 0, %v779
        %v781 = vrot.slane %v776, %v780
        %v783 = vadd.f32 %v773, %v781
        %v784 = vadd.f32 %v774, %v781
        %v785 = vadd.f32 %v775, %v781
        %vm786 = vcmp.ge.f32.partialorder %v783, 0.0
        %vm787 = vcmp.ge.f32.partialorder %v784, 0.0
        %vm788 = vcmp.ge.f32.partialorder %v785, 0.0
        %v789 = vld [vmem:[#allocation11] sm:$0x1]
        %v791 = vlaneseq
        %v792 = vshrl.u32 %v791, 7
        %v793 = vsub.s32 0, %v792
        %v794 = vrot.slane %v789, %v793
        %v796 = vmul.f32 %v794, %v783
        %v797 = vmul.f32 %v794, %v784
        %v798 = vmul.f32 %v794, %v785
        %v799 = vsel %vm786, %v783, %v796
        %v800 = vsel %vm787, %v784, %v797
        %v801 = vsel %vm788, %v785, %v798
        %803 = vset.pattern.permute.xlu0 0
        %804 = vperm.xlu0 %803, %v419
        %v805 = vpop.permute.xlu0 %804
        %808 = vset.pattern.permute.xlu0 0
        %809 = vperm.xlu0 %808, %v420
        %v810 = vpop.permute.xlu0 %809
        %813 = vset.pattern.permute.xlu0 0
        %814 = vperm.xlu0 %813, %v421
        %v815 = vpop.permute.xlu0 %814
        %v817 = vmul.f32 %v799, %v805
        %v818 = vmul.f32 %v800, %v810
        %v819 = vmul.f32 %v801, %v815
        %vm820 = vcmask 125952
        %821 = vst.msk [vmem:[#allocation2] sm:$0xf] %vm820, 0
        %822 = vst.msk [vmem:[#allocation2 + $0x4] sm:$0xf] %vm820, 0
        %823 = vst.msk [vmem:[#allocation2 + $0x8] sm:$0xf] %vm820, 0
        %824 = vst.msk [vmem:[#allocation2 + $0xc] sm:$0xf] %vm820, 0
        %825 = vst.msk [vmem:[#allocation2 + $0x10] sm:$0xf] %vm820, 0
        %826 = vst.msk [vmem:[#allocation2 + $0x14] sm:$0xf] %vm820, 0
        %vm827 = vcmask 124928
        %vm828 = vsmask.f32 2304
        %vm829 = vmand %vm827, %vm828
        %v830 = vld [vmem:[#allocation2 + $0x18] sm:$0x7]
        %v831 = vsel %vm829, 0, %v830
        %832 = vst [vmem:[#allocation2 + $0x18] sm:$0x7] %v831
        %v833 = vpack.c.bf16 %v818, %v817
        %v834 = vpack.c.bf16 %v819, %v819
        %v837 = vunpack.c.l.b16 %v833
        %v838 = vunpack.c.h.b16 %v833
        %v839 = vunpack.c.l.b16 %v834
        %v840 = vpack.c.b16 %v837, %v837
        %v841 = vpack.c.b16 %v838, %v838
        %v842 = vpack.c.b16 %v839, %v839
        %846 = vst.msk [vmem:[#allocation2 + $0x8] sm:$0xf] %vm820, %v840
        %847 = vst.msk [vmem:[#allocation2 + $0xc] sm:$0xf] %vm820, %v841
        %848 = vst.msk [vmem:[#allocation2 + $0x10] sm:$0xf] %vm820, %v842
        %v849 = vld [vmem:[#allocation2 + $0x4] sm:$0xf]
        %v850 = vld [vmem:[#allocation2 + $0x8] sm:$0xf]
        %v851 = vld [vmem:[#allocation2 + $0xc] sm:$0xf]
        %v852 = vld [vmem:[#allocation2 + $0x10] sm:$0x1]
        %v853 = vld [vmem:[#allocation12] sm:$0xf]
        %v854 = vld [vmem:[#allocation12 + $0x4] sm:$0xf]
        %v855 = vld [vmem:[#allocation2 + $0x4] sm:$0xe]
        %s856 = scalar_lea.vmem [#allocation12], 8
        %v857 = vld [vmem:[%s856] sm:$0xf]
        %v858 = vld [vmem:[%s856 + $0x4] sm:$0xf]
        %v863 = vunpack.c.l.b16 %v855
        %v864 = vunpack.c.l.b16 %v850
        %v865 = vunpack.c.l.b16 %v851
        %v866 = vunpack.c.l.b16 %v852
        %v867 = vpack.c.b16 %v864, %v863
        %v868 = vpack.c.b16 %v866, %v865
        %vm869 = vcmask 1046528
        %v870 = vrot.slane %v867, 1
        %v871 = vrot.slane %v868, 1
        %v872 = vsel %vm869, %v870, %v871
        %v875 = vunpack.c.l.b16 %v857
        %v876 = vunpack.c.l.b16 %v858
        %v877 = vpack.c.b16 %v876, %v875
        %vm879 = vcmask 130048
        %v881 = vsel %vm879, %v872, 0
        %v884 = vsel %vm879, %v871, 0
        %886 = vmatprep.subr.bf16.mxu0 0
        %887 = vmatpush1.bf16.msra.mxu0 %v877
        %888 = vmatprep.subr.bf16.mxu0 0
        %889 = vmatpush1.bf16.msra.mxu0 0
        %890 = vmatprep.subr.bf16.mxu0 0
        %891 = vmatpush1.bf16.msra.mxu0 0
        %892 = vmatprep.subr.bf16.mxu0 0
        %893 = vmatpush1.bf16.msra.mxu0 0
        %894 = vmatprep.subr.bf16.mxu0 0
        %895 = vmatpush1.bf16.msra.mxu0 0
        %896 = vmatprep.subr.bf16.mxu0 0
        %897 = vmatpush1.bf16.msra.mxu0 0
        %898 = vmatprep.subr.bf16.mxu0 0
        %899 = vmatpush1.bf16.msra.mxu0 0
        %900 = vmatprep.subr.bf16.mxu0 0
        %901 = vmatpush1.bf16.msra.mxu0 0
        %902 = vmatprep.subr.bf16.mxu0 0
        %903 = vmatpush1.bf16.msra.mxu0 0
        %904 = vmatprep.subr.bf16.mxu0 0
        %905 = vmatpush1.bf16.msra.mxu0 0
        %906 = vmatprep.subr.bf16.mxu0 0
        %907 = vmatpush1.bf16.msra.mxu0 0
        %908 = vmatprep.subr.bf16.mxu0 0
        %909 = vmatpush1.bf16.msra.mxu0 0
        %910 = vmatprep.subr.bf16.mxu0 0
        %911 = vmatpush1.bf16.msra.mxu0 0
        %912 = vmatprep.subr.bf16.mxu0 0
        %913 = vmatpush1.bf16.msra.mxu0 0
        %914 = vmatprep.subr.bf16.mxu0 0
        %915 = vmatpush1.bf16.msra.mxu0 0
        %916 = vmatprep.subr.bf16.mxu0 0
        %917 = vmatpush1.bf16.msra.mxu0 0
        %918 = vmatprep.mubr.bf16.mxu0 0
        %919 = vmatmul.mubr.bf16.gmra.mrb[0].mxu0 %v881
        %v920 = vpop.f32.mrb[0].mxu0
        %v921 = vadd.f32 0.0, %v920
        %v922 = vpop.f32.mrb[0].mxu0
        %v923 = vpop.f32.mrb[0].mxu0
        %v924 = vadd.f32 0.0, %v923
        %v925 = vpop.f32.mrb[0].mxu0
        %926 = vmatprep.mubr.bf16.mxu0 0
        %927 = vmatmul.mubr.bf16.gmra.mrb[0].mxu0 %v884
        %v928 = vpop.f32.mrb[0].mxu0
        %v929 = vadd.f32 0.0, %v928
        %v930 = vpop.f32.mrb[0].mxu0
        %v931 = vpop.f32.mrb[0].mxu0
        %v932 = vpop.f32.mrb[0].mxu0
        %933 = vdwg.mxu0
        %v935 = vunpack.c.l.b16 %v849
        %v936 = vpack.c.b16 %v864, %v935
        %v938 = vshrl.u32 %v936, 16
        %v940 = vshll.u32 %v936, 16
        %v942 = vrot.slane %v940, 1
        %v943 = vor.u32 %v938, %v942
        %v945 = vshll.u32 %v868, 16
        %v947 = vrot.slane %v945, 1
        %v948 = vsel %vm445, %v943, %v947
        %v949 = vshrl.u32 %v868, 16
        %v951 = vor.u32 %v949, %v947
        %v954 = vunpack.c.l.b16 %v853
        %v955 = vunpack.c.l.b16 %v854
        %v956 = vpack.c.b16 %v955, %v954
        %v959 = vsel %vm879, %v948, 0
        %v962 = vsel %vm879, %v951, 0
        %964 = vmatprep.subr.bf16.mxu0 0
        %965 = vmatpush1.bf16.msra.mxu0 %v956
        %966 = vmatprep.subr.bf16.mxu0 0
        %967 = vmatpush1.bf16.msra.mxu0 0
        %968 = vmatprep.subr.bf16.mxu0 0
        %969 = vmatpush1.bf16.msra.mxu0 0
        %970 = vmatprep.subr.bf16.mxu0 0
        %971 = vmatpush1.bf16.msra.mxu0 0
        %972 = vmatprep.subr.bf16.mxu0 0
        %973 = vmatpush1.bf16.msra.mxu0 0
        %974 = vmatprep.subr.bf16.mxu0 0
        %975 = vmatpush1.bf16.msra.mxu0 0
        %976 = vmatprep.subr.bf16.mxu0 0
        %977 = vmatpush1.bf16.msra.mxu0 0
        %978 = vmatprep.subr.bf16.mxu0 0
        %979 = vmatpush1.bf16.msra.mxu0 0
        %980 = vmatprep.subr.bf16.mxu0 0
        %981 = vmatpush1.bf16.msra.mxu0 0
        %982 = vmatprep.subr.bf16.mxu0 0
        %983 = vmatpush1.bf16.msra.mxu0 0
        %984 = vmatprep.subr.bf16.mxu0 0
        %985 = vmatpush1.bf16.msra.mxu0 0
        %986 = vmatprep.subr.bf16.mxu0 0
        %987 = vmatpush1.bf16.msra.mxu0 0
        %988 = vmatprep.subr.bf16.mxu0 0
        %989 = vmatpush1.bf16.msra.mxu0 0
        %990 = vmatprep.subr.bf16.mxu0 0
        %991 = vmatpush1.bf16.msra.mxu0 0
        %992 = vmatprep.subr.bf16.mxu0 0
        %993 = vmatpush1.bf16.msra.mxu0 0
        %994 = vmatprep.subr.bf16.mxu0 0
        %995 = vmatpush1.bf16.msra.mxu0 0
        %996 = vmatprep.mubr.bf16.mxu0 0
        %997 = vmatmul.mubr.bf16.gmra.mrb[0].mxu0 %v959
        %v998 = vpop.f32.mrb[0].mxu0
        %v999 = vadd.f32 %v921, %v998
        %v1000 = vpop.f32.mrb[0].mxu0
        %v1001 = vpop.f32.mrb[0].mxu0
        %v1002 = vadd.f32 %v924, %v1001
        %v1003 = vpop.f32.mrb[0].mxu0
        %1004 = vmatprep.mubr.bf16.mxu0 0
        %1005 = vmatmul.mubr.bf16.gmra.mrb[0].mxu0 %v962
        %v1006 = vpop.f32.mrb[0].mxu0
        %v1007 = vadd.f32 %v929, %v1006
        %v1008 = vpop.f32.mrb[0].mxu0
        %v1009 = vpop.f32.mrb[0].mxu0
        %v1010 = vpop.f32.mrb[0].mxu0
        %1011 = vdwg.mxu0
        %v1012 = vld [vmem:[#allocation2 + $0x10] sm:$0x3]
        %s1013 = scalar_lea.vmem [#allocation12], 16
        %v1014 = vld [vmem:[%s1013] sm:$0xf]
        %v1015 = vld [vmem:[%s1013 + $0x4] sm:$0xf]
        %v1017 = vunpack.c.l.b16 %v1012
        %v1018 = vpack.c.b16 %v1017, %v865
        %vm1019 = vsmask.f32 6400
        %v1021 = vshrl.u32 %v867, 16
        %v1023 = vrot.slane %v1021, 1
        %v1024 = vshll.u32 %v867, 16
        %v1026 = vrot.slane %v1024, 2
        %v1027 = vor.u32 %v1023, %v1026
        %v1029 = vshrl.u32 %v1018, 16
        %v1031 = vrot.slane %v1029, 1
        %v1032 = vshll.u32 %v1018, 16
        %v1034 = vrot.slane %v1032, 2
        %v1035 = vor.u32 %v1031, %v1034
        %v1036 = vsel %vm1019, %v1027, %v1035
        %v1039 = vunpack.c.l.b16 %v1014
        %v1040 = vunpack.c.l.b16 %v1015
        %v1041 = vpack.c.b16 %v1040, %v1039
        %v1044 = vsel %vm879, %v1036, 0
        %v1047 = vsel %vm879, %v1035, 0
        %1049 = vmatprep.subr.bf16.mxu0 0
        %1050 = vmatpush1.bf16.msra.mxu0 %v1041
        %1051 = vmatprep.subr.bf16.mxu0 0
        %1052 = vmatpush1.bf16.msra.mxu0 0
        %1053 = vmatprep.subr.bf16.mxu0 0
        %1054 = vmatpush1.bf16.msra.mxu0 0
        %1055 = vmatprep.subr.bf16.mxu0 0
        %1056 = vmatpush1.bf16.msra.mxu0 0
        %1057 = vmatprep.subr.bf16.mxu0 0
        %1058 = vmatpush1.bf16.msra.mxu0 0
        %1059 = vmatprep.subr.bf16.mxu0 0
        %1060 = vmatpush1.bf16.msra.mxu0 0
        %1061 = vmatprep.subr.bf16.mxu0 0
        %1062 = vmatpush1.bf16.msra.mxu0 0
        %1063 = vmatprep.subr.bf16.mxu0 0
        %1064 = vmatpush1.bf16.msra.mxu0 0
        %1065 = vmatprep.subr.bf16.mxu0 0
        %1066 = vmatpush1.bf16.msra.mxu0 0
        %1067 = vmatprep.subr.bf16.mxu0 0
        %1068 = vmatpush1.bf16.msra.mxu0 0
        %1069 = vmatprep.subr.bf16.mxu0 0
        %1070 = vmatpush1.bf16.msra.mxu0 0
        %1071 = vmatprep.subr.bf16.mxu0 0
        %1072 = vmatpush1.bf16.msra.mxu0 0
        %1073 = vmatprep.subr.bf16.mxu0 0
        %1074 = vmatpush1.bf16.msra.mxu0 0
        %1075 = vmatprep.subr.bf16.mxu0 0
        %1076 = vmatpush1.bf16.msra.mxu0 0
        %1077 = vmatprep.subr.bf16.mxu0 0
        %1078 = vmatpush1.bf16.msra.mxu0 0
        %1079 = vmatprep.subr.bf16.mxu0 0
        %1080 = vmatpush1.bf16.msra.mxu0 0
        %1081 = vmatprep.mubr.bf16.mxu0 0
        %1082 = vmatmul.mubr.bf16.gmra.mrb[0].mxu0 %v1044
        %v1083 = vpop.f32.mrb[0].mxu0
        %v1084 = vadd.f32 0.0, %v1083
        %v1085 = vpop.f32.mrb[0].mxu0
        %v1086 = vpop.f32.mrb[0].mxu0
        %v1087 = vadd.f32 0.0, %v1086
        %v1088 = vpop.f32.mrb[0].mxu0
        %1089 = vmatprep.mubr.bf16.mxu0 0
        %1090 = vmatmul.mubr.bf16.gmra.mrb[0].mxu0 %v1047
        %v1091 = vpop.f32.mrb[0].mxu0
        %v1092 = vadd.f32 0.0, %v1091
        %v1093 = vpop.f32.mrb[0].mxu0
        %v1094 = vpop.f32.mrb[0].mxu0
        %v1095 = vpop.f32.mrb[0].mxu0
        %1096 = vdwg.mxu0
        %v1097 = vadd.f32 %v999, %v1084
        %v1098 = vadd.f32 %v1002, %v1087
        %v1099 = vadd.f32 %v1007, %v1092
        %v1100 = vld [vmem:[#allocation2 + $0x4] sm:$0x8]
        %v1101 = vld [vmem:[#allocation2 + $0x10] sm:$0xf]
        %s1102 = scalar_lea.vmem [#allocation12], 24
        %v1103 = vld [vmem:[%s1102] sm:$0xf]
        %v1104 = vld [vmem:[%s1102 + $0x4] sm:$0xf]
        %v1107 = vunpack.c.l.b16 %v1100
        %v1108 = vunpack.c.l.b16 %v1101
        %v1109 = vpack.c.b16 %v864, %v1107
        %v1110 = vpack.c.b16 %v1108, %v865
        %v1112 = vshrl.u32 %v1109, 16
        %v1114 = vrot.slane %v1112, 3
        %v1115 = vshll.u32 %v1109, 16
        %v1117 = vrot.slane %v1115, 4
        %v1118 = vor.u32 %v1114, %v1117
        %v1120 = vshrl.u32 %v1110, 16
        %v1122 = vrot.slane %v1120, 3
        %v1123 = vshll.u32 %v1110, 16
        %v1125 = vrot.slane %v1123, 4
        %v1126 = vor.u32 %v1122, %v1125
        %v1127 = vsel %vm689, %v1118, %v1126
        %v1130 = vunpack.c.l.b16 %v1103
        %v1131 = vunpack.c.l.b16 %v1104
        %v1132 = vpack.c.b16 %v1131, %v1130
        %v1135 = vsel %vm879, %v1127, 0
        %v1138 = vsel %vm879, %v1126, 0
        %1140 = vmatprep.subr.bf16.mxu0 0
        %1141 = vmatpush1.bf16.msra.mxu0 %v1132
        %1142 = vmatprep.subr.bf16.mxu0 0
        %1143 = vmatpush1.bf16.msra.mxu0 0
        %1144 = vmatprep.subr.bf16.mxu0 0
        %1145 = vmatpush1.bf16.msra.mxu0 0
        %1146 = vmatprep.subr.bf16.mxu0 0
        %1147 = vmatpush1.bf16.msra.mxu0 0
        %1148 = vmatprep.subr.bf16.mxu0 0
        %1149 = vmatpush1.bf16.msra.mxu0 0
        %1150 = vmatprep.subr.bf16.mxu0 0
        %1151 = vmatpush1.bf16.msra.mxu0 0
        %1152 = vmatprep.subr.bf16.mxu0 0
        %1153 = vmatpush1.bf16.msra.mxu0 0
        %1154 = vmatprep.subr.bf16.mxu0 0
        %1155 = vmatpush1.bf16.msra.mxu0 0
        %1156 = vmatprep.subr.bf16.mxu0 0
        %1157 = vmatpush1.bf16.msra.mxu0 0
        %1158 = vmatprep.subr.bf16.mxu0 0
        %1159 = vmatpush1.bf16.msra.mxu0 0
        %1160 = vmatprep.subr.bf16.mxu0 0
        %1161 = vmatpush1.bf16.msra.mxu0 0
        %1162 = vmatprep.subr.bf16.mxu0 0
        %1163 = vmatpush1.bf16.msra.mxu0 0
        %1164 = vmatprep.subr.bf16.mxu0 0
        %1165 = vmatpush1.bf16.msra.mxu0 0
        %1166 = vmatprep.subr.bf16.mxu0 0
        %1167 = vmatpush1.bf16.msra.mxu0 0
        %1168 = vmatprep.subr.bf16.mxu0 0
        %1169 = vmatpush1.bf16.msra.mxu0 0
        %1170 = vmatprep.subr.bf16.mxu0 0
        %1171 = vmatpush1.bf16.msra.mxu0 0
        %1172 = vmatprep.mubr.bf16.mxu0 0
        %1173 = vmatmul.mubr.bf16.gmra.mrb[0].mxu0 %v1135
        %v1174 = vpop.f32.mrb[0].mxu0
        %v1175 = vadd.f32 0.0, %v1174
        %v1176 = vpop.f32.mrb[0].mxu0
        %v1177 = vpop.f32.mrb[0].mxu0
        %v1178 = vadd.f32 0.0, %v1177
        %v1179 = vpop.f32.mrb[0].mxu0
        %1180 = vmatprep.mubr.bf16.mxu0 0
        %1181 = vmatmul.mubr.bf16.gmra.mrb[0].mxu0 %v1138
        %v1182 = vpop.f32.mrb[0].mxu0
        %v1183 = vadd.f32 0.0, %v1182
        %v1184 = vpop.f32.mrb[0].mxu0
        %v1185 = vpop.f32.mrb[0].mxu0
        %v1186 = vpop.f32.mrb[0].mxu0
        %1187 = vdwg.mxu0
        %v1188 = vadd.f32 %v1097, %v1175
        %v1189 = vadd.f32 %v1098, %v1178
        %v1190 = vadd.f32 %v1099, %v1183
        %s1191 = scalar_lea.vmem [#allocation12], 32
        %v1192 = vld [vmem:[%s1191] sm:$0xf]
        %v1193 = vld [vmem:[%s1191 + $0x4] sm:$0xf]
        %v1194 = vpack.c.b16 %v865, %v864
        %v1195 = vpack.c.b16 %v1108, %v1108
        %v1198 = vunpack.c.l.b16 %v1192
        %v1199 = vunpack.c.l.b16 %v1193
        %v1200 = vpack.c.b16 %v1199, %v1198
        %v1203 = vsel %vm879, %v1194, 0
        %v1206 = vsel %vm879, %v1195, 0
        %1208 = vmatprep.subr.bf16.mxu0 0
        %1209 = vmatpush1.bf16.msra.mxu0 %v1200
        %1210 = vmatprep.subr.bf16.mxu0 0
        %1211 = vmatpush1.bf16.msra.mxu0 0
        %1212 = vmatprep.subr.bf16.mxu0 0
        %1213 = vmatpush1.bf16.msra.mxu0 0
        %1214 = vmatprep.subr.bf16.mxu0 0
        %1215 = vmatpush1.bf16.msra.mxu0 0
        %1216 = vmatprep.subr.bf16.mxu0 0
        %1217 = vmatpush1.bf16.msra.mxu0 0
        %1218 = vmatprep.subr.bf16.mxu0 0
        %1219 = vmatpush1.bf16.msra.mxu0 0
        %1220 = vmatprep.subr.bf16.mxu0 0
        %1221 = vmatpush1.bf16.msra.mxu0 0
        %1222 = vmatprep.subr.bf16.mxu0 0
        %1223 = vmatpush1.bf16.msra.mxu0 0
        %1224 = vmatprep.subr.bf16.mxu0 0
        %1225 = vmatpush1.bf16.msra.mxu0 0
        %1226 = vmatprep.subr.bf16.mxu0 0
        %1227 = vmatpush1.bf16.msra.mxu0 0
        %1228 = vmatprep.subr.bf16.mxu0 0
        %1229 = vmatpush1.bf16.msra.mxu0 0
        %1230 = vmatprep.subr.bf16.mxu0 0
        %1231 = vmatpush1.bf16.msra.mxu0 0
        %1232 = vmatprep.subr.bf16.mxu0 0
        %1233 = vmatpush1.bf16.msra.mxu0 0
        %1234 = vmatprep.subr.bf16.mxu0 0
        %1235 = vmatpush1.bf16.msra.mxu0 0
        %1236 = vmatprep.subr.bf16.mxu0 0
        %1237 = vmatpush1.bf16.msra.mxu0 0
        %1238 = vmatprep.subr.bf16.mxu0 0
        %1239 = vmatpush1.bf16.msra.mxu0 0
        %1240 = vmatprep.mubr.bf16.mxu0 0
        %1241 = vmatmul.mubr.bf16.gmra.mrb[0].mxu0 %v1203
        %v1242 = vpop.f32.mrb[0].mxu0
        %v1243 = vadd.f32 0.0, %v1242
        %v1244 = vpop.f32.mrb[0].mxu0
        %v1245 = vpop.f32.mrb[0].mxu0
        %v1246 = vadd.f32 0.0, %v1245
        %v1247 = vpop.f32.mrb[0].mxu0
        %1248 = vmatprep.mubr.bf16.mxu0 0
        %1249 = vmatmul.mubr.bf16.gmra.mrb[0].mxu0 %v1206
        %v1250 = vpop.f32.mrb[0].mxu0
        %v1251 = vadd.f32 0.0, %v1250
        %v1252 = vpop.f32.mrb[0].mxu0
        %v1253 = vpop.f32.mrb[0].mxu0
        %v1254 = vpop.f32.mrb[0].mxu0
        %1255 = vdwg.mxu0
        %v1256 = vadd.f32 %v1188, %v1243
        %v1257 = vadd.f32 %v1189, %v1246
        %v1258 = vadd.f32 %v1190, %v1251
        %v1259 = vld [vmem:[#allocation2 + $0x8] sm:$0xf]
        %v1260 = vld [vmem:[#allocation2 + $0xc] sm:$0xf]
        %v1261 = vld [vmem:[#allocation2 + $0x10] sm:$0xf]
        %v1262 = vld [vmem:[#allocation2 + $0x14] sm:$0x1]
        %s1263 = scalar_lea.vmem [#allocation12], 40
        %v1264 = vld [vmem:[%s1263] sm:$0xf]
        %v1265 = vld [vmem:[%s1263 + $0x4] sm:$0xf]
        %v1270 = vunpack.c.l.b16 %v1259
        %v1271 = vunpack.c.l.b16 %v1260
        %v1272 = vunpack.c.l.b16 %v1261
        %v1273 = vunpack.c.l.b16 %v1262
        %v1274 = vpack.c.b16 %v1271, %v1270
        %v1275 = vpack.c.b16 %v1273, %v1272
        %v1277 = vshrl.u32 %v1274, 16
        %v1279 = vshll.u32 %v1274, 16
        %v1281 = vrot.slane %v1279, 1
        %v1282 = vor.u32 %v1277, %v1281
        %v1284 = vshll.u32 %v1275, 16
        %v1286 = vrot.slane %v1284, 1
        %v1287 = vsel %vm445, %v1282, %v1286
        %v1288 = vshrl.u32 %v1275, 16
        %v1290 = vor.u32 %v1288, %v1286
        %v1293 = vunpack.c.l.b16 %v1264
        %v1294 = vunpack.c.l.b16 %v1265
        %v1295 = vpack.c.b16 %v1294, %v1293
        %v1298 = vsel %vm879, %v1287, 0
        %v1301 = vsel %vm879, %v1290, 0
        %1303 = vmatprep.subr.bf16.mxu0 0
        %1304 = vmatpush1.bf16.msra.mxu0 %v1295
        %1305 = vmatprep.subr.bf16.mxu0 0
        %1306 = vmatpush1.bf16.msra.mxu0 0
        %1307 = vmatprep.subr.bf16.mxu0 0
        %1308 = vmatpush1.bf16.msra.mxu0 0
        %1309 = vmatprep.subr.bf16.mxu0 0
        %1310 = vmatpush1.bf16.msra.mxu0 0
        %1311 = vmatprep.subr.bf16.mxu0 0
        %1312 = vmatpush1.bf16.msra.mxu0 0
        %1313 = vmatprep.subr.bf16.mxu0 0
        %1314 = vmatpush1.bf16.msra.mxu0 0
        %1315 = vmatprep.subr.bf16.mxu0 0
        %1316 = vmatpush1.bf16.msra.mxu0 0
        %1317 = vmatprep.subr.bf16.mxu0 0
        %1318 = vmatpush1.bf16.msra.mxu0 0
        %1319 = vmatprep.subr.bf16.mxu0 0
        %1320 = vmatpush1.bf16.msra.mxu0 0
        %1321 = vmatprep.subr.bf16.mxu0 0
        %1322 = vmatpush1.bf16.msra.mxu0 0
        %1323 = vmatprep.subr.bf16.mxu0 0
        %1324 = vmatpush1.bf16.msra.mxu0 0
        %1325 = vmatprep.subr.bf16.mxu0 0
        %1326 = vmatpush1.bf16.msra.mxu0 0
        %1327 = vmatprep.subr.bf16.mxu0 0
        %1328 = vmatpush1.bf16.msra.mxu0 0
        %1329 = vmatprep.subr.bf16.mxu0 0
        %1330 = vmatpush1.bf16.msra.mxu0 0
        %1331 = vmatprep.subr.bf16.mxu0 0
        %1332 = vmatpush1.bf16.msra.mxu0 0
        %1333 = vmatprep.subr.bf16.mxu0 0
        %1334 = vmatpush1.bf16.msra.mxu0 0
        %1335 = vmatprep.mubr.bf16.mxu0 0
        %1336 = vmatmul.mubr.bf16.gmra.mrb[0].mxu0 %v1298
        %v1337 = vpop.f32.mrb[0].mxu0
        %v1338 = vadd.f32 0.0, %v1337
        %v1339 = vpop.f32.mrb[0].mxu0
        %v1340 = vpop.f32.mrb[0].mxu0
        %v1341 = vadd.f32 0.0, %v1340
        %v1342 = vpop.f32.mrb[0].mxu0
        %1343 = vmatprep.mubr.bf16.mxu0 0
        %1344 = vmatmul.mubr.bf16.gmra.mrb[0].mxu0 %v1301
        %v1345 = vpop.f32.mrb[0].mxu0
        %v1346 = vadd.f32 0.0, %v1345
        %v1347 = vpop.f32.mrb[0].mxu0
        %v1348 = vpop.f32.mrb[0].mxu0
        %v1349 = vpop.f32.mrb[0].mxu0
        %1350 = vdwg.mxu0
        %v1351 = vadd.f32 %v1256, %v1338
        %v1352 = vadd.f32 %v1257, %v1341
        %v1353 = vadd.f32 %v1258, %v1346
        %v1354 = vld [vmem:[#allocation2 + $0x8] sm:$0xc]
        %v1355 = vld [vmem:[#allocation2 + $0x14] sm:$0x7]
        %s1356 = scalar_lea.vmem [#allocation12], 48
        %v1357 = vld [vmem:[%s1356] sm:$0xf]
        %v1358 = vld [vmem:[%s1356 + $0x4] sm:$0xf]
        %v1361 = vunpack.c.l.b16 %v1354
        %v1362 = vunpack.c.l.b16 %v1355
        %v1363 = vpack.c.b16 %v1271, %v1361
        %v1364 = vpack.c.b16 %v1362, %v1272
        %vm1365 = vsmask.f32 5376
        %v1367 = vshrl.u32 %v1363, 16
        %v1369 = vrot.slane %v1367, 2
        %v1370 = vshll.u32 %v1363, 16
        %v1372 = vrot.slane %v1370, 3
        %v1373 = vor.u32 %v1369, %v1372
        %v1375 = vshrl.u32 %v1364, 16
        %v1377 = vrot.slane %v1375, 2
        %v1378 = vshll.u32 %v1364, 16
        %v1380 = vrot.slane %v1378, 3
        %v1381 = vor.u32 %v1377, %v1380
        %v1382 = vsel %vm1365, %v1373, %v1381
        %v1385 = vunpack.c.l.b16 %v1357
        %v1386 = vunpack.c.l.b16 %v1358
        %v1387 = vpack.c.b16 %v1386, %v1385
        %v1390 = vsel %vm879, %v1382, 0
        %v1393 = vsel %vm879, %v1381, 0
        %1395 = vmatprep.subr.bf16.mxu0 0
        %1396 = vmatpush1.bf16.msra.mxu0 %v1387
        %1397 = vmatprep.subr.bf16.mxu0 0
        %1398 = vmatpush1.bf16.msra.mxu0 0
        %1399 = vmatprep.subr.bf16.mxu0 0
        %1400 = vmatpush1.bf16.msra.mxu0 0
        %1401 = vmatprep.subr.bf16.mxu0 0
        %1402 = vmatpush1.bf16.msra.mxu0 0
        %1403 = vmatprep.subr.bf16.mxu0 0
        %1404 = vmatpush1.bf16.msra.mxu0 0
        %1405 = vmatprep.subr.bf16.mxu0 0
        %1406 = vmatpush1.bf16.msra.mxu0 0
        %1407 = vmatprep.subr.bf16.mxu0 0
        %1408 = vmatpush1.bf16.msra.mxu0 0
        %1409 = vmatprep.subr.bf16.mxu0 0
        %1410 = vmatpush1.bf16.msra.mxu0 0
        %1411 = vmatprep.subr.bf16.mxu0 0
        %1412 = vmatpush1.bf16.msra.mxu0 0
        %1413 = vmatprep.subr.bf16.mxu0 0
        %1414 = vmatpush1.bf16.msra.mxu0 0
        %1415 = vmatprep.subr.bf16.mxu0 0
        %1416 = vmatpush1.bf16.msra.mxu0 0
        %1417 = vmatprep.subr.bf16.mxu0 0
        %1418 = vmatpush1.bf16.msra.mxu0 0
        %1419 = vmatprep.subr.bf16.mxu0 0
        %1420 = vmatpush1.bf16.msra.mxu0 0
        %1421 = vmatprep.subr.bf16.mxu0 0
        %1422 = vmatpush1.bf16.msra.mxu0 0
        %1423 = vmatprep.subr.bf16.mxu0 0
        %1424 = vmatpush1.bf16.msra.mxu0 0
        %1425 = vmatprep.subr.bf16.mxu0 0
        %1426 = vmatpush1.bf16.msra.mxu0 0
        %1427 = vmatprep.mubr.bf16.mxu0 0
        %1428 = vmatmul.mubr.bf16.gmra.mrb[0].mxu0 %v1390
        %v1429 = vpop.f32.mrb[0].mxu0
        %v1430 = vadd.f32 0.0, %v1429
        %v1431 = vpop.f32.mrb[0].mxu0
        %v1432 = vpop.f32.mrb[0].mxu0
        %v1433 = vadd.f32 0.0, %v1432
        %v1434 = vpop.f32.mrb[0].mxu0
        %1435 = vmatprep.mubr.bf16.mxu0 0
        %1436 = vmatmul.mubr.bf16.gmra.mrb[0].mxu0 %v1393
        %v1437 = vpop.f32.mrb[0].mxu0
        %v1438 = vadd.f32 0.0, %v1437
        %v1439 = vpop.f32.mrb[0].mxu0
        %v1440 = vpop.f32.mrb[0].mxu0
        %v1441 = vpop.f32.mrb[0].mxu0
        %1442 = vdwg.mxu0
        %v1443 = vadd.f32 %v1351, %v1430
        %v1444 = vadd.f32 %v1352, %v1433
        %v1445 = vadd.f32 %v1353, %v1438
        %v1446 = vld [vmem:[#allocation2 + $0x8] sm:$0x8]
        %s1447 = scalar_lea.vmem [#allocation12], 56
        %v1448 = vld [vmem:[%s1447] sm:$0xf]
        %v1449 = vld [vmem:[%s1447 + $0x4] sm:$0xf]
        %v1451 = vunpack.c.l.b16 %v1446
        %v1452 = vpack.c.b16 %v1271, %v1451
        %v1453 = vrot.slane %v1452, 3
        %v1454 = vrot.slane %v1364, 3
        %v1455 = vsel %vm607, %v1453, %v1454
        %v1458 = vunpack.c.l.b16 %v1448
        %v1459 = vunpack.c.l.b16 %v1449
        %v1460 = vpack.c.b16 %v1459, %v1458
        %v1463 = vsel %vm879, %v1455, 0
        %v1466 = vsel %vm879, %v1454, 0
        %1468 = vmatprep.subr.bf16.mxu0 0
        %1469 = vmatpush1.bf16.msra.mxu0 %v1460
        %1470 = vmatprep.subr.bf16.mxu0 0
        %1471 = vmatpush1.bf16.msra.mxu0 0
        %1472 = vmatprep.subr.bf16.mxu0 0
        %1473 = vmatpush1.bf16.msra.mxu0 0
        %1474 = vmatprep.subr.bf16.mxu0 0
        %1475 = vmatpush1.bf16.msra.mxu0 0
        %1476 = vmatprep.subr.bf16.mxu0 0
        %1477 = vmatpush1.bf16.msra.mxu0 0
        %1478 = vmatprep.subr.bf16.mxu0 0
        %1479 = vmatpush1.bf16.msra.mxu0 0
        %1480 = vmatprep.subr.bf16.mxu0 0
        %1481 = vmatpush1.bf16.msra.mxu0 0
        %1482 = vmatprep.subr.bf16.mxu0 0
        %1483 = vmatpush1.bf16.msra.mxu0 0
        %1484 = vmatprep.subr.bf16.mxu0 0
        %1485 = vmatpush1.bf16.msra.mxu0 0
        %1486 = vmatprep.subr.bf16.mxu0 0
        %1487 = vmatpush1.bf16.msra.mxu0 0
        %1488 = vmatprep.subr.bf16.mxu0 0
        %1489 = vmatpush1.bf16.msra.mxu0 0
        %1490 = vmatprep.subr.bf16.mxu0 0
        %1491 = vmatpush1.bf16.msra.mxu0 0
        %1492 = vmatprep.subr.bf16.mxu0 0
        %1493 = vmatpush1.bf16.msra.mxu0 0
        %1494 = vmatprep.subr.bf16.mxu0 0
        %1495 = vmatpush1.bf16.msra.mxu0 0
        %1496 = vmatprep.subr.bf16.mxu0 0
        %1497 = vmatpush1.bf16.msra.mxu0 0
        %1498 = vmatprep.subr.bf16.mxu0 0
        %1499 = vmatpush1.bf16.msra.mxu0 0
        %1500 = vmatprep.mubr.bf16.mxu0 0
        %1501 = vmatmul.mubr.bf16.gmra.mrb[0].mxu0 %v1463
        %v1502 = vpop.f32.mrb[0].mxu0
        %v1503 = vadd.f32 0.0, %v1502
        %v1504 = vpop.f32.mrb[0].mxu0
        %v1505 = vpop.f32.mrb[0].mxu0
        %v1506 = vadd.f32 0.0, %v1505
        %v1507 = vpop.f32.mrb[0].mxu0
        %1508 = vmatprep.mubr.bf16.mxu0 0
        %1509 = vmatmul.mubr.bf16.gmra.mrb[0].mxu0 %v1466
        %v1510 = vpop.f32.mrb[0].mxu0
        %v1511 = vadd.f32 0.0, %v1510
        %v1512 = vpop.f32.mrb[0].mxu0
        %v1513 = vpop.f32.mrb[0].mxu0
        %v1514 = vpop.f32.mrb[0].mxu0
        %1515 = vdwg.mxu0
        %v1516 = vadd.f32 %v1443, %v1503
        %v1517 = vadd.f32 %v1444, %v1506
        %v1518 = vadd.f32 %v1445, %v1511
        %v1519 = vld [vmem:[#allocation2 + $0x14] sm:$0xf]
        %s1520 = scalar_lea.vmem [#allocation12], 64
        %v1521 = vld [vmem:[%s1520] sm:$0xf]
        %v1522 = vld [vmem:[%s1520 + $0x4] sm:$0xf]
        %v1524 = vunpack.c.l.b16 %v1519
        %v1525 = vpack.c.b16 %v1524, %v1272
        %v1527 = vshrl.u32 %v1452, 16
        %v1529 = vrot.slane %v1527, 3
        %v1530 = vshll.u32 %v1452, 16
        %v1532 = vrot.slane %v1530, 4
        %v1533 = vor.u32 %v1529, %v1532
        %v1535 = vshrl.u32 %v1525, 16
        %v1537 = vrot.slane %v1535, 3
        %v1538 = vshll.u32 %v1525, 16
        %v1540 = vrot.slane %v1538, 4
        %v1541 = vor.u32 %v1537, %v1540
        %v1542 = vsel %vm689, %v1533, %v1541
        %v1545 = vunpack.c.l.b16 %v1521
        %v1546 = vunpack.c.l.b16 %v1522
        %v1547 = vpack.c.b16 %v1546, %v1545
        %v1550 = vsel %vm879, %v1542, 0
        %v1553 = vsel %vm879, %v1541, 0
        %1555 = vmatprep.subr.bf16.mxu0 0
        %1556 = vmatpush1.bf16.msra.mxu0 %v1547
        %1557 = vmatprep.subr.bf16.mxu0 0
        %1558 = vmatpush1.bf16.msra.mxu0 0
        %1559 = vmatprep.subr.bf16.mxu0 0
        %1560 = vmatpush1.bf16.msra.mxu0 0
        %1561 = vmatprep.subr.bf16.mxu0 0
        %1562 = vmatpush1.bf16.msra.mxu0 0
        %1563 = vmatprep.subr.bf16.mxu0 0
        %1564 = vmatpush1.bf16.msra.mxu0 0
        %1565 = vmatprep.subr.bf16.mxu0 0
        %1566 = vmatpush1.bf16.msra.mxu0 0
        %1567 = vmatprep.subr.bf16.mxu0 0
        %1568 = vmatpush1.bf16.msra.mxu0 0
        %1569 = vmatprep.subr.bf16.mxu0 0
        %1570 = vmatpush1.bf16.msra.mxu0 0
        %1571 = vmatprep.subr.bf16.mxu0 0
        %1572 = vmatpush1.bf16.msra.mxu0 0
        %1573 = vmatprep.subr.bf16.mxu0 0
        %1574 = vmatpush1.bf16.msra.mxu0 0
        %1575 = vmatprep.subr.bf16.mxu0 0
        %1576 = vmatpush1.bf16.msra.mxu0 0
        %1577 = vmatprep.subr.bf16.mxu0 0
        %1578 = vmatpush1.bf16.msra.mxu0 0
        %1579 = vmatprep.subr.bf16.mxu0 0
        %1580 = vmatpush1.bf16.msra.mxu0 0
        %1581 = vmatprep.subr.bf16.mxu0 0
        %1582 = vmatpush1.bf16.msra.mxu0 0
        %1583 = vmatprep.subr.bf16.mxu0 0
        %1584 = vmatpush1.bf16.msra.mxu0 0
        %1585 = vmatprep.subr.bf16.mxu0 0
        %1586 = vmatpush1.bf16.msra.mxu0 0
        %1587 = vmatprep.mubr.bf16.mxu0 0
        %1588 = vmatmul.mubr.bf16.gmra.mrb[0].mxu0 %v1550
        %v1589 = vpop.f32.mrb[0].mxu0
        %v1590 = vadd.f32 0.0, %v1589
        %v1591 = vpop.f32.mrb[0].mxu0
        %v1592 = vpop.f32.mrb[0].mxu0
        %v1593 = vadd.f32 0.0, %v1592
        %v1594 = vpop.f32.mrb[0].mxu0
        %1595 = vmatprep.mubr.bf16.mxu0 0
        %1596 = vmatmul.mubr.bf16.gmra.mrb[0].mxu0 %v1553
        %v1597 = vpop.f32.mrb[0].mxu0
        %v1598 = vadd.f32 0.0, %v1597
        %v1599 = vpop.f32.mrb[0].mxu0
        %v1600 = vpop.f32.mrb[0].mxu0
        %v1601 = vpop.f32.mrb[0].mxu0
        %1602 = vdwg.mxu0
        %v1603 = vadd.f32 %v1516, %v1590
        %v1604 = vadd.f32 %v1517, %v1593
        %v1605 = vadd.f32 %v1518, %v1598
        %v1606 = vld [vmem:[#allocation14] sm:$0x1]
        %v1608 = vlaneseq
        %v1609 = vshrl.u32 %v1608, 7
        %v1610 = vsub.s32 0, %v1609
        %v1611 = vrot.slane %v1606, %v1610
        %v1613 = vadd.f32 %v1603, %v1611
        %v1614 = vadd.f32 %v1604, %v1611
        %v1615 = vadd.f32 %v1605, %v1611
        %vm1616 = vcmp.ge.f32.partialorder %v1613, 0.0
        %vm1617 = vcmp.ge.f32.partialorder %v1614, 0.0
        %vm1618 = vcmp.ge.f32.partialorder %v1615, 0.0
        %v1619 = vld [vmem:[#allocation15] sm:$0x1]
        %v1621 = vlaneseq
        %v1622 = vshrl.u32 %v1621, 7
        %v1623 = vsub.s32 0, %v1622
        %v1624 = vrot.slane %v1619, %v1623
        %v1626 = vmul.f32 %v1624, %v1613
        %v1627 = vmul.f32 %v1624, %v1614
        %v1628 = vmul.f32 %v1624, %v1615
        %v1629 = vsel %vm1616, %v1613, %v1626
        %v1630 = vsel %vm1617, %v1614, %v1627
        %v1631 = vsel %vm1618, %v1615, %v1628
        %1632 = vst.msk [vmem:[%s417] sm:$0xff] %vm879, %v1629
        %1633 = vst.msk [vmem:[%s417 + $0x8] sm:$0xff] %vm879, %v1630
        %1634 = vst.msk [vmem:[%s417 + $0x10] sm:$0xff] %vm879, %v1631
        %s1635 = sand.u32 %s210, 1
        %s1636 = scalar_lea.sflag [#allocation5], %s1635
        %s1637 = sand.u32 %s210, 1
        %s1638 = smul.addr %s1637, 24
        %s1639 = scalar_lea.vmem [#allocation17], %s1638
        // Predicated region
        $region85: #{context_net_forward.4} parent=51 // pred_check
          %p1640 = pneg %p220
        $region86: #{context_net_forward.4} parent=51 // pred_check_branch
          %1642 = sbr.rel (%p1640) target = $region88
        $region87: #{context_net_forward.4} parent=51 // pred_region
          %s1644 = ssub.s32 384, 384
          %1645 = vsyncadd %s1636, %s1644
          %s1646 = smul.addr %s29, 3
          %s1647 = smul.addr %s1646, 128
          %s1648 = scalar_lea.hbm %s8, %s1647
          %s1649 = sshll.u32 %s1639, 4
          %s1650 = int_to_ptr.vmem [resolvable:$true] %s1649
          %1655 = dma.vmem_to_hbm [thread:$0]  %s1650, 384, %s1648, %s1636, 128, 128, 8
        $region88: #{context_net_forward.4} parent=51 // pred_fallthru
          _
      $region52: #{context_net_forward.4} parent=5 // pred_fallthru
        _
      %p1656 = scmp.le.s32.totalorder 2, %s24
      // Predicated region
      $region89: #{context_net_forward.4} parent=5 // pred_check
        %p1657 = pneg %p1656
      $region90: #{context_net_forward.4} parent=5 // pred_check_branch
        %1659 = sbr.rel (%p1657) target = $region92
      $region91: #{context_net_forward.4} parent=5 // pred_region
        %s1660 = ssub.s32 %s24, 2
        // Predicated region
        $region93: #{context_net_forward.4} parent=91 // pred_check
          %p1661 = pneg %p226
        $region94: #{context_net_forward.4} parent=91 // pred_check_branch
          %1663 = sbr.rel (%p1661) target = $region96
        $region95: #{context_net_forward.4} parent=91 // pred_region
          %s1664 = sand.u32 %s211, 1
          %s1665 = scalar_lea.sflag [#allocation5], %s1664
          %s1666 = sand.u32 %s211, 1
          %s1667 = smul.addr %s1666, 24
          %s1668 = scalar_lea.vmem [#allocation17], %s1667
          %1669 = dma.done %s1665, 384
        $region96: #{context_net_forward.4} parent=91 // pred_fallthru
          _
      $region92: #{context_net_forward.4} parent=5 // pred_fallthru
        _
    $region6: #{context_net_forward.4} parent=1 // loop_footer
      %s28 = sadd.s32 1, %s24
    $region7: #{context_net_forward.4} parent=1 // loop_footer_branch
      %23 = sbr.rel target = $region3
    $region8: #{context_net_forward.4} parent=1 // loop_exit
      _
    %1670 = vsyncpa [#allocation4], 1
    %s1671 = scalar_lea.sflag [#allocation4], 1
    %1672 = vsyncpa %s1671, 1
    %1673 = vsyncpa [#allocation7], 1
    %1674 = vsyncpa [#allocation10], 1
    %1675 = vsyncpa [#allocation13], 1
    %1676 = vsyncpa [#allocation16], 1
    %1677 = vsyncpa [#allocation5], 1
    %s1678 = scalar_lea.sflag [#allocation5], 1
    %1679 = vsyncpa %s1678, 1

// kernel: context_net_forward.5
$region0: #{context_net_forward.5}
  #allocation0 [shape = 'u32[]', space=smem, size = 0x4, offset = 0x4, fixed_abs, tag = 'smem constant byte address 0x4 - core index']
  #allocation1 [shape = 'u32[144,128]{1,0:T(1,128)}', space=vmem, size = 0x12000, scoped, tag = 'internal scratch']
  #allocation2 [shape = 'bf16[35,32]{1,0:T(8,128)(2,1)}', space=vmem, size = 0x2800, scoped, tag = 'scratch operand']
  %s0 = inlined_call_operand.hbm [shape: bf16[2,16,64], index: 0, kind: input, shape index: {}]
  %s1 = inlined_call_operand.hbm [shape: f32[8,1], index: 1, kind: input, shape index: {}]
  %s2 = inlined_call_operand.hbm [shape: bf16[4,64,32], index: 2, kind: input, shape index: {}]
  %s3 = inlined_call_operand.hbm [shape: f32[1,32], index: 3, kind: input, shape index: {}]
  %s4 = inlined_call_operand.hbm [shape: f32[1,32], index: 4, kind: input, shape index: {}, may-alias: {4,7}]
  %s5 = inlined_call_operand.hbm [shape: bf16[9,32,32], index: 5, kind: input, shape index: {}]
  %s6 = inlined_call_operand.hbm [shape: f32[1,32], index: 6, kind: input, shape index: {}]
  %s7 = inlined_call_operand.hbm [shape: f32[1,32], index: 7, kind: input, shape index: {}, may-alias: {4,7}]
  %s8 = inlined_call_operand.hbm [shape: f32[32,4], index: 8, kind: input, shape index: {}]
  %s9 = inlined_call_operand.hbm [shape: f32[1,4], index: 9, kind: input, shape index: {}]
  %s10 = inlined_call_operand.hbm [shape: f32[4,32], index: 10, kind: input, shape index: {}]
  %s11 = inlined_call_operand.hbm [shape: f32[1,32], index: 11, kind: input, shape index: {}]
  %s12 = inlined_call_operand.hbm [shape: f32[2,8,32], index: 12, kind: output, shape index: {}]
  %s13 = sld [smem:[#allocation0]]
  $region129: #{context_net_forward.5} parent=0
    _
  %s15 = ssub.s32 1, %s13
  %s16 = scalar_select 0, %s15, %s13
  $region1: #{context_net_forward.5} parent=0
    #allocation3 [shape = 'u8[8192]{0}', space=vmem, size = 0x2000, scoped, tag = 'input window, operand 0']
    #allocation4 [shape = 's32[2]{0}', space=sflag, size = 0x8, scoped, tag = 'scoped memory for context_net_forward.5']
    #allocation5 [shape = 's32[2]{0}', space=sflag, size = 0x8, scoped, tag = 'scoped memory for context_net_forward.5']
    #allocation6 [shape = 'u8[4096]{0}', space=vmem, size = 0x1000, scoped, tag = 'input window, operand 1, single buffered']
    #allocation7 [shape = 's32[1]{0}', space=sflag, size = 0x4, scoped, tag = 'scoped memory for context_net_forward.5']
    #allocation8 [shape = 'u8[65536]{0}', space=vmem, size = 0x10000, scoped, tag = 'input window, operand 2, single buffered']
    #allocation9 [shape = 'u8[512]{0}', space=vmem, size = 0x400, scoped, tag = 'input window, operand 3, single buffered']
    #allocation10 [shape = 's32[1]{0}', space=sflag, size = 0x4, scoped, tag = 'scoped memory for context_net_forward.5']
    #allocation11 [shape = 'u8[512]{0}', space=vmem, size = 0x400, scoped, tag = 'input window, operand 4, single buffered']
    #allocation12 [shape = 'u8[73728]{0}', space=vmem, size = 0x12000, scoped, tag = 'input window, operand 5, single buffered']
    #allocation13 [shape = 's32[1]{0}', space=sflag, size = 0x4, scoped, tag = 'scoped memory for context_net_forward.5']
    #allocation14 [shape = 'u8[512]{0}', space=vmem, size = 0x400, scoped, tag = 'input window, operand 6, single buffered']
    #allocation15 [shape = 'u8[512]{0}', space=vmem, size = 0x400, scoped, tag = 'input window, operand 7, single buffered']
    #allocation16 [shape = 's32[1]{0}', space=sflag, size = 0x4, scoped, tag = 'scoped memory for context_net_forward.5']
    #allocation17 [shape = 'u8[16384]{0}', space=vmem, size = 0x4000, scoped, tag = 'input window, operand 8, single buffered']
    #allocation18 [shape = 'u8[512]{0}', space=vmem, size = 0x400, scoped, tag = 'input window, operand 9, single buffered']
    #allocation19 [shape = 's32[1]{0}', space=sflag, size = 0x4, scoped, tag = 'scoped memory for context_net_forward.5']
    #allocation20 [shape = 'u8[2048]{0}', space=vmem, size = 0x800, scoped, tag = 'input window, operand 10, single buffered']
    #allocation21 [shape = 'u8[512]{0}', space=vmem, size = 0x400, scoped, tag = 'input window, operand 11, single buffered']
    #allocation22 [shape = 's32[1]{0}', space=sflag, size = 0x4, scoped, tag = 'scoped memory for context_net_forward.5']
    #allocation23 [shape = 'u8[8192]{0}', space=vmem, size = 0x2000, scoped, tag = 'output window, operand 0']
    %17 = vsyncpa [#allocation4], 0
    %s18 = scalar_lea.sflag [#allocation4], 1
    %19 = vsyncpa %s18, 0
    %20 = vsyncpa [#allocation7], 0
    %21 = vsyncpa [#allocation10], 0
    %22 = vsyncpa [#allocation13], 0
    %23 = vsyncpa [#allocation16], 0
    %24 = vsyncpa [#allocation19], 0
    %25 = vsyncpa [#allocation22], 0
    %26 = vsyncpa [#allocation5], 0
    %s27 = scalar_lea.sflag [#allocation5], 1
    %28 = vsyncpa %s27, 0
    loop: start=0, step=1, limit=4
    $region2: #{context_net_forward.5} parent=1 // loop_pre_header
      _
    $region3: #{context_net_forward.5} parent=1 // loop_header
      %s30 = sphi 0, %s34
      %p31 = scmp.ge.s32.totalorder %s30, 4
      %s40 = sphi 0, %s42
      %s43 = sphi 0, %s40
      %s44 = sphi 0, %s43
      %s60 = sphi 0, %s44
      %s64 = sphi 0, %s64
      %s66 = sphi 0, %s64
      %s67 = sphi 0, %s66
      %s81 = sphi 0, %s67
      %s85 = sphi 0, %s85
      %s87 = sphi 0, %s85
      %s88 = sphi 0, %s87
      %s102 = sphi 0, %s88
      %s106 = sphi 0, %s106
      %s108 = sphi 0, %s106
      %s109 = sphi 0, %s108
      %s123 = sphi 0, %s109
      %s127 = sphi 0, %s127
      %s129 = sphi 0, %s127
      %s130 = sphi 0, %s129
      %s144 = sphi 0, %s130
      %s148 = sphi 0, %s148
      %s150 = sphi 0, %s148
      %s151 = sphi 0, %s150
      %s165 = sphi 0, %s151
      %s169 = sphi 0, %s169
      %s171 = sphi 0, %s169
      %s172 = sphi 0, %s171
      %s186 = sphi 0, %s172
      %s190 = sphi 0, %s190
      %s192 = sphi 0, %s190
      %s193 = sphi 0, %s192
      %s207 = sphi 0, %s193
      %s211 = sphi 0, %s211
      %s213 = sphi 0, %s211
      %s214 = sphi 0, %s213
      %s228 = sphi 0, %s214
      %s232 = sphi 0, %s232
      %s234 = sphi 0, %s232
      %s235 = sphi 0, %s234
      %s249 = sphi 0, %s235
      %s253 = sphi 0, %s253
      %s255 = sphi 0, %s253
      %s256 = sphi 0, %s255
      %s270 = sphi 0, %s256
      %s274 = sphi 0, %s274
      %s276 = sphi 0, %s274
      %s277 = sphi 0, %s276
      %s291 = sphi 0, %s277
      %s297 = sphi 0, %s299
      %s300 = sphi 0, %s297
      %s301 = sphi 0, %s300
      %s317 = sphi 0, %s301
    $region4: #{context_net_forward.5} parent=1 // loop_header_branch
      %33 = sbr.rel (%p31) target = $region8
    $region5: #{context_net_forward.5} parent=1 // loop_body
      %s35 = ssub.s32 %s30, 1
      %s36 = ssub.s32 %s30, 2
      %s37 = sadd.s32 %s30, 1
      %s38 = ssub.s32 %s30, %s37
      %p39 = scmp.eq.s32.totalorder %s38, 0
      %s41 = sadd.s32 %s40, 1
      %s42 = scalar_select %p39, %s40, %s41
      %p45 = pneg %p39
      %p46 = scmp.eq.s32.totalorder %s30, 1
      %p47 = por %p45, %p46
      %p48 = scmp.ne.s32.totalorder %s40, %s43
      %p49 = scmp.eq.s32.totalorder %s30, 0
      %p50 = por %p48, %p49
      %p51 = scmp.ne.s32.totalorder %s40, %s43
      %p52 = scmp.eq.s32.totalorder %s35, 1
      %p53 = por %p51, %p52
      %p54 = scmp.ne.s32.totalorder %s43, %s44
      %p55 = scmp.eq.s32.totalorder %s35, 0
      %p56 = por %p54, %p55
      %p57 = scmp.ne.s32.totalorder %s43, %s44
      %p58 = scmp.eq.s32.totalorder %s36, 1
      %p59 = por %p57, %p58
      %p61 = scmp.ne.s32.totalorder %s44, %s60
      %p62 = scmp.eq.s32.totalorder %s36, 0
      %p63 = por %p61, %p62
      %s65 = sadd.s32 %s64, 1
      %p68 = scmp.eq.s32.totalorder %s30, 1
      %p69 = scmp.ne.s32.totalorder %s64, %s66
      %p70 = scmp.eq.s32.totalorder %s30, 0
      %p71 = por %p69, %p70
      %p72 = scmp.ne.s32.totalorder %s64, %s66
      %p73 = scmp.eq.s32.totalorder %s35, 1
      %p74 = por %p72, %p73
      %p75 = scmp.ne.s32.totalorder %s66, %s67
      %p76 = scmp.eq.s32.totalorder %s35, 0
      %p77 = por %p75, %p76
      %p78 = scmp.ne.s32.totalorder %s66, %s67
      %p79 = scmp.eq.s32.totalorder %s36, 1
      %p80 = por %p78, %p79
      %p82 = scmp.ne.s32.totalorder %s67, %s81
      %p83 = scmp.eq.s32.totalorder %s36, 0
      %p84 = por %p82, %p83
      %s86 = sadd.s32 %s85, 1
      %p89 = scmp.eq.s32.totalorder %s30, 1
      %p90 = scmp.ne.s32.totalorder %s85, %s87
      %p91 = scmp.eq.s32.totalorder %s30, 0
      %p92 = por %p90, %p91
      %p93 = scmp.ne.s32.totalorder %s85, %s87
      %p94 = scmp.eq.s32.totalorder %s35, 1
      %p95 = por %p93, %p94
      %p96 = scmp.ne.s32.totalorder %s87, %s88
      %p97 = scmp.eq.s32.totalorder %s35, 0
      %p98 = por %p96, %p97
      %p99 = scmp.ne.s32.totalorder %s87, %s88
      %p100 = scmp.eq.s32.totalorder %s36, 1
      %p101 = por %p99, %p100
      %p103 = scmp.ne.s32.totalorder %s88, %s102
      %p104 = scmp.eq.s32.totalorder %s36, 0
      %p105 = por %p103, %p104
      %s107 = sadd.s32 %s106, 1
      %p110 = scmp.eq.s32.totalorder %s30, 1
      %p111 = scmp.ne.s32.totalorder %s106, %s108
      %p112 = scmp.eq.s32.totalorder %s30, 0
      %p113 = por %p111, %p112
      %p114 = scmp.ne.s32.totalorder %s106, %s108
      %p115 = scmp.eq.s32.totalorder %s35, 1
      %p116 = por %p114, %p115
      %p117 = scmp.ne.s32.totalorder %s108, %s109
      %p118 = scmp.eq.s32.totalorder %s35, 0
      %p119 = por %p117, %p118
      %p120 = scmp.ne.s32.totalorder %s108, %s109
      %p121 = scmp.eq.s32.totalorder %s36, 1
      %p122 = por %p120, %p121
      %p124 = scmp.ne.s32.totalorder %s109, %s123
      %p125 = scmp.eq.s32.totalorder %s36, 0
      %p126 = por %p124, %p125
      %s128 = sadd.s32 %s127, 1
      %p131 = scmp.eq.s32.totalorder %s30, 1
      %p132 = scmp.ne.s32.totalorder %s127, %s129
      %p133 = scmp.eq.s32.totalorder %s30, 0
      %p134 = por %p132, %p133
      %p135 = scmp.ne.s32.totalorder %s127, %s129
      %p136 = scmp.eq.s32.totalorder %s35, 1
      %p137 = por %p135, %p136
      %p138 = scmp.ne.s32.totalorder %s129, %s130
      %p139 = scmp.eq.s32.totalorder %s35, 0
      %p140 = por %p138, %p139
      %p141 = scmp.ne.s32.totalorder %s129, %s130
      %p142 = scmp.eq.s32.totalorder %s36, 1
      %p143 = por %p141, %p142
      %p145 = scmp.ne.s32.totalorder %s130, %s144
      %p146 = scmp.eq.s32.totalorder %s36, 0
      %p147 = por %p145, %p146
      %s149 = sadd.s32 %s148, 1
      %p152 = scmp.eq.s32.totalorder %s30, 1
      %p153 = scmp.ne.s32.totalorder %s148, %s150
      %p154 = scmp.eq.s32.totalorder %s30, 0
      %p155 = por %p153, %p154
      %p156 = scmp.ne.s32.totalorder %s148, %s150
      %p157 = scmp.eq.s32.totalorder %s35, 1
      %p158 = por %p156, %p157
      %p159 = scmp.ne.s32.totalorder %s150, %s151
      %p160 = scmp.eq.s32.totalorder %s35, 0
      %p161 = por %p159, %p160
      %p162 = scmp.ne.s32.totalorder %s150, %s151
      %p163 = scmp.eq.s32.totalorder %s36, 1
      %p164 = por %p162, %p163
      %p166 = scmp.ne.s32.totalorder %s151, %s165
      %p167 = scmp.eq.s32.totalorder %s36, 0
      %p168 = por %p166, %p167
      %s170 = sadd.s32 %s169, 1
      %p173 = scmp.eq.s32.totalorder %s30, 1
      %p174 = scmp.ne.s32.totalorder %s169, %s171
      %p175 = scmp.eq.s32.totalorder %s30, 0
      %p176 = por %p174, %p175
      %p177 = scmp.ne.s32.totalorder %s169, %s171
      %p178 = scmp.eq.s32.totalorder %s35, 1
      %p179 = por %p177, %p178
      %p180 = scmp.ne.s32.totalorder %s171, %s172
      %p181 = scmp.eq.s32.totalorder %s35, 0
      %p182 = por %p180, %p181
      %p183 = scmp.ne.s32.totalorder %s171, %s172
      %p184 = scmp.eq.s32.totalorder %s36, 1
      %p185 = por %p183, %p184
      %p187 = scmp.ne.s32.totalorder %s172, %s186
      %p188 = scmp.eq.s32.totalorder %s36, 0
      %p189 = por %p187, %p188
      %s191 = sadd.s32 %s190, 1
      %p194 = scmp.eq.s32.totalorder %s30, 1
      %p195 = scmp.ne.s32.totalorder %s190, %s192
      %p196 = scmp.eq.s32.totalorder %s30, 0
      %p197 = por %p195, %p196
      %p198 = scmp.ne.s32.totalorder %s190, %s192
      %p199 = scmp.eq.s32.totalorder %s35, 1
      %p200 = por %p198, %p199
      %p201 = scmp.ne.s32.totalorder %s192, %s193
      %p202 = scmp.eq.s32.totalorder %s35, 0
      %p203 = por %p201, %p202
      %p204 = scmp.ne.s32.totalorder %s192, %s193
      %p205 = scmp.eq.s32.totalorder %s36, 1
      %p206 = por %p204, %p205
      %p208 = scmp.ne.s32.totalorder %s193, %s207
      %p209 = scmp.eq.s32.totalorder %s36, 0
      %p210 = por %p208, %p209
      %s212 = sadd.s32 %s211, 1
      %p215 = scmp.eq.s32.totalorder %s30, 1
      %p216 = scmp.ne.s32.totalorder %s211, %s213
      %p217 = scmp.eq.s32.totalorder %s30, 0
      %p218 = por %p216, %p217
      %p219 = scmp.ne.s32.totalorder %s211, %s213
      %p220 = scmp.eq.s32.totalorder %s35, 1
      %p221 = por %p219, %p220
      %p222 = scmp.ne.s32.totalorder %s213, %s214
      %p223 = scmp.eq.s32.totalorder %s35, 0
      %p224 = por %p222, %p223
      %p225 = scmp.ne.s32.totalorder %s213, %s214
      %p226 = scmp.eq.s32.totalorder %s36, 1
      %p227 = por %p225, %p226
      %p229 = scmp.ne.s32.totalorder %s214, %s228
      %p230 = scmp.eq.s32.totalorder %s36, 0
      %p231 = por %p229, %p230
      %s233 = sadd.s32 %s232, 1
      %p236 = scmp.eq.s32.totalorder %s30, 1
      %p237 = scmp.ne.s32.totalorder %s232, %s234
      %p238 = scmp.eq.s32.totalorder %s30, 0
      %p239 = por %p237, %p238
      %p240 = scmp.ne.s32.totalorder %s232, %s234
      %p241 = scmp.eq.s32.totalorder %s35, 1
      %p242 = por %p240, %p241
      %p243 = scmp.ne.s32.totalorder %s234, %s235
      %p244 = scmp.eq.s32.totalorder %s35, 0
      %p245 = por %p243, %p244
      %p246 = scmp.ne.s32.totalorder %s234, %s235
      %p247 = scmp.eq.s32.totalorder %s36, 1
      %p248 = por %p246, %p247
      %p250 = scmp.ne.s32.totalorder %s235, %s249
      %p251 = scmp.eq.s32.totalorder %s36, 0
      %p252 = por %p250, %p251
      %s254 = sadd.s32 %s253, 1
      %p257 = scmp.eq.s32.totalorder %s30, 1
      %p258 = scmp.ne.s32.totalorder %s253, %s255
      %p259 = scmp.eq.s32.totalorder %s30, 0
      %p260 = por %p258, %p259
      %p261 = scmp.ne.s32.totalorder %s253, %s255
      %p262 = scmp.eq.s32.totalorder %s35, 1
      %p263 = por %p261, %p262
      %p264 = scmp.ne.s32.totalorder %s255, %s256
      %p265 = scmp.eq.s32.totalorder %s35, 0
      %p266 = por %p264, %p265
      %p267 = scmp.ne.s32.totalorder %s255, %s256
      %p268 = scmp.eq.s32.totalorder %s36, 1
      %p269 = por %p267, %p268
      %p271 = scmp.ne.s32.totalorder %s256, %s270
      %p272 = scmp.eq.s32.totalorder %s36, 0
      %p273 = por %p271, %p272
      %s275 = sadd.s32 %s274, 1
      %p278 = scmp.eq.s32.totalorder %s30, 1
      %p279 = scmp.ne.s32.totalorder %s274, %s276
      %p280 = scmp.eq.s32.totalorder %s30, 0
      %p281 = por %p279, %p280
      %p282 = scmp.ne.s32.totalorder %s274, %s276
      %p283 = scmp.eq.s32.totalorder %s35, 1
      %p284 = por %p282, %p283
      %p285 = scmp.ne.s32.totalorder %s276, %s277
      %p286 = scmp.eq.s32.totalorder %s35, 0
      %p287 = por %p285, %p286
      %p288 = scmp.ne.s32.totalorder %s276, %s277
      %p289 = scmp.eq.s32.totalorder %s36, 1
      %p290 = por %p288, %p289
      %p292 = scmp.ne.s32.totalorder %s277, %s291
      %p293 = scmp.eq.s32.totalorder %s36, 0
      %p294 = por %p292, %p293
      %s295 = ssub.s32 %s30, %s37
      %p296 = scmp.eq.s32.totalorder %s295, 0
      %s298 = sadd.s32 %s297, 1
      %s299 = scalar_select %p296, %s297, %s298
      %p302 = pneg %p296
      %p303 = scmp.eq.s32.totalorder %s30, 1
      %p304 = por %p302, %p303
      %p305 = scmp.ne.s32.totalorder %s297, %s300
      %p306 = scmp.eq.s32.totalorder %s30, 0
      %p307 = por %p305, %p306
      %p308 = scmp.ne.s32.totalorder %s297, %s300
      %p309 = scmp.eq.s32.totalorder %s35, 1
      %p310 = por %p308, %p309
      %p311 = scmp.ne.s32.totalorder %s300, %s301
      %p312 = scmp.eq.s32.totalorder %s35, 0
      %p313 = por %p311, %p312
      %p314 = scmp.ne.s32.totalorder %s300, %s301
      %p315 = scmp.eq.s32.totalorder %s36, 1
      %p316 = por %p314, %p315
      %p318 = scmp.ne.s32.totalorder %s301, %s317
      %p319 = scmp.eq.s32.totalorder %s36, 0
      %p320 = por %p318, %p319
      %p321 = scmp.le.s32.totalorder 1, %s30
      %p322 = scmp.lt.s32.totalorder %s30, 3
      %p323 = pnand %p321, %p322
      %p324 = pneg %p323
      // Predicated region
      $region9: #{context_net_forward.5} parent=5 // pred_check
        _
      $region10: #{context_net_forward.5} parent=5 // pred_check_branch
        %326 = sbr.rel (%p323) target = $region12
      $region11: #{context_net_forward.5} parent=5 // pred_region
        %s327 = ssub.s32 %s30, 1
        // Predicated region
        $region13: #{context_net_forward.5} parent=11 // pred_check
          %p328 = pneg %p77
        $region14: #{context_net_forward.5} parent=11 // pred_check_branch
          %330 = sbr.rel (%p328) target = $region16
        $region15: #{context_net_forward.5} parent=11 // pred_region
          %s332 = ssub.s32 128, 128
          %333 = vsyncadd [#allocation7], %s332
          %s335 = sshll.u32 [#allocation6], 4
          %s336 = int_to_ptr.vmem [resolvable:$true] %s335
          %338 = dma.hbm_to_vmem [thread:$0]  %s1, 128, %s336, [#allocation7]
        $region16: #{context_net_forward.5} parent=11 // pred_fallthru
          _
        // Predicated region
        $region17: #{context_net_forward.5} parent=11 // pred_check
          %p339 = pneg %p98
        $region18: #{context_net_forward.5} parent=11 // pred_check_branch
          %341 = sbr.rel (%p339) target = $region20
        $region19: #{context_net_forward.5} parent=11 // pred_region
          %s343 = ssub.s32 2048, 2048
          %344 = vsyncadd [#allocation7], %s343
          %s345 = sshll.u32 [#allocation8], 4
          %s346 = int_to_ptr.vmem [resolvable:$true] %s345
          %351 = dma.hbm_to_vmem [thread:$0]  %s2, 2048, %s346, [#allocation7], 64, 64, 4
        $region20: #{context_net_forward.5} parent=11 // pred_fallthru
          _
        // Predicated region
        $region21: #{context_net_forward.5} parent=11 // pred_check
          %p352 = pneg %p119
        $region22: #{context_net_forward.5} parent=11 // pred_check_branch
          %354 = sbr.rel (%p352) target = $region24
        $region23: #{context_net_forward.5} parent=11 // pred_region
          %s356 = ssub.s32 16, 16
          %357 = vsyncadd [#allocation10], %s356
          %s359 = sshll.u32 [#allocation9], 4
          %s360 = int_to_ptr.vmem [resolvable:$true] %s359
          %362 = dma.hbm_to_vmem [thread:$0]  %s3, 16, %s360, [#allocation10]
        $region24: #{context_net_forward.5} parent=11 // pred_fallthru
          _
        // Predicated region
        $region25: #{context_net_forward.5} parent=11 // pred_check
          %p363 = pneg %p140
        $region26: #{context_net_forward.5} parent=11 // pred_check_branch
          %365 = sbr.rel (%p363) target = $region28
        $region27: #{context_net_forward.5} parent=11 // pred_region
          %s367 = ssub.s32 16, 16
          %368 = vsyncadd [#allocation10], %s367
          %s370 = sshll.u32 [#allocation11], 4
          %s371 = int_to_ptr.vmem [resolvable:$true] %s370
          %373 = dma.hbm_to_vmem [thread:$0]  %s4, 16, %s371, [#allocation10]
        $region28: #{context_net_forward.5} parent=11 // pred_fallthru
          _
        // Predicated region
        $region29: #{context_net_forward.5} parent=11 // pred_check
          %p374 = pneg %p161
        $region30: #{context_net_forward.5} parent=11 // pred_check_branch
          %376 = sbr.rel (%p374) target = $region32
        $region31: #{context_net_forward.5} parent=11 // pred_region
          %s378 = ssub.s32 2304, 2304
          %379 = vsyncadd [#allocation13], %s378
          %s380 = sshll.u32 [#allocation12], 4
          %s381 = int_to_ptr.vmem [resolvable:$true] %s380
          %386 = dma.hbm_to_vmem [thread:$0]  %s5, 2304, %s381, [#allocation13], 64, 64, 4
        $region32: #{context_net_forward.5} parent=11 // pred_fallthru
          _
        // Predicated region
        $region33: #{context_net_forward.5} parent=11 // pred_check
          %p387 = pneg %p182
        $region34: #{context_net_forward.5} parent=11 // pred_check_branch
          %389 = sbr.rel (%p387) target = $region36
        $region35: #{context_net_forward.5} parent=11 // pred_region
          %s391 = ssub.s32 16, 16
          %392 = vsyncadd [#allocation13], %s391
          %s394 = sshll.u32 [#allocation14], 4
          %s395 = int_to_ptr.vmem [resolvable:$true] %s394
          %397 = dma.hbm_to_vmem [thread:$0]  %s6, 16, %s395, [#allocation13]
        $region36: #{context_net_forward.5} parent=11 // pred_fallthru
          _
        // Predicated region
        $region37: #{context_net_forward.5} parent=11 // pred_check
          %p398 = pneg %p203
        $region38: #{context_net_forward.5} parent=11 // pred_check_branch
          %400 = sbr.rel (%p398) target = $region40
        $region39: #{context_net_forward.5} parent=11 // pred_region
          %s402 = ssub.s32 16, 16
          %403 = vsyncadd [#allocation16], %s402
          %s405 = sshll.u32 [#allocation15], 4
          %s406 = int_to_ptr.vmem [resolvable:$true] %s405
          %408 = dma.hbm_to_vmem [thread:$0]  %s7, 16, %s406, [#allocation16]
        $region40: #{context_net_forward.5} parent=11 // pred_fallthru
          _
        // Predicated region
        $region41: #{context_net_forward.5} parent=11 // pred_check
          %p409 = pneg %p224
        $region42: #{context_net_forward.5} parent=11 // pred_check_branch
          %411 = sbr.rel (%p409) target = $region44
        $region43: #{context_net_forward.5} parent=11 // pred_region
          %s413 = ssub.s32 512, 512
          %414 = vsyncadd [#allocation16], %s413
          %s415 = sshll.u32 [#allocation17], 4
          %s416 = int_to_ptr.vmem [resolvable:$true] %s415
          %421 = dma.hbm_to_vmem [thread:$0]  %s8, 512, %s416, [#allocation16], 128, 128, 8
        $region44: #{context_net_forward.5} parent=11 // pred_fallthru
          _
        // Predicated region
        $region45: #{context_net_forward.5} parent=11 // pred_check
          %p422 = pneg %p245
        $region46: #{context_net_forward.5} parent=11 // pred_check_branch
          %424 = sbr.rel (%p422) target = $region48
        $region47: #{context_net_forward.5} parent=11 // pred_region
          %s426 = ssub.s32 16, 16
          %427 = vsyncadd [#allocation19], %s426
          %s429 = sshll.u32 [#allocation18], 4
          %s430 = int_to_ptr.vmem [resolvable:$true] %s429
          %432 = dma.hbm_to_vmem [thread:$0]  %s9, 16, %s430, [#allocation19]
        $region48: #{context_net_forward.5} parent=11 // pred_fallthru
          _
        // Predicated region
        $region49: #{context_net_forward.5} parent=11 // pred_check
          %p433 = pneg %p266
        $region50: #{context_net_forward.5} parent=11 // pred_check_branch
          %435 = sbr.rel (%p433) target = $region52
        $region51: #{context_net_forward.5} parent=11 // pred_region
          %s437 = ssub.s32 64, 64
          %438 = vsyncadd [#allocation19], %s437
          %s440 = sshll.u32 [#allocation20], 4
          %s441 = int_to_ptr.vmem [resolvable:$true] %s440
          %443 = dma.hbm_to_vmem [thread:$0]  %s10, 64, %s441, [#allocation19]
        $region52: #{context_net_forward.5} parent=11 // pred_fallthru
          _
        // Predicated region
        $region53: #{context_net_forward.5} parent=11 // pred_check
          %p444 = pneg %p287
        $region54: #{context_net_forward.5} parent=11 // pred_check_branch
          %446 = sbr.rel (%p444) target = $region56
        $region55: #{context_net_forward.5} parent=11 // pred_region
          %s448 = ssub.s32 16, 16
          %449 = vsyncadd [#allocation22], %s448
          %s451 = sshll.u32 [#allocation21], 4
          %s452 = int_to_ptr.vmem [resolvable:$true] %s451
          %454 = dma.hbm_to_vmem [thread:$0]  %s11, 16, %s452, [#allocation22]
        $region56: #{context_net_forward.5} parent=11 // pred_fallthru
          _
      $region12: #{context_net_forward.5} parent=5 // pred_fallthru
        _
      %p455 = scmp.lt.s32.totalorder %s30, 2
      // Predicated region
      $region57: #{context_net_forward.5} parent=5 // pred_check
        %p456 = pneg %p455
      $region58: #{context_net_forward.5} parent=5 // pred_check_branch
        %458 = sbr.rel (%p456) target = $region60
      $region59: #{context_net_forward.5} parent=5 // pred_region
        // Predicated region
        $region61: #{context_net_forward.5} parent=59 // pred_check
          %p459 = pneg %p50
        $region62: #{context_net_forward.5} parent=59 // pred_check_branch
          %461 = sbr.rel (%p459) target = $region64
        $region63: #{context_net_forward.5} parent=59 // pred_region
          %s462 = sand.u32 %s40, 1
          %s463 = scalar_lea.sflag [#allocation4], %s462
          %s464 = sand.u32 %s40, 1
          %s465 = smul.addr %s464, 8
          %s466 = scalar_lea.vmem [#allocation3], %s465
          %s468 = ssub.s32 128, 128
          %469 = vsyncadd %s463, %s468
          %s470 = smul.addr %s30, 2
          %s471 = smul.addr %s470, 64
          %s472 = scalar_lea.hbm %s0, %s471
          %s473 = sshll.u32 %s466, 4
          %s474 = int_to_ptr.vmem [resolvable:$true] %s473
          %479 = dma.hbm_to_vmem [thread:$0]  %s472, 128, %s474, %s463, 64, 64, 4
        $region64: #{context_net_forward.5} parent=59 // pred_fallthru
          _
      $region60: #{context_net_forward.5} parent=5 // pred_fallthru
        _
      %p480 = scmp.le.s32.totalorder 1, %s30
      %p481 = scmp.lt.s32.totalorder %s30, 3
      %p482 = pnand %p480, %p481
      %p483 = pneg %p482
      // Predicated region
      $region65: #{context_net_forward.5} parent=5 // pred_check
        _
      $region66: #{context_net_forward.5} parent=5 // pred_check_branch
        %485 = sbr.rel (%p482) target = $region68
      $region67: #{context_net_forward.5} parent=5 // pred_region
        %s486 = ssub.s32 %s30, 1
        %s487 = sand.u32 %s43, 1
        %s488 = scalar_lea.sflag [#allocation4], %s487
        %s489 = sand.u32 %s43, 1
        %s490 = smul.addr %s489, 8
        %s491 = scalar_lea.vmem [#allocation3], %s490
        // Predicated region
        $region69: #{context_net_forward.5} parent=67 // pred_check
          %p492 = pneg %p56
        $region70: #{context_net_forward.5} parent=67 // pred_check_branch
          %494 = sbr.rel (%p492) target = $region72
        $region71: #{context_net_forward.5} parent=67 // pred_region
          %495 = dma.done %s488, 128
        $region72: #{context_net_forward.5} parent=67 // pred_fallthru
          _
        // Predicated region
        $region73: #{context_net_forward.5} parent=67 // pred_check
          %p496 = pneg %p77
        $region74: #{context_net_forward.5} parent=67 // pred_check_branch
          %498 = sbr.rel (%p496) target = $region76
        $region75: #{context_net_forward.5} parent=67 // pred_region
          %499 = dma.done [#allocation7], 128
        $region76: #{context_net_forward.5} parent=67 // pred_fallthru
          _
        // Predicated region
        $region77: #{context_net_forward.5} parent=67 // pred_check
          %p500 = pneg %p98
        $region78: #{context_net_forward.5} parent=67 // pred_check_branch
          %502 = sbr.rel (%p500) target = $region80
        $region79: #{context_net_forward.5} parent=67 // pred_region
          %503 = dma.done [#allocation7], 2048
        $region80: #{context_net_forward.5} parent=67 // pred_fallthru
          _
        // Predicated region
        $region81: #{context_net_forward.5} parent=67 // pred_check
          %p504 = pneg %p119
        $region82: #{context_net_forward.5} parent=67 // pred_check_branch
          %506 = sbr.rel (%p504) target = $region84
        $region83: #{context_net_forward.5} parent=67 // pred_region
          %507 = dma.done [#allocation10], 16
        $region84: #{context_net_forward.5} parent=67 // pred_fallthru
          _
        // Predicated region
        $region85: #{context_net_forward.5} parent=67 // pred_check
          %p508 = pneg %p140
        $region86: #{context_net_forward.5} parent=67 // pred_check_branch
          %510 = sbr.rel (%p508) target = $region88
        $region87: #{context_net_forward.5} parent=67 // pred_region
          %511 = dma.done [#allocation10], 16
        $region88: #{context_net_forward.5} parent=67 // pred_fallthru
          _
        // Predicated region
        $region89: #{context_net_forward.5} parent=67 // pred_check
          %p512 = pneg %p161
        $region90: #{context_net_forward.5} parent=67 // pred_check_branch
          %514 = sbr.rel (%p512) target = $region92
        $region91: #{context_net_forward.5} parent=67 // pred_region
          %515 = dma.done [#allocation13], 2304
        $region92: #{context_net_forward.5} parent=67 // pred_fallthru
          _
        // Predicated region
        $region93: #{context_net_forward.5} parent=67 // pred_check
          %p516 = pneg %p182
        $region94: #{context_net_forward.5} parent=67 // pred_check_branch
          %518 = sbr.rel (%p516) target = $region96
        $region95: #{context_net_forward.5} parent=67 // pred_region
          %519 = dma.done [#allocation13], 16
        $region96: #{context_net_forward.5} parent=67 // pred_fallthru
          _
        // Predicated region
        $region97: #{context_net_forward.5} parent=67 // pred_check
          %p520 = pneg %p203
        $region98: #{context_net_forward.5} parent=67 // pred_check_branch
          %522 = sbr.rel (%p520) target = $region100
        $region99: #{context_net_forward.5} parent=67 // pred_region
          %523 = dma.done [#allocation16], 16
        $region100: #{context_net_forward.5} parent=67 // pred_fallthru
          _
        // Predicated region
        $region101: #{context_net_forward.5} parent=67 // pred_check
          %p524 = pneg %p224
        $region102: #{context_net_forward.5} parent=67 // pred_check_branch
          %526 = sbr.rel (%p524) target = $region104
        $region103: #{context_net_forward.5} parent=67 // pred_region
          %527 = dma.done [#allocation16], 512
        $region104: #{context_net_forward.5} parent=67 // pred_fallthru
          _
        // Predicated region
        $region105: #{context_net_forward.5} parent=67 // pred_check
          %p528 = pneg %p245
        $region106: #{context_net_forward.5} parent=67 // pred_check_branch
          %530 = sbr.rel (%p528) target = $region108
        $region107: #{context_net_forward.5} parent=67 // pred_region
          %531 = dma.done [#allocation19], 16
        $region108: #{context_net_forward.5} parent=67 // pred_fallthru
          _
        // Predicated region
        $region109: #{context_net_forward.5} parent=67 // pred_check
          %p532 = pneg %p266
        $region110: #{context_net_forward.5} parent=67 // pred_check_branch
          %534 = sbr.rel (%p532) target = $region112
        $region111: #{context_net_forward.5} parent=67 // pred_region
          %535 = dma.done [#allocation19], 64
        $region112: #{context_net_forward.5} parent=67 // pred_fallthru
          _
        // Predicated region
        $region113: #{context_net_forward.5} parent=67 // pred_check
          %p536 = pneg %p287
        $region114: #{context_net_forward.5} parent=67 // pred_check_branch
          %538 = sbr.rel (%p536) target = $region116
        $region115: #{context_net_forward.5} parent=67 // pred_region
          %539 = dma.done [#allocation22], 16
        $region116: #{context_net_forward.5} parent=67 // pred_fallthru
          _
        %s540 = sand.u32 %s43, 1
        %s541 = scalar_lea.sflag [#allocation4], %s540
        %s542 = sand.u32 %s43, 1
        %s543 = smul.addr %s542, 8
        %s544 = scalar_lea.vmem [#allocation3], %s543
        %p545 = pneg %p56
        %p546 = pneg %p53
        %p547 = pneg %p77
        %p548 = pneg %p74
        %p549 = pneg %p98
        %p550 = pneg %p95
        %p551 = pneg %p119
        %p552 = pneg %p116
        %p553 = pneg %p140
        %p554 = pneg %p137
        %p555 = pneg %p161
        %p556 = pneg %p158
        %p557 = pneg %p182
        %p558 = pneg %p179
        %p559 = pneg %p203
        %p560 = pneg %p200
        %p561 = pneg %p224
        %p562 = pneg %p221
        %p563 = pneg %p245
        %p564 = pneg %p242
        %p565 = pneg %p266
        %p566 = pneg %p263
        %p567 = pneg %p287
        %p568 = pneg %p284
        %p569 = pneg %p313
        %p570 = pneg %p310
        %s571 = sand.u32 %s300, 1
        %s572 = scalar_lea.sflag [#allocation5], %s571
        %s573 = sand.u32 %s300, 1
        %s574 = smul.addr %s573, 8
        %s575 = scalar_lea.vmem [#allocation23], %s574
        %v577 = vld [vmem:[#allocation6] sm:$0xff]
        %v578 = vld [vmem:[%s491] sm:$0xf]
        %v579 = vld [vmem:[#allocation8] sm:$0xf]
        %v580 = vld [vmem:[#allocation8 + $0x4] sm:$0xf]
        %v581 = vld [vmem:[#allocation8 + $0x8] sm:$0xf]
        %v582 = vld [vmem:[#allocation8 + $0xc] sm:$0xf]
        %v583 = vld [vmem:[#allocation8 + $0x10] sm:$0xf]
        %v584 = vld [vmem:[#allocation8 + $0x14] sm:$0xf]
        %v585 = vld [vmem:[#allocation8 + $0x18] sm:$0xf]
        %v586 = vld [vmem:[#allocation8 + $0x1c] sm:$0xf]
        %v587 = vld [vmem:[%s491 + $0x4] sm:$0x1]
        %s588 = scalar_lea.vmem [#allocation8], 32
        %v589 = vld [vmem:[%s588] sm:$0xf]
        %v590 = vld [vmem:[%s588 + $0x4] sm:$0xf]
        %v591 = vld [vmem:[%s588 + $0x8] sm:$0xf]
        %v592 = vld [vmem:[%s588 + $0xc] sm:$0xf]
        %v593 = vld [vmem:[%s588 + $0x10] sm:$0xf]
        %v594 = vld [vmem:[%s588 + $0x14] sm:$0xf]
        %v595 = vld [vmem:[%s588 + $0x18] sm:$0xf]
        %v596 = vld [vmem:[%s588 + $0x1c] sm:$0xf]
        %v599 = vunpack.c.l.b16 %v578
        %v600 = vunpack.c.l.b16 %v587
        %v601 = vpack.c.b16 %v600, %v599
        %v603 = vshrl.u32 %v601, 16
        %v605 = vshll.u32 %v601, 16
        %v607 = vrot.slane %v605, 1
        %v608 = vor.u32 %v603, %v607
        %v617 = vunpack.c.l.b16 %v589
        %v618 = vunpack.c.l.b16 %v590
        %v619 = vunpack.c.l.b16 %v591
        %v620 = vunpack.c.l.b16 %v592
        %v621 = vunpack.c.l.b16 %v593
        %v622 = vunpack.c.l.b16 %v594
        %v623 = vunpack.c.l.b16 %v595
        %v624 = vunpack.c.l.b16 %v596
        %v625 = vpack.c.b16 %v618, %v617
        %v626 = vpack.c.b16 %v620, %v619
        %v627 = vpack.c.b16 %v622, %v621
        %v628 = vpack.c.b16 %v624, %v623
        %vm633 = vcmask 523264
        %v635 = vsel %vm633, %v608, 0
        %637 = vmatprep.subr.bf16.mxu0 0
        %638 = vmatpush1.bf16.msra.mxu0 %v625
        %639 = vmatprep.subr.bf16.mxu0 0
        %640 = vmatpush1.bf16.msra.mxu0 %v626
        %641 = vmatprep.subr.bf16.mxu0 0
        %642 = vmatpush1.bf16.msra.mxu0 %v627
        %643 = vmatprep.subr.bf16.mxu0 0
        %644 = vmatpush1.bf16.msra.mxu0 %v628
        %645 = vmatprep.subr.bf16.mxu0 0
        %646 = vmatpush1.bf16.msra.mxu0 0
        %647 = vmatprep.subr.bf16.mxu0 0
        %648 = vmatpush1.bf16.msra.mxu0 0
        %649 = vmatprep.subr.bf16.mxu0 0
        %650 = vmatpush1.bf16.msra.mxu0 0
        %651 = vmatprep.subr.bf16.mxu0 0
        %652 = vmatpush1.bf16.msra.mxu0 0
        %653 = vmatprep.subr.bf16.mxu0 0
        %654 = vmatpush1.bf16.msra.mxu0 0
        %655 = vmatprep.subr.bf16.mxu0 0
        %656 = vmatpush1.bf16.msra.mxu0 0
        %657 = vmatprep.subr.bf16.mxu0 0
        %658 = vmatpush1.bf16.msra.mxu0 0
        %659 = vmatprep.subr.bf16.mxu0 0
        %660 = vmatpush1.bf16.msra.mxu0 0
        %661 = vmatprep.subr.bf16.mxu0 0
        %662 = vmatpush1.bf16.msra.mxu0 0
        %663 = vmatprep.subr.bf16.mxu0 0
        %664 = vmatpush1.bf16.msra.mxu0 0
        %665 = vmatprep.subr.bf16.mxu0 0
        %666 = vmatpush1.bf16.msra.mxu0 0
        %667 = vmatprep.subr.bf16.mxu0 0
        %668 = vmatpush1.bf16.msra.mxu0 0
        %669 = vmatprep.mubr.bf16.mxu0 0
        %670 = vmatmul.mubr.bf16.gmra.mrb[0].mxu0 %v635
        %v671 = vpop.f32.mrb[0].mxu0
        %v672 = vadd.f32 0.0, %v671
        %v673 = vpop.f32.mrb[0].mxu0
        %v674 = vpop.f32.mrb[0].mxu0
        %v675 = vpop.f32.mrb[0].mxu0
        %676 = vdwg.mxu0
        %v685 = vunpack.c.l.b16 %v579
        %v686 = vunpack.c.l.b16 %v580
        %v687 = vunpack.c.l.b16 %v581
        %v688 = vunpack.c.l.b16 %v582
        %v689 = vunpack.c.l.b16 %v583
        %v690 = vunpack.c.l.b16 %v584
        %v691 = vunpack.c.l.b16 %v585
        %v692 = vunpack.c.l.b16 %v586
        %v693 = vpack.c.b16 %v686, %v685
        %v694 = vpack.c.b16 %v688, %v687
        %v695 = vpack.c.b16 %v690, %v689
        %v696 = vpack.c.b16 %v692, %v691
        %v702 = vsel %vm633, %v578, 0
        %704 = vmatprep.subr.bf16.mxu0 0
        %705 = vmatpush1.bf16.msra.mxu0 %v693
        %706 = vmatprep.subr.bf16.mxu0 0
        %707 = vmatpush1.bf16.msra.mxu0 %v694
        %708 = vmatprep.subr.bf16.mxu0 0
        %709 = vmatpush1.bf16.msra.mxu0 %v695
        %710 = vmatprep.subr.bf16.mxu0 0
        %711 = vmatpush1.bf16.msra.mxu0 %v696
        %712 = vmatprep.subr.bf16.mxu0 0
        %713 = vmatpush1.bf16.msra.mxu0 0
        %714 = vmatprep.subr.bf16.mxu0 0
        %715 = vmatpush1.bf16.msra.mxu0 0
        %716 = vmatprep.subr.bf16.mxu0 0
        %717 = vmatpush1.bf16.msra.mxu0 0
        %718 = vmatprep.subr.bf16.mxu0 0
        %719 = vmatpush1.bf16.msra.mxu0 0
        %720 = vmatprep.subr.bf16.mxu0 0
        %721 = vmatpush1.bf16.msra.mxu0 0
        %722 = vmatprep.subr.bf16.mxu0 0
        %723 = vmatpush1.bf16.msra.mxu0 0
        %724 = vmatprep.subr.bf16.mxu0 0
        %725 = vmatpush1.bf16.msra.mxu0 0
        %726 = vmatprep.subr.bf16.mxu0 0
        %727 = vmatpush1.bf16.msra.mxu0 0
        %728 = vmatprep.subr.bf16.mxu0 0
        %729 = vmatpush1.bf16.msra.mxu0 0
        %730 = vmatprep.subr.bf16.mxu0 0
        %731 = vmatpush1.bf16.msra.mxu0 0
        %732 = vmatprep.subr.bf16.mxu0 0
        %733 = vmatpush1.bf16.msra.mxu0 0
        %734 = vmatprep.subr.bf16.mxu0 0
        %735 = vmatpush1.bf16.msra.mxu0 0
        %736 = vmatprep.mubr.bf16.mxu0 0
        %737 = vmatmul.mubr.bf16.gmra.mrb[0].mxu0 %v702
        %v738 = vpop.f32.mrb[0].mxu0
        %v739 = vadd.f32 %v672, %v738
        %v740 = vpop.f32.mrb[0].mxu0
        %v741 = vpop.f32.mrb[0].mxu0
        %v742 = vpop.f32.mrb[0].mxu0
        %743 = vdwg.mxu0
        %v744 = vld [vmem:[%s491] sm:$0xc]
        %v745 = vld [vmem:[%s491 + $0x4] sm:$0x3]
        %s746 = scalar_lea.vmem [#allocation8], 64
        %v747 = vld [vmem:[%s746] sm:$0xf]
        %v748 = vld [vmem:[%s746 + $0x4] sm:$0xf]
        %v749 = vld [vmem:[%s746 + $0x8] sm:$0xf]
        %v750 = vld [vmem:[%s746 + $0xc] sm:$0xf]
        %v751 = vld [vmem:[%s746 + $0x10] sm:$0xf]
        %v752 = vld [vmem:[%s746 + $0x14] sm:$0xf]
        %v753 = vld [vmem:[%s746 + $0x18] sm:$0xf]
        %v754 = vld [vmem:[%s746 + $0x1c] sm:$0xf]
        %v757 = vunpack.c.l.b16 %v744
        %v758 = vunpack.c.l.b16 %v745
        %v759 = vpack.c.b16 %v758, %v757
        %v760 = vrot.slane %v759, 2
        %v769 = vunpack.c.l.b16 %v747
        %v770 = vunpack.c.l.b16 %v748
        %v771 = vunpack.c.l.b16 %v749
        %v772 = vunpack.c.l.b16 %v750
        %v773 = vunpack.c.l.b16 %v751
        %v774 = vunpack.c.l.b16 %v752
        %v775 = vunpack.c.l.b16 %v753
        %v776 = vunpack.c.l.b16 %v754
        %v777 = vpack.c.b16 %v770, %v769
        %v778 = vpack.c.b16 %v772, %v771
        %v779 = vpack.c.b16 %v774, %v773
        %v780 = vpack.c.b16 %v776, %v775
        %v786 = vsel %vm633, %v760, 0
        %788 = vmatprep.subr.bf16.mxu0 0
        %789 = vmatpush1.bf16.msra.mxu0 %v777
        %790 = vmatprep.subr.bf16.mxu0 0
        %791 = vmatpush1.bf16.msra.mxu0 %v778
        %792 = vmatprep.subr.bf16.mxu0 0
        %793 = vmatpush1.bf16.msra.mxu0 %v779
        %794 = vmatprep.subr.bf16.mxu0 0
        %795 = vmatpush1.bf16.msra.mxu0 %v780
        %796 = vmatprep.subr.bf16.mxu0 0
        %797 = vmatpush1.bf16.msra.mxu0 0
        %798 = vmatprep.subr.bf16.mxu0 0
        %799 = vmatpush1.bf16.msra.mxu0 0
        %800 = vmatprep.subr.bf16.mxu0 0
        %801 = vmatpush1.bf16.msra.mxu0 0
        %802 = vmatprep.subr.bf16.mxu0 0
        %803 = vmatpush1.bf16.msra.mxu0 0
        %804 = vmatprep.subr.bf16.mxu0 0
        %805 = vmatpush1.bf16.msra.mxu0 0
        %806 = vmatprep.subr.bf16.mxu0 0
        %807 = vmatpush1.bf16.msra.mxu0 0
        %808 = vmatprep.subr.bf16.mxu0 0
        %809 = vmatpush1.bf16.msra.mxu0 0
        %810 = vmatprep.subr.bf16.mxu0 0
        %811 = vmatpush1.bf16.msra.mxu0 0
        %812 = vmatprep.subr.bf16.mxu0 0
        %813 = vmatpush1.bf16.msra.mxu0 0
        %814 = vmatprep.subr.bf16.mxu0 0
        %815 = vmatpush1.bf16.msra.mxu0 0
        %816 = vmatprep.subr.bf16.mxu0 0
        %817 = vmatpush1.bf16.msra.mxu0 0
        %818 = vmatprep.subr.bf16.mxu0 0
        %819 = vmatpush1.bf16.msra.mxu0 0
        %820 = vmatprep.mubr.bf16.mxu0 0
        %821 = vmatmul.mubr.bf16.gmra.mrb[0].mxu0 %v786
        %v822 = vpop.f32.mrb[0].mxu0
        %v823 = vadd.f32 0.0, %v822
        %v824 = vpop.f32.mrb[0].mxu0
        %v825 = vpop.f32.mrb[0].mxu0
        %v826 = vpop.f32.mrb[0].mxu0
        %827 = vdwg.mxu0
        %v828 = vadd.f32 %v739, %v823
        %v829 = vld [vmem:[%s491 + $0x4] sm:$0x7]
        %s830 = scalar_lea.vmem [#allocation8], 96
        %v831 = vld [vmem:[%s830] sm:$0xf]
        %v832 = vld [vmem:[%s830 + $0x4] sm:$0xf]
        %v833 = vld [vmem:[%s830 + $0x8] sm:$0xf]
        %v834 = vld [vmem:[%s830 + $0xc] sm:$0xf]
        %v835 = vld [vmem:[%s830 + $0x10] sm:$0xf]
        %v836 = vld [vmem:[%s830 + $0x14] sm:$0xf]
        %v837 = vld [vmem:[%s830 + $0x18] sm:$0xf]
        %v838 = vld [vmem:[%s830 + $0x1c] sm:$0xf]
        %v840 = vunpack.c.l.b16 %v829
        %v841 = vpack.c.b16 %v840, %v757
        %v843 = vshrl.u32 %v841, 16
        %v845 = vrot.slane %v843, 2
        %v846 = vshll.u32 %v841, 16
        %v848 = vrot.slane %v846, 3
        %v849 = vor.u32 %v845, %v848
        %v858 = vunpack.c.l.b16 %v831
        %v859 = vunpack.c.l.b16 %v832
        %v860 = vunpack.c.l.b16 %v833
        %v861 = vunpack.c.l.b16 %v834
        %v862 = vunpack.c.l.b16 %v835
        %v863 = vunpack.c.l.b16 %v836
        %v864 = vunpack.c.l.b16 %v837
        %v865 = vunpack.c.l.b16 %v838
        %v866 = vpack.c.b16 %v859, %v858
        %v867 = vpack.c.b16 %v861, %v860
        %v868 = vpack.c.b16 %v863, %v862
        %v869 = vpack.c.b16 %v865, %v864
        %v875 = vsel %vm633, %v849, 0
        %877 = vmatprep.subr.bf16.mxu0 0
        %878 = vmatpush1.bf16.msra.mxu0 %v866
        %879 = vmatprep.subr.bf16.mxu0 0
        %880 = vmatpush1.bf16.msra.mxu0 %v867
        %881 = vmatprep.subr.bf16.mxu0 0
        %882 = vmatpush1.bf16.msra.mxu0 %v868
        %883 = vmatprep.subr.bf16.mxu0 0
        %884 = vmatpush1.bf16.msra.mxu0 %v869
        %885 = vmatprep.subr.bf16.mxu0 0
        %886 = vmatpush1.bf16.msra.mxu0 0
        %887 = vmatprep.subr.bf16.mxu0 0
        %888 = vmatpush1.bf16.msra.mxu0 0
        %889 = vmatprep.subr.bf16.mxu0 0
        %890 = vmatpush1.bf16.msra.mxu0 0
        %891 = vmatprep.subr.bf16.mxu0 0
        %892 = vmatpush1.bf16.msra.mxu0 0
        %893 = vmatprep.subr.bf16.mxu0 0
        %894 = vmatpush1.bf16.msra.mxu0 0
        %895 = vmatprep.subr.bf16.mxu0 0
        %896 = vmatpush1.bf16.msra.mxu0 0
        %897 = vmatprep.subr.bf16.mxu0 0
        %898 = vmatpush1.bf16.msra.mxu0 0
        %899 = vmatprep.subr.bf16.mxu0 0
        %900 = vmatpush1.bf16.msra.mxu0 0
        %901 = vmatprep.subr.bf16.mxu0 0
        %902 = vmatpush1.bf16.msra.mxu0 0
        %903 = vmatprep.subr.bf16.mxu0 0
        %904 = vmatpush1.bf16.msra.mxu0 0
        %905 = vmatprep.subr.bf16.mxu0 0
        %906 = vmatpush1.bf16.msra.mxu0 0
        %907 = vmatprep.subr.bf16.mxu0 0
        %908 = vmatpush1.bf16.msra.mxu0 0
        %909 = vmatprep.mubr.bf16.mxu0 0
        %910 = vmatmul.mubr.bf16.gmra.mrb[0].mxu0 %v875
        %v911 = vpop.f32.mrb[0].mxu0
        %v912 = vadd.f32 0.0, %v911
        %v913 = vpop.f32.mrb[0].mxu0
        %v914 = vpop.f32.mrb[0].mxu0
        %v915 = vpop.f32.mrb[0].mxu0
        %916 = vdwg.mxu0
        %v917 = vadd.f32 %v828, %v912
        %v918 = vld [vmem:[#allocation9] sm:$0x1]
        %v920 = vlaneseq
        %v921 = vshrl.u32 %v920, 7
        %v922 = vsub.s32 0, %v921
        %v923 = vrot.slane %v918, %v922
        %v925 = vadd.f32 %v917, %v923
        %vm926 = vcmp.ge.f32.partialorder %v925, 0.0
        %v927 = vld [vmem:[#allocation11] sm:$0x1]
        %v929 = vlaneseq
        %v930 = vshrl.u32 %v929, 7
        %v931 = vsub.s32 0, %v930
        %v932 = vrot.slane %v927, %v931
        %v934 = vmul.f32 %v932, %v925
        %v935 = vsel %vm926, %v925, %v934
        %937 = vset.pattern.permute.xlu0 0
        %938 = vperm.xlu0 %937, %v577
        %v939 = vpop.permute.xlu0 %938
        %v941 = vmul.f32 %v935, %v939
        %vm942 = vcmask 257024
        %943 = vst.msk [vmem:[#allocation2] sm:$0xf] %vm942, 0
        %944 = vst.msk [vmem:[#allocation2 + $0x4] sm:$0xf] %vm942, 0
        %945 = vst.msk [vmem:[#allocation2 + $0x8] sm:$0xf] %vm942, 0
        %946 = vst.msk [vmem:[#allocation2 + $0xc] sm:$0xf] %vm942, 0
        %vm947 = vcmask 254976
        %vm948 = vsmask.f32 1280
        %vm949 = vmand %vm947, %vm948
        %v950 = vld [vmem:[#allocation2 + $0x10] sm:$0x3]
        %v951 = vsel %vm949, 0, %v950
        %952 = vst [vmem:[#allocation2 + $0x10] sm:$0x3] %v951
        %v953 = vpack.c.bf16 %v941, %v941
        %954 = vst.msk [vmem:[#allocation2 + $0x8] sm:$0xf] %vm942, %v953
        %v955 = vld [vmem:[#allocation2 + $0x4] sm:$0xe]
        %v956 = vld [vmem:[#allocation2 + $0x8] sm:$0x3]
        %v957 = vld [vmem:[#allocation12] sm:$0xf]
        %v958 = vld [vmem:[#allocation12 + $0x4] sm:$0xf]
        %v959 = vld [vmem:[#allocation12 + $0x8] sm:$0xf]
        %v960 = vld [vmem:[#allocation12 + $0xc] sm:$0xf]
        %v961 = vld [vmem:[#allocation2 + $0x4] sm:$0xc]
        %s962 = scalar_lea.vmem [#allocation12], 16
        %v963 = vld [vmem:[%s962] sm:$0xf]
        %v964 = vld [vmem:[%s962 + $0x4] sm:$0xf]
        %v965 = vld [vmem:[%s962 + $0x8] sm:$0xf]
        %v966 = vld [vmem:[%s962 + $0xc] sm:$0xf]
        %v969 = vunpack.c.l.b16 %v961
        %v970 = vunpack.c.l.b16 %v956
        %v971 = vpack.c.b16 %v970, %v969
        %v972 = vrot.slane %v971, 2
        %v977 = vunpack.c.l.b16 %v963
        %v978 = vunpack.c.l.b16 %v964
        %v979 = vunpack.c.l.b16 %v965
        %v980 = vunpack.c.l.b16 %v966
        %v981 = vpack.c.b16 %v978, %v977
        %v982 = vpack.c.b16 %v980, %v979
        %vm985 = vcmask 261120
        %v987 = vsel %vm985, %v972, 0
        %989 = vmatprep.subr.bf16.mxu0 0
        %990 = vmatpush1.bf16.msra.mxu0 %v981
        %991 = vmatprep.subr.bf16.mxu0 0
        %992 = vmatpush1.bf16.msra.mxu0 %v982
        %993 = vmatprep.subr.bf16.mxu0 0
        %994 = vmatpush1.bf16.msra.mxu0 0
        %995 = vmatprep.subr.bf16.mxu0 0
        %996 = vmatpush1.bf16.msra.mxu0 0
        %997 = vmatprep.subr.bf16.mxu0 0
        %998 = vmatpush1.bf16.msra.mxu0 0
        %999 = vmatprep.subr.bf16.mxu0 0
        %1000 = vmatpush1.bf16.msra.mxu0 0
        %1001 = vmatprep.subr.bf16.mxu0 0
        %1002 = vmatpush1.bf16.msra.mxu0 0
        %1003 = vmatprep.subr.bf16.mxu0 0
        %1004 = vmatpush1.bf16.msra.mxu0 0
        %1005 = vmatprep.subr.bf16.mxu0 0
        %1006 = vmatpush1.bf16.msra.mxu0 0
        %1007 = vmatprep.subr.bf16.mxu0 0
        %1008 = vmatpush1.bf16.msra.mxu0 0
        %1009 = vmatprep.subr.bf16.mxu0 0
        %1010 = vmatpush1.bf16.msra.mxu0 0
        %1011 = vmatprep.subr.bf16.mxu0 0
        %1012 = vmatpush1.bf16.msra.mxu0 0
        %1013 = vmatprep.subr.bf16.mxu0 0
        %1014 = vmatpush1.bf16.msra.mxu0 0
        %1015 = vmatprep.subr.bf16.mxu0 0
        %1016 = vmatpush1.bf16.msra.mxu0 0
        %1017 = vmatprep.subr.bf16.mxu0 0
        %1018 = vmatpush1.bf16.msra.mxu0 0
        %1019 = vmatprep.subr.bf16.mxu0 0
        %1020 = vmatpush1.bf16.msra.mxu0 0
        %1021 = vmatprep.mubr.bf16.mxu0 0
        %1022 = vmatmul.mubr.bf16.gmra.mrb[0].mxu0 %v987
        %v1023 = vpop.f32.mrb[0].mxu0
        %v1024 = vadd.f32 0.0, %v1023
        %v1025 = vpop.f32.mrb[0].mxu0
        %v1026 = vpop.f32.mrb[0].mxu0
        %v1027 = vpop.f32.mrb[0].mxu0
        %1028 = vdwg.mxu0
        %v1030 = vunpack.c.l.b16 %v955
        %v1031 = vpack.c.b16 %v970, %v1030
        %v1033 = vshrl.u32 %v1031, 16
        %v1035 = vrot.slane %v1033, 1
        %v1036 = vshll.u32 %v1031, 16
        %v1038 = vrot.slane %v1036, 2
        %v1039 = vor.u32 %v1035, %v1038
        %v1044 = vunpack.c.l.b16 %v957
        %v1045 = vunpack.c.l.b16 %v958
        %v1046 = vunpack.c.l.b16 %v959
        %v1047 = vunpack.c.l.b16 %v960
        %v1048 = vpack.c.b16 %v1045, %v1044
        %v1049 = vpack.c.b16 %v1047, %v1046
        %v1053 = vsel %vm985, %v1039, 0
        %1055 = vmatprep.subr.bf16.mxu0 0
        %1056 = vmatpush1.bf16.msra.mxu0 %v1048
        %1057 = vmatprep.subr.bf16.mxu0 0
        %1058 = vmatpush1.bf16.msra.mxu0 %v1049
        %1059 = vmatprep.subr.bf16.mxu0 0
        %1060 = vmatpush1.bf16.msra.mxu0 0
        %1061 = vmatprep.subr.bf16.mxu0 0
        %1062 = vmatpush1.bf16.msra.mxu0 0
        %1063 = vmatprep.subr.bf16.mxu0 0
        %1064 = vmatpush1.bf16.msra.mxu0 0
        %1065 = vmatprep.subr.bf16.mxu0 0
        %1066 = vmatpush1.bf16.msra.mxu0 0
        %1067 = vmatprep.subr.bf16.mxu0 0
        %1068 = vmatpush1.bf16.msra.mxu0 0
        %1069 = vmatprep.subr.bf16.mxu0 0
        %1070 = vmatpush1.bf16.msra.mxu0 0
        %1071 = vmatprep.subr.bf16.mxu0 0
        %1072 = vmatpush1.bf16.msra.mxu0 0
        %1073 = vmatprep.subr.bf16.mxu0 0
        %1074 = vmatpush1.bf16.msra.mxu0 0
        %1075 = vmatprep.subr.bf16.mxu0 0
        %1076 = vmatpush1.bf16.msra.mxu0 0
        %1077 = vmatprep.subr.bf16.mxu0 0
        %1078 = vmatpush1.bf16.msra.mxu0 0
        %1079 = vmatprep.subr.bf16.mxu0 0
        %1080 = vmatpush1.bf16.msra.mxu0 0
        %1081 = vmatprep.subr.bf16.mxu0 0
        %1082 = vmatpush1.bf16.msra.mxu0 0
        %1083 = vmatprep.subr.bf16.mxu0 0
        %1084 = vmatpush1.bf16.msra.mxu0 0
        %1085 = vmatprep.subr.bf16.mxu0 0
        %1086 = vmatpush1.bf16.msra.mxu0 0
        %1087 = vmatprep.mubr.bf16.mxu0 0
        %1088 = vmatmul.mubr.bf16.gmra.mrb[0].mxu0 %v1053
        %v1089 = vpop.f32.mrb[0].mxu0
        %v1090 = vadd.f32 %v1024, %v1089
        %v1091 = vpop.f32.mrb[0].mxu0
        %v1092 = vpop.f32.mrb[0].mxu0
        %v1093 = vpop.f32.mrb[0].mxu0
        %1094 = vdwg.mxu0
        %v1095 = vld [vmem:[#allocation2 + $0x8] sm:$0x7]
        %s1096 = scalar_lea.vmem [#allocation12], 32
        %v1097 = vld [vmem:[%s1096] sm:$0xf]
        %v1098 = vld [vmem:[%s1096 + $0x4] sm:$0xf]
        %v1099 = vld [vmem:[%s1096 + $0x8] sm:$0xf]
        %v1100 = vld [vmem:[%s1096 + $0xc] sm:$0xf]
        %v1102 = vunpack.c.l.b16 %v1095
        %v1103 = vpack.c.b16 %v1102, %v969
        %v1105 = vshrl.u32 %v1103, 16
        %v1107 = vrot.slane %v1105, 2
        %v1108 = vshll.u32 %v1103, 16
        %v1110 = vrot.slane %v1108, 3
        %v1111 = vor.u32 %v1107, %v1110
        %v1116 = vunpack.c.l.b16 %v1097
        %v1117 = vunpack.c.l.b16 %v1098
        %v1118 = vunpack.c.l.b16 %v1099
        %v1119 = vunpack.c.l.b16 %v1100
        %v1120 = vpack.c.b16 %v1117, %v1116
        %v1121 = vpack.c.b16 %v1119, %v1118
        %v1125 = vsel %vm985, %v1111, 0
        %1127 = vmatprep.subr.bf16.mxu0 0
        %1128 = vmatpush1.bf16.msra.mxu0 %v1120
        %1129 = vmatprep.subr.bf16.mxu0 0
        %1130 = vmatpush1.bf16.msra.mxu0 %v1121
        %1131 = vmatprep.subr.bf16.mxu0 0
        %1132 = vmatpush1.bf16.msra.mxu0 0
        %1133 = vmatprep.subr.bf16.mxu0 0
        %1134 = vmatpush1.bf16.msra.mxu0 0
        %1135 = vmatprep.subr.bf16.mxu0 0
        %1136 = vmatpush1.bf16.msra.mxu0 0
        %1137 = vmatprep.subr.bf16.mxu0 0
        %1138 = vmatpush1.bf16.msra.mxu0 0
        %1139 = vmatprep.subr.bf16.mxu0 0
        %1140 = vmatpush1.bf16.msra.mxu0 0
        %1141 = vmatprep.subr.bf16.mxu0 0
        %1142 = vmatpush1.bf16.msra.mxu0 0
        %1143 = vmatprep.subr.bf16.mxu0 0
        %1144 = vmatpush1.bf16.msra.mxu0 0
        %1145 = vmatprep.subr.bf16.mxu0 0
        %1146 = vmatpush1.bf16.msra.mxu0 0
        %1147 = vmatprep.subr.bf16.mxu0 0
        %1148 = vmatpush1.bf16.msra.mxu0 0
        %1149 = vmatprep.subr.bf16.mxu0 0
        %1150 = vmatpush1.bf16.msra.mxu0 0
        %1151 = vmatprep.subr.bf16.mxu0 0
        %1152 = vmatpush1.bf16.msra.mxu0 0
        %1153 = vmatprep.subr.bf16.mxu0 0
        %1154 = vmatpush1.bf16.msra.mxu0 0
        %1155 = vmatprep.subr.bf16.mxu0 0
        %1156 = vmatpush1.bf16.msra.mxu0 0
        %1157 = vmatprep.subr.bf16.mxu0 0
        %1158 = vmatpush1.bf16.msra.mxu0 0
        %1159 = vmatprep.mubr.bf16.mxu0 0
        %1160 = vmatmul.mubr.bf16.gmra.mrb[0].mxu0 %v1125
        %v1161 = vpop.f32.mrb[0].mxu0
        %v1162 = vadd.f32 0.0, %v1161
        %v1163 = vpop.f32.mrb[0].mxu0
        %v1164 = vpop.f32.mrb[0].mxu0
        %v1165 = vpop.f32.mrb[0].mxu0
        %1166 = vdwg.mxu0
        %v1167 = vadd.f32 %v1090, %v1162
        %v1168 = vld [vmem:[#allocation2 + $0x4] sm:$0x8]
        %v1169 = vld [vmem:[#allocation2 + $0x8] sm:$0xf]
        %s1170 = scalar_lea.vmem [#allocation12], 48
        %v1171 = vld [vmem:[%s1170] sm:$0xf]
        %v1172 = vld [vmem:[%s1170 + $0x4] sm:$0xf]
        %v1173 = vld [vmem:[%s1170 + $0x8] sm:$0xf]
        %v1174 = vld [vmem:[%s1170 + $0xc] sm:$0xf]
        %v1177 = vunpack.c.l.b16 %v1168
        %v1178 = vunpack.c.l.b16 %v1169
        %v1179 = vpack.c.b16 %v1178, %v1177
        %v1181 = vshrl.u32 %v1179, 16
        %v1183 = vrot.slane %v1181, 3
        %v1184 = vshll.u32 %v1179, 16
        %v1186 = vrot.slane %v1184, 4
        %v1187 = vor.u32 %v1183, %v1186
        %v1192 = vunpack.c.l.b16 %v1171
        %v1193 = vunpack.c.l.b16 %v1172
        %v1194 = vunpack.c.l.b16 %v1173
        %v1195 = vunpack.c.l.b16 %v1174
        %v1196 = vpack.c.b16 %v1193, %v1192
        %v1197 = vpack.c.b16 %v1195, %v1194
        %v1201 = vsel %vm985, %v1187, 0
        %1203 = vmatprep.subr.bf16.mxu0 0
        %1204 = vmatpush1.bf16.msra.mxu0 %v1196
        %1205 = vmatprep.subr.bf16.mxu0 0
        %1206 = vmatpush1.bf16.msra.mxu0 %v1197
        %1207 = vmatprep.subr.bf16.mxu0 0
        %1208 = vmatpush1.bf16.msra.mxu0 0
        %1209 = vmatprep.subr.bf16.mxu0 0
        %1210 = vmatpush1.bf16.msra.mxu0 0
        %1211 = vmatprep.subr.bf16.mxu0 0
        %1212 = vmatpush1.bf16.msra.mxu0 0
        %1213 = vmatprep.subr.bf16.mxu0 0
        %1214 = vmatpush1.bf16.msra.mxu0 0
        %1215 = vmatprep.subr.bf16.mxu0 0
        %1216 = vmatpush1.bf16.msra.mxu0 0
        %1217 = vmatprep.subr.bf16.mxu0 0
        %1218 = vmatpush1.bf16.msra.mxu0 0
        %1219 = vmatprep.subr.bf16.mxu0 0
        %1220 = vmatpush1.bf16.msra.mxu0 0
        %1221 = vmatprep.subr.bf16.mxu0 0
        %1222 = vmatpush1.bf16.msra.mxu0 0
        %1223 = vmatprep.subr.bf16.mxu0 0
        %1224 = vmatpush1.bf16.msra.mxu0 0
        %1225 = vmatprep.subr.bf16.mxu0 0
        %1226 = vmatpush1.bf16.msra.mxu0 0
        %1227 = vmatprep.subr.bf16.mxu0 0
        %1228 = vmatpush1.bf16.msra.mxu0 0
        %1229 = vmatprep.subr.bf16.mxu0 0
        %1230 = vmatpush1.bf16.msra.mxu0 0
        %1231 = vmatprep.subr.bf16.mxu0 0
        %1232 = vmatpush1.bf16.msra.mxu0 0
        %1233 = vmatprep.subr.bf16.mxu0 0
        %1234 = vmatpush1.bf16.msra.mxu0 0
        %1235 = vmatprep.mubr.bf16.mxu0 0
        %1236 = vmatmul.mubr.bf16.gmra.mrb[0].mxu0 %v1201
        %v1237 = vpop.f32.mrb[0].mxu0
        %v1238 = vadd.f32 0.0, %v1237
        %v1239 = vpop.f32.mrb[0].mxu0
        %v1240 = vpop.f32.mrb[0].mxu0
        %v1241 = vpop.f32.mrb[0].mxu0
        %1242 = vdwg.mxu0
        %v1243 = vadd.f32 %v1167, %v1238
        %s1244 = scalar_lea.vmem [#allocation12], 64
        %v1245 = vld [vmem:[%s1244] sm:$0xf]
        %v1246 = vld [vmem:[%s1244 + $0x4] sm:$0xf]
        %v1247 = vld [vmem:[%s1244 + $0x8] sm:$0xf]
        %v1248 = vld [vmem:[%s1244 + $0xc] sm:$0xf]
        %v1253 = vunpack.c.l.b16 %v1245
        %v1254 = vunpack.c.l.b16 %v1246
        %v1255 = vunpack.c.l.b16 %v1247
        %v1256 = vunpack.c.l.b16 %v1248
        %v1257 = vpack.c.b16 %v1254, %v1253
        %v1258 = vpack.c.b16 %v1256, %v1255
        %v1262 = vsel %vm985, %v1169, 0
        %1264 = vmatprep.subr.bf16.mxu0 0
        %1265 = vmatpush1.bf16.msra.mxu0 %v1257
        %1266 = vmatprep.subr.bf16.mxu0 0
        %1267 = vmatpush1.bf16.msra.mxu0 %v1258
        %1268 = vmatprep.subr.bf16.mxu0 0
        %1269 = vmatpush1.bf16.msra.mxu0 0
        %1270 = vmatprep.subr.bf16.mxu0 0
        %1271 = vmatpush1.bf16.msra.mxu0 0
        %1272 = vmatprep.subr.bf16.mxu0 0
        %1273 = vmatpush1.bf16.msra.mxu0 0
        %1274 = vmatprep.subr.bf16.mxu0 0
        %1275 = vmatpush1.bf16.msra.mxu0 0
        %1276 = vmatprep.subr.bf16.mxu0 0
        %1277 = vmatpush1.bf16.msra.mxu0 0
        %1278 = vmatprep.subr.bf16.mxu0 0
        %1279 = vmatpush1.bf16.msra.mxu0 0
        %1280 = vmatprep.subr.bf16.mxu0 0
        %1281 = vmatpush1.bf16.msra.mxu0 0
        %1282 = vmatprep.subr.bf16.mxu0 0
        %1283 = vmatpush1.bf16.msra.mxu0 0
        %1284 = vmatprep.subr.bf16.mxu0 0
        %1285 = vmatpush1.bf16.msra.mxu0 0
        %1286 = vmatprep.subr.bf16.mxu0 0
        %1287 = vmatpush1.bf16.msra.mxu0 0
        %1288 = vmatprep.subr.bf16.mxu0 0
        %1289 = vmatpush1.bf16.msra.mxu0 0
        %1290 = vmatprep.subr.bf16.mxu0 0
        %1291 = vmatpush1.bf16.msra.mxu0 0
        %1292 = vmatprep.subr.bf16.mxu0 0
        %1293 = vmatpush1.bf16.msra.mxu0 0
        %1294 = vmatprep.subr.bf16.mxu0 0
        %1295 = vmatpush1.bf16.msra.mxu0 0
        %1296 = vmatprep.mubr.bf16.mxu0 0
        %1297 = vmatmul.mubr.bf16.gmra.mrb[0].mxu0 %v1262
        %v1298 = vpop.f32.mrb[0].mxu0
        %v1299 = vadd.f32 0.0, %v1298
        %v1300 = vpop.f32.mrb[0].mxu0
        %v1301 = vpop.f32.mrb[0].mxu0
        %v1302 = vpop.f32.mrb[0].mxu0
        %1303 = vdwg.mxu0
        %v1304 = vadd.f32 %v1243, %v1299
        %v1305 = vld [vmem:[#allocation2 + $0x8] sm:$0xf]
        %v1306 = vld [vmem:[#allocation2 + $0xc] sm:$0x1]
        %s1307 = scalar_lea.vmem [#allocation12], 80
        %v1308 = vld [vmem:[%s1307] sm:$0xf]
        %v1309 = vld [vmem:[%s1307 + $0x4] sm:$0xf]
        %v1310 = vld [vmem:[%s1307 + $0x8] sm:$0xf]
        %v1311 = vld [vmem:[%s1307 + $0xc] sm:$0xf]
        %v1314 = vunpack.c.l.b16 %v1305
        %v1315 = vunpack.c.l.b16 %v1306
        %v1316 = vpack.c.b16 %v1315, %v1314
        %v1318 = vshrl.u32 %v1316, 16
        %v1320 = vshll.u32 %v1316, 16
        %v1322 = vrot.slane %v1320, 1
        %v1323 = vor.u32 %v1318, %v1322
        %v1328 = vunpack.c.l.b16 %v1308
        %v1329 = vunpack.c.l.b16 %v1309
        %v1330 = vunpack.c.l.b16 %v1310
        %v1331 = vunpack.c.l.b16 %v1311
        %v1332 = vpack.c.b16 %v1329, %v1328
        %v1333 = vpack.c.b16 %v1331, %v1330
        %v1337 = vsel %vm985, %v1323, 0
        %1339 = vmatprep.subr.bf16.mxu0 0
        %1340 = vmatpush1.bf16.msra.mxu0 %v1332
        %1341 = vmatprep.subr.bf16.mxu0 0
        %1342 = vmatpush1.bf16.msra.mxu0 %v1333
        %1343 = vmatprep.subr.bf16.mxu0 0
        %1344 = vmatpush1.bf16.msra.mxu0 0
        %1345 = vmatprep.subr.bf16.mxu0 0
        %1346 = vmatpush1.bf16.msra.mxu0 0
        %1347 = vmatprep.subr.bf16.mxu0 0
        %1348 = vmatpush1.bf16.msra.mxu0 0
        %1349 = vmatprep.subr.bf16.mxu0 0
        %1350 = vmatpush1.bf16.msra.mxu0 0
        %1351 = vmatprep.subr.bf16.mxu0 0
        %1352 = vmatpush1.bf16.msra.mxu0 0
        %1353 = vmatprep.subr.bf16.mxu0 0
        %1354 = vmatpush1.bf16.msra.mxu0 0
        %1355 = vmatprep.subr.bf16.mxu0 0
        %1356 = vmatpush1.bf16.msra.mxu0 0
        %1357 = vmatprep.subr.bf16.mxu0 0
        %1358 = vmatpush1.bf16.msra.mxu0 0
        %1359 = vmatprep.subr.bf16.mxu0 0
        %1360 = vmatpush1.bf16.msra.mxu0 0
        %1361 = vmatprep.subr.bf16.mxu0 0
        %1362 = vmatpush1.bf16.msra.mxu0 0
        %1363 = vmatprep.subr.bf16.mxu0 0
        %1364 = vmatpush1.bf16.msra.mxu0 0
        %1365 = vmatprep.subr.bf16.mxu0 0
        %1366 = vmatpush1.bf16.msra.mxu0 0
        %1367 = vmatprep.subr.bf16.mxu0 0
        %1368 = vmatpush1.bf16.msra.mxu0 0
        %1369 = vmatprep.subr.bf16.mxu0 0
        %1370 = vmatpush1.bf16.msra.mxu0 0
        %1371 = vmatprep.mubr.bf16.mxu0 0
        %1372 = vmatmul.mubr.bf16.gmra.mrb[0].mxu0 %v1337
        %v1373 = vpop.f32.mrb[0].mxu0
        %v1374 = vadd.f32 0.0, %v1373
        %v1375 = vpop.f32.mrb[0].mxu0
        %v1376 = vpop.f32.mrb[0].mxu0
        %v1377 = vpop.f32.mrb[0].mxu0
        %1378 = vdwg.mxu0
        %v1379 = vadd.f32 %v1304, %v1374
        %v1380 = vld [vmem:[#allocation2 + $0x8] sm:$0xe]
        %v1381 = vld [vmem:[#allocation2 + $0xc] sm:$0x3]
        %s1382 = scalar_lea.vmem [#allocation12], 96
        %v1383 = vld [vmem:[%s1382] sm:$0xf]
        %v1384 = vld [vmem:[%s1382 + $0x4] sm:$0xf]
        %v1385 = vld [vmem:[%s1382 + $0x8] sm:$0xf]
        %v1386 = vld [vmem:[%s1382 + $0xc] sm:$0xf]
        %v1389 = vunpack.c.l.b16 %v1380
        %v1390 = vunpack.c.l.b16 %v1381
        %v1391 = vpack.c.b16 %v1390, %v1389
        %v1393 = vshrl.u32 %v1391, 16
        %v1395 = vrot.slane %v1393, 1
        %v1396 = vshll.u32 %v1391, 16
        %v1398 = vrot.slane %v1396, 2
        %v1399 = vor.u32 %v1395, %v1398
        %v1404 = vunpack.c.l.b16 %v1383
        %v1405 = vunpack.c.l.b16 %v1384
        %v1406 = vunpack.c.l.b16 %v1385
        %v1407 = vunpack.c.l.b16 %v1386
        %v1408 = vpack.c.b16 %v1405, %v1404
        %v1409 = vpack.c.b16 %v1407, %v1406
        %v1413 = vsel %vm985, %v1399, 0
        %1415 = vmatprep.subr.bf16.mxu0 0
        %1416 = vmatpush1.bf16.msra.mxu0 %v1408
        %1417 = vmatprep.subr.bf16.mxu0 0
        %1418 = vmatpush1.bf16.msra.mxu0 %v1409
        %1419 = vmatprep.subr.bf16.mxu0 0
        %1420 = vmatpush1.bf16.msra.mxu0 0
        %1421 = vmatprep.subr.bf16.mxu0 0
        %1422 = vmatpush1.bf16.msra.mxu0 0
        %1423 = vmatprep.subr.bf16.mxu0 0
        %1424 = vmatpush1.bf16.msra.mxu0 0
        %1425 = vmatprep.subr.bf16.mxu0 0
        %1426 = vmatpush1.bf16.msra.mxu0 0
        %1427 = vmatprep.subr.bf16.mxu0 0
        %1428 = vmatpush1.bf16.msra.mxu0 0
        %1429 = vmatprep.subr.bf16.mxu0 0
        %1430 = vmatpush1.bf16.msra.mxu0 0
        %1431 = vmatprep.subr.bf16.mxu0 0
        %1432 = vmatpush1.bf16.msra.mxu0 0
        %1433 = vmatprep.subr.bf16.mxu0 0
        %1434 = vmatpush1.bf16.msra.mxu0 0
        %1435 = vmatprep.subr.bf16.mxu0 0
        %1436 = vmatpush1.bf16.msra.mxu0 0
        %1437 = vmatprep.subr.bf16.mxu0 0
        %1438 = vmatpush1.bf16.msra.mxu0 0
        %1439 = vmatprep.subr.bf16.mxu0 0
        %1440 = vmatpush1.bf16.msra.mxu0 0
        %1441 = vmatprep.subr.bf16.mxu0 0
        %1442 = vmatpush1.bf16.msra.mxu0 0
        %1443 = vmatprep.subr.bf16.mxu0 0
        %1444 = vmatpush1.bf16.msra.mxu0 0
        %1445 = vmatprep.subr.bf16.mxu0 0
        %1446 = vmatpush1.bf16.msra.mxu0 0
        %1447 = vmatprep.mubr.bf16.mxu0 0
        %1448 = vmatmul.mubr.bf16.gmra.mrb[0].mxu0 %v1413
        %v1449 = vpop.f32.mrb[0].mxu0
        %v1450 = vadd.f32 0.0, %v1449
        %v1451 = vpop.f32.mrb[0].mxu0
        %v1452 = vpop.f32.mrb[0].mxu0
        %v1453 = vpop.f32.mrb[0].mxu0
        %1454 = vdwg.mxu0
        %v1455 = vadd.f32 %v1379, %v1450
        %v1456 = vld [vmem:[#allocation2 + $0x8] sm:$0xc]
        %s1457 = scalar_lea.vmem [#allocation12], 112
        %v1458 = vld [vmem:[%s1457] sm:$0xf]
        %v1459 = vld [vmem:[%s1457 + $0x4] sm:$0xf]
        %v1460 = vld [vmem:[%s1457 + $0x8] sm:$0xf]
        %v1461 = vld [vmem:[%s1457 + $0xc] sm:$0xf]
        %v1463 = vunpack.c.l.b16 %v1456
        %v1464 = vpack.c.b16 %v1390, %v1463
        %v1465 = vrot.slane %v1464, 2
        %v1470 = vunpack.c.l.b16 %v1458
        %v1471 = vunpack.c.l.b16 %v1459
        %v1472 = vunpack.c.l.b16 %v1460
        %v1473 = vunpack.c.l.b16 %v1461
        %v1474 = vpack.c.b16 %v1471, %v1470
        %v1475 = vpack.c.b16 %v1473, %v1472
        %v1479 = vsel %vm985, %v1465, 0
        %1481 = vmatprep.subr.bf16.mxu0 0
        %1482 = vmatpush1.bf16.msra.mxu0 %v1474
        %1483 = vmatprep.subr.bf16.mxu0 0
        %1484 = vmatpush1.bf16.msra.mxu0 %v1475
        %1485 = vmatprep.subr.bf16.mxu0 0
        %1486 = vmatpush1.bf16.msra.mxu0 0
        %1487 = vmatprep.subr.bf16.mxu0 0
        %1488 = vmatpush1.bf16.msra.mxu0 0
        %1489 = vmatprep.subr.bf16.mxu0 0
        %1490 = vmatpush1.bf16.msra.mxu0 0
        %1491 = vmatprep.subr.bf16.mxu0 0
        %1492 = vmatpush1.bf16.msra.mxu0 0
        %1493 = vmatprep.subr.bf16.mxu0 0
        %1494 = vmatpush1.bf16.msra.mxu0 0
        %1495 = vmatprep.subr.bf16.mxu0 0
        %1496 = vmatpush1.bf16.msra.mxu0 0
        %1497 = vmatprep.subr.bf16.mxu0 0
        %1498 = vmatpush1.bf16.msra.mxu0 0
        %1499 = vmatprep.subr.bf16.mxu0 0
        %1500 = vmatpush1.bf16.msra.mxu0 0
        %1501 = vmatprep.subr.bf16.mxu0 0
        %1502 = vmatpush1.bf16.msra.mxu0 0
        %1503 = vmatprep.subr.bf16.mxu0 0
        %1504 = vmatpush1.bf16.msra.mxu0 0
        %1505 = vmatprep.subr.bf16.mxu0 0
        %1506 = vmatpush1.bf16.msra.mxu0 0
        %1507 = vmatprep.subr.bf16.mxu0 0
        %1508 = vmatpush1.bf16.msra.mxu0 0
        %1509 = vmatprep.subr.bf16.mxu0 0
        %1510 = vmatpush1.bf16.msra.mxu0 0
        %1511 = vmatprep.subr.bf16.mxu0 0
        %1512 = vmatpush1.bf16.msra.mxu0 0
        %1513 = vmatprep.mubr.bf16.mxu0 0
        %1514 = vmatmul.mubr.bf16.gmra.mrb[0].mxu0 %v1479
        %v1515 = vpop.f32.mrb[0].mxu0
        %v1516 = vadd.f32 0.0, %v1515
        %v1517 = vpop.f32.mrb[0].mxu0
        %v1518 = vpop.f32.mrb[0].mxu0
        %v1519 = vpop.f32.mrb[0].mxu0
        %1520 = vdwg.mxu0
        %v1521 = vadd.f32 %v1455, %v1516
        %v1522 = vld [vmem:[#allocation2 + $0xc] sm:$0x7]
        %s1523 = scalar_lea.vmem [#allocation12], 128
        %v1524 = vld [vmem:[%s1523] sm:$0xf]
        %v1525 = vld [vmem:[%s1523 + $0x4] sm:$0xf]
        %v1526 = vld [vmem:[%s1523 + $0x8] sm:$0xf]
        %v1527 = vld [vmem:[%s1523 + $0xc] sm:$0xf]
        %v1529 = vunpack.c.l.b16 %v1522
        %v1530 = vpack.c.b16 %v1529, %v1463
        %v1532 = vshrl.u32 %v1530, 16
        %v1534 = vrot.slane %v1532, 2
        %v1535 = vshll.u32 %v1530, 16
        %v1537 = vrot.slane %v1535, 3
        %v1538 = vor.u32 %v1534, %v1537
        %v1543 = vunpack.c.l.b16 %v1524
        %v1544 = vunpack.c.l.b16 %v1525
        %v1545 = vunpack.c.l.b16 %v1526
        %v1546 = vunpack.c.l.b16 %v1527
        %v1547 = vpack.c.b16 %v1544, %v1543
        %v1548 = vpack.c.b16 %v1546, %v1545
        %v1552 = vsel %vm985, %v1538, 0
        %1554 = vmatprep.subr.bf16.mxu0 0
        %1555 = vmatpush1.bf16.msra.mxu0 %v1547
        %1556 = vmatprep.subr.bf16.mxu0 0
        %1557 = vmatpush1.bf16.msra.mxu0 %v1548
        %1558 = vmatprep.subr.bf16.mxu0 0
        %1559 = vmatpush1.bf16.msra.mxu0 0
        %1560 = vmatprep.subr.bf16.mxu0 0
        %1561 = vmatpush1.bf16.msra.mxu0 0
        %1562 = vmatprep.subr.bf16.mxu0 0
        %1563 = vmatpush1.bf16.msra.mxu0 0
        %1564 = vmatprep.subr.bf16.mxu0 0
        %1565 = vmatpush1.bf16.msra.mxu0 0
        %1566 = vmatprep.subr.bf16.mxu0 0
        %1567 = vmatpush1.bf16.msra.mxu0 0
        %1568 = vmatprep.subr.bf16.mxu0 0
        %1569 = vmatpush1.bf16.msra.mxu0 0
        %1570 = vmatprep.subr.bf16.mxu0 0
        %1571 = vmatpush1.bf16.msra.mxu0 0
        %1572 = vmatprep.subr.bf16.mxu0 0
        %1573 = vmatpush1.bf16.msra.mxu0 0
        %1574 = vmatprep.subr.bf16.mxu0 0
        %1575 = vmatpush1.bf16.msra.mxu0 0
        %1576 = vmatprep.subr.bf16.mxu0 0
        %1577 = vmatpush1.bf16.msra.mxu0 0
        %1578 = vmatprep.subr.bf16.mxu0 0
        %1579 = vmatpush1.bf16.msra.mxu0 0
        %1580 = vmatprep.subr.bf16.mxu0 0
        %1581 = vmatpush1.bf16.msra.mxu0 0
        %1582 = vmatprep.subr.bf16.mxu0 0
        %1583 = vmatpush1.bf16.msra.mxu0 0
        %1584 = vmatprep.subr.bf16.mxu0 0
        %1585 = vmatpush1.bf16.msra.mxu0 0
        %1586 = vmatprep.mubr.bf16.mxu0 0
        %1587 = vmatmul.mubr.bf16.gmra.mrb[0].mxu0 %v1552
        %v1588 = vpop.f32.mrb[0].mxu0
        %v1589 = vadd.f32 0.0, %v1588
        %v1590 = vpop.f32.mrb[0].mxu0
        %v1591 = vpop.f32.mrb[0].mxu0
        %v1592 = vpop.f32.mrb[0].mxu0
        %1593 = vdwg.mxu0
        %v1594 = vadd.f32 %v1521, %v1589
        %v1595 = vld [vmem:[#allocation14] sm:$0x1]
        %v1597 = vlaneseq
        %v1598 = vshrl.u32 %v1597, 7
        %v1599 = vsub.s32 0, %v1598
        %v1600 = vrot.slane %v1595, %v1599
        %v1602 = vadd.f32 %v1594, %v1600
        %vm1603 = vcmp.ge.f32.partialorder %v1602, 0.0
        %v1604 = vld [vmem:[#allocation15] sm:$0x1]
        %v1606 = vlaneseq
        %v1607 = vshrl.u32 %v1606, 7
        %v1608 = vsub.s32 0, %v1607
        %v1609 = vrot.slane %v1604, %v1608
        %v1611 = vmul.f32 %v1609, %v1602
        %v1612 = vsel %vm1603, %v1602, %v1611
        %v1613 = vmul.f32 %v1612, %v939
        %v1614 = vsel %vm985, %v1613, 0.0
        %v1615 = vrot.slane %v1614, 4
        %v1616 = vadd.f32 %v1614, %v1615
        %v1617 = vrot.slane %v1616, 2
        %v1618 = vadd.f32 %v1616, %v1617
        %v1619 = vrot.slane %v1618, 1
        %v1620 = vadd.f32 %v1618, %v1619
        %v1621 = vmul.f32 %v1620, 0.25
        %v1622 = vld [vmem:[#allocation17] sm:$0xff]
        %v1623 = vld [vmem:[#allocation17 + $0x8] sm:$0xff]
        %v1624 = vld [vmem:[#allocation17 + $0x10] sm:$0xff]
        %v1625 = vld [vmem:[#allocation17 + $0x18] sm:$0xff]
        %v1626 = vld [vmem:[#allocation18] sm:$0x1]
        %v1628 = vsel %vm985, %v1621, 0
        %1630 = vmatprep.subr.mxu0 0.0
        %1631 = vmatpush1.msra.mxu0 %v1622
        %1632 = vmatprep.subr.mxu0 0.0
        %1633 = vmatpush1.msra.mxu0 %v1623
        %1634 = vmatprep.subr.mxu0 0.0
        %1635 = vmatpush1.msra.mxu0 %v1624
        %1636 = vmatprep.subr.mxu0 0.0
        %1637 = vmatpush1.msra.mxu0 %v1625
        %1638 = vmatprep.subr.mxu0 0.0
        %1639 = vmatpush1.msra.mxu0 0.0
        %1640 = vmatprep.subr.mxu0 0.0
        %1641 = vmatpush1.msra.mxu0 0.0
        %1642 = vmatprep.subr.mxu0 0.0
        %1643 = vmatpush1.msra.mxu0 0.0
        %1644 = vmatprep.subr.mxu0 0.0
        %1645 = vmatpush1.msra.mxu0 0.0
        %1646 = vmatprep.subr.mxu0 0.0
        %1647 = vmatpush1.msra.mxu0 0.0
        %1648 = vmatprep.subr.mxu0 0.0
        %1649 = vmatpush1.msra.mxu0 0.0
        %1650 = vmatprep.subr.mxu0 0.0
        %1651 = vmatpush1.msra.mxu0 0.0
        %1652 = vmatprep.subr.mxu0 0.0
        %1653 = vmatpush1.msra.mxu0 0.0
        %1654 = vmatprep.subr.mxu0 0.0
        %1655 = vmatpush1.msra.mxu0 0.0
        %1656 = vmatprep.subr.mxu0 0.0
        %1657 = vmatpush1.msra.mxu0 0.0
        %1658 = vmatprep.subr.mxu0 0.0
        %1659 = vmatpush1.msra.mxu0 0.0
        %1660 = vmatprep.subr.mxu0 0.0
        %1661 = vmatpush1.msra.mxu0 0.0
        %1662 = vmatprep.subr.mxu0 0.0
        %1663 = vmatpush1.msra.mxu0 0.0
        %1664 = vmatprep.subr.mxu0 0.0
        %1665 = vmatpush1.msra.mxu0 0.0
        %1666 = vmatprep.subr.mxu0 0.0
        %1667 = vmatpush1.msra.mxu0 0.0
        %1668 = vmatprep.subr.mxu0 0.0
        %1669 = vmatpush1.msra.mxu0 0.0
        %1670 = vmatprep.subr.mxu0 0.0
        %1671 = vmatpush1.msra.mxu0 0.0
        %1672 = vmatprep.subr.mxu0 0.0
        %1673 = vmatpush1.msra.mxu0 0.0
        %1674 = vmatprep.subr.mxu0 0.0
        %1675 = vmatpush1.msra.mxu0 0.0
        %1676 = vmatprep.subr.mxu0 0.0
        %1677 = vmatpush1.msra.mxu0 0.0
        %1678 = vmatprep.subr.mxu0 0.0
        %1679 = vmatpush1.msra.mxu0 0.0
        %1680 = vmatprep.subr.mxu0 0.0
        %1681 = vmatpush1.msra.mxu0 0.0
        %1682 = vmatprep.subr.mxu0 0.0
        %1683 = vmatpush1.msra.mxu0 0.0
        %1684 = vmatprep.subr.mxu0 0.0
        %1685 = vmatpush1.msra.mxu0 0.0
        %1686 = vmatprep.subr.mxu0 0.0
        %1687 = vmatpush1.msra.mxu0 0.0
        %1688 = vmatprep.subr.mxu0 0.0
        %1689 = vmatpush1.msra.mxu0 0.0
        %1690 = vmatprep.subr.mxu0 0.0
        %1691 = vmatpush1.msra.mxu0 0.0
        %1692 = vmatprep.subr.mxu0 0.0
        %1693 = vmatpush1.msra.mxu0 0.0
        %1694 = vmatprep.mubr.f32.mxu0 0.0
        %1695 = vmatmul.mubr.f32.gmra.mrb[0].mxu0 %v1628
        %v1696 = vpop.f32.mrb[0].mxu0
        %v1697 = vadd.f32 %v1626, %v1696
        %v1698 = vpop.f32.mrb[0].mxu0
        %1699 = vdwg.mxu0
        %v1700 = vmax.f32 %v1697, 0.0
        %v1701 = vld [vmem:[#allocation20] sm:$0xf]
        %v1702 = vld [vmem:[#allocation21] sm:$0x1]
        %vm1703 = vcmask 31744
        %v1705 = vsel %vm1703, %v1700, 0
        %vm1707 = vcmask 1043456
        %v1709 = vsel %vm1707, %v1701, 0
        %1711 = vmatprep.subr.mxu0 0.0
        %1712 = vmatpush1.msra.mxu0 %v1709
        %1713 = vmatprep.subr.mxu0 0.0
        %1714 = vmatpush1.msra.mxu0 0.0
        %1715 = vmatprep.subr.mxu0 0.0
        %1716 = vmatpush1.msra.mxu0 0.0
        %1717 = vmatprep.subr.mxu0 0.0
        %1718 = vmatpush1.msra.mxu0 0.0
        %1719 = vmatprep.subr.mxu0 0.0
        %1720 = vmatpush1.msra.mxu0 0.0
        %1721 = vmatprep.subr.mxu0 0.0
        %1722 = vmatpush1.msra.mxu0 0.0
        %1723 = vmatprep.subr.mxu0 0.0
        %1724 = vmatpush1.msra.mxu0 0.0
        %1725 = vmatprep.subr.mxu0 0.0
        %1726 = vmatpush1.msra.mxu0 0.0
        %1727 = vmatprep.subr.mxu0 0.0
        %1728 = vmatpush1.msra.mxu0 0.0
        %1729 = vmatprep.subr.mxu0 0.0
        %1730 = vmatpush1.msra.mxu0 0.0
        %1731 = vmatprep.subr.mxu0 0.0
        %1732 = vmatpush1.msra.mxu0 0.0
        %1733 = vmatprep.subr.mxu0 0.0
        %1734 = vmatpush1.msra.mxu0 0.0
        %1735 = vmatprep.subr.mxu0 0.0
        %1736 = vmatpush1.msra.mxu0 0.0
        %1737 = vmatprep.subr.mxu0 0.0
        %1738 = vmatpush1.msra.mxu0 0.0
        %1739 = vmatprep.subr.mxu0 0.0
        %1740 = vmatpush1.msra.mxu0 0.0
        %1741 = vmatprep.subr.mxu0 0.0
        %1742 = vmatpush1.msra.mxu0 0.0
        %1743 = vmatprep.subr.mxu0 0.0
        %1744 = vmatpush1.msra.mxu0 0.0
        %1745 = vmatprep.subr.mxu0 0.0
        %1746 = vmatpush1.msra.mxu0 0.0
        %1747 = vmatprep.subr.mxu0 0.0
        %1748 = vmatpush1.msra.mxu0 0.0
        %1749 = vmatprep.subr.mxu0 0.0
        %1750 = vmatpush1.msra.mxu0 0.0
        %1751 = vmatprep.subr.mxu0 0.0
        %1752 = vmatpush1.msra.mxu0 0.0
        %1753 = vmatprep.subr.mxu0 0.0
        %1754 = vmatpush1.msra.mxu0 0.0
        %1755 = vmatprep.subr.mxu0 0.0
        %1756 = vmatpush1.msra.mxu0 0.0
        %1757 = vmatprep.subr.mxu0 0.0
        %1758 = vmatpush1.msra.mxu0 0.0
        %1759 = vmatprep.subr.mxu0 0.0
        %1760 = vmatpush1.msra.mxu0 0.0
        %1761 = vmatprep.subr.mxu0 0.0
        %1762 = vmatpush1.msra.mxu0 0.0
        %1763 = vmatprep.subr.mxu0 0.0
        %1764 = vmatpush1.msra.mxu0 0.0
        %1765 = vmatprep.subr.mxu0 0.0
        %1766 = vmatpush1.msra.mxu0 0.0
        %1767 = vmatprep.subr.mxu0 0.0
        %1768 = vmatpush1.msra.mxu0 0.0
        %1769 = vmatprep.subr.mxu0 0.0
        %1770 = vmatpush1.msra.mxu0 0.0
        %1771 = vmatprep.subr.mxu0 0.0
        %1772 = vmatpush1.msra.mxu0 0.0
        %1773 = vmatprep.subr.mxu0 0.0
        %1774 = vmatpush1.msra.mxu0 0.0
        %1775 = vmatprep.mubr.f32.mxu0 0.0
        %1776 = vmatmul.mubr.f32.gmra.mrb[0].mxu0 %v1705
        %v1777 = vpop.f32.mrb[0].mxu0
        %v1778 = vadd.f32 %v1702, %v1777
        %v1779 = vpop.f32.mrb[0].mxu0
        %1780 = vdwg.mxu0
        %v1781 = vsub.f32 0.0, %v1778
        %v1782 = vmul.f32 %v1781, 1.442695
        %v1783 = vpow.pop %v1782
        %v1784 = vadd.f32 %v1783, 1.0
        %v1785 = vrcp.pop %v1784
        %v1786 = vmul.f32 1.0, %v1785
        %v1787 = vlaneseq
        %v1788 = vshrl.u32 %v1787, 7
        %v1789 = vsub.s32 0, %v1788
        %v1790 = vrot.slane %v1786, %v1789
        %v1791 = vmul.f32 %v1612, %v1790
        %1792 = vst.msk [vmem:[%s575] sm:$0xff] %vm985, %v1791
        %s1793 = sand.u32 %s300, 1
        %s1794 = scalar_lea.sflag [#allocation5], %s1793
        %s1795 = sand.u32 %s300, 1
        %s1796 = smul.addr %s1795, 8
        %s1797 = scalar_lea.vmem [#allocation23], %s1796
        // Predicated region
        $region117: #{context_net_forward.5} parent=67 // pred_check
          %p1798 = pneg %p310
        $region118: #{context_net_forward.5} parent=67 // pred_check_branch
          %1800 = sbr.rel (%p1798) target = $region120
        $region119: #{context_net_forward.5} parent=67 // pred_region
          %s1802 = ssub.s32 128, 128
          %1803 = vsyncadd %s1794, %s1802
          %s1804 = smul.addr %s35, 128
          %s1805 = scalar_lea.hbm %s12, %s1804
          %s1807 = sshll.u32 %s1797, 4
          %s1808 = int_to_ptr.vmem [resolvable:$true] %s1807
          %1810 = dma.vmem_to_hbm [thread:$0]  %s1808, 128, %s1805, %s1794
        $region120: #{context_net_forward.5} parent=67 // pred_fallthru
          _
      $region68: #{context_net_forward.5} parent=5 // pred_fallthru
        _
      %p1811 = scmp.le.s32.totalorder 2, %s30
      // Predicated region
      $region121: #{context_net_forward.5} parent=5 // pred_check
        %p1812 = pneg %p1811
      $region122: #{context_net_forward.5} parent=5 // pred_check_branch
        %1814 = sbr.rel (%p1812) target = $region124
      $region123: #{context_net_forward.5} parent=5 // pred_region
        %s1815 = ssub.s32 %s30, 2
        // Predicated region
        $region125: #{context_net_forward.5} parent=123 // pred_check
          %p1816 = pneg %p316
        $region126: #{context_net_forward.5} parent=123 // pred_check_branch
          %1818 = sbr.rel (%p1816) target = $region128
        $region127: #{context_net_forward.5} parent=123 // pred_region
          %s1819 = sand.u32 %s301, 1
          %s1820 = scalar_lea.sflag [#allocation5], %s1819
          %s1821 = sand.u32 %s301, 1
          %s1822 = smul.addr %s1821, 8
          %s1823 = scalar_lea.vmem [#allocation23], %s1822
          %1824 = dma.done %s1820, 128
        $region128: #{context_net_forward.5} parent=123 // pred_fallthru
          _
      $region124: #{context_net_forward.5} parent=5 // pred_fallthru
        _
    $region6: #{context_net_forward.5} parent=1 // loop_footer
      %s34 = sadd.s32 1, %s30
    $region7: #{context_net_forward.5} parent=1 // loop_footer_branch
      %29 = sbr.rel target = $region3
    $region8: #{context_net_forward.5} parent=1 // loop_exit
      _
    %1825 = vsyncpa [#allocation4], 1
    %s1826 = scalar_lea.sflag [#allocation4], 1
    %1827 = vsyncpa %s1826, 1
    %1828 = vsyncpa [#allocation7], 1
    %1829 = vsyncpa [#allocation10], 1
    %1830 = vsyncpa [#allocation13], 1
    %1831 = vsyncpa [#allocation16], 1
    %1832 = vsyncpa [#allocation19], 1
    %1833 = vsyncpa [#allocation22], 1
    %1834 = vsyncpa [#allocation5], 1
    %s1835 = scalar_lea.sflag [#allocation5], 1
    %1836 = vsyncpa %s1835, 1

</llo_original>
